<compile_context>
chip_gen: v6e
topology: v6e:2x2x1
jax: 0.10.0
libtpu: 0.0.40
codegen_flags: <defaults>
</compile_context>

<pallas_src>
import math

import jax
import jax.numpy as jnp
import numpy as np
from jax.experimental import pallas as pl
from jax.experimental.pallas import tpu as pltpu

EMB_H = 16    # embed_hidden_size  (EmbedConv hidden width)
GNN_H = 32    # TransformerConv out_channels  (= final feature width)
HEADS = 3     # TransformerConv heads, concat=False -> mean over heads
LN_EPS = 1e-5


def _layernorm(x, g, b):
    m = jnp.mean(x, axis=-1, keepdims=True)
    v = jnp.mean((x - m) ** 2, axis=-1, keepdims=True)
    return (x - m) * jax.lax.rsqrt(v + LN_EPS) * g + b


def _gnn_kernel(node_obs_ref, adj_ref,
                w1n_ref, w1e_ref, b1_ref, g1_ref, be1_ref,
                w2_ref, b2_ref, g2_ref, be2_ref,
                wqkvs_ref, bqkvs_ref, we_ref,
                out_ref):
    x = node_obs_ref[...]          # (G, N, D)   node features, G graphs per step
    adj = adj_ref[...]             # (G, Ns, Nt) edge weights adj[g, s, t]
    G, N, D = x.shape

    # ---------------- EmbedConv: vectorized edge MLP + 'add' aggregation ----------
    # Linear1([x_s, e_st]) = x_s @ W1_node + e_st * W1_edge + b1, for all (g,s,t).
    base = jnp.dot(x.reshape(G * N, D), w1n_ref[...],
                   preferred_element_type=jnp.float32) + b1_ref[...]       # (G*N, E)
    pre1 = (base.reshape(G, N, 1, EMB_H)
            + adj[..., None] * w1e_ref[...].reshape(1, 1, 1, EMB_H))       # (G,Ns,Nt,E)
    h1 = _layernorm(jnp.maximum(pre1, 0.0), g1_ref[...], be1_ref[...])     # lin1
    pre2 = jnp.dot(h1.reshape(G * N * N, EMB_H), w2_ref[...],
                   preferred_element_type=jnp.float32) + b2_ref[...]
    h2 = _layernorm(jnp.maximum(pre2, 0.0), g2_ref[...], be2_ref[...])     # lin2[0]
    h2 = h2.reshape(G, N, N, EMB_H)
    mask_f = (adj != 0.0).astype(jnp.float32)                              # (G,Ns,Nt)
    x_emb = jnp.sum(h2 * mask_f[..., None], axis=1)   # aggr='add' over sources (G,Nt,E)

    # ---------------- TransformerConv (3 heads, concat=False -> mean) -------------
    adj_t = jnp.swapaxes(adj, 1, 2)                   # (G, Nt, Ns) -- one transpose
    mask_t = adj_t != 0.0
    mask_t_f = mask_t.astype(jnp.float32)

    # One fused projection: columns = [q(h0..h2) | k(h0..h2) | v(h0..h2) | skip]
    big = jnp.dot(x_emb.reshape(G * N, EMB_H), wqkvs_ref[...],
                  preferred_element_type=jnp.float32) + bqkvs_ref[...]     # (G*N, 320)
    skip = big[:, 3 * HEADS * GNN_H:].reshape(G, N, GNN_H)
    we = we_ref[...]                                                       # (HEADS, C)

    scale = jnp.float32(1.0 / math.sqrt(GNN_H))
    neg = jnp.float32(-1e30)
    out_sum = jnp.zeros((G, N, GNN_H), jnp.float32)
    for h in range(HEADS):                            # tiny fixed trip count
        qh = big[:, h * GNN_H:(h + 1) * GNN_H].reshape(G, N, GNN_H)
        kh = big[:, (HEADS + h) * GNN_H:(HEADS + h + 1) * GNN_H].reshape(G, N, GNN_H)
        vh = big[:, (2 * HEADS + h) * GNN_H:(2 * HEADS + h + 1) * GNN_H].reshape(G, N, GNN_H)
        weh = we[h:h + 1, :]                          # (1, C)

        # alpha[g,t,s] = q[g,t] . (k[g,s] + adj[g,s,t]*we) / sqrt(C)
        qk = jnp.einsum('gtc,gsc->gts', qh, kh, preferred_element_type=jnp.float32)
        qe = jnp.sum(qh * weh, axis=-1)               # (G, Nt)  = q[t] . we
        alpha = (qk + adj_t * qe[:, :, None]) * scale
        alpha = jnp.where(mask_t, alpha, neg)

        # masked softmax over incoming edges (sources), per target node
        mx = jnp.max(alpha, axis=2, keepdims=True)
        p = jnp.exp(alpha - mx) * mask_t_f
        den = jnp.maximum(jnp.sum(p, axis=2, keepdims=True), 1e-16)
        r = pl.reciprocal(den, approx=True)
        r = r * (2.0 - den * r)                       # one Newton step -> f32 accuracy
        w_att = p * r                                 # (G, Nt, Ns)

        # sum_s w[t,s] * (v[s] + adj[s,t]*we)
        att_v = jnp.einsum('gts,gsc->gtc', w_att, vh, preferred_element_type=jnp.float32)
        att_e = jnp.sum(w_att * adj_t, axis=2)        # (G, Nt)
        out_sum = out_sum + att_v + att_e[:, :, None] * weh

    # concat=False -> mean over heads, + root skip, ReLU, global mean pool
    y = jnp.maximum(out_sum * jnp.float32(1.0 / HEADS) + skip, 0.0)        # (G, N, C)
    out_ref[...] = jnp.sum(y, axis=1) * jnp.float32(1.0 / N)               # (G, C)


def _pack_params(params):
    """Fuse q/k/v/skip weights into one (EMB_H, (3*HEADS+1)*GNN_H) matrix."""
    def flat(w):  # (H, E, C) -> (E, H*C), columns ordered head0, head1, head2
        return jnp.transpose(w, (1, 0, 2)).reshape(EMB_H, HEADS * GNN_H)
    w_cat = jnp.concatenate([flat(params["wq"]), flat(params["wk"]),
                             flat(params["wv"]), params["ws"]], axis=1)    # (16, 320)
    b_cat = jnp.concatenate([params["bq"].reshape(1, -1),
                             params["bk"].reshape(1, -1),
                             params["bv"].reshape(1, -1),
                             params["bs"]], axis=1)                        # (1, 320)
    we2 = params["we"][:, 0, :]                                            # (HEADS, 32)
    return [params["w1n"], params["w1e"], params["b1"], params["g1"], params["be1"],
            params["w2"], params["b2"], params["g2"], params["be2"],
            w_cat, b_cat, we2]


def gnn_base_forward(params, node_obs, adj, agent_id=None, graphs_per_block=256):
    """GNNBase.forward.  agent_id is unused because TransformerConvNet.__init__
    hard-codes graph_aggr='global'."""
    del agent_id
    B, N, D = node_obs.shape
    node_obs = node_obs.astype(jnp.float32)
    adj = adj.astype(jnp.float32)

    # Graphs per grid step: amortize per-step overhead over many tiny graphs.
    if B <= graphs_per_block:
        G = B                                    # single/full block -> any B allowed
    else:
        G = max(8, (graphs_per_block // 8) * 8)  # multiple of 8 for the (G,32) out block
    Bp = ((B + G - 1) // G) * G
    if Bp != B:                                  # pad with empty graphs (masked out)
        node_obs = jnp.concatenate(
            [node_obs, jnp.zeros((Bp - B, N, D), jnp.float32)], axis=0)
        adj = jnp.concatenate(
            [adj, jnp.zeros((Bp - B, N, N), jnp.float32)], axis=0)

    p_list = _pack_params(params)

    def full_spec(a):
        z = (0,) * a.ndim
        return pl.BlockSpec(a.shape, lambda i, _z=z: _z)

    in_specs = [
        pl.BlockSpec((G, N, D), lambda i: (i, 0, 0)),    # G graphs per grid step
        pl.BlockSpec((G, N, N), lambda i: (i, 0, 0)),
    ] + [full_spec(a) for a in p_list]

    out = pl.pallas_call(
        _gnn_kernel,
        out_shape=jax.ShapeDtypeStruct((Bp, GNN_H), jnp.float32),
        grid=(Bp // G,),
        in_specs=in_specs,
        out_specs=pl.BlockSpec((G, GNN_H), lambda i: (i, 0)),
        compiler_params=pltpu.CompilerParams(dimension_semantics=("parallel",)),
    )(node_obs, adj, *p_list)
    return out[:B]                                       # (B, GNN_H)


def reference_forward(params, node_obs, adj):
    """Dense pure-JAX reference with identical semantics (for verification)."""
    w1n, w1e, b1 = params["w1n"], params["w1e"], params["b1"]
    g1, be1 = params["g1"], params["be1"]
    w2, b2, g2, be2 = params["w2"], params["b2"], params["g2"], params["be2"]
    wq, bq, wk, bk = params["wq"], params["bq"], params["wk"], params["bk"]
    wv, bv, we3 = params["wv"], params["bv"], params["we"]
    ws, bs = params["ws"], params["bs"]

    def one(x, A):
        base = x @ w1n + b1
        pre1 = base[:, None, :] + A[:, :, None] * w1e[None, :, :]
        h1 = _layernorm(jnp.maximum(pre1, 0.0), g1, be1)
        pre2 = h1 @ w2 + b2
        h2 = _layernorm(jnp.maximum(pre2, 0.0), g2, be2)
        mask = A != 0.0
        x_emb = jnp.sum(h2 * mask[:, :, None], axis=0)

        q = jnp.einsum("nd,hdc->nhc", x_emb, wq) + bq[:, 0, :][None]
        k = jnp.einsum("nd,hdc->nhc", x_emb, wk) + bk[:, 0, :][None]
        v = jnp.einsum("nd,hdc->nhc", x_emb, wv) + bv[:, 0, :][None]
        we = we3[:, 0, :]

        qk = jnp.einsum("shc,thc->sth", k, q)
        qe = jnp.einsum("thc,hc->th", q, we)
        alpha = (qk + A[:, :, None] * qe[None]) / math.sqrt(GNN_H)
        alpha = jnp.where(mask[:, :, None], alpha, -1e30)
        mx = jnp.max(alpha, axis=0, keepdims=True)
        p = jnp.exp(alpha - mx) * mask[:, :, None]
        den = jnp.sum(p, axis=0, keepdims=True)
        watt = p / jnp.maximum(den, 1e-16)
        att_v = jnp.einsum("sth,shc->thc", watt, v)
        att_e = jnp.einsum("sth,st->th", watt, A)
        out = jnp.mean(att_v + att_e[:, :, None] * we[None], axis=1)
        y = jnp.maximum(out + x_emb @ ws + bs, 0.0)
        return jnp.mean(y, axis=0)

    return jax.vmap(one)(node_obs, adj)


if __name__ == "__main__":
    B, N, D = 16, 8, 6         # batch, num_nodes, node_obs_dim (edge_dim = 1)
    key = jax.random.PRNGKey(0)
    ks = jax.random.split(key, 20)

    def w(k, shape, scale=0.3):
        return (scale * jax.random.normal(k, shape)).astype(jnp.float32)

    # Deterministic synthetic parameters (shapes from the module's __init__).
    # TODO(synk): EmbedConv.entity_embed (Embedding(3, 2)) is never used in the
    # forward path, so it is intentionally not materialized here.
    params = {
        # EmbedConv.lin1 : Linear(D+1, 16) split into node / edge parts, +LayerNorm
        "w1n": w(ks[0], (D, EMB_H)), "w1e": w(ks[1], (1, EMB_H)),
        "b1": w(ks[2], (1, EMB_H), 0.1),
        "g1": jnp.ones((1, EMB_H), jnp.float32),
        "be1": jnp.zeros((1, EMB_H), jnp.float32),
        # EmbedConv.lin2[0] : Linear(16, 16) + LayerNorm
        "w2": w(ks[3], (EMB_H, EMB_H)), "b2": w(ks[4], (1, EMB_H), 0.1),
        "g2": jnp.ones((1, EMB_H), jnp.float32),
        "be2": jnp.zeros((1, EMB_H), jnp.float32),
        # TransformerConv: per-head (H, 16, 32) projections, lin_edge, lin_skip
        "wq": w(ks[5], (HEADS, EMB_H, GNN_H)), "bq": w(ks[6], (HEADS, 1, GNN_H), 0.1),
        "wk": w(ks[7], (HEADS, EMB_H, GNN_H)), "bk": w(ks[8], (HEADS, 1, GNN_H), 0.1),
        "wv": w(ks[9], (HEADS, EMB_H, GNN_H)), "bv": w(ks[10], (HEADS, 1, GNN_H), 0.1),
        "we": w(ks[11], (HEADS, 1, GNN_H)),
        "ws": w(ks[12], (EMB_H, GNN_H)), "bs": w(ks[13], (1, GNN_H), 0.1),
    }

    node_obs = jax.random.normal(ks[14], (B, N, D), jnp.float32)
    raw = jax.random.uniform(ks[15], (B, N, N), jnp.float32, 0.1, 2.0)
    eye = jnp.eye(N, dtype=jnp.float32)[None]
    adj = jnp.where((raw < 1.2) & (eye == 0.0), raw, 0.0)   # weighted, sparse-ish
    agent_id = jnp.zeros((B, 1), jnp.int32)                 # unused (global aggr)

    # graphs_per_block=8 -> blocks of 8 graphs, grid=(2,) (exercises batching path)
    out = gnn_base_forward(params, node_obs, adj, agent_id, graphs_per_block=8)
    out = jax.block_until_ready(out)

    ref = reference_forward(params, node_obs, adj)
    assert out.shape == (B, GNN_H)
    np.testing.assert_allclose(np.asarray(out), np.asarray(ref), rtol=2e-4, atol=2e-4)
    print("KERNEL_OK")
</pallas_src>

<mosaic_0001>
module attributes {stable_mosaic.version = 11 : i64} {
  func.func @_gnn_kernel(%arg0: i32, %arg1: memref<8x8x6xf32, #tpu.memory_space<vmem>>, %arg2: memref<8x8x8xf32, #tpu.memory_space<vmem>>, %arg3: memref<6x16xf32, #tpu.memory_space<vmem>>, %arg4: memref<1x16xf32, #tpu.memory_space<vmem>>, %arg5: memref<1x16xf32, #tpu.memory_space<vmem>>, %arg6: memref<1x16xf32, #tpu.memory_space<vmem>>, %arg7: memref<1x16xf32, #tpu.memory_space<vmem>>, %arg8: memref<16x16xf32, #tpu.memory_space<vmem>>, %arg9: memref<1x16xf32, #tpu.memory_space<vmem>>, %arg10: memref<1x16xf32, #tpu.memory_space<vmem>>, %arg11: memref<1x16xf32, #tpu.memory_space<vmem>>, %arg12: memref<16x320xf32, #tpu.memory_space<vmem>>, %arg13: memref<1x320xf32, #tpu.memory_space<vmem>>, %arg14: memref<3x32xf32, #tpu.memory_space<vmem>>, %arg15: memref<8x32xf32, #tpu.memory_space<vmem>>) attributes {dimension_semantics = [#tpu.dimension_semantics<parallel>], iteration_bounds = array<i64: 2>, scalar_prefetch = 0 : i64, scratch_operands = 0 : i64, tpu.core_type = #tpu.core_type<tc>, window_params = [{transform_indices = @transform_0, window_bounds = array<i64: 8, 8, 6>}, {transform_indices = @transform_1, window_bounds = array<i64: 8, 8, 8>}, {pipeline_mode = #tpu.pipeline_mode<synchronous>, transform_indices = @transform_2, window_bounds = array<i64: 6, 16>}, {pipeline_mode = #tpu.pipeline_mode<synchronous>, transform_indices = @transform_3, window_bounds = array<i64: 1, 16>}, {pipeline_mode = #tpu.pipeline_mode<synchronous>, transform_indices = @transform_4, window_bounds = array<i64: 1, 16>}, {pipeline_mode = #tpu.pipeline_mode<synchronous>, transform_indices = @transform_5, window_bounds = array<i64: 1, 16>}, {pipeline_mode = #tpu.pipeline_mode<synchronous>, transform_indices = @transform_6, window_bounds = array<i64: 1, 16>}, {pipeline_mode = #tpu.pipeline_mode<synchronous>, transform_indices = @transform_7, window_bounds = array<i64: 16, 16>}, {pipeline_mode = #tpu.pipeline_mode<synchronous>, transform_indices = @transform_8, window_bounds = array<i64: 1, 16>}, {pipeline_mode = #tpu.pipeline_mode<synchronous>, transform_indices = @transform_9, window_bounds = array<i64: 1, 16>}, {pipeline_mode = #tpu.pipeline_mode<synchronous>, transform_indices = @transform_10, window_bounds = array<i64: 1, 16>}, {pipeline_mode = #tpu.pipeline_mode<synchronous>, transform_indices = @transform_11, window_bounds = array<i64: 16, 320>}, {pipeline_mode = #tpu.pipeline_mode<synchronous>, transform_indices = @transform_12, window_bounds = array<i64: 1, 320>}, {pipeline_mode = #tpu.pipeline_mode<synchronous>, transform_indices = @transform_13, window_bounds = array<i64: 3, 32>}, {transform_indices = @transform_14, window_bounds = array<i64: 8, 32>}]} {
    %c0 = arith.constant 0 : index
    %c0_0 = arith.constant 0 : index
    %c0_1 = arith.constant 0 : index
    %0 = vector.load %arg1[%c0, %c0_0, %c0_1] : memref<8x8x6xf32, #tpu.memory_space<vmem>>, vector<8x8x6xf32>
    %c0_2 = arith.constant 0 : index
    %c0_3 = arith.constant 0 : index
    %c0_4 = arith.constant 0 : index
    %1 = vector.load %arg2[%c0_2, %c0_3, %c0_4] : memref<8x8x8xf32, #tpu.memory_space<vmem>>, vector<8x8x8xf32>
    %2 = vector.shape_cast %0 : vector<8x8x6xf32> to vector<64x6xf32>
    %c0_5 = arith.constant 0 : index
    %c0_6 = arith.constant 0 : index
    %3 = vector.load %arg3[%c0_5, %c0_6] : memref<6x16xf32, #tpu.memory_space<vmem>>, vector<6x16xf32>
    %cst = arith.constant dense<0.000000e+00> : vector<64x16xf32>
    %4 = tpu.matmul %2, %3, %cst {dimension_numbers = #tpu.dot_dimension_numbers<[1], [0], [0], [1], [0, 0, 1, 1], [], []>} : vector<64x6xf32>, vector<6x16xf32>, vector<64x16xf32> -> vector<64x16xf32>
    %c0_7 = arith.constant 0 : index
    %c0_8 = arith.constant 0 : index
    %5 = vector.load %arg5[%c0_7, %c0_8] : memref<1x16xf32, #tpu.memory_space<vmem>>, vector<1x16xf32>
    %6 = vector.broadcast %5 : vector<1x16xf32> to vector<64x16xf32>
    %7 = arith.addf %4, %6 : vector<64x16xf32>
    %8 = vector.shape_cast %7 : vector<64x16xf32> to vector<8x8x1x16xf32>
    %9 = vector.shape_cast %1 : vector<8x8x8xf32> to vector<8x8x8x1xf32>
    %c0_9 = arith.constant 0 : index
    %c0_10 = arith.constant 0 : index
    %10 = vector.load %arg4[%c0_9, %c0_10] : memref<1x16xf32, #tpu.memory_space<vmem>>, vector<1x16xf32>
    %11 = vector.shape_cast %10 : vector<1x16xf32> to vector<1x1x1x16xf32>
    %12 = vector.broadcast %9 : vector<8x8x8x1xf32> to vector<8x8x8x16xf32>
    %13 = vector.broadcast %11 : vector<1x1x1x16xf32> to vector<8x8x8x16xf32>
    %14 = arith.mulf %12, %13 : vector<8x8x8x16xf32>
    %15 = vector.broadcast %8 : vector<8x8x1x16xf32> to vector<8x8x8x16xf32>
    %16 = arith.addf %15, %14 : vector<8x8x8x16xf32>
    %cst_11 = arith.constant 0.000000e+00 : f32
    %17 = vector.broadcast %cst_11 : f32 to vector<8x8x8x16xf32>
    %18 = arith.maximumf %16, %17 : vector<8x8x8x16xf32>
    %c0_12 = arith.constant 0 : index
    %c0_13 = arith.constant 0 : index
    %19 = vector.load %arg6[%c0_12, %c0_13] : memref<1x16xf32, #tpu.memory_space<vmem>>, vector<1x16xf32>
    %c0_14 = arith.constant 0 : index
    %c0_15 = arith.constant 0 : index
    %20 = vector.load %arg7[%c0_14, %c0_15] : memref<1x16xf32, #tpu.memory_space<vmem>>, vector<1x16xf32>
    %cst_16 = arith.constant dense<0.000000e+00> : vector<8x8x8xf32>
    %21 = vector.multi_reduction <add>, %18, %cst_16 [3] : vector<8x8x8x16xf32> to vector<8x8x8xf32>
    %22 = vector.shape_cast %21 : vector<8x8x8xf32> to vector<8x8x8x1xf32>
    %cst_17 = arith.constant 1.600000e+01 : f32
    %23 = vector.broadcast %cst_17 : f32 to vector<8x8x8x1xf32>
    %24 = arith.divf %22, %23 : vector<8x8x8x1xf32>
    %25 = vector.broadcast %24 : vector<8x8x8x1xf32> to vector<8x8x8x16xf32>
    %26 = arith.subf %18, %25 : vector<8x8x8x16xf32>
    %27 = arith.mulf %26, %26 : vector<8x8x8x16xf32>
    %cst_18 = arith.constant dense<0.000000e+00> : vector<8x8x8xf32>
    %28 = vector.multi_reduction <add>, %27, %cst_18 [3] : vector<8x8x8x16xf32> to vector<8x8x8xf32>
    %29 = vector.shape_cast %28 : vector<8x8x8xf32> to vector<8x8x8x1xf32>
    %cst_19 = arith.constant 1.600000e+01 : f32
    %30 = vector.broadcast %cst_19 : f32 to vector<8x8x8x1xf32>
    %31 = arith.divf %29, %30 : vector<8x8x8x1xf32>
    %32 = vector.broadcast %24 : vector<8x8x8x1xf32> to vector<8x8x8x16xf32>
    %33 = arith.subf %18, %32 : vector<8x8x8x16xf32>
    %cst_20 = arith.constant 9.99999974E-6 : f32
    %34 = vector.broadcast %cst_20 : f32 to vector<8x8x8x1xf32>
    %35 = arith.addf %31, %34 : vector<8x8x8x1xf32>
    %36 = math.rsqrt %35 : vector<8x8x8x1xf32>
    %37 = vector.broadcast %36 : vector<8x8x8x1xf32> to vector<8x8x8x16xf32>
    %38 = arith.mulf %33, %37 : vector<8x8x8x16xf32>
    %39 = vector.shape_cast %19 : vector<1x16xf32> to vector<1x1x1x16xf32>
    %40 = vector.broadcast %39 : vector<1x1x1x16xf32> to vector<8x8x8x16xf32>
    %41 = arith.mulf %38, %40 : vector<8x8x8x16xf32>
    %42 = vector.shape_cast %20 : vector<1x16xf32> to vector<1x1x1x16xf32>
    %43 = vector.broadcast %42 : vector<1x1x1x16xf32> to vector<8x8x8x16xf32>
    %44 = arith.addf %41, %43 : vector<8x8x8x16xf32>
    %45 = vector.shape_cast %44 : vector<8x8x8x16xf32> to vector<512x16xf32>
    %c0_21 = arith.constant 0 : index
    %c0_22 = arith.constant 0 : index
    %46 = vector.load %arg8[%c0_21, %c0_22] : memref<16x16xf32, #tpu.memory_space<vmem>>, vector<16x16xf32>
    %cst_23 = arith.constant dense<0.000000e+00> : vector<512x16xf32>
    %47 = tpu.matmul %45, %46, %cst_23 {dimension_numbers = #tpu.dot_dimension_numbers<[1], [0], [0], [1], [0, 0, 1, 1], [], []>} : vector<512x16xf32>, vector<16x16xf32>, vector<512x16xf32> -> vector<512x16xf32>
    %c0_24 = arith.constant 0 : index
    %c0_25 = arith.constant 0 : index
    %48 = vector.load %arg9[%c0_24, %c0_25] : memref<1x16xf32, #tpu.memory_space<vmem>>, vector<1x16xf32>
    %49 = vector.broadcast %48 : vector<1x16xf32> to vector<512x16xf32>
    %50 = arith.addf %47, %49 : vector<512x16xf32>
    %cst_26 = arith.constant 0.000000e+00 : f32
    %51 = vector.broadcast %cst_26 : f32 to vector<512x16xf32>
    %52 = arith.maximumf %50, %51 : vector<512x16xf32>
    %c0_27 = arith.constant 0 : index
    %c0_28 = arith.constant 0 : index
    %53 = vector.load %arg10[%c0_27, %c0_28] : memref<1x16xf32, #tpu.memory_space<vmem>>, vector<1x16xf32>
    %c0_29 = arith.constant 0 : index
    %c0_30 = arith.constant 0 : index
    %54 = vector.load %arg11[%c0_29, %c0_30] : memref<1x16xf32, #tpu.memory_space<vmem>>, vector<1x16xf32>
    %cst_31 = arith.constant dense<0.000000e+00> : vector<512xf32>
    %55 = vector.multi_reduction <add>, %52, %cst_31 [1] : vector<512x16xf32> to vector<512xf32>
    %56 = vector.shape_cast %55 : vector<512xf32> to vector<512x1xf32>
    %cst_32 = arith.constant 1.600000e+01 : f32
    %57 = vector.broadcast %cst_32 : f32 to vector<512x1xf32>
    %58 = arith.divf %56, %57 : vector<512x1xf32>
    %59 = vector.broadcast %58 : vector<512x1xf32> to vector<512x16xf32>
    %60 = arith.subf %52, %59 : vector<512x16xf32>
    %61 = arith.mulf %60, %60 : vector<512x16xf32>
    %cst_33 = arith.constant dense<0.000000e+00> : vector<512xf32>
    %62 = vector.multi_reduction <add>, %61, %cst_33 [1] : vector<512x16xf32> to vector<512xf32>
    %63 = vector.shape_cast %62 : vector<512xf32> to vector<512x1xf32>
    %cst_34 = arith.constant 1.600000e+01 : f32
    %64 = vector.broadcast %cst_34 : f32 to vector<512x1xf32>
    %65 = arith.divf %63, %64 : vector<512x1xf32>
    %66 = vector.broadcast %58 : vector<512x1xf32> to vector<512x16xf32>
    %67 = arith.subf %52, %66 : vector<512x16xf32>
    %cst_35 = arith.constant 9.99999974E-6 : f32
    %68 = vector.broadcast %cst_35 : f32 to vector<512x1xf32>
    %69 = arith.addf %65, %68 : vector<512x1xf32>
    %70 = math.rsqrt %69 : vector<512x1xf32>
    %71 = vector.broadcast %70 : vector<512x1xf32> to vector<512x16xf32>
    %72 = arith.mulf %67, %71 : vector<512x16xf32>
    %73 = vector.broadcast %53 : vector<1x16xf32> to vector<512x16xf32>
    %74 = arith.mulf %72, %73 : vector<512x16xf32>
    %75 = vector.broadcast %54 : vector<1x16xf32> to vector<512x16xf32>
    %76 = arith.addf %74, %75 : vector<512x16xf32>
    %77 = vector.shape_cast %76 : vector<512x16xf32> to vector<8x8x8x16xf32>
    %cst_36 = arith.constant 0.000000e+00 : f32
    %78 = vector.broadcast %cst_36 : f32 to vector<8x8x8xf32>
    %79 = arith.cmpf one, %1, %78 : vector<8x8x8xf32>
    %80 = arith.extui %79 : vector<8x8x8xi1> to vector<8x8x8xi32>
    %81 = arith.sitofp %80 : vector<8x8x8xi32> to vector<8x8x8xf32>
    %82 = vector.shape_cast %81 : vector<8x8x8xf32> to vector<8x8x8x1xf32>
    %83 = vector.broadcast %82 : vector<8x8x8x1xf32> to vector<8x8x8x16xf32>
    %84 = arith.mulf %77, %83 : vector<8x8x8x16xf32>
    %cst_37 = arith.constant dense<0.000000e+00> : vector<8x8x16xf32>
    %85 = vector.multi_reduction <add>, %84, %cst_37 [1] : vector<8x8x8x16xf32> to vector<8x8x16xf32>
    %86 = tpu.transpose %1, [0, 2, 1] : vector<8x8x8xf32> -> vector<8x8x8xf32>
    %cst_38 = arith.constant 0.000000e+00 : f32
    %87 = vector.broadcast %cst_38 : f32 to vector<8x8x8xf32>
    %88 = arith.cmpf one, %86, %87 : vector<8x8x8xf32>
    %89 = arith.extui %88 : vector<8x8x8xi1> to vector<8x8x8xi32>
    %90 = arith.sitofp %89 : vector<8x8x8xi32> to vector<8x8x8xf32>
    %91 = vector.shape_cast %85 : vector<8x8x16xf32> to vector<64x16xf32>
    %c0_39 = arith.constant 0 : index
    %c0_40 = arith.constant 0 : index
    %92 = vector.load %arg12[%c0_39, %c0_40] : memref<16x320xf32, #tpu.memory_space<vmem>>, vector<16x320xf32>
    %cst_41 = arith.constant dense<0.000000e+00> : vector<64x320xf32>
    %93 = tpu.matmul %91, %92, %cst_41 {dimension_numbers = #tpu.dot_dimension_numbers<[1], [0], [0], [1], [0, 0, 1, 1], [], []>} : vector<64x16xf32>, vector<16x320xf32>, vector<64x320xf32> -> vector<64x320xf32>
    %c0_42 = arith.constant 0 : index
    %c0_43 = arith.constant 0 : index
    %94 = vector.load %arg13[%c0_42, %c0_43] : memref<1x320xf32, #tpu.memory_space<vmem>>, vector<1x320xf32>
    %95 = vector.broadcast %94 : vector<1x320xf32> to vector<64x320xf32>
    %96 = arith.addf %93, %95 : vector<64x320xf32>
    %97 = vector.extract_strided_slice %96 {offsets = [0, 288], sizes = [64, 32], strides = [1, 1]} : vector<64x320xf32> to vector<64x32xf32>
    %98 = vector.shape_cast %97 : vector<64x32xf32> to vector<8x8x32xf32>
    %c0_44 = arith.constant 0 : index
    %c0_45 = arith.constant 0 : index
    %99 = vector.load %arg14[%c0_44, %c0_45] : memref<3x32xf32, #tpu.memory_space<vmem>>, vector<3x32xf32>
    %cst_46 = arith.constant 0.000000e+00 : f32
    %100 = vector.broadcast %cst_46 : f32 to vector<8x8x32xf32>
    %101 = vector.extract_strided_slice %96 {offsets = [0, 0], sizes = [64, 32], strides = [1, 1]} : vector<64x320xf32> to vector<64x32xf32>
    %102 = vector.shape_cast %101 : vector<64x32xf32> to vector<8x8x32xf32>
    %103 = vector.extract_strided_slice %96 {offsets = [0, 96], sizes = [64, 32], strides = [1, 1]} : vector<64x320xf32> to vector<64x32xf32>
    %104 = vector.shape_cast %103 : vector<64x32xf32> to vector<8x8x32xf32>
    %105 = vector.extract_strided_slice %96 {offsets = [0, 192], sizes = [64, 32], strides = [1, 1]} : vector<64x320xf32> to vector<64x32xf32>
    %106 = vector.shape_cast %105 : vector<64x32xf32> to vector<8x8x32xf32>
    %107 = vector.extract_strided_slice %99 {offsets = [0, 0], sizes = [1, 32], strides = [1, 1]} : vector<3x32xf32> to vector<1x32xf32>
    "tpu.trace_start"() <{level = 10 : i32, message = "gtc,gsc->gts"}> : () -> ()
    %cst_47 = arith.constant dense<0.000000e+00> : vector<8x8x8xf32>
    %108 = tpu.matmul %102, %104, %cst_47 {dimension_numbers = #tpu.dot_dimension_numbers<[2], [2], [1], [1], [0, 0, 0, 1, 1, 1], [0], [0]>} : vector<8x8x32xf32>, vector<8x8x32xf32>, vector<8x8x8xf32> -> vector<8x8x8xf32>
    "tpu.trace_stop"() : () -> ()
    %109 = vector.shape_cast %107 : vector<1x32xf32> to vector<1x1x32xf32>
    %110 = vector.broadcast %109 : vector<1x1x32xf32> to vector<8x8x32xf32>
    %111 = arith.mulf %102, %110 : vector<8x8x32xf32>
    %cst_48 = arith.constant dense<0.000000e+00> : vector<8x8xf32>
    %112 = vector.multi_reduction <add>, %111, %cst_48 [2] : vector<8x8x32xf32> to vector<8x8xf32>
    %113 = vector.shape_cast %112 : vector<8x8xf32> to vector<8x8x1xf32>
    %114 = vector.broadcast %113 : vector<8x8x1xf32> to vector<8x8x8xf32>
    %115 = arith.mulf %86, %114 : vector<8x8x8xf32>
    %116 = arith.addf %108, %115 : vector<8x8x8xf32>
    %cst_49 = arith.constant 0.176776692 : f32
    %117 = vector.broadcast %cst_49 : f32 to vector<8x8x8xf32>
    %118 = arith.mulf %116, %117 : vector<8x8x8xf32>
    %cst_50 = arith.constant -1.000000e+30 : f32
    %119 = vector.broadcast %cst_50 : f32 to vector<8x8x8xf32>
    %120 = arith.select %88, %118, %119 : vector<8x8x8xi1>, vector<8x8x8xf32>
    %cst_51 = arith.constant dense<0xFF800000> : vector<8x8xf32>
    %121 = vector.multi_reduction <maximumf>, %120, %cst_51 [2] : vector<8x8x8xf32> to vector<8x8xf32>
    %122 = vector.shape_cast %121 : vector<8x8xf32> to vector<8x8x1xf32>
    %123 = vector.broadcast %122 : vector<8x8x1xf32> to vector<8x8x8xf32>
    %124 = arith.subf %120, %123 : vector<8x8x8xf32>
    %125 = math.exp %124 : vector<8x8x8xf32>
    %126 = arith.mulf %125, %90 : vector<8x8x8xf32>
    %cst_52 = arith.constant dense<0.000000e+00> : vector<8x8xf32>
    %127 = vector.multi_reduction <add>, %126, %cst_52 [2] : vector<8x8x8xf32> to vector<8x8xf32>
    %128 = vector.shape_cast %127 : vector<8x8xf32> to vector<8x8x1xf32>
    %cst_53 = arith.constant 1.000000e-16 : f32
    %129 = vector.broadcast %cst_53 : f32 to vector<8x8x1xf32>
    %130 = arith.maximumf %128, %129 : vector<8x8x1xf32>
    %131 = tpu.reciprocal %130 {approx = true} : vector<8x8x1xf32> -> vector<8x8x1xf32>
    %132 = arith.mulf %130, %131 : vector<8x8x1xf32>
    %cst_54 = arith.constant 2.000000e+00 : f32
    %133 = vector.broadcast %cst_54 : f32 to vector<8x8x1xf32>
    %134 = arith.subf %133, %132 : vector<8x8x1xf32>
    %135 = arith.mulf %131, %134 : vector<8x8x1xf32>
    %136 = vector.broadcast %135 : vector<8x8x1xf32> to vector<8x8x8xf32>
    %137 = arith.mulf %126, %136 : vector<8x8x8xf32>
    "tpu.trace_start"() <{level = 10 : i32, message = "gts,gsc->gtc"}> : () -> ()
    %cst_55 = arith.constant dense<0.000000e+00> : vector<8x8x32xf32>
    %138 = tpu.matmul %137, %106, %cst_55 {dimension_numbers = #tpu.dot_dimension_numbers<[2], [1], [1], [2], [0, 0, 0, 1, 1, 2], [0], [0]>} : vector<8x8x8xf32>, vector<8x8x32xf32>, vector<8x8x32xf32> -> vector<8x8x32xf32>
    "tpu.trace_stop"() : () -> ()
    %139 = arith.mulf %137, %86 : vector<8x8x8xf32>
    %cst_56 = arith.constant dense<0.000000e+00> : vector<8x8xf32>
    %140 = vector.multi_reduction <add>, %139, %cst_56 [2] : vector<8x8x8xf32> to vector<8x8xf32>
    %141 = arith.addf %100, %138 : vector<8x8x32xf32>
    %142 = vector.shape_cast %140 : vector<8x8xf32> to vector<8x8x1xf32>
    %143 = vector.shape_cast %107 : vector<1x32xf32> to vector<1x1x32xf32>
    %144 = vector.broadcast %142 : vector<8x8x1xf32> to vector<8x8x32xf32>
    %145 = vector.broadcast %143 : vector<1x1x32xf32> to vector<8x8x32xf32>
    %146 = arith.mulf %144, %145 : vector<8x8x32xf32>
    %147 = arith.addf %141, %146 : vector<8x8x32xf32>
    %148 = vector.extract_strided_slice %96 {offsets = [0, 32], sizes = [64, 32], strides = [1, 1]} : vector<64x320xf32> to vector<64x32xf32>
    %149 = vector.shape_cast %148 : vector<64x32xf32> to vector<8x8x32xf32>
    %150 = vector.extract_strided_slice %96 {offsets = [0, 128], sizes = [64, 32], strides = [1, 1]} : vector<64x320xf32> to vector<64x32xf32>
    %151 = vector.shape_cast %150 : vector<64x32xf32> to vector<8x8x32xf32>
    %152 = vector.extract_strided_slice %96 {offsets = [0, 224], sizes = [64, 32], strides = [1, 1]} : vector<64x320xf32> to vector<64x32xf32>
    %153 = vector.shape_cast %152 : vector<64x32xf32> to vector<8x8x32xf32>
    %154 = vector.extract_strided_slice %99 {offsets = [1, 0], sizes = [1, 32], strides = [1, 1]} : vector<3x32xf32> to vector<1x32xf32>
    "tpu.trace_start"() <{level = 10 : i32, message = "gtc,gsc->gts"}> : () -> ()
    %cst_57 = arith.constant dense<0.000000e+00> : vector<8x8x8xf32>
    %155 = tpu.matmul %149, %151, %cst_57 {dimension_numbers = #tpu.dot_dimension_numbers<[2], [2], [1], [1], [0, 0, 0, 1, 1, 1], [0], [0]>} : vector<8x8x32xf32>, vector<8x8x32xf32>, vector<8x8x8xf32> -> vector<8x8x8xf32>
    "tpu.trace_stop"() : () -> ()
    %156 = vector.shape_cast %154 : vector<1x32xf32> to vector<1x1x32xf32>
    %157 = vector.broadcast %156 : vector<1x1x32xf32> to vector<8x8x32xf32>
    %158 = arith.mulf %149, %157 : vector<8x8x32xf32>
    %cst_58 = arith.constant dense<0.000000e+00> : vector<8x8xf32>
    %159 = vector.multi_reduction <add>, %158, %cst_58 [2] : vector<8x8x32xf32> to vector<8x8xf32>
    %160 = vector.shape_cast %159 : vector<8x8xf32> to vector<8x8x1xf32>
    %161 = vector.broadcast %160 : vector<8x8x1xf32> to vector<8x8x8xf32>
    %162 = arith.mulf %86, %161 : vector<8x8x8xf32>
    %163 = arith.addf %155, %162 : vector<8x8x8xf32>
    %cst_59 = arith.constant 0.176776692 : f32
    %164 = vector.broadcast %cst_59 : f32 to vector<8x8x8xf32>
    %165 = arith.mulf %163, %164 : vector<8x8x8xf32>
    %cst_60 = arith.constant -1.000000e+30 : f32
    %166 = vector.broadcast %cst_60 : f32 to vector<8x8x8xf32>
    %167 = arith.select %88, %165, %166 : vector<8x8x8xi1>, vector<8x8x8xf32>
    %cst_61 = arith.constant dense<0xFF800000> : vector<8x8xf32>
    %168 = vector.multi_reduction <maximumf>, %167, %cst_61 [2] : vector<8x8x8xf32> to vector<8x8xf32>
    %169 = vector.shape_cast %168 : vector<8x8xf32> to vector<8x8x1xf32>
    %170 = vector.broadcast %169 : vector<8x8x1xf32> to vector<8x8x8xf32>
    %171 = arith.subf %167, %170 : vector<8x8x8xf32>
    %172 = math.exp %171 : vector<8x8x8xf32>
    %173 = arith.mulf %172, %90 : vector<8x8x8xf32>
    %cst_62 = arith.constant dense<0.000000e+00> : vector<8x8xf32>
    %174 = vector.multi_reduction <add>, %173, %cst_62 [2] : vector<8x8x8xf32> to vector<8x8xf32>
    %175 = vector.shape_cast %174 : vector<8x8xf32> to vector<8x8x1xf32>
    %cst_63 = arith.constant 1.000000e-16 : f32
    %176 = vector.broadcast %cst_63 : f32 to vector<8x8x1xf32>
    %177 = arith.maximumf %175, %176 : vector<8x8x1xf32>
    %178 = tpu.reciprocal %177 {approx = true} : vector<8x8x1xf32> -> vector<8x8x1xf32>
    %179 = arith.mulf %177, %178 : vector<8x8x1xf32>
    %cst_64 = arith.constant 2.000000e+00 : f32
    %180 = vector.broadcast %cst_64 : f32 to vector<8x8x1xf32>
    %181 = arith.subf %180, %179 : vector<8x8x1xf32>
    %182 = arith.mulf %178, %181 : vector<8x8x1xf32>
    %183 = vector.broadcast %182 : vector<8x8x1xf32> to vector<8x8x8xf32>
    %184 = arith.mulf %173, %183 : vector<8x8x8xf32>
    "tpu.trace_start"() <{level = 10 : i32, message = "gts,gsc->gtc"}> : () -> ()
    %cst_65 = arith.constant dense<0.000000e+00> : vector<8x8x32xf32>
    %185 = tpu.matmul %184, %153, %cst_65 {dimension_numbers = #tpu.dot_dimension_numbers<[2], [1], [1], [2], [0, 0, 0, 1, 1, 2], [0], [0]>} : vector<8x8x8xf32>, vector<8x8x32xf32>, vector<8x8x32xf32> -> vector<8x8x32xf32>
    "tpu.trace_stop"() : () -> ()
    %186 = arith.mulf %184, %86 : vector<8x8x8xf32>
    %cst_66 = arith.constant dense<0.000000e+00> : vector<8x8xf32>
    %187 = vector.multi_reduction <add>, %186, %cst_66 [2] : vector<8x8x8xf32> to vector<8x8xf32>
    %188 = arith.addf %147, %185 : vector<8x8x32xf32>
    %189 = vector.shape_cast %187 : vector<8x8xf32> to vector<8x8x1xf32>
    %190 = vector.shape_cast %154 : vector<1x32xf32> to vector<1x1x32xf32>
    %191 = vector.broadcast %189 : vector<8x8x1xf32> to vector<8x8x32xf32>
    %192 = vector.broadcast %190 : vector<1x1x32xf32> to vector<8x8x32xf32>
    %193 = arith.mulf %191, %192 : vector<8x8x32xf32>
    %194 = arith.addf %188, %193 : vector<8x8x32xf32>
    %195 = vector.extract_strided_slice %96 {offsets = [0, 64], sizes = [64, 32], strides = [1, 1]} : vector<64x320xf32> to vector<64x32xf32>
    %196 = vector.shape_cast %195 : vector<64x32xf32> to vector<8x8x32xf32>
    %197 = vector.extract_strided_slice %96 {offsets = [0, 160], sizes = [64, 32], strides = [1, 1]} : vector<64x320xf32> to vector<64x32xf32>
    %198 = vector.shape_cast %197 : vector<64x32xf32> to vector<8x8x32xf32>
    %199 = vector.extract_strided_slice %96 {offsets = [0, 256], sizes = [64, 32], strides = [1, 1]} : vector<64x320xf32> to vector<64x32xf32>
    %200 = vector.shape_cast %199 : vector<64x32xf32> to vector<8x8x32xf32>
    %201 = vector.extract_strided_slice %99 {offsets = [2, 0], sizes = [1, 32], strides = [1, 1]} : vector<3x32xf32> to vector<1x32xf32>
    "tpu.trace_start"() <{level = 10 : i32, message = "gtc,gsc->gts"}> : () -> ()
    %cst_67 = arith.constant dense<0.000000e+00> : vector<8x8x8xf32>
    %202 = tpu.matmul %196, %198, %cst_67 {dimension_numbers = #tpu.dot_dimension_numbers<[2], [2], [1], [1], [0, 0, 0, 1, 1, 1], [0], [0]>} : vector<8x8x32xf32>, vector<8x8x32xf32>, vector<8x8x8xf32> -> vector<8x8x8xf32>
    "tpu.trace_stop"() : () -> ()
    %203 = vector.shape_cast %201 : vector<1x32xf32> to vector<1x1x32xf32>
    %204 = vector.broadcast %203 : vector<1x1x32xf32> to vector<8x8x32xf32>
    %205 = arith.mulf %196, %204 : vector<8x8x32xf32>
    %cst_68 = arith.constant dense<0.000000e+00> : vector<8x8xf32>
    %206 = vector.multi_reduction <add>, %205, %cst_68 [2] : vector<8x8x32xf32> to vector<8x8xf32>
    %207 = vector.shape_cast %206 : vector<8x8xf32> to vector<8x8x1xf32>
    %208 = vector.broadcast %207 : vector<8x8x1xf32> to vector<8x8x8xf32>
    %209 = arith.mulf %86, %208 : vector<8x8x8xf32>
    %210 = arith.addf %202, %209 : vector<8x8x8xf32>
    %cst_69 = arith.constant 0.176776692 : f32
    %211 = vector.broadcast %cst_69 : f32 to vector<8x8x8xf32>
    %212 = arith.mulf %210, %211 : vector<8x8x8xf32>
    %cst_70 = arith.constant -1.000000e+30 : f32
    %213 = vector.broadcast %cst_70 : f32 to vector<8x8x8xf32>
    %214 = arith.select %88, %212, %213 : vector<8x8x8xi1>, vector<8x8x8xf32>
    %cst_71 = arith.constant dense<0xFF800000> : vector<8x8xf32>
    %215 = vector.multi_reduction <maximumf>, %214, %cst_71 [2] : vector<8x8x8xf32> to vector<8x8xf32>
    %216 = vector.shape_cast %215 : vector<8x8xf32> to vector<8x8x1xf32>
    %217 = vector.broadcast %216 : vector<8x8x1xf32> to vector<8x8x8xf32>
    %218 = arith.subf %214, %217 : vector<8x8x8xf32>
    %219 = math.exp %218 : vector<8x8x8xf32>
    %220 = arith.mulf %219, %90 : vector<8x8x8xf32>
    %cst_72 = arith.constant dense<0.000000e+00> : vector<8x8xf32>
    %221 = vector.multi_reduction <add>, %220, %cst_72 [2] : vector<8x8x8xf32> to vector<8x8xf32>
    %222 = vector.shape_cast %221 : vector<8x8xf32> to vector<8x8x1xf32>
    %cst_73 = arith.constant 1.000000e-16 : f32
    %223 = vector.broadcast %cst_73 : f32 to vector<8x8x1xf32>
    %224 = arith.maximumf %222, %223 : vector<8x8x1xf32>
    %225 = tpu.reciprocal %224 {approx = true} : vector<8x8x1xf32> -> vector<8x8x1xf32>
    %226 = arith.mulf %224, %225 : vector<8x8x1xf32>
    %cst_74 = arith.constant 2.000000e+00 : f32
    %227 = vector.broadcast %cst_74 : f32 to vector<8x8x1xf32>
    %228 = arith.subf %227, %226 : vector<8x8x1xf32>
    %229 = arith.mulf %225, %228 : vector<8x8x1xf32>
    %230 = vector.broadcast %229 : vector<8x8x1xf32> to vector<8x8x8xf32>
    %231 = arith.mulf %220, %230 : vector<8x8x8xf32>
    "tpu.trace_start"() <{level = 10 : i32, message = "gts,gsc->gtc"}> : () -> ()
    %cst_75 = arith.constant dense<0.000000e+00> : vector<8x8x32xf32>
    %232 = tpu.matmul %231, %200, %cst_75 {dimension_numbers = #tpu.dot_dimension_numbers<[2], [1], [1], [2], [0, 0, 0, 1, 1, 2], [0], [0]>} : vector<8x8x8xf32>, vector<8x8x32xf32>, vector<8x8x32xf32> -> vector<8x8x32xf32>
    "tpu.trace_stop"() : () -> ()
    %233 = arith.mulf %231, %86 : vector<8x8x8xf32>
    %cst_76 = arith.constant dense<0.000000e+00> : vector<8x8xf32>
    %234 = vector.multi_reduction <add>, %233, %cst_76 [2] : vector<8x8x8xf32> to vector<8x8xf32>
    %235 = arith.addf %194, %232 : vector<8x8x32xf32>
    %236 = vector.shape_cast %234 : vector<8x8xf32> to vector<8x8x1xf32>
    %237 = vector.shape_cast %201 : vector<1x32xf32> to vector<1x1x32xf32>
    %238 = vector.broadcast %236 : vector<8x8x1xf32> to vector<8x8x32xf32>
    %239 = vector.broadcast %237 : vector<1x1x32xf32> to vector<8x8x32xf32>
    %240 = arith.mulf %238, %239 : vector<8x8x32xf32>
    %241 = arith.addf %235, %240 : vector<8x8x32xf32>
    %cst_77 = arith.constant 0.333333343 : f32
    %242 = vector.broadcast %cst_77 : f32 to vector<8x8x32xf32>
    %243 = arith.mulf %241, %242 : vector<8x8x32xf32>
    %244 = arith.addf %243, %98 : vector<8x8x32xf32>
    %cst_78 = arith.constant 0.000000e+00 : f32
    %245 = vector.broadcast %cst_78 : f32 to vector<8x8x32xf32>
    %246 = arith.maximumf %244, %245 : vector<8x8x32xf32>
    %cst_79 = arith.constant dense<0.000000e+00> : vector<8x32xf32>
    %247 = vector.multi_reduction <add>, %246, %cst_79 [1] : vector<8x8x32xf32> to vector<8x32xf32>
    %cst_80 = arith.constant 1.250000e-01 : f32
    %248 = vector.broadcast %cst_80 : f32 to vector<8x32xf32>
    %249 = arith.mulf %247, %248 : vector<8x32xf32>
    %c0_81 = arith.constant 0 : index
    %c0_82 = arith.constant 0 : index
    %250 = vector.load %arg15[%c0_81, %c0_82] : memref<8x32xf32, #tpu.memory_space<vmem>>, vector<8x32xf32>
    tpu.vector_store %arg15[%c0_81, %c0_82], %249 {strides = array<i32>} : memref<8x32xf32, #tpu.memory_space<vmem>>, vector<8x32xf32>,
    return
  }
  func.func @transform_0(%arg0: i32) -> (i32, i32, i32) {
    %c0_i32 = arith.constant 0 : i32
    %c0_i32_0 = arith.constant 0 : i32
    %c0_i32_1 = arith.constant 0 : i32
    return %arg0, %c0_i32, %c0_i32_0 : i32, i32, i32
  }
  func.func @transform_1(%arg0: i32) -> (i32, i32, i32) {
    %c0_i32 = arith.constant 0 : i32
    %c0_i32_0 = arith.constant 0 : i32
    %c0_i32_1 = arith.constant 0 : i32
    return %arg0, %c0_i32, %c0_i32_0 : i32, i32, i32
  }
  func.func @transform_2(%arg0: i32) -> (i32, i32) {
    %c0_i32 = arith.constant 0 : i32
    %c0_i32_0 = arith.constant 0 : i32
    %c0_i32_1 = arith.constant 0 : i32
    return %c0_i32, %c0_i32_0 : i32, i32
  }
  func.func @transform_3(%arg0: i32) -> (i32, i32) {
    %c0_i32 = arith.constant 0 : i32
    %c0_i32_0 = arith.constant 0 : i32
    %c0_i32_1 = arith.constant 0 : i32
    return %c0_i32, %c0_i32_0 : i32, i32
  }
  func.func @transform_4(%arg0: i32) -> (i32, i32) {
    %c0_i32 = arith.constant 0 : i32
    %c0_i32_0 = arith.constant 0 : i32
    %c0_i32_1 = arith.constant 0 : i32
    return %c0_i32, %c0_i32_0 : i32, i32
  }
  func.func @transform_5(%arg0: i32) -> (i32, i32) {
    %c0_i32 = arith.constant 0 : i32
    %c0_i32_0 = arith.constant 0 : i32
    %c0_i32_1 = arith.constant 0 : i32
    return %c0_i32, %c0_i32_0 : i32, i32
  }
  func.func @transform_6(%arg0: i32) -> (i32, i32) {
    %c0_i32 = arith.constant 0 : i32
    %c0_i32_0 = arith.constant 0 : i32
    %c0_i32_1 = arith.constant 0 : i32
    return %c0_i32, %c0_i32_0 : i32, i32
  }
  func.func @transform_7(%arg0: i32) -> (i32, i32) {
    %c0_i32 = arith.constant 0 : i32
    %c0_i32_0 = arith.constant 0 : i32
    %c0_i32_1 = arith.constant 0 : i32
    return %c0_i32, %c0_i32_0 : i32, i32
  }
  func.func @transform_8(%arg0: i32) -> (i32, i32) {
    %c0_i32 = arith.constant 0 : i32
    %c0_i32_0 = arith.constant 0 : i32
    %c0_i32_1 = arith.constant 0 : i32
    return %c0_i32, %c0_i32_0 : i32, i32
  }
  func.func @transform_9(%arg0: i32) -> (i32, i32) {
    %c0_i32 = arith.constant 0 : i32
    %c0_i32_0 = arith.constant 0 : i32
    %c0_i32_1 = arith.constant 0 : i32
    return %c0_i32, %c0_i32_0 : i32, i32
  }
  func.func @transform_10(%arg0: i32) -> (i32, i32) {
    %c0_i32 = arith.constant 0 : i32
    %c0_i32_0 = arith.constant 0 : i32
    %c0_i32_1 = arith.constant 0 : i32
    return %c0_i32, %c0_i32_0 : i32, i32
  }
  func.func @transform_11(%arg0: i32) -> (i32, i32) {
    %c0_i32 = arith.constant 0 : i32
    %c0_i32_0 = arith.constant 0 : i32
    %c0_i32_1 = arith.constant 0 : i32
    return %c0_i32, %c0_i32_0 : i32, i32
  }
  func.func @transform_12(%arg0: i32) -> (i32, i32) {
    %c0_i32 = arith.constant 0 : i32
    %c0_i32_0 = arith.constant 0 : i32
    %c0_i32_1 = arith.constant 0 : i32
    return %c0_i32, %c0_i32_0 : i32, i32
  }
  func.func @transform_13(%arg0: i32) -> (i32, i32) {
    %c0_i32 = arith.constant 0 : i32
    %c0_i32_0 = arith.constant 0 : i32
    %c0_i32_1 = arith.constant 0 : i32
    return %c0_i32, %c0_i32_0 : i32, i32
  }
  func.func @transform_14(%arg0: i32) -> (i32, i32) {
    %c0_i32 = arith.constant 0 : i32
    %c0_i32_0 = arith.constant 0 : i32
    return %arg0, %c0_i32 : i32, i32
  }
}

</mosaic_0001>

<llo_original>
// kernel: tpu_custom_call.1
$region0: #{tpu_custom_call.1}
  #allocation0 [shape = 'u32[]', space=smem, size = 0x4, offset = 0x4, fixed_abs, tag = 'smem constant byte address 0x4 - core index']
  #allocation1 [shape = 'u32[144,128]{1,0:T(1,128)}', space=vmem, size = 0x12000, scoped, tag = 'internal scratch']
  %s0 = inlined_call_operand.vmem [shape: f32[16,8,6], index: 0, kind: input, shape index: {}]
  %s1 = inlined_call_operand.vmem [shape: f32[16,8,8], index: 1, kind: input, shape index: {}]
  %s2 = inlined_call_operand.vmem [shape: f32[6,16], index: 2, kind: input, shape index: {}]
  %s3 = inlined_call_operand.vmem [shape: f32[1,16], index: 3, kind: input, shape index: {}]
  %s4 = inlined_call_operand.vmem [shape: f32[1,16], index: 4, kind: input, shape index: {}]
  %s5 = inlined_call_operand.vmem [shape: f32[1,16], index: 5, kind: input, shape index: {}]
  %s6 = inlined_call_operand.vmem [shape: f32[1,16], index: 6, kind: input, shape index: {}]
  %s7 = inlined_call_operand.vmem [shape: f32[16,16], index: 7, kind: input, shape index: {}]
  %s8 = inlined_call_operand.vmem [shape: f32[1,16], index: 8, kind: input, shape index: {}]
  %s9 = inlined_call_operand.vmem [shape: f32[1,16], index: 9, kind: input, shape index: {}]
  %s10 = inlined_call_operand.vmem [shape: f32[1,16], index: 10, kind: input, shape index: {}]
  %s11 = inlined_call_operand.vmem [shape: f32[16,320], index: 11, kind: input, shape index: {}]
  %s12 = inlined_call_operand.vmem [shape: f32[1,320], index: 12, kind: input, shape index: {}]
  %s13 = inlined_call_operand.vmem [shape: f32[3,32], index: 13, kind: input, shape index: {}]
  %s14 = inlined_call_operand.hbm [shape: f32[16,32], index: 14, kind: output, shape index: {}]
  %s15 = sld [smem:[#allocation0]]
  $region89: #{tpu_custom_call.1} parent=0
    _
  %s17 = ssub.s32 1, %s15
  %s18 = scalar_select 0, %s17, %s15
  $region1: #{tpu_custom_call.1} parent=0
    #allocation2 [shape = 'u8[8192]{0}', space=vmem, size = 0x2000, scoped, tag = 'output window, operand 0']
    #allocation3 [shape = 's32[2]{0}', space=sflag, size = 0x8, scoped, tag = 'scoped memory for tpu_custom_call.1']
    %19 = vsyncpa [#allocation3], 0
    %s20 = scalar_lea.sflag [#allocation3], 1
    %21 = vsyncpa %s20, 0
    loop: start=0, step=1, limit=4
    $region2: #{tpu_custom_call.1} parent=1 // loop_pre_header
      _
    $region3: #{tpu_custom_call.1} parent=1 // loop_header
      %s23 = sphi 0, %s27
      %p24 = scmp.ge.s32.totalorder %s23, 4
      %s33 = sphi 0, %s35
      %s36 = sphi 0, %s33
      %s37 = sphi 0, %s36
      %s53 = sphi 0, %s37
      %s59 = sphi 0, %s61
      %s62 = sphi 0, %s59
      %s63 = sphi 0, %s62
      %s79 = sphi 0, %s63
      %s83 = sphi 0, %s83
      %s85 = sphi 0, %s83
      %s86 = sphi 0, %s85
      %s100 = sphi 0, %s86
      %s104 = sphi 0, %s104
      %s106 = sphi 0, %s104
      %s107 = sphi 0, %s106
      %s121 = sphi 0, %s107
      %s125 = sphi 0, %s125
      %s127 = sphi 0, %s125
      %s128 = sphi 0, %s127
      %s142 = sphi 0, %s128
      %s146 = sphi 0, %s146
      %s148 = sphi 0, %s146
      %s149 = sphi 0, %s148
      %s163 = sphi 0, %s149
      %s167 = sphi 0, %s167
      %s169 = sphi 0, %s167
      %s170 = sphi 0, %s169
      %s184 = sphi 0, %s170
      %s188 = sphi 0, %s188
      %s190 = sphi 0, %s188
      %s191 = sphi 0, %s190
      %s205 = sphi 0, %s191
      %s209 = sphi 0, %s209
      %s211 = sphi 0, %s209
      %s212 = sphi 0, %s211
      %s226 = sphi 0, %s212
      %s230 = sphi 0, %s230
      %s232 = sphi 0, %s230
      %s233 = sphi 0, %s232
      %s247 = sphi 0, %s233
      %s251 = sphi 0, %s251
      %s253 = sphi 0, %s251
      %s254 = sphi 0, %s253
      %s268 = sphi 0, %s254
      %s272 = sphi 0, %s272
      %s274 = sphi 0, %s272
      %s275 = sphi 0, %s274
      %s289 = sphi 0, %s275
      %s293 = sphi 0, %s293
      %s295 = sphi 0, %s293
      %s296 = sphi 0, %s295
      %s310 = sphi 0, %s296
      %s314 = sphi 0, %s314
      %s316 = sphi 0, %s314
      %s317 = sphi 0, %s316
      %s331 = sphi 0, %s317
      %s337 = sphi 0, %s339
      %s340 = sphi 0, %s337
      %s341 = sphi 0, %s340
      %s357 = sphi 0, %s341
    $region4: #{tpu_custom_call.1} parent=1 // loop_header_branch
      %26 = sbr.rel (%p24) target = $region8
    $region5: #{tpu_custom_call.1} parent=1 // loop_body
      %s28 = ssub.s32 %s23, 1
      %s29 = ssub.s32 %s23, 2
      %s30 = sadd.s32 %s23, 1
      %s31 = ssub.s32 %s23, %s30
      %p32 = scmp.eq.s32.totalorder %s31, 0
      %s34 = sadd.s32 %s33, 1
      %s35 = scalar_select %p32, %s33, %s34
      %p38 = pneg %p32
      %p39 = scmp.eq.s32.totalorder %s23, 1
      %p40 = por %p38, %p39
      %p41 = scmp.ne.s32.totalorder %s33, %s36
      %p42 = scmp.eq.s32.totalorder %s23, 0
      %p43 = por %p41, %p42
      %p44 = scmp.ne.s32.totalorder %s33, %s36
      %p45 = scmp.eq.s32.totalorder %s28, 1
      %p46 = por %p44, %p45
      %p47 = scmp.ne.s32.totalorder %s36, %s37
      %p48 = scmp.eq.s32.totalorder %s28, 0
      %p49 = por %p47, %p48
      %p50 = scmp.ne.s32.totalorder %s36, %s37
      %p51 = scmp.eq.s32.totalorder %s29, 1
      %p52 = por %p50, %p51
      %p54 = scmp.ne.s32.totalorder %s37, %s53
      %p55 = scmp.eq.s32.totalorder %s29, 0
      %p56 = por %p54, %p55
      %s57 = ssub.s32 %s23, %s30
      %p58 = scmp.eq.s32.totalorder %s57, 0
      %s60 = sadd.s32 %s59, 1
      %s61 = scalar_select %p58, %s59, %s60
      %p64 = pneg %p58
      %p65 = scmp.eq.s32.totalorder %s23, 1
      %p66 = por %p64, %p65
      %p67 = scmp.ne.s32.totalorder %s59, %s62
      %p68 = scmp.eq.s32.totalorder %s23, 0
      %p69 = por %p67, %p68
      %p70 = scmp.ne.s32.totalorder %s59, %s62
      %p71 = scmp.eq.s32.totalorder %s28, 1
      %p72 = por %p70, %p71
      %p73 = scmp.ne.s32.totalorder %s62, %s63
      %p74 = scmp.eq.s32.totalorder %s28, 0
      %p75 = por %p73, %p74
      %p76 = scmp.ne.s32.totalorder %s62, %s63
      %p77 = scmp.eq.s32.totalorder %s29, 1
      %p78 = por %p76, %p77
      %p80 = scmp.ne.s32.totalorder %s63, %s79
      %p81 = scmp.eq.s32.totalorder %s29, 0
      %p82 = por %p80, %p81
      %s84 = sadd.s32 %s83, 1
      %p87 = scmp.eq.s32.totalorder %s23, 1
      %p88 = scmp.ne.s32.totalorder %s83, %s85
      %p89 = scmp.eq.s32.totalorder %s23, 0
      %p90 = por %p88, %p89
      %p91 = scmp.ne.s32.totalorder %s83, %s85
      %p92 = scmp.eq.s32.totalorder %s28, 1
      %p93 = por %p91, %p92
      %p94 = scmp.ne.s32.totalorder %s85, %s86
      %p95 = scmp.eq.s32.totalorder %s28, 0
      %p96 = por %p94, %p95
      %p97 = scmp.ne.s32.totalorder %s85, %s86
      %p98 = scmp.eq.s32.totalorder %s29, 1
      %p99 = por %p97, %p98
      %p101 = scmp.ne.s32.totalorder %s86, %s100
      %p102 = scmp.eq.s32.totalorder %s29, 0
      %p103 = por %p101, %p102
      %s105 = sadd.s32 %s104, 1
      %p108 = scmp.eq.s32.totalorder %s23, 1
      %p109 = scmp.ne.s32.totalorder %s104, %s106
      %p110 = scmp.eq.s32.totalorder %s23, 0
      %p111 = por %p109, %p110
      %p112 = scmp.ne.s32.totalorder %s104, %s106
      %p113 = scmp.eq.s32.totalorder %s28, 1
      %p114 = por %p112, %p113
      %p115 = scmp.ne.s32.totalorder %s106, %s107
      %p116 = scmp.eq.s32.totalorder %s28, 0
      %p117 = por %p115, %p116
      %p118 = scmp.ne.s32.totalorder %s106, %s107
      %p119 = scmp.eq.s32.totalorder %s29, 1
      %p120 = por %p118, %p119
      %p122 = scmp.ne.s32.totalorder %s107, %s121
      %p123 = scmp.eq.s32.totalorder %s29, 0
      %p124 = por %p122, %p123
      %s126 = sadd.s32 %s125, 1
      %p129 = scmp.eq.s32.totalorder %s23, 1
      %p130 = scmp.ne.s32.totalorder %s125, %s127
      %p131 = scmp.eq.s32.totalorder %s23, 0
      %p132 = por %p130, %p131
      %p133 = scmp.ne.s32.totalorder %s125, %s127
      %p134 = scmp.eq.s32.totalorder %s28, 1
      %p135 = por %p133, %p134
      %p136 = scmp.ne.s32.totalorder %s127, %s128
      %p137 = scmp.eq.s32.totalorder %s28, 0
      %p138 = por %p136, %p137
      %p139 = scmp.ne.s32.totalorder %s127, %s128
      %p140 = scmp.eq.s32.totalorder %s29, 1
      %p141 = por %p139, %p140
      %p143 = scmp.ne.s32.totalorder %s128, %s142
      %p144 = scmp.eq.s32.totalorder %s29, 0
      %p145 = por %p143, %p144
      %s147 = sadd.s32 %s146, 1
      %p150 = scmp.eq.s32.totalorder %s23, 1
      %p151 = scmp.ne.s32.totalorder %s146, %s148
      %p152 = scmp.eq.s32.totalorder %s23, 0
      %p153 = por %p151, %p152
      %p154 = scmp.ne.s32.totalorder %s146, %s148
      %p155 = scmp.eq.s32.totalorder %s28, 1
      %p156 = por %p154, %p155
      %p157 = scmp.ne.s32.totalorder %s148, %s149
      %p158 = scmp.eq.s32.totalorder %s28, 0
      %p159 = por %p157, %p158
      %p160 = scmp.ne.s32.totalorder %s148, %s149
      %p161 = scmp.eq.s32.totalorder %s29, 1
      %p162 = por %p160, %p161
      %p164 = scmp.ne.s32.totalorder %s149, %s163
      %p165 = scmp.eq.s32.totalorder %s29, 0
      %p166 = por %p164, %p165
      %s168 = sadd.s32 %s167, 1
      %p171 = scmp.eq.s32.totalorder %s23, 1
      %p172 = scmp.ne.s32.totalorder %s167, %s169
      %p173 = scmp.eq.s32.totalorder %s23, 0
      %p174 = por %p172, %p173
      %p175 = scmp.ne.s32.totalorder %s167, %s169
      %p176 = scmp.eq.s32.totalorder %s28, 1
      %p177 = por %p175, %p176
      %p178 = scmp.ne.s32.totalorder %s169, %s170
      %p179 = scmp.eq.s32.totalorder %s28, 0
      %p180 = por %p178, %p179
      %p181 = scmp.ne.s32.totalorder %s169, %s170
      %p182 = scmp.eq.s32.totalorder %s29, 1
      %p183 = por %p181, %p182
      %p185 = scmp.ne.s32.totalorder %s170, %s184
      %p186 = scmp.eq.s32.totalorder %s29, 0
      %p187 = por %p185, %p186
      %s189 = sadd.s32 %s188, 1
      %p192 = scmp.eq.s32.totalorder %s23, 1
      %p193 = scmp.ne.s32.totalorder %s188, %s190
      %p194 = scmp.eq.s32.totalorder %s23, 0
      %p195 = por %p193, %p194
      %p196 = scmp.ne.s32.totalorder %s188, %s190
      %p197 = scmp.eq.s32.totalorder %s28, 1
      %p198 = por %p196, %p197
      %p199 = scmp.ne.s32.totalorder %s190, %s191
      %p200 = scmp.eq.s32.totalorder %s28, 0
      %p201 = por %p199, %p200
      %p202 = scmp.ne.s32.totalorder %s190, %s191
      %p203 = scmp.eq.s32.totalorder %s29, 1
      %p204 = por %p202, %p203
      %p206 = scmp.ne.s32.totalorder %s191, %s205
      %p207 = scmp.eq.s32.totalorder %s29, 0
      %p208 = por %p206, %p207
      %s210 = sadd.s32 %s209, 1
      %p213 = scmp.eq.s32.totalorder %s23, 1
      %p214 = scmp.ne.s32.totalorder %s209, %s211
      %p215 = scmp.eq.s32.totalorder %s23, 0
      %p216 = por %p214, %p215
      %p217 = scmp.ne.s32.totalorder %s209, %s211
      %p218 = scmp.eq.s32.totalorder %s28, 1
      %p219 = por %p217, %p218
      %p220 = scmp.ne.s32.totalorder %s211, %s212
      %p221 = scmp.eq.s32.totalorder %s28, 0
      %p222 = por %p220, %p221
      %p223 = scmp.ne.s32.totalorder %s211, %s212
      %p224 = scmp.eq.s32.totalorder %s29, 1
      %p225 = por %p223, %p224
      %p227 = scmp.ne.s32.totalorder %s212, %s226
      %p228 = scmp.eq.s32.totalorder %s29, 0
      %p229 = por %p227, %p228
      %s231 = sadd.s32 %s230, 1
      %p234 = scmp.eq.s32.totalorder %s23, 1
      %p235 = scmp.ne.s32.totalorder %s230, %s232
      %p236 = scmp.eq.s32.totalorder %s23, 0
      %p237 = por %p235, %p236
      %p238 = scmp.ne.s32.totalorder %s230, %s232
      %p239 = scmp.eq.s32.totalorder %s28, 1
      %p240 = por %p238, %p239
      %p241 = scmp.ne.s32.totalorder %s232, %s233
      %p242 = scmp.eq.s32.totalorder %s28, 0
      %p243 = por %p241, %p242
      %p244 = scmp.ne.s32.totalorder %s232, %s233
      %p245 = scmp.eq.s32.totalorder %s29, 1
      %p246 = por %p244, %p245
      %p248 = scmp.ne.s32.totalorder %s233, %s247
      %p249 = scmp.eq.s32.totalorder %s29, 0
      %p250 = por %p248, %p249
      %s252 = sadd.s32 %s251, 1
      %p255 = scmp.eq.s32.totalorder %s23, 1
      %p256 = scmp.ne.s32.totalorder %s251, %s253
      %p257 = scmp.eq.s32.totalorder %s23, 0
      %p258 = por %p256, %p257
      %p259 = scmp.ne.s32.totalorder %s251, %s253
      %p260 = scmp.eq.s32.totalorder %s28, 1
      %p261 = por %p259, %p260
      %p262 = scmp.ne.s32.totalorder %s253, %s254
      %p263 = scmp.eq.s32.totalorder %s28, 0
      %p264 = por %p262, %p263
      %p265 = scmp.ne.s32.totalorder %s253, %s254
      %p266 = scmp.eq.s32.totalorder %s29, 1
      %p267 = por %p265, %p266
      %p269 = scmp.ne.s32.totalorder %s254, %s268
      %p270 = scmp.eq.s32.totalorder %s29, 0
      %p271 = por %p269, %p270
      %s273 = sadd.s32 %s272, 1
      %p276 = scmp.eq.s32.totalorder %s23, 1
      %p277 = scmp.ne.s32.totalorder %s272, %s274
      %p278 = scmp.eq.s32.totalorder %s23, 0
      %p279 = por %p277, %p278
      %p280 = scmp.ne.s32.totalorder %s272, %s274
      %p281 = scmp.eq.s32.totalorder %s28, 1
      %p282 = por %p280, %p281
      %p283 = scmp.ne.s32.totalorder %s274, %s275
      %p284 = scmp.eq.s32.totalorder %s28, 0
      %p285 = por %p283, %p284
      %p286 = scmp.ne.s32.totalorder %s274, %s275
      %p287 = scmp.eq.s32.totalorder %s29, 1
      %p288 = por %p286, %p287
      %p290 = scmp.ne.s32.totalorder %s275, %s289
      %p291 = scmp.eq.s32.totalorder %s29, 0
      %p292 = por %p290, %p291
      %s294 = sadd.s32 %s293, 1
      %p297 = scmp.eq.s32.totalorder %s23, 1
      %p298 = scmp.ne.s32.totalorder %s293, %s295
      %p299 = scmp.eq.s32.totalorder %s23, 0
      %p300 = por %p298, %p299
      %p301 = scmp.ne.s32.totalorder %s293, %s295
      %p302 = scmp.eq.s32.totalorder %s28, 1
      %p303 = por %p301, %p302
      %p304 = scmp.ne.s32.totalorder %s295, %s296
      %p305 = scmp.eq.s32.totalorder %s28, 0
      %p306 = por %p304, %p305
      %p307 = scmp.ne.s32.totalorder %s295, %s296
      %p308 = scmp.eq.s32.totalorder %s29, 1
      %p309 = por %p307, %p308
      %p311 = scmp.ne.s32.totalorder %s296, %s310
      %p312 = scmp.eq.s32.totalorder %s29, 0
      %p313 = por %p311, %p312
      %s315 = sadd.s32 %s314, 1
      %p318 = scmp.eq.s32.totalorder %s23, 1
      %p319 = scmp.ne.s32.totalorder %s314, %s316
      %p320 = scmp.eq.s32.totalorder %s23, 0
      %p321 = por %p319, %p320
      %p322 = scmp.ne.s32.totalorder %s314, %s316
      %p323 = scmp.eq.s32.totalorder %s28, 1
      %p324 = por %p322, %p323
      %p325 = scmp.ne.s32.totalorder %s316, %s317
      %p326 = scmp.eq.s32.totalorder %s28, 0
      %p327 = por %p325, %p326
      %p328 = scmp.ne.s32.totalorder %s316, %s317
      %p329 = scmp.eq.s32.totalorder %s29, 1
      %p330 = por %p328, %p329
      %p332 = scmp.ne.s32.totalorder %s317, %s331
      %p333 = scmp.eq.s32.totalorder %s29, 0
      %p334 = por %p332, %p333
      %s335 = ssub.s32 %s23, %s30
      %p336 = scmp.eq.s32.totalorder %s335, 0
      %s338 = sadd.s32 %s337, 1
      %s339 = scalar_select %p336, %s337, %s338
      %p342 = pneg %p336
      %p343 = scmp.eq.s32.totalorder %s23, 1
      %p344 = por %p342, %p343
      %p345 = scmp.ne.s32.totalorder %s337, %s340
      %p346 = scmp.eq.s32.totalorder %s23, 0
      %p347 = por %p345, %p346
      %p348 = scmp.ne.s32.totalorder %s337, %s340
      %p349 = scmp.eq.s32.totalorder %s28, 1
      %p350 = por %p348, %p349
      %p351 = scmp.ne.s32.totalorder %s340, %s341
      %p352 = scmp.eq.s32.totalorder %s28, 0
      %p353 = por %p351, %p352
      %p354 = scmp.ne.s32.totalorder %s340, %s341
      %p355 = scmp.eq.s32.totalorder %s29, 1
      %p356 = por %p354, %p355
      %p358 = scmp.ne.s32.totalorder %s341, %s357
      %p359 = scmp.eq.s32.totalorder %s29, 0
      %p360 = por %p358, %p359
      %p361 = scmp.le.s32.totalorder 1, %s23
      %p362 = scmp.lt.s32.totalorder %s23, 3
      %p363 = pnand %p361, %p362
      %p364 = pneg %p363
      // Predicated region
      $region9: #{tpu_custom_call.1} parent=5 // pred_check
        _
      $region10: #{tpu_custom_call.1} parent=5 // pred_check_branch
        %366 = sbr.rel (%p363) target = $region12
      $region11: #{tpu_custom_call.1} parent=5 // pred_region
        %s367 = ssub.s32 %s23, 1
        // Predicated region
        $region13: #{tpu_custom_call.1} parent=11 // pred_check
          %p368 = pneg %p96
        $region14: #{tpu_custom_call.1} parent=11 // pred_check_branch
          %370 = sbr.rel (%p368) target = $region16
        $region15: #{tpu_custom_call.1} parent=11 // pred_region
          _
        $region16: #{tpu_custom_call.1} parent=11 // pred_fallthru
          _
        // Predicated region
        $region17: #{tpu_custom_call.1} parent=11 // pred_check
          %p371 = pneg %p117
        $region18: #{tpu_custom_call.1} parent=11 // pred_check_branch
          %373 = sbr.rel (%p371) target = $region20
        $region19: #{tpu_custom_call.1} parent=11 // pred_region
          _
        $region20: #{tpu_custom_call.1} parent=11 // pred_fallthru
          _
        // Predicated region
        $region21: #{tpu_custom_call.1} parent=11 // pred_check
          %p374 = pneg %p138
        $region22: #{tpu_custom_call.1} parent=11 // pred_check_branch
          %376 = sbr.rel (%p374) target = $region24
        $region23: #{tpu_custom_call.1} parent=11 // pred_region
          _
        $region24: #{tpu_custom_call.1} parent=11 // pred_fallthru
          _
        // Predicated region
        $region25: #{tpu_custom_call.1} parent=11 // pred_check
          %p377 = pneg %p159
        $region26: #{tpu_custom_call.1} parent=11 // pred_check_branch
          %379 = sbr.rel (%p377) target = $region28
        $region27: #{tpu_custom_call.1} parent=11 // pred_region
          _
        $region28: #{tpu_custom_call.1} parent=11 // pred_fallthru
          _
        // Predicated region
        $region29: #{tpu_custom_call.1} parent=11 // pred_check
          %p380 = pneg %p180
        $region30: #{tpu_custom_call.1} parent=11 // pred_check_branch
          %382 = sbr.rel (%p380) target = $region32
        $region31: #{tpu_custom_call.1} parent=11 // pred_region
          _
        $region32: #{tpu_custom_call.1} parent=11 // pred_fallthru
          _
        // Predicated region
        $region33: #{tpu_custom_call.1} parent=11 // pred_check
          %p383 = pneg %p201
        $region34: #{tpu_custom_call.1} parent=11 // pred_check_branch
          %385 = sbr.rel (%p383) target = $region36
        $region35: #{tpu_custom_call.1} parent=11 // pred_region
          _
        $region36: #{tpu_custom_call.1} parent=11 // pred_fallthru
          _
        // Predicated region
        $region37: #{tpu_custom_call.1} parent=11 // pred_check
          %p386 = pneg %p222
        $region38: #{tpu_custom_call.1} parent=11 // pred_check_branch
          %388 = sbr.rel (%p386) target = $region40
        $region39: #{tpu_custom_call.1} parent=11 // pred_region
          _
        $region40: #{tpu_custom_call.1} parent=11 // pred_fallthru
          _
        // Predicated region
        $region41: #{tpu_custom_call.1} parent=11 // pred_check
          %p389 = pneg %p243
        $region42: #{tpu_custom_call.1} parent=11 // pred_check_branch
          %391 = sbr.rel (%p389) target = $region44
        $region43: #{tpu_custom_call.1} parent=11 // pred_region
          _
        $region44: #{tpu_custom_call.1} parent=11 // pred_fallthru
          _
        // Predicated region
        $region45: #{tpu_custom_call.1} parent=11 // pred_check
          %p392 = pneg %p264
        $region46: #{tpu_custom_call.1} parent=11 // pred_check_branch
          %394 = sbr.rel (%p392) target = $region48
        $region47: #{tpu_custom_call.1} parent=11 // pred_region
          _
        $region48: #{tpu_custom_call.1} parent=11 // pred_fallthru
          _
        // Predicated region
        $region49: #{tpu_custom_call.1} parent=11 // pred_check
          %p395 = pneg %p285
        $region50: #{tpu_custom_call.1} parent=11 // pred_check_branch
          %397 = sbr.rel (%p395) target = $region52
        $region51: #{tpu_custom_call.1} parent=11 // pred_region
          _
        $region52: #{tpu_custom_call.1} parent=11 // pred_fallthru
          _
        // Predicated region
        $region53: #{tpu_custom_call.1} parent=11 // pred_check
          %p398 = pneg %p306
        $region54: #{tpu_custom_call.1} parent=11 // pred_check_branch
          %400 = sbr.rel (%p398) target = $region56
        $region55: #{tpu_custom_call.1} parent=11 // pred_region
          _
        $region56: #{tpu_custom_call.1} parent=11 // pred_fallthru
          _
        // Predicated region
        $region57: #{tpu_custom_call.1} parent=11 // pred_check
          %p401 = pneg %p327
        $region58: #{tpu_custom_call.1} parent=11 // pred_check_branch
          %403 = sbr.rel (%p401) target = $region60
        $region59: #{tpu_custom_call.1} parent=11 // pred_region
          _
        $region60: #{tpu_custom_call.1} parent=11 // pred_fallthru
          _
      $region12: #{tpu_custom_call.1} parent=5 // pred_fallthru
        _
      %p404 = scmp.lt.s32.totalorder %s23, 2
      // Predicated region
      $region61: #{tpu_custom_call.1} parent=5 // pred_check
        %p405 = pneg %p404
      $region62: #{tpu_custom_call.1} parent=5 // pred_check_branch
        %407 = sbr.rel (%p405) target = $region64
      $region63: #{tpu_custom_call.1} parent=5 // pred_region
        // Predicated region
        $region65: #{tpu_custom_call.1} parent=63 // pred_check
          %p408 = pneg %p43
        $region66: #{tpu_custom_call.1} parent=63 // pred_check_branch
          %410 = sbr.rel (%p408) target = $region68
        $region67: #{tpu_custom_call.1} parent=63 // pred_region
          %s411 = smul.u32 8, %s23
          %p412 = scmp.lt.s32.totalorder %s411, 15
          %s413 = scalar_select %p412, %s411, 15
          %s414 = smul.addr %s413, 8
          %s415 = scalar_lea.vmem %s0, %s414
          %s416 = smul.u32 8, %s23
        $region68: #{tpu_custom_call.1} parent=63 // pred_fallthru
          _
        // Predicated region
        $region69: #{tpu_custom_call.1} parent=63 // pred_check
          %p417 = pneg %p69
        $region70: #{tpu_custom_call.1} parent=63 // pred_check_branch
          %419 = sbr.rel (%p417) target = $region72
        $region71: #{tpu_custom_call.1} parent=63 // pred_region
          %s420 = smul.u32 8, %s23
          %p421 = scmp.lt.s32.totalorder %s420, 15
          %s422 = scalar_select %p421, %s420, 15
          %s423 = smul.addr %s422, 8
          %s424 = scalar_lea.vmem %s1, %s423
          %s425 = smul.u32 8, %s23
        $region72: #{tpu_custom_call.1} parent=63 // pred_fallthru
          _
      $region64: #{tpu_custom_call.1} parent=5 // pred_fallthru
        _
      %p426 = scmp.le.s32.totalorder 1, %s23
      %p427 = scmp.lt.s32.totalorder %s23, 3
      %p428 = pnand %p426, %p427
      %p429 = pneg %p428
      // Predicated region
      $region73: #{tpu_custom_call.1} parent=5 // pred_check
        _
      $region74: #{tpu_custom_call.1} parent=5 // pred_check_branch
        %431 = sbr.rel (%p428) target = $region76
      $region75: #{tpu_custom_call.1} parent=5 // pred_region
        %s432 = ssub.s32 %s23, 1
        %s433 = smul.u32 8, %s28
        %p434 = scmp.lt.s32.totalorder %s433, 15
        %s435 = scalar_select %p434, %s433, 15
        %s436 = smul.addr %s435, 8
        %s437 = scalar_lea.vmem %s0, %s436
        %p438 = pneg %p49
        %p439 = pneg %p46
        %s440 = smul.u32 8, %s28
        %p441 = scmp.lt.s32.totalorder %s440, 15
        %s442 = scalar_select %p441, %s440, 15
        %s443 = smul.addr %s442, 8
        %s444 = scalar_lea.vmem %s1, %s443
        %p445 = pneg %p75
        %p446 = pneg %p72
        %p447 = pneg %p96
        %p448 = pneg %p93
        %p449 = pneg %p117
        %p450 = pneg %p114
        %p451 = pneg %p138
        %p452 = pneg %p135
        %p453 = pneg %p159
        %p454 = pneg %p156
        %p455 = pneg %p180
        %p456 = pneg %p177
        %p457 = pneg %p201
        %p458 = pneg %p198
        %p459 = pneg %p222
        %p460 = pneg %p219
        %p461 = pneg %p243
        %p462 = pneg %p240
        %p463 = pneg %p264
        %p464 = pneg %p261
        %p465 = pneg %p285
        %p466 = pneg %p282
        %p467 = pneg %p306
        %p468 = pneg %p303
        %p469 = pneg %p327
        %p470 = pneg %p324
        %p471 = pneg %p353
        %p472 = pneg %p350
        %s473 = sand.u32 %s340, 1
        %s474 = scalar_lea.sflag [#allocation3], %s473
        %s475 = sand.u32 %s340, 1
        %s476 = smul.addr %s475, 8
        %s477 = scalar_lea.vmem [#allocation2], %s476
        %s478 = smul.u32 8, %s28
        %p479 = scmp.lt.s32.totalorder %s478, 15
        %s480 = scalar_select %p479, %s478, 15
        %s481 = smul.addr %s480, 8
        %s482 = scalar_lea.vmem %s0, %s481
        %s483 = smul.u32 8, %s28
        %s484 = smul.u32 8, %s28
        %p485 = scmp.lt.s32.totalorder %s484, 15
        %s486 = scalar_select %p485, %s484, 15
        %s487 = smul.addr %s486, 8
        %s488 = scalar_lea.vmem %s1, %s487
        %s489 = smul.u32 8, %s28
        %v490 = vld [vmem:[%s482] sm:$0xff]
        %v491 = vld [vmem:[%s482 + $0x8] sm:$0xff]
        %v492 = vld [vmem:[%s482 + $0x10] sm:$0xff]
        %v493 = vld [vmem:[%s482 + $0x18] sm:$0xff]
        %v494 = vld [vmem:[%s482 + $0x20] sm:$0xff]
        %v495 = vld [vmem:[%s482 + $0x28] sm:$0xff]
        %v496 = vld [vmem:[%s482 + $0x30] sm:$0xff]
        %v497 = vld [vmem:[%s482 + $0x38] sm:$0xff]
        %v498 = vld [vmem:[%s488] sm:$0xff]
        %v499 = vld [vmem:[%s488 + $0x8] sm:$0xff]
        %v500 = vld [vmem:[%s488 + $0x10] sm:$0xff]
        %v501 = vld [vmem:[%s488 + $0x18] sm:$0xff]
        %v502 = vld [vmem:[%s488 + $0x20] sm:$0xff]
        %v503 = vld [vmem:[%s488 + $0x28] sm:$0xff]
        %v504 = vld [vmem:[%s488 + $0x30] sm:$0xff]
        %v505 = vld [vmem:[%s488 + $0x38] sm:$0xff]
        %v506 = vld [vmem:[%s2] sm:$0x3f]
        %v507 = vld [vmem:[%s4] sm:$0x1]
        %v509 = vlaneseq
        %v510 = vshrl.u32 %v509, 7
        %v511 = vsub.s32 0, %v510
        %v512 = vrot.slane %v507, %v511
        %vm514 = vcmask 48128
        %v516 = vsel %vm514, %v490, 0
        %v519 = vsel %vm514, %v491, 0
        %v522 = vsel %vm514, %v492, 0
        %v525 = vsel %vm514, %v493, 0
        %v528 = vsel %vm514, %v494, 0
        %v531 = vsel %vm514, %v495, 0
        %v534 = vsel %vm514, %v496, 0
        %v537 = vsel %vm514, %v497, 0
        %vm539 = vcmask 1045504
        %v541 = vsel %vm539, %v506, 0
        %543 = vmatprep.subr.mxu0 0.0
        %544 = vmatpush1.msra.mxu0 0.0
        %545 = vmatprep.subr.mxu0 0.0
        %546 = vmatpush1.msra.mxu0 0.0
        %547 = vmatprep.subr.mxu0 0.0
        %548 = vmatpush1.msra.mxu0 0.0
        %549 = vmatprep.subr.mxu0 0.0
        %550 = vmatpush1.msra.mxu0 0.0
        %551 = vmatprep.subr.mxu0 0.0
        %552 = vmatpush1.msra.mxu0 0.0
        %553 = vmatprep.subr.mxu0 0.0
        %554 = vmatpush1.msra.mxu0 0.0
        %555 = vmatprep.subr.mxu0 0.0
        %556 = vmatpush1.msra.mxu0 0.0
        %557 = vmatprep.subr.mxu0 0.0
        %558 = vmatpush1.msra.mxu0 0.0
        %559 = vmatprep.subr.mxu0 0.0
        %560 = vmatpush1.msra.mxu0 0.0
        %561 = vmatprep.subr.mxu0 0.0
        %562 = vmatpush1.msra.mxu0 0.0
        %563 = vmatprep.subr.mxu0 0.0
        %564 = vmatpush1.msra.mxu0 0.0
        %565 = vmatprep.subr.mxu0 0.0
        %566 = vmatpush1.msra.mxu0 0.0
        %567 = vmatprep.subr.mxu0 0.0
        %568 = vmatpush1.msra.mxu0 0.0
        %569 = vmatprep.subr.mxu0 0.0
        %570 = vmatpush1.msra.mxu0 0.0
        %571 = vmatprep.subr.mxu0 0.0
        %572 = vmatpush1.msra.mxu0 0.0
        %573 = vmatprep.subr.mxu0 0.0
        %574 = vmatpush1.msra.mxu0 %v541
        %575 = vmatprep.subr.mxu0 0.0
        %576 = vmatpush2.msra.mxu0 0.0
        %577 = vmatprep.subr.mxu0 0.0
        %578 = vmatpush2.msra.mxu0 0.0
        %579 = vmatprep.subr.mxu0 0.0
        %580 = vmatpush2.msra.mxu0 0.0
        %581 = vmatprep.subr.mxu0 0.0
        %582 = vmatpush2.msra.mxu0 0.0
        %583 = vmatprep.subr.mxu0 0.0
        %584 = vmatpush2.msra.mxu0 0.0
        %585 = vmatprep.subr.mxu0 0.0
        %586 = vmatpush2.msra.mxu0 0.0
        %587 = vmatprep.subr.mxu0 0.0
        %588 = vmatpush2.msra.mxu0 0.0
        %589 = vmatprep.subr.mxu0 0.0
        %590 = vmatpush2.msra.mxu0 0.0
        %591 = vmatprep.subr.mxu0 0.0
        %592 = vmatpush2.msra.mxu0 0.0
        %593 = vmatprep.subr.mxu0 0.0
        %594 = vmatpush2.msra.mxu0 0.0
        %595 = vmatprep.subr.mxu0 0.0
        %596 = vmatpush2.msra.mxu0 0.0
        %597 = vmatprep.subr.mxu0 0.0
        %598 = vmatpush2.msra.mxu0 0.0
        %599 = vmatprep.subr.mxu0 0.0
        %600 = vmatpush2.msra.mxu0 0.0
        %601 = vmatprep.subr.mxu0 0.0
        %602 = vmatpush2.msra.mxu0 0.0
        %603 = vmatprep.subr.mxu0 0.0
        %604 = vmatpush2.msra.mxu0 0.0
        %605 = vmatprep.subr.mxu0 0.0
        %606 = vmatpush2.msra.mxu0 0.0
        %607 = vmatprep.mubr.f32.mxu0 0.0
        %608 = vmatmul.mubr.f32.gmra.mxu0 %v516
        %v609 = vpop.f32.mrf.mxu0
        %v610 = vadd.f32 %v512, %v609
        %v611 = vpop.f32.mrf.mxu0
        %612 = vmatprep.mubr.f32.mxu0 0.0
        %613 = vmatmul.mubr.f32.gmra.mxu0 %v519
        %v614 = vpop.f32.mrf.mxu0
        %v615 = vadd.f32 %v512, %v614
        %v616 = vpop.f32.mrf.mxu0
        %617 = vmatprep.mubr.f32.mxu0 0.0
        %618 = vmatmul.mubr.f32.gmra.mxu0 %v522
        %v619 = vpop.f32.mrf.mxu0
        %v620 = vadd.f32 %v512, %v619
        %v621 = vpop.f32.mrf.mxu0
        %622 = vmatprep.mubr.f32.mxu0 0.0
        %623 = vmatmul.mubr.f32.gmra.mxu0 %v525
        %v624 = vpop.f32.mrf.mxu0
        %v625 = vadd.f32 %v512, %v624
        %v626 = vpop.f32.mrf.mxu0
        %627 = vmatprep.mubr.f32.mxu0 0.0
        %628 = vmatmul.mubr.f32.gmra.mxu0 %v528
        %v629 = vpop.f32.mrf.mxu0
        %v630 = vadd.f32 %v512, %v629
        %v631 = vpop.f32.mrf.mxu0
        %632 = vmatprep.mubr.f32.mxu0 0.0
        %633 = vmatmul.mubr.f32.gmra.mxu0 %v531
        %v634 = vpop.f32.mrf.mxu0
        %v635 = vadd.f32 %v512, %v634
        %v636 = vpop.f32.mrf.mxu0
        %637 = vmatprep.mubr.f32.mxu0 0.0
        %638 = vmatmul.mubr.f32.gmra.mxu0 %v534
        %v639 = vpop.f32.mrf.mxu0
        %v640 = vadd.f32 %v512, %v639
        %v641 = vpop.f32.mrf.mxu0
        %642 = vmatprep.mubr.f32.mxu0 0.0
        %643 = vmatmul.mubr.f32.gmra.mxu0 %v537
        %v644 = vpop.f32.mrf.mxu0
        %v645 = vadd.f32 %v512, %v644
        %v646 = vpop.f32.mrf.mxu0
        %647 = vdwg.mxu0
        %v656 = vcombine.high %v610, %v610
        %v658 = vunpack.c.l.s4 1966171168
        %v659 = vunpack.c.0.s8 %v658
        %v660 = vlaneseq
        %v661 = vshrl.u32 %v660, 7
        %v662 = vsub.s32 %v659, %v661
        %v663 = vrot.slane %v610, %v662
        %v665 = vunpack.c.l.s4 1966171168
        %v666 = vunpack.c.0.s8 %v665
        %v667 = vlaneseq
        %v668 = vshrl.u32 %v667, 7
        %v669 = vsub.s32 %v666, %v668
        %v670 = vrot.slane %v656, %v669
        %v671 = vcombine.high %v663, %v663
        %v672 = vcombine.high %v670, %v670
        %v674 = vunpack.c.l.s4 1966171168
        %v675 = vunpack.c.0.s8 %v674
        %v676 = vlaneseq
        %v677 = vshrl.u32 %v676, 7
        %v678 = vsub.s32 %v675, %v677
        %v679 = vrot.slane %v663, %v678
        %v681 = vunpack.c.l.s4 1966171168
        %v682 = vunpack.c.0.s8 %v681
        %v683 = vlaneseq
        %v684 = vshrl.u32 %v683, 7
        %v685 = vsub.s32 %v682, %v684
        %v686 = vrot.slane %v670, %v685
        %v688 = vunpack.c.l.s4 1966171168
        %v689 = vunpack.c.0.s8 %v688
        %v690 = vlaneseq
        %v691 = vshrl.u32 %v690, 7
        %v692 = vsub.s32 %v689, %v691
        %v693 = vrot.slane %v671, %v692
        %v695 = vunpack.c.l.s4 1966171168
        %v696 = vunpack.c.0.s8 %v695
        %v697 = vlaneseq
        %v698 = vshrl.u32 %v697, 7
        %v699 = vsub.s32 %v696, %v698
        %v700 = vrot.slane %v672, %v699
        %v701 = vcombine.high %v679, %v679
        %v702 = vcombine.high %v686, %v686
        %v703 = vcombine.high %v693, %v693
        %v704 = vcombine.high %v700, %v700
        %v705 = vcombine.high %v615, %v615
        %v707 = vunpack.c.l.s4 1966171168
        %v708 = vunpack.c.0.s8 %v707
        %v709 = vlaneseq
        %v710 = vshrl.u32 %v709, 7
        %v711 = vsub.s32 %v708, %v710
        %v712 = vrot.slane %v615, %v711
        %v714 = vunpack.c.l.s4 1966171168
        %v715 = vunpack.c.0.s8 %v714
        %v716 = vlaneseq
        %v717 = vshrl.u32 %v716, 7
        %v718 = vsub.s32 %v715, %v717
        %v719 = vrot.slane %v705, %v718
        %v720 = vcombine.high %v712, %v712
        %v721 = vcombine.high %v719, %v719
        %v723 = vunpack.c.l.s4 1966171168
        %v724 = vunpack.c.0.s8 %v723
        %v725 = vlaneseq
        %v726 = vshrl.u32 %v725, 7
        %v727 = vsub.s32 %v724, %v726
        %v728 = vrot.slane %v712, %v727
        %v730 = vunpack.c.l.s4 1966171168
        %v731 = vunpack.c.0.s8 %v730
        %v732 = vlaneseq
        %v733 = vshrl.u32 %v732, 7
        %v734 = vsub.s32 %v731, %v733
        %v735 = vrot.slane %v719, %v734
        %v737 = vunpack.c.l.s4 1966171168
        %v738 = vunpack.c.0.s8 %v737
        %v739 = vlaneseq
        %v740 = vshrl.u32 %v739, 7
        %v741 = vsub.s32 %v738, %v740
        %v742 = vrot.slane %v720, %v741
        %v744 = vunpack.c.l.s4 1966171168
        %v745 = vunpack.c.0.s8 %v744
        %v746 = vlaneseq
        %v747 = vshrl.u32 %v746, 7
        %v748 = vsub.s32 %v745, %v747
        %v749 = vrot.slane %v721, %v748
        %v750 = vcombine.high %v728, %v728
        %v751 = vcombine.high %v735, %v735
        %v752 = vcombine.high %v742, %v742
        %v753 = vcombine.high %v749, %v749
        %v754 = vcombine.high %v620, %v620
        %v756 = vunpack.c.l.s4 1966171168
        %v757 = vunpack.c.0.s8 %v756
        %v758 = vlaneseq
        %v759 = vshrl.u32 %v758, 7
        %v760 = vsub.s32 %v757, %v759
        %v761 = vrot.slane %v620, %v760
        %v763 = vunpack.c.l.s4 1966171168
        %v764 = vunpack.c.0.s8 %v763
        %v765 = vlaneseq
        %v766 = vshrl.u32 %v765, 7
        %v767 = vsub.s32 %v764, %v766
        %v768 = vrot.slane %v754, %v767
        %v769 = vcombine.high %v761, %v761
        %v770 = vcombine.high %v768, %v768
        %v772 = vunpack.c.l.s4 1966171168
        %v773 = vunpack.c.0.s8 %v772
        %v774 = vlaneseq
        %v775 = vshrl.u32 %v774, 7
        %v776 = vsub.s32 %v773, %v775
        %v777 = vrot.slane %v761, %v776
        %v779 = vunpack.c.l.s4 1966171168
        %v780 = vunpack.c.0.s8 %v779
        %v781 = vlaneseq
        %v782 = vshrl.u32 %v781, 7
        %v783 = vsub.s32 %v780, %v782
        %v784 = vrot.slane %v768, %v783
        %v786 = vunpack.c.l.s4 1966171168
        %v787 = vunpack.c.0.s8 %v786
        %v788 = vlaneseq
        %v789 = vshrl.u32 %v788, 7
        %v790 = vsub.s32 %v787, %v789
        %v791 = vrot.slane %v769, %v790
        %v793 = vunpack.c.l.s4 1966171168
        %v794 = vunpack.c.0.s8 %v793
        %v795 = vlaneseq
        %v796 = vshrl.u32 %v795, 7
        %v797 = vsub.s32 %v794, %v796
        %v798 = vrot.slane %v770, %v797
        %v799 = vcombine.high %v777, %v777
        %v800 = vcombine.high %v784, %v784
        %v801 = vcombine.high %v791, %v791
        %v802 = vcombine.high %v798, %v798
        %v803 = vcombine.high %v625, %v625
        %v805 = vunpack.c.l.s4 1966171168
        %v806 = vunpack.c.0.s8 %v805
        %v807 = vlaneseq
        %v808 = vshrl.u32 %v807, 7
        %v809 = vsub.s32 %v806, %v808
        %v810 = vrot.slane %v625, %v809
        %v812 = vunpack.c.l.s4 1966171168
        %v813 = vunpack.c.0.s8 %v812
        %v814 = vlaneseq
        %v815 = vshrl.u32 %v814, 7
        %v816 = vsub.s32 %v813, %v815
        %v817 = vrot.slane %v803, %v816
        %v818 = vcombine.high %v810, %v810
        %v819 = vcombine.high %v817, %v817
        %v821 = vunpack.c.l.s4 1966171168
        %v822 = vunpack.c.0.s8 %v821
        %v823 = vlaneseq
        %v824 = vshrl.u32 %v823, 7
        %v825 = vsub.s32 %v822, %v824
        %v826 = vrot.slane %v810, %v825
        %v828 = vunpack.c.l.s4 1966171168
        %v829 = vunpack.c.0.s8 %v828
        %v830 = vlaneseq
        %v831 = vshrl.u32 %v830, 7
        %v832 = vsub.s32 %v829, %v831
        %v833 = vrot.slane %v817, %v832
        %v835 = vunpack.c.l.s4 1966171168
        %v836 = vunpack.c.0.s8 %v835
        %v837 = vlaneseq
        %v838 = vshrl.u32 %v837, 7
        %v839 = vsub.s32 %v836, %v838
        %v840 = vrot.slane %v818, %v839
        %v842 = vunpack.c.l.s4 1966171168
        %v843 = vunpack.c.0.s8 %v842
        %v844 = vlaneseq
        %v845 = vshrl.u32 %v844, 7
        %v846 = vsub.s32 %v843, %v845
        %v847 = vrot.slane %v819, %v846
        %v848 = vcombine.high %v826, %v826
        %v849 = vcombine.high %v833, %v833
        %v850 = vcombine.high %v840, %v840
        %v851 = vcombine.high %v847, %v847
        %v852 = vcombine.high %v630, %v630
        %v854 = vunpack.c.l.s4 1966171168
        %v855 = vunpack.c.0.s8 %v854
        %v856 = vlaneseq
        %v857 = vshrl.u32 %v856, 7
        %v858 = vsub.s32 %v855, %v857
        %v859 = vrot.slane %v630, %v858
        %v861 = vunpack.c.l.s4 1966171168
        %v862 = vunpack.c.0.s8 %v861
        %v863 = vlaneseq
        %v864 = vshrl.u32 %v863, 7
        %v865 = vsub.s32 %v862, %v864
        %v866 = vrot.slane %v852, %v865
        %v867 = vcombine.high %v859, %v859
        %v868 = vcombine.high %v866, %v866
        %v870 = vunpack.c.l.s4 1966171168
        %v871 = vunpack.c.0.s8 %v870
        %v872 = vlaneseq
        %v873 = vshrl.u32 %v872, 7
        %v874 = vsub.s32 %v871, %v873
        %v875 = vrot.slane %v859, %v874
        %v877 = vunpack.c.l.s4 1966171168
        %v878 = vunpack.c.0.s8 %v877
        %v879 = vlaneseq
        %v880 = vshrl.u32 %v879, 7
        %v881 = vsub.s32 %v878, %v880
        %v882 = vrot.slane %v866, %v881
        %v884 = vunpack.c.l.s4 1966171168
        %v885 = vunpack.c.0.s8 %v884
        %v886 = vlaneseq
        %v887 = vshrl.u32 %v886, 7
        %v888 = vsub.s32 %v885, %v887
        %v889 = vrot.slane %v867, %v888
        %v891 = vunpack.c.l.s4 1966171168
        %v892 = vunpack.c.0.s8 %v891
        %v893 = vlaneseq
        %v894 = vshrl.u32 %v893, 7
        %v895 = vsub.s32 %v892, %v894
        %v896 = vrot.slane %v868, %v895
        %v897 = vcombine.high %v875, %v875
        %v898 = vcombine.high %v882, %v882
        %v899 = vcombine.high %v889, %v889
        %v900 = vcombine.high %v896, %v896
        %v901 = vcombine.high %v635, %v635
        %v903 = vunpack.c.l.s4 1966171168
        %v904 = vunpack.c.0.s8 %v903
        %v905 = vlaneseq
        %v906 = vshrl.u32 %v905, 7
        %v907 = vsub.s32 %v904, %v906
        %v908 = vrot.slane %v635, %v907
        %v910 = vunpack.c.l.s4 1966171168
        %v911 = vunpack.c.0.s8 %v910
        %v912 = vlaneseq
        %v913 = vshrl.u32 %v912, 7
        %v914 = vsub.s32 %v911, %v913
        %v915 = vrot.slane %v901, %v914
        %v916 = vcombine.high %v908, %v908
        %v917 = vcombine.high %v915, %v915
        %v919 = vunpack.c.l.s4 1966171168
        %v920 = vunpack.c.0.s8 %v919
        %v921 = vlaneseq
        %v922 = vshrl.u32 %v921, 7
        %v923 = vsub.s32 %v920, %v922
        %v924 = vrot.slane %v908, %v923
        %v926 = vunpack.c.l.s4 1966171168
        %v927 = vunpack.c.0.s8 %v926
        %v928 = vlaneseq
        %v929 = vshrl.u32 %v928, 7
        %v930 = vsub.s32 %v927, %v929
        %v931 = vrot.slane %v915, %v930
        %v933 = vunpack.c.l.s4 1966171168
        %v934 = vunpack.c.0.s8 %v933
        %v935 = vlaneseq
        %v936 = vshrl.u32 %v935, 7
        %v937 = vsub.s32 %v934, %v936
        %v938 = vrot.slane %v916, %v937
        %v940 = vunpack.c.l.s4 1966171168
        %v941 = vunpack.c.0.s8 %v940
        %v942 = vlaneseq
        %v943 = vshrl.u32 %v942, 7
        %v944 = vsub.s32 %v941, %v943
        %v945 = vrot.slane %v917, %v944
        %v946 = vcombine.high %v924, %v924
        %v947 = vcombine.high %v931, %v931
        %v948 = vcombine.high %v938, %v938
        %v949 = vcombine.high %v945, %v945
        %v950 = vcombine.high %v640, %v640
        %v952 = vunpack.c.l.s4 1966171168
        %v953 = vunpack.c.0.s8 %v952
        %v954 = vlaneseq
        %v955 = vshrl.u32 %v954, 7
        %v956 = vsub.s32 %v953, %v955
        %v957 = vrot.slane %v640, %v956
        %v959 = vunpack.c.l.s4 1966171168
        %v960 = vunpack.c.0.s8 %v959
        %v961 = vlaneseq
        %v962 = vshrl.u32 %v961, 7
        %v963 = vsub.s32 %v960, %v962
        %v964 = vrot.slane %v950, %v963
        %v965 = vcombine.high %v957, %v957
        %v966 = vcombine.high %v964, %v964
        %v968 = vunpack.c.l.s4 1966171168
        %v969 = vunpack.c.0.s8 %v968
        %v970 = vlaneseq
        %v971 = vshrl.u32 %v970, 7
        %v972 = vsub.s32 %v969, %v971
        %v973 = vrot.slane %v957, %v972
        %v975 = vunpack.c.l.s4 1966171168
        %v976 = vunpack.c.0.s8 %v975
        %v977 = vlaneseq
        %v978 = vshrl.u32 %v977, 7
        %v979 = vsub.s32 %v976, %v978
        %v980 = vrot.slane %v964, %v979
        %v982 = vunpack.c.l.s4 1966171168
        %v983 = vunpack.c.0.s8 %v982
        %v984 = vlaneseq
        %v985 = vshrl.u32 %v984, 7
        %v986 = vsub.s32 %v983, %v985
        %v987 = vrot.slane %v965, %v986
        %v989 = vunpack.c.l.s4 1966171168
        %v990 = vunpack.c.0.s8 %v989
        %v991 = vlaneseq
        %v992 = vshrl.u32 %v991, 7
        %v993 = vsub.s32 %v990, %v992
        %v994 = vrot.slane %v966, %v993
        %v995 = vcombine.high %v973, %v973
        %v996 = vcombine.high %v980, %v980
        %v997 = vcombine.high %v987, %v987
        %v998 = vcombine.high %v994, %v994
        %v999 = vcombine.high %v645, %v645
        %v1001 = vunpack.c.l.s4 1966171168
        %v1002 = vunpack.c.0.s8 %v1001
        %v1003 = vlaneseq
        %v1004 = vshrl.u32 %v1003, 7
        %v1005 = vsub.s32 %v1002, %v1004
        %v1006 = vrot.slane %v645, %v1005
        %v1008 = vunpack.c.l.s4 1966171168
        %v1009 = vunpack.c.0.s8 %v1008
        %v1010 = vlaneseq
        %v1011 = vshrl.u32 %v1010, 7
        %v1012 = vsub.s32 %v1009, %v1011
        %v1013 = vrot.slane %v999, %v1012
        %v1014 = vcombine.high %v1006, %v1006
        %v1015 = vcombine.high %v1013, %v1013
        %v1017 = vunpack.c.l.s4 1966171168
        %v1018 = vunpack.c.0.s8 %v1017
        %v1019 = vlaneseq
        %v1020 = vshrl.u32 %v1019, 7
        %v1021 = vsub.s32 %v1018, %v1020
        %v1022 = vrot.slane %v1006, %v1021
        %v1024 = vunpack.c.l.s4 1966171168
        %v1025 = vunpack.c.0.s8 %v1024
        %v1026 = vlaneseq
        %v1027 = vshrl.u32 %v1026, 7
        %v1028 = vsub.s32 %v1025, %v1027
        %v1029 = vrot.slane %v1013, %v1028
        %v1031 = vunpack.c.l.s4 1966171168
        %v1032 = vunpack.c.0.s8 %v1031
        %v1033 = vlaneseq
        %v1034 = vshrl.u32 %v1033, 7
        %v1035 = vsub.s32 %v1032, %v1034
        %v1036 = vrot.slane %v1014, %v1035
        %v1038 = vunpack.c.l.s4 1966171168
        %v1039 = vunpack.c.0.s8 %v1038
        %v1040 = vlaneseq
        %v1041 = vshrl.u32 %v1040, 7
        %v1042 = vsub.s32 %v1039, %v1041
        %v1043 = vrot.slane %v1015, %v1042
        %v1044 = vcombine.high %v1022, %v1022
        %v1045 = vcombine.high %v1029, %v1029
        %v1046 = vcombine.high %v1036, %v1036
        %v1047 = vcombine.high %v1043, %v1043
        %v1048 = vlaneseq
        %v1049 = vshrl.u32 %v1048, 7
        %v1050 = vsub.s32 0, %v1049
        %v1051 = vrot.slane %v498, %v1050
        %1053 = vbcast.lane.b32.xlu0 %v1051, 256
        %v1054 = vpop.permute.xlu0 %1053
        %v1055 = vlaneseq
        %v1056 = vshrl.u32 %v1055, 7
        %v1057 = vsub.s32 1, %v1056
        %v1058 = vrot.slane %v498, %v1057
        %1060 = vbcast.lane.b32.xlu0 %v1058, 256
        %v1061 = vpop.permute.xlu0 %1060
        %v1062 = vlaneseq
        %v1063 = vshrl.u32 %v1062, 7
        %v1064 = vsub.s32 2, %v1063
        %v1065 = vrot.slane %v498, %v1064
        %1067 = vbcast.lane.b32.xlu0 %v1065, 256
        %v1068 = vpop.permute.xlu0 %1067
        %v1069 = vlaneseq
        %v1070 = vshrl.u32 %v1069, 7
        %v1071 = vsub.s32 3, %v1070
        %v1072 = vrot.slane %v498, %v1071
        %1074 = vbcast.lane.b32.xlu0 %v1072, 256
        %v1075 = vpop.permute.xlu0 %1074
        %v1076 = vlaneseq
        %v1077 = vshrl.u32 %v1076, 7
        %v1078 = vsub.s32 4, %v1077
        %v1079 = vrot.slane %v498, %v1078
        %1081 = vbcast.lane.b32.xlu0 %v1079, 256
        %v1082 = vpop.permute.xlu0 %1081
        %v1083 = vlaneseq
        %v1084 = vshrl.u32 %v1083, 7
        %v1085 = vsub.s32 5, %v1084
        %v1086 = vrot.slane %v498, %v1085
        %1088 = vbcast.lane.b32.xlu0 %v1086, 256
        %v1089 = vpop.permute.xlu0 %1088
        %v1090 = vlaneseq
        %v1091 = vshrl.u32 %v1090, 7
        %v1092 = vsub.s32 6, %v1091
        %v1093 = vrot.slane %v498, %v1092
        %1095 = vbcast.lane.b32.xlu0 %v1093, 256
        %v1096 = vpop.permute.xlu0 %1095
        %v1097 = vlaneseq
        %v1098 = vshrl.u32 %v1097, 7
        %v1099 = vsub.s32 7, %v1098
        %v1100 = vrot.slane %v498, %v1099
        %1102 = vbcast.lane.b32.xlu0 %v1100, 256
        %v1103 = vpop.permute.xlu0 %1102
        %v1104 = vlaneseq
        %v1105 = vshrl.u32 %v1104, 7
        %v1106 = vsub.s32 0, %v1105
        %v1107 = vrot.slane %v499, %v1106
        %1109 = vbcast.lane.b32.xlu0 %v1107, 256
        %v1110 = vpop.permute.xlu0 %1109
        %v1111 = vlaneseq
        %v1112 = vshrl.u32 %v1111, 7
        %v1113 = vsub.s32 1, %v1112
        %v1114 = vrot.slane %v499, %v1113
        %1116 = vbcast.lane.b32.xlu0 %v1114, 256
        %v1117 = vpop.permute.xlu0 %1116
        %v1118 = vlaneseq
        %v1119 = vshrl.u32 %v1118, 7
        %v1120 = vsub.s32 2, %v1119
        %v1121 = vrot.slane %v499, %v1120
        %1123 = vbcast.lane.b32.xlu0 %v1121, 256
        %v1124 = vpop.permute.xlu0 %1123
        %v1125 = vlaneseq
        %v1126 = vshrl.u32 %v1125, 7
        %v1127 = vsub.s32 3, %v1126
        %v1128 = vrot.slane %v499, %v1127
        %1130 = vbcast.lane.b32.xlu0 %v1128, 256
        %v1131 = vpop.permute.xlu0 %1130
        %v1132 = vlaneseq
        %v1133 = vshrl.u32 %v1132, 7
        %v1134 = vsub.s32 4, %v1133
        %v1135 = vrot.slane %v499, %v1134
        %1137 = vbcast.lane.b32.xlu0 %v1135, 256
        %v1138 = vpop.permute.xlu0 %1137
        %v1139 = vlaneseq
        %v1140 = vshrl.u32 %v1139, 7
        %v1141 = vsub.s32 5, %v1140
        %v1142 = vrot.slane %v499, %v1141
        %1144 = vbcast.lane.b32.xlu0 %v1142, 256
        %v1145 = vpop.permute.xlu0 %1144
        %v1146 = vlaneseq
        %v1147 = vshrl.u32 %v1146, 7
        %v1148 = vsub.s32 6, %v1147
        %v1149 = vrot.slane %v499, %v1148
        %1151 = vbcast.lane.b32.xlu0 %v1149, 256
        %v1152 = vpop.permute.xlu0 %1151
        %v1153 = vlaneseq
        %v1154 = vshrl.u32 %v1153, 7
        %v1155 = vsub.s32 7, %v1154
        %v1156 = vrot.slane %v499, %v1155
        %1158 = vbcast.lane.b32.xlu0 %v1156, 256
        %v1159 = vpop.permute.xlu0 %1158
        %v1160 = vlaneseq
        %v1161 = vshrl.u32 %v1160, 7
        %v1162 = vsub.s32 0, %v1161
        %v1163 = vrot.slane %v500, %v1162
        %1165 = vbcast.lane.b32.xlu0 %v1163, 256
        %v1166 = vpop.permute.xlu0 %1165
        %v1167 = vlaneseq
        %v1168 = vshrl.u32 %v1167, 7
        %v1169 = vsub.s32 1, %v1168
        %v1170 = vrot.slane %v500, %v1169
        %1172 = vbcast.lane.b32.xlu0 %v1170, 256
        %v1173 = vpop.permute.xlu0 %1172
        %v1174 = vlaneseq
        %v1175 = vshrl.u32 %v1174, 7
        %v1176 = vsub.s32 2, %v1175
        %v1177 = vrot.slane %v500, %v1176
        %1179 = vbcast.lane.b32.xlu0 %v1177, 256
        %v1180 = vpop.permute.xlu0 %1179
        %v1181 = vlaneseq
        %v1182 = vshrl.u32 %v1181, 7
        %v1183 = vsub.s32 3, %v1182
        %v1184 = vrot.slane %v500, %v1183
        %1186 = vbcast.lane.b32.xlu0 %v1184, 256
        %v1187 = vpop.permute.xlu0 %1186
        %v1188 = vlaneseq
        %v1189 = vshrl.u32 %v1188, 7
        %v1190 = vsub.s32 4, %v1189
        %v1191 = vrot.slane %v500, %v1190
        %1193 = vbcast.lane.b32.xlu0 %v1191, 256
        %v1194 = vpop.permute.xlu0 %1193
        %v1195 = vlaneseq
        %v1196 = vshrl.u32 %v1195, 7
        %v1197 = vsub.s32 5, %v1196
        %v1198 = vrot.slane %v500, %v1197
        %1200 = vbcast.lane.b32.xlu0 %v1198, 256
        %v1201 = vpop.permute.xlu0 %1200
        %v1202 = vlaneseq
        %v1203 = vshrl.u32 %v1202, 7
        %v1204 = vsub.s32 6, %v1203
        %v1205 = vrot.slane %v500, %v1204
        %1207 = vbcast.lane.b32.xlu0 %v1205, 256
        %v1208 = vpop.permute.xlu0 %1207
        %v1209 = vlaneseq
        %v1210 = vshrl.u32 %v1209, 7
        %v1211 = vsub.s32 7, %v1210
        %v1212 = vrot.slane %v500, %v1211
        %1214 = vbcast.lane.b32.xlu0 %v1212, 256
        %v1215 = vpop.permute.xlu0 %1214
        %v1216 = vlaneseq
        %v1217 = vshrl.u32 %v1216, 7
        %v1218 = vsub.s32 0, %v1217
        %v1219 = vrot.slane %v501, %v1218
        %1221 = vbcast.lane.b32.xlu0 %v1219, 256
        %v1222 = vpop.permute.xlu0 %1221
        %v1223 = vlaneseq
        %v1224 = vshrl.u32 %v1223, 7
        %v1225 = vsub.s32 1, %v1224
        %v1226 = vrot.slane %v501, %v1225
        %1228 = vbcast.lane.b32.xlu0 %v1226, 256
        %v1229 = vpop.permute.xlu0 %1228
        %v1230 = vlaneseq
        %v1231 = vshrl.u32 %v1230, 7
        %v1232 = vsub.s32 2, %v1231
        %v1233 = vrot.slane %v501, %v1232
        %1235 = vbcast.lane.b32.xlu0 %v1233, 256
        %v1236 = vpop.permute.xlu0 %1235
        %v1237 = vlaneseq
        %v1238 = vshrl.u32 %v1237, 7
        %v1239 = vsub.s32 3, %v1238
        %v1240 = vrot.slane %v501, %v1239
        %1242 = vbcast.lane.b32.xlu0 %v1240, 256
        %v1243 = vpop.permute.xlu0 %1242
        %v1244 = vlaneseq
        %v1245 = vshrl.u32 %v1244, 7
        %v1246 = vsub.s32 4, %v1245
        %v1247 = vrot.slane %v501, %v1246
        %1249 = vbcast.lane.b32.xlu0 %v1247, 256
        %v1250 = vpop.permute.xlu0 %1249
        %v1251 = vlaneseq
        %v1252 = vshrl.u32 %v1251, 7
        %v1253 = vsub.s32 5, %v1252
        %v1254 = vrot.slane %v501, %v1253
        %1256 = vbcast.lane.b32.xlu0 %v1254, 256
        %v1257 = vpop.permute.xlu0 %1256
        %v1258 = vlaneseq
        %v1259 = vshrl.u32 %v1258, 7
        %v1260 = vsub.s32 6, %v1259
        %v1261 = vrot.slane %v501, %v1260
        %1263 = vbcast.lane.b32.xlu0 %v1261, 256
        %v1264 = vpop.permute.xlu0 %1263
        %v1265 = vlaneseq
        %v1266 = vshrl.u32 %v1265, 7
        %v1267 = vsub.s32 7, %v1266
        %v1268 = vrot.slane %v501, %v1267
        %1270 = vbcast.lane.b32.xlu0 %v1268, 256
        %v1271 = vpop.permute.xlu0 %1270
        %v1272 = vlaneseq
        %v1273 = vshrl.u32 %v1272, 7
        %v1274 = vsub.s32 0, %v1273
        %v1275 = vrot.slane %v502, %v1274
        %1277 = vbcast.lane.b32.xlu0 %v1275, 256
        %v1278 = vpop.permute.xlu0 %1277
        %v1279 = vlaneseq
        %v1280 = vshrl.u32 %v1279, 7
        %v1281 = vsub.s32 1, %v1280
        %v1282 = vrot.slane %v502, %v1281
        %1284 = vbcast.lane.b32.xlu0 %v1282, 256
        %v1285 = vpop.permute.xlu0 %1284
        %v1286 = vlaneseq
        %v1287 = vshrl.u32 %v1286, 7
        %v1288 = vsub.s32 2, %v1287
        %v1289 = vrot.slane %v502, %v1288
        %1291 = vbcast.lane.b32.xlu0 %v1289, 256
        %v1292 = vpop.permute.xlu0 %1291
        %v1293 = vlaneseq
        %v1294 = vshrl.u32 %v1293, 7
        %v1295 = vsub.s32 3, %v1294
        %v1296 = vrot.slane %v502, %v1295
        %1298 = vbcast.lane.b32.xlu0 %v1296, 256
        %v1299 = vpop.permute.xlu0 %1298
        %v1300 = vlaneseq
        %v1301 = vshrl.u32 %v1300, 7
        %v1302 = vsub.s32 4, %v1301
        %v1303 = vrot.slane %v502, %v1302
        %1305 = vbcast.lane.b32.xlu0 %v1303, 256
        %v1306 = vpop.permute.xlu0 %1305
        %v1307 = vlaneseq
        %v1308 = vshrl.u32 %v1307, 7
        %v1309 = vsub.s32 5, %v1308
        %v1310 = vrot.slane %v502, %v1309
        %1312 = vbcast.lane.b32.xlu0 %v1310, 256
        %v1313 = vpop.permute.xlu0 %1312
        %v1314 = vlaneseq
        %v1315 = vshrl.u32 %v1314, 7
        %v1316 = vsub.s32 6, %v1315
        %v1317 = vrot.slane %v502, %v1316
        %1319 = vbcast.lane.b32.xlu0 %v1317, 256
        %v1320 = vpop.permute.xlu0 %1319
        %v1321 = vlaneseq
        %v1322 = vshrl.u32 %v1321, 7
        %v1323 = vsub.s32 7, %v1322
        %v1324 = vrot.slane %v502, %v1323
        %1326 = vbcast.lane.b32.xlu0 %v1324, 256
        %v1327 = vpop.permute.xlu0 %1326
        %v1328 = vlaneseq
        %v1329 = vshrl.u32 %v1328, 7
        %v1330 = vsub.s32 0, %v1329
        %v1331 = vrot.slane %v503, %v1330
        %1333 = vbcast.lane.b32.xlu0 %v1331, 256
        %v1334 = vpop.permute.xlu0 %1333
        %v1335 = vlaneseq
        %v1336 = vshrl.u32 %v1335, 7
        %v1337 = vsub.s32 1, %v1336
        %v1338 = vrot.slane %v503, %v1337
        %1340 = vbcast.lane.b32.xlu0 %v1338, 256
        %v1341 = vpop.permute.xlu0 %1340
        %v1342 = vlaneseq
        %v1343 = vshrl.u32 %v1342, 7
        %v1344 = vsub.s32 2, %v1343
        %v1345 = vrot.slane %v503, %v1344
        %1347 = vbcast.lane.b32.xlu0 %v1345, 256
        %v1348 = vpop.permute.xlu0 %1347
        %v1349 = vlaneseq
        %v1350 = vshrl.u32 %v1349, 7
        %v1351 = vsub.s32 3, %v1350
        %v1352 = vrot.slane %v503, %v1351
        %1354 = vbcast.lane.b32.xlu0 %v1352, 256
        %v1355 = vpop.permute.xlu0 %1354
        %v1356 = vlaneseq
        %v1357 = vshrl.u32 %v1356, 7
        %v1358 = vsub.s32 4, %v1357
        %v1359 = vrot.slane %v503, %v1358
        %1361 = vbcast.lane.b32.xlu0 %v1359, 256
        %v1362 = vpop.permute.xlu0 %1361
        %v1363 = vlaneseq
        %v1364 = vshrl.u32 %v1363, 7
        %v1365 = vsub.s32 5, %v1364
        %v1366 = vrot.slane %v503, %v1365
        %1368 = vbcast.lane.b32.xlu0 %v1366, 256
        %v1369 = vpop.permute.xlu0 %1368
        %v1370 = vlaneseq
        %v1371 = vshrl.u32 %v1370, 7
        %v1372 = vsub.s32 6, %v1371
        %v1373 = vrot.slane %v503, %v1372
        %1375 = vbcast.lane.b32.xlu0 %v1373, 256
        %v1376 = vpop.permute.xlu0 %1375
        %v1377 = vlaneseq
        %v1378 = vshrl.u32 %v1377, 7
        %v1379 = vsub.s32 7, %v1378
        %v1380 = vrot.slane %v503, %v1379
        %1382 = vbcast.lane.b32.xlu0 %v1380, 256
        %v1383 = vpop.permute.xlu0 %1382
        %v1384 = vlaneseq
        %v1385 = vshrl.u32 %v1384, 7
        %v1386 = vsub.s32 0, %v1385
        %v1387 = vrot.slane %v504, %v1386
        %1389 = vbcast.lane.b32.xlu0 %v1387, 256
        %v1390 = vpop.permute.xlu0 %1389
        %v1391 = vlaneseq
        %v1392 = vshrl.u32 %v1391, 7
        %v1393 = vsub.s32 1, %v1392
        %v1394 = vrot.slane %v504, %v1393
        %1396 = vbcast.lane.b32.xlu0 %v1394, 256
        %v1397 = vpop.permute.xlu0 %1396
        %v1398 = vlaneseq
        %v1399 = vshrl.u32 %v1398, 7
        %v1400 = vsub.s32 2, %v1399
        %v1401 = vrot.slane %v504, %v1400
        %1403 = vbcast.lane.b32.xlu0 %v1401, 256
        %v1404 = vpop.permute.xlu0 %1403
        %v1405 = vlaneseq
        %v1406 = vshrl.u32 %v1405, 7
        %v1407 = vsub.s32 3, %v1406
        %v1408 = vrot.slane %v504, %v1407
        %1410 = vbcast.lane.b32.xlu0 %v1408, 256
        %v1411 = vpop.permute.xlu0 %1410
        %v1412 = vlaneseq
        %v1413 = vshrl.u32 %v1412, 7
        %v1414 = vsub.s32 4, %v1413
        %v1415 = vrot.slane %v504, %v1414
        %1417 = vbcast.lane.b32.xlu0 %v1415, 256
        %v1418 = vpop.permute.xlu0 %1417
        %v1419 = vlaneseq
        %v1420 = vshrl.u32 %v1419, 7
        %v1421 = vsub.s32 5, %v1420
        %v1422 = vrot.slane %v504, %v1421
        %1424 = vbcast.lane.b32.xlu0 %v1422, 256
        %v1425 = vpop.permute.xlu0 %1424
        %v1426 = vlaneseq
        %v1427 = vshrl.u32 %v1426, 7
        %v1428 = vsub.s32 6, %v1427
        %v1429 = vrot.slane %v504, %v1428
        %1431 = vbcast.lane.b32.xlu0 %v1429, 256
        %v1432 = vpop.permute.xlu0 %1431
        %v1433 = vlaneseq
        %v1434 = vshrl.u32 %v1433, 7
        %v1435 = vsub.s32 7, %v1434
        %v1436 = vrot.slane %v504, %v1435
        %1438 = vbcast.lane.b32.xlu0 %v1436, 256
        %v1439 = vpop.permute.xlu0 %1438
        %v1440 = vlaneseq
        %v1441 = vshrl.u32 %v1440, 7
        %v1442 = vsub.s32 0, %v1441
        %v1443 = vrot.slane %v505, %v1442
        %1445 = vbcast.lane.b32.xlu0 %v1443, 256
        %v1446 = vpop.permute.xlu0 %1445
        %v1447 = vlaneseq
        %v1448 = vshrl.u32 %v1447, 7
        %v1449 = vsub.s32 1, %v1448
        %v1450 = vrot.slane %v505, %v1449
        %1452 = vbcast.lane.b32.xlu0 %v1450, 256
        %v1453 = vpop.permute.xlu0 %1452
        %v1454 = vlaneseq
        %v1455 = vshrl.u32 %v1454, 7
        %v1456 = vsub.s32 2, %v1455
        %v1457 = vrot.slane %v505, %v1456
        %1459 = vbcast.lane.b32.xlu0 %v1457, 256
        %v1460 = vpop.permute.xlu0 %1459
        %v1461 = vlaneseq
        %v1462 = vshrl.u32 %v1461, 7
        %v1463 = vsub.s32 3, %v1462
        %v1464 = vrot.slane %v505, %v1463
        %1466 = vbcast.lane.b32.xlu0 %v1464, 256
        %v1467 = vpop.permute.xlu0 %1466
        %v1468 = vlaneseq
        %v1469 = vshrl.u32 %v1468, 7
        %v1470 = vsub.s32 4, %v1469
        %v1471 = vrot.slane %v505, %v1470
        %1473 = vbcast.lane.b32.xlu0 %v1471, 256
        %v1474 = vpop.permute.xlu0 %1473
        %v1475 = vlaneseq
        %v1476 = vshrl.u32 %v1475, 7
        %v1477 = vsub.s32 5, %v1476
        %v1478 = vrot.slane %v505, %v1477
        %1480 = vbcast.lane.b32.xlu0 %v1478, 256
        %v1481 = vpop.permute.xlu0 %1480
        %v1482 = vlaneseq
        %v1483 = vshrl.u32 %v1482, 7
        %v1484 = vsub.s32 6, %v1483
        %v1485 = vrot.slane %v505, %v1484
        %1487 = vbcast.lane.b32.xlu0 %v1485, 256
        %v1488 = vpop.permute.xlu0 %1487
        %v1489 = vlaneseq
        %v1490 = vshrl.u32 %v1489, 7
        %v1491 = vsub.s32 7, %v1490
        %v1492 = vrot.slane %v505, %v1491
        %1494 = vbcast.lane.b32.xlu0 %v1492, 256
        %v1495 = vpop.permute.xlu0 %1494
        %v1496 = vld [vmem:[%s3] sm:$0x1]
        %v1498 = vlaneseq
        %v1499 = vshrl.u32 %v1498, 7
        %v1500 = vsub.s32 0, %v1499
        %v1501 = vrot.slane %v1496, %v1500
        %v1503 = vmul.f32 %v1054, %v1501
        %v1504 = vmul.f32 %v1061, %v1501
        %v1505 = vmul.f32 %v1068, %v1501
        %v1506 = vmul.f32 %v1075, %v1501
        %v1507 = vmul.f32 %v1082, %v1501
        %v1508 = vmul.f32 %v1089, %v1501
        %v1509 = vmul.f32 %v1096, %v1501
        %v1510 = vmul.f32 %v1103, %v1501
        %v1511 = vmul.f32 %v1110, %v1501
        %v1512 = vmul.f32 %v1117, %v1501
        %v1513 = vmul.f32 %v1124, %v1501
        %v1514 = vmul.f32 %v1131, %v1501
        %v1515 = vmul.f32 %v1138, %v1501
        %v1516 = vmul.f32 %v1145, %v1501
        %v1517 = vmul.f32 %v1152, %v1501
        %v1518 = vmul.f32 %v1159, %v1501
        %v1519 = vmul.f32 %v1166, %v1501
        %v1520 = vmul.f32 %v1173, %v1501
        %v1521 = vmul.f32 %v1180, %v1501
        %v1522 = vmul.f32 %v1187, %v1501
        %v1523 = vmul.f32 %v1194, %v1501
        %v1524 = vmul.f32 %v1201, %v1501
        %v1525 = vmul.f32 %v1208, %v1501
        %v1526 = vmul.f32 %v1215, %v1501
        %v1527 = vmul.f32 %v1222, %v1501
        %v1528 = vmul.f32 %v1229, %v1501
        %v1529 = vmul.f32 %v1236, %v1501
        %v1530 = vmul.f32 %v1243, %v1501
        %v1531 = vmul.f32 %v1250, %v1501
        %v1532 = vmul.f32 %v1257, %v1501
        %v1533 = vmul.f32 %v1264, %v1501
        %v1534 = vmul.f32 %v1271, %v1501
        %v1535 = vmul.f32 %v1278, %v1501
        %v1536 = vmul.f32 %v1285, %v1501
        %v1537 = vmul.f32 %v1292, %v1501
        %v1538 = vmul.f32 %v1299, %v1501
        %v1539 = vmul.f32 %v1306, %v1501
        %v1540 = vmul.f32 %v1313, %v1501
        %v1541 = vmul.f32 %v1320, %v1501
        %v1542 = vmul.f32 %v1327, %v1501
        %v1543 = vmul.f32 %v1334, %v1501
        %v1544 = vmul.f32 %v1341, %v1501
        %v1545 = vmul.f32 %v1348, %v1501
        %v1546 = vmul.f32 %v1355, %v1501
        %v1547 = vmul.f32 %v1362, %v1501
        %v1548 = vmul.f32 %v1369, %v1501
        %v1549 = vmul.f32 %v1376, %v1501
        %v1550 = vmul.f32 %v1383, %v1501
        %v1551 = vmul.f32 %v1390, %v1501
        %v1552 = vmul.f32 %v1397, %v1501
        %v1553 = vmul.f32 %v1404, %v1501
        %v1554 = vmul.f32 %v1411, %v1501
        %v1555 = vmul.f32 %v1418, %v1501
        %v1556 = vmul.f32 %v1425, %v1501
        %v1557 = vmul.f32 %v1432, %v1501
        %v1558 = vmul.f32 %v1439, %v1501
        %v1559 = vmul.f32 %v1446, %v1501
        %v1560 = vmul.f32 %v1453, %v1501
        %v1561 = vmul.f32 %v1460, %v1501
        %v1562 = vmul.f32 %v1467, %v1501
        %v1563 = vmul.f32 %v1474, %v1501
        %v1564 = vmul.f32 %v1481, %v1501
        %v1565 = vmul.f32 %v1488, %v1501
        %v1566 = vmul.f32 %v1495, %v1501
        %v1567 = vlaneseq
        %v1568 = vshrl.u32 %v1567, 7
        %v1569 = vsub.s32 0, %v1568
        %v1570 = vrot.slane %v679, %v1569
        %v1571 = vlaneseq
        %v1572 = vshrl.u32 %v1571, 7
        %v1573 = vsub.s32 0, %v1572
        %v1574 = vrot.slane %v693, %v1573
        %v1575 = vlaneseq
        %v1576 = vshrl.u32 %v1575, 7
        %v1577 = vsub.s32 0, %v1576
        %v1578 = vrot.slane %v701, %v1577
        %v1579 = vlaneseq
        %v1580 = vshrl.u32 %v1579, 7
        %v1581 = vsub.s32 0, %v1580
        %v1582 = vrot.slane %v703, %v1581
        %v1583 = vlaneseq
        %v1584 = vshrl.u32 %v1583, 7
        %v1585 = vsub.s32 0, %v1584
        %v1586 = vrot.slane %v686, %v1585
        %v1587 = vlaneseq
        %v1588 = vshrl.u32 %v1587, 7
        %v1589 = vsub.s32 0, %v1588
        %v1590 = vrot.slane %v700, %v1589
        %v1591 = vlaneseq
        %v1592 = vshrl.u32 %v1591, 7
        %v1593 = vsub.s32 0, %v1592
        %v1594 = vrot.slane %v702, %v1593
        %v1595 = vlaneseq
        %v1596 = vshrl.u32 %v1595, 7
        %v1597 = vsub.s32 0, %v1596
        %v1598 = vrot.slane %v704, %v1597
        %v1599 = vlaneseq
        %v1600 = vshrl.u32 %v1599, 7
        %v1601 = vsub.s32 0, %v1600
        %v1602 = vrot.slane %v728, %v1601
        %v1603 = vlaneseq
        %v1604 = vshrl.u32 %v1603, 7
        %v1605 = vsub.s32 0, %v1604
        %v1606 = vrot.slane %v742, %v1605
        %v1607 = vlaneseq
        %v1608 = vshrl.u32 %v1607, 7
        %v1609 = vsub.s32 0, %v1608
        %v1610 = vrot.slane %v750, %v1609
        %v1611 = vlaneseq
        %v1612 = vshrl.u32 %v1611, 7
        %v1613 = vsub.s32 0, %v1612
        %v1614 = vrot.slane %v752, %v1613
        %v1615 = vlaneseq
        %v1616 = vshrl.u32 %v1615, 7
        %v1617 = vsub.s32 0, %v1616
        %v1618 = vrot.slane %v735, %v1617
        %v1619 = vlaneseq
        %v1620 = vshrl.u32 %v1619, 7
        %v1621 = vsub.s32 0, %v1620
        %v1622 = vrot.slane %v749, %v1621
        %v1623 = vlaneseq
        %v1624 = vshrl.u32 %v1623, 7
        %v1625 = vsub.s32 0, %v1624
        %v1626 = vrot.slane %v751, %v1625
        %v1627 = vlaneseq
        %v1628 = vshrl.u32 %v1627, 7
        %v1629 = vsub.s32 0, %v1628
        %v1630 = vrot.slane %v753, %v1629
        %v1631 = vlaneseq
        %v1632 = vshrl.u32 %v1631, 7
        %v1633 = vsub.s32 0, %v1632
        %v1634 = vrot.slane %v777, %v1633
        %v1635 = vlaneseq
        %v1636 = vshrl.u32 %v1635, 7
        %v1637 = vsub.s32 0, %v1636
        %v1638 = vrot.slane %v791, %v1637
        %v1639 = vlaneseq
        %v1640 = vshrl.u32 %v1639, 7
        %v1641 = vsub.s32 0, %v1640
        %v1642 = vrot.slane %v799, %v1641
        %v1643 = vlaneseq
        %v1644 = vshrl.u32 %v1643, 7
        %v1645 = vsub.s32 0, %v1644
        %v1646 = vrot.slane %v801, %v1645
        %v1647 = vlaneseq
        %v1648 = vshrl.u32 %v1647, 7
        %v1649 = vsub.s32 0, %v1648
        %v1650 = vrot.slane %v784, %v1649
        %v1651 = vlaneseq
        %v1652 = vshrl.u32 %v1651, 7
        %v1653 = vsub.s32 0, %v1652
        %v1654 = vrot.slane %v798, %v1653
        %v1655 = vlaneseq
        %v1656 = vshrl.u32 %v1655, 7
        %v1657 = vsub.s32 0, %v1656
        %v1658 = vrot.slane %v800, %v1657
        %v1659 = vlaneseq
        %v1660 = vshrl.u32 %v1659, 7
        %v1661 = vsub.s32 0, %v1660
        %v1662 = vrot.slane %v802, %v1661
        %v1663 = vlaneseq
        %v1664 = vshrl.u32 %v1663, 7
        %v1665 = vsub.s32 0, %v1664
        %v1666 = vrot.slane %v826, %v1665
        %v1667 = vlaneseq
        %v1668 = vshrl.u32 %v1667, 7
        %v1669 = vsub.s32 0, %v1668
        %v1670 = vrot.slane %v840, %v1669
        %v1671 = vlaneseq
        %v1672 = vshrl.u32 %v1671, 7
        %v1673 = vsub.s32 0, %v1672
        %v1674 = vrot.slane %v848, %v1673
        %v1675 = vlaneseq
        %v1676 = vshrl.u32 %v1675, 7
        %v1677 = vsub.s32 0, %v1676
        %v1678 = vrot.slane %v850, %v1677
        %v1679 = vlaneseq
        %v1680 = vshrl.u32 %v1679, 7
        %v1681 = vsub.s32 0, %v1680
        %v1682 = vrot.slane %v833, %v1681
        %v1683 = vlaneseq
        %v1684 = vshrl.u32 %v1683, 7
        %v1685 = vsub.s32 0, %v1684
        %v1686 = vrot.slane %v847, %v1685
        %v1687 = vlaneseq
        %v1688 = vshrl.u32 %v1687, 7
        %v1689 = vsub.s32 0, %v1688
        %v1690 = vrot.slane %v849, %v1689
        %v1691 = vlaneseq
        %v1692 = vshrl.u32 %v1691, 7
        %v1693 = vsub.s32 0, %v1692
        %v1694 = vrot.slane %v851, %v1693
        %v1695 = vlaneseq
        %v1696 = vshrl.u32 %v1695, 7
        %v1697 = vsub.s32 0, %v1696
        %v1698 = vrot.slane %v875, %v1697
        %v1699 = vlaneseq
        %v1700 = vshrl.u32 %v1699, 7
        %v1701 = vsub.s32 0, %v1700
        %v1702 = vrot.slane %v889, %v1701
        %v1703 = vlaneseq
        %v1704 = vshrl.u32 %v1703, 7
        %v1705 = vsub.s32 0, %v1704
        %v1706 = vrot.slane %v897, %v1705
        %v1707 = vlaneseq
        %v1708 = vshrl.u32 %v1707, 7
        %v1709 = vsub.s32 0, %v1708
        %v1710 = vrot.slane %v899, %v1709
        %v1711 = vlaneseq
        %v1712 = vshrl.u32 %v1711, 7
        %v1713 = vsub.s32 0, %v1712
        %v1714 = vrot.slane %v882, %v1713
        %v1715 = vlaneseq
        %v1716 = vshrl.u32 %v1715, 7
        %v1717 = vsub.s32 0, %v1716
        %v1718 = vrot.slane %v896, %v1717
        %v1719 = vlaneseq
        %v1720 = vshrl.u32 %v1719, 7
        %v1721 = vsub.s32 0, %v1720
        %v1722 = vrot.slane %v898, %v1721
        %v1723 = vlaneseq
        %v1724 = vshrl.u32 %v1723, 7
        %v1725 = vsub.s32 0, %v1724
        %v1726 = vrot.slane %v900, %v1725
        %v1727 = vlaneseq
        %v1728 = vshrl.u32 %v1727, 7
        %v1729 = vsub.s32 0, %v1728
        %v1730 = vrot.slane %v924, %v1729
        %v1731 = vlaneseq
        %v1732 = vshrl.u32 %v1731, 7
        %v1733 = vsub.s32 0, %v1732
        %v1734 = vrot.slane %v938, %v1733
        %v1735 = vlaneseq
        %v1736 = vshrl.u32 %v1735, 7
        %v1737 = vsub.s32 0, %v1736
        %v1738 = vrot.slane %v946, %v1737
        %v1739 = vlaneseq
        %v1740 = vshrl.u32 %v1739, 7
        %v1741 = vsub.s32 0, %v1740
        %v1742 = vrot.slane %v948, %v1741
        %v1743 = vlaneseq
        %v1744 = vshrl.u32 %v1743, 7
        %v1745 = vsub.s32 0, %v1744
        %v1746 = vrot.slane %v931, %v1745
        %v1747 = vlaneseq
        %v1748 = vshrl.u32 %v1747, 7
        %v1749 = vsub.s32 0, %v1748
        %v1750 = vrot.slane %v945, %v1749
        %v1751 = vlaneseq
        %v1752 = vshrl.u32 %v1751, 7
        %v1753 = vsub.s32 0, %v1752
        %v1754 = vrot.slane %v947, %v1753
        %v1755 = vlaneseq
        %v1756 = vshrl.u32 %v1755, 7
        %v1757 = vsub.s32 0, %v1756
        %v1758 = vrot.slane %v949, %v1757
        %v1759 = vlaneseq
        %v1760 = vshrl.u32 %v1759, 7
        %v1761 = vsub.s32 0, %v1760
        %v1762 = vrot.slane %v973, %v1761
        %v1763 = vlaneseq
        %v1764 = vshrl.u32 %v1763, 7
        %v1765 = vsub.s32 0, %v1764
        %v1766 = vrot.slane %v987, %v1765
        %v1767 = vlaneseq
        %v1768 = vshrl.u32 %v1767, 7
        %v1769 = vsub.s32 0, %v1768
        %v1770 = vrot.slane %v995, %v1769
        %v1771 = vlaneseq
        %v1772 = vshrl.u32 %v1771, 7
        %v1773 = vsub.s32 0, %v1772
        %v1774 = vrot.slane %v997, %v1773
        %v1775 = vlaneseq
        %v1776 = vshrl.u32 %v1775, 7
        %v1777 = vsub.s32 0, %v1776
        %v1778 = vrot.slane %v980, %v1777
        %v1779 = vlaneseq
        %v1780 = vshrl.u32 %v1779, 7
        %v1781 = vsub.s32 0, %v1780
        %v1782 = vrot.slane %v994, %v1781
        %v1783 = vlaneseq
        %v1784 = vshrl.u32 %v1783, 7
        %v1785 = vsub.s32 0, %v1784
        %v1786 = vrot.slane %v996, %v1785
        %v1787 = vlaneseq
        %v1788 = vshrl.u32 %v1787, 7
        %v1789 = vsub.s32 0, %v1788
        %v1790 = vrot.slane %v998, %v1789
        %v1791 = vlaneseq
        %v1792 = vshrl.u32 %v1791, 7
        %v1793 = vsub.s32 0, %v1792
        %v1794 = vrot.slane %v1022, %v1793
        %v1795 = vlaneseq
        %v1796 = vshrl.u32 %v1795, 7
        %v1797 = vsub.s32 0, %v1796
        %v1798 = vrot.slane %v1036, %v1797
        %v1799 = vlaneseq
        %v1800 = vshrl.u32 %v1799, 7
        %v1801 = vsub.s32 0, %v1800
        %v1802 = vrot.slane %v1044, %v1801
        %v1803 = vlaneseq
        %v1804 = vshrl.u32 %v1803, 7
        %v1805 = vsub.s32 0, %v1804
        %v1806 = vrot.slane %v1046, %v1805
        %v1807 = vlaneseq
        %v1808 = vshrl.u32 %v1807, 7
        %v1809 = vsub.s32 0, %v1808
        %v1810 = vrot.slane %v1029, %v1809
        %v1811 = vlaneseq
        %v1812 = vshrl.u32 %v1811, 7
        %v1813 = vsub.s32 0, %v1812
        %v1814 = vrot.slane %v1043, %v1813
        %v1815 = vlaneseq
        %v1816 = vshrl.u32 %v1815, 7
        %v1817 = vsub.s32 0, %v1816
        %v1818 = vrot.slane %v1045, %v1817
        %v1819 = vlaneseq
        %v1820 = vshrl.u32 %v1819, 7
        %v1821 = vsub.s32 0, %v1820
        %v1822 = vrot.slane %v1047, %v1821
        %v1887 = vadd.f32 %v1570, %v1503
        %v1888 = vadd.f32 %v1574, %v1504
        %v1889 = vadd.f32 %v1578, %v1505
        %v1890 = vadd.f32 %v1582, %v1506
        %v1891 = vadd.f32 %v1586, %v1507
        %v1892 = vadd.f32 %v1590, %v1508
        %v1893 = vadd.f32 %v1594, %v1509
        %v1894 = vadd.f32 %v1598, %v1510
        %v1895 = vadd.f32 %v1602, %v1511
        %v1896 = vadd.f32 %v1606, %v1512
        %v1897 = vadd.f32 %v1610, %v1513
        %v1898 = vadd.f32 %v1614, %v1514
        %v1899 = vadd.f32 %v1618, %v1515
        %v1900 = vadd.f32 %v1622, %v1516
        %v1901 = vadd.f32 %v1626, %v1517
        %v1902 = vadd.f32 %v1630, %v1518
        %v1903 = vadd.f32 %v1634, %v1519
        %v1904 = vadd.f32 %v1638, %v1520
        %v1905 = vadd.f32 %v1642, %v1521
        %v1906 = vadd.f32 %v1646, %v1522
        %v1907 = vadd.f32 %v1650, %v1523
        %v1908 = vadd.f32 %v1654, %v1524
        %v1909 = vadd.f32 %v1658, %v1525
        %v1910 = vadd.f32 %v1662, %v1526
        %v1911 = vadd.f32 %v1666, %v1527
        %v1912 = vadd.f32 %v1670, %v1528
        %v1913 = vadd.f32 %v1674, %v1529
        %v1914 = vadd.f32 %v1678, %v1530
        %v1915 = vadd.f32 %v1682, %v1531
        %v1916 = vadd.f32 %v1686, %v1532
        %v1917 = vadd.f32 %v1690, %v1533
        %v1918 = vadd.f32 %v1694, %v1534
        %v1919 = vadd.f32 %v1698, %v1535
        %v1920 = vadd.f32 %v1702, %v1536
        %v1921 = vadd.f32 %v1706, %v1537
        %v1922 = vadd.f32 %v1710, %v1538
        %v1923 = vadd.f32 %v1714, %v1539
        %v1924 = vadd.f32 %v1718, %v1540
        %v1925 = vadd.f32 %v1722, %v1541
        %v1926 = vadd.f32 %v1726, %v1542
        %v1927 = vadd.f32 %v1730, %v1543
        %v1928 = vadd.f32 %v1734, %v1544
        %v1929 = vadd.f32 %v1738, %v1545
        %v1930 = vadd.f32 %v1742, %v1546
        %v1931 = vadd.f32 %v1746, %v1547
        %v1932 = vadd.f32 %v1750, %v1548
        %v1933 = vadd.f32 %v1754, %v1549
        %v1934 = vadd.f32 %v1758, %v1550
        %v1935 = vadd.f32 %v1762, %v1551
        %v1936 = vadd.f32 %v1766, %v1552
        %v1937 = vadd.f32 %v1770, %v1553
        %v1938 = vadd.f32 %v1774, %v1554
        %v1939 = vadd.f32 %v1778, %v1555
        %v1940 = vadd.f32 %v1782, %v1556
        %v1941 = vadd.f32 %v1786, %v1557
        %v1942 = vadd.f32 %v1790, %v1558
        %v1943 = vadd.f32 %v1794, %v1559
        %v1944 = vadd.f32 %v1798, %v1560
        %v1945 = vadd.f32 %v1802, %v1561
        %v1946 = vadd.f32 %v1806, %v1562
        %v1947 = vadd.f32 %v1810, %v1563
        %v1948 = vadd.f32 %v1814, %v1564
        %v1949 = vadd.f32 %v1818, %v1565
        %v1950 = vadd.f32 %v1822, %v1566
        %v1951 = vmax.f32 %v1887, 0.0
        %v1952 = vmax.f32 %v1888, 0.0
        %v1953 = vmax.f32 %v1889, 0.0
        %v1954 = vmax.f32 %v1890, 0.0
        %v1955 = vmax.f32 %v1891, 0.0
        %v1956 = vmax.f32 %v1892, 0.0
        %v1957 = vmax.f32 %v1893, 0.0
        %v1958 = vmax.f32 %v1894, 0.0
        %v1959 = vmax.f32 %v1895, 0.0
        %v1960 = vmax.f32 %v1896, 0.0
        %v1961 = vmax.f32 %v1897, 0.0
        %v1962 = vmax.f32 %v1898, 0.0
        %v1963 = vmax.f32 %v1899, 0.0
        %v1964 = vmax.f32 %v1900, 0.0
        %v1965 = vmax.f32 %v1901, 0.0
        %v1966 = vmax.f32 %v1902, 0.0
        %v1967 = vmax.f32 %v1903, 0.0
        %v1968 = vmax.f32 %v1904, 0.0
        %v1969 = vmax.f32 %v1905, 0.0
        %v1970 = vmax.f32 %v1906, 0.0
        %v1971 = vmax.f32 %v1907, 0.0
        %v1972 = vmax.f32 %v1908, 0.0
        %v1973 = vmax.f32 %v1909, 0.0
        %v1974 = vmax.f32 %v1910, 0.0
        %v1975 = vmax.f32 %v1911, 0.0
        %v1976 = vmax.f32 %v1912, 0.0
        %v1977 = vmax.f32 %v1913, 0.0
        %v1978 = vmax.f32 %v1914, 0.0
        %v1979 = vmax.f32 %v1915, 0.0
        %v1980 = vmax.f32 %v1916, 0.0
        %v1981 = vmax.f32 %v1917, 0.0
        %v1982 = vmax.f32 %v1918, 0.0
        %v1983 = vmax.f32 %v1919, 0.0
        %v1984 = vmax.f32 %v1920, 0.0
        %v1985 = vmax.f32 %v1921, 0.0
        %v1986 = vmax.f32 %v1922, 0.0
        %v1987 = vmax.f32 %v1923, 0.0
        %v1988 = vmax.f32 %v1924, 0.0
        %v1989 = vmax.f32 %v1925, 0.0
        %v1990 = vmax.f32 %v1926, 0.0
        %v1991 = vmax.f32 %v1927, 0.0
        %v1992 = vmax.f32 %v1928, 0.0
        %v1993 = vmax.f32 %v1929, 0.0
        %v1994 = vmax.f32 %v1930, 0.0
        %v1995 = vmax.f32 %v1931, 0.0
        %v1996 = vmax.f32 %v1932, 0.0
        %v1997 = vmax.f32 %v1933, 0.0
        %v1998 = vmax.f32 %v1934, 0.0
        %v1999 = vmax.f32 %v1935, 0.0
        %v2000 = vmax.f32 %v1936, 0.0
        %v2001 = vmax.f32 %v1937, 0.0
        %v2002 = vmax.f32 %v1938, 0.0
        %v2003 = vmax.f32 %v1939, 0.0
        %v2004 = vmax.f32 %v1940, 0.0
        %v2005 = vmax.f32 %v1941, 0.0
        %v2006 = vmax.f32 %v1942, 0.0
        %v2007 = vmax.f32 %v1943, 0.0
        %v2008 = vmax.f32 %v1944, 0.0
        %v2009 = vmax.f32 %v1945, 0.0
        %v2010 = vmax.f32 %v1946, 0.0
        %v2011 = vmax.f32 %v1947, 0.0
        %v2012 = vmax.f32 %v1948, 0.0
        %v2013 = vmax.f32 %v1949, 0.0
        %v2014 = vmax.f32 %v1950, 0.0
        %v2015 = vld [vmem:[%s5] sm:$0x1]
        %v2016 = vld [vmem:[%s6] sm:$0x1]
        %vm2017 = vcmask 130048
        %v2018 = vsel %vm2017, %v1951, 0.0
        %2019 = vadd.xlane.f32.xlu0 %v2018
        %v2020 = vpop.xlane.xlu0 %2019
        %v2021 = vsel %vm2017, %v1952, 0.0
        %2022 = vadd.xlane.f32.xlu0 %v2021
        %v2023 = vpop.xlane.xlu0 %2022
        %v2024 = vsel %vm2017, %v1953, 0.0
        %2025 = vadd.xlane.f32.xlu0 %v2024
        %v2026 = vpop.xlane.xlu0 %2025
        %v2027 = vsel %vm2017, %v1954, 0.0
        %2028 = vadd.xlane.f32.xlu0 %v2027
        %v2029 = vpop.xlane.xlu0 %2028
        %v2030 = vsel %vm2017, %v1955, 0.0
        %2031 = vadd.xlane.f32.xlu0 %v2030
        %v2032 = vpop.xlane.xlu0 %2031
        %v2033 = vsel %vm2017, %v1956, 0.0
        %2034 = vadd.xlane.f32.xlu0 %v2033
        %v2035 = vpop.xlane.xlu0 %2034
        %v2036 = vsel %vm2017, %v1957, 0.0
        %2037 = vadd.xlane.f32.xlu0 %v2036
        %v2038 = vpop.xlane.xlu0 %2037
        %v2039 = vsel %vm2017, %v1958, 0.0
        %2040 = vadd.xlane.f32.xlu0 %v2039
        %v2041 = vpop.xlane.xlu0 %2040
        %v2042 = vsel %vm2017, %v1959, 0.0
        %2043 = vadd.xlane.f32.xlu0 %v2042
        %v2044 = vpop.xlane.xlu0 %2043
        %v2045 = vsel %vm2017, %v1960, 0.0
        %2046 = vadd.xlane.f32.xlu0 %v2045
        %v2047 = vpop.xlane.xlu0 %2046
        %v2048 = vsel %vm2017, %v1961, 0.0
        %2049 = vadd.xlane.f32.xlu0 %v2048
        %v2050 = vpop.xlane.xlu0 %2049
        %v2051 = vsel %vm2017, %v1962, 0.0
        %2052 = vadd.xlane.f32.xlu0 %v2051
        %v2053 = vpop.xlane.xlu0 %2052
        %v2054 = vsel %vm2017, %v1963, 0.0
        %2055 = vadd.xlane.f32.xlu0 %v2054
        %v2056 = vpop.xlane.xlu0 %2055
        %v2057 = vsel %vm2017, %v1964, 0.0
        %2058 = vadd.xlane.f32.xlu0 %v2057
        %v2059 = vpop.xlane.xlu0 %2058
        %v2060 = vsel %vm2017, %v1965, 0.0
        %2061 = vadd.xlane.f32.xlu0 %v2060
        %v2062 = vpop.xlane.xlu0 %2061
        %v2063 = vsel %vm2017, %v1966, 0.0
        %2064 = vadd.xlane.f32.xlu0 %v2063
        %v2065 = vpop.xlane.xlu0 %2064
        %v2066 = vsel %vm2017, %v1967, 0.0
        %2067 = vadd.xlane.f32.xlu0 %v2066
        %v2068 = vpop.xlane.xlu0 %2067
        %v2069 = vsel %vm2017, %v1968, 0.0
        %2070 = vadd.xlane.f32.xlu0 %v2069
        %v2071 = vpop.xlane.xlu0 %2070
        %v2072 = vsel %vm2017, %v1969, 0.0
        %2073 = vadd.xlane.f32.xlu0 %v2072
        %v2074 = vpop.xlane.xlu0 %2073
        %v2075 = vsel %vm2017, %v1970, 0.0
        %2076 = vadd.xlane.f32.xlu0 %v2075
        %v2077 = vpop.xlane.xlu0 %2076
        %v2078 = vsel %vm2017, %v1971, 0.0
        %2079 = vadd.xlane.f32.xlu0 %v2078
        %v2080 = vpop.xlane.xlu0 %2079
        %v2081 = vsel %vm2017, %v1972, 0.0
        %2082 = vadd.xlane.f32.xlu0 %v2081
        %v2083 = vpop.xlane.xlu0 %2082
        %v2084 = vsel %vm2017, %v1973, 0.0
        %2085 = vadd.xlane.f32.xlu0 %v2084
        %v2086 = vpop.xlane.xlu0 %2085
        %v2087 = vsel %vm2017, %v1974, 0.0
        %2088 = vadd.xlane.f32.xlu0 %v2087
        %v2089 = vpop.xlane.xlu0 %2088
        %v2090 = vsel %vm2017, %v1975, 0.0
        %2091 = vadd.xlane.f32.xlu0 %v2090
        %v2092 = vpop.xlane.xlu0 %2091
        %v2093 = vsel %vm2017, %v1976, 0.0
        %2094 = vadd.xlane.f32.xlu0 %v2093
        %v2095 = vpop.xlane.xlu0 %2094
        %v2096 = vsel %vm2017, %v1977, 0.0
        %2097 = vadd.xlane.f32.xlu0 %v2096
        %v2098 = vpop.xlane.xlu0 %2097
        %v2099 = vsel %vm2017, %v1978, 0.0
        %2100 = vadd.xlane.f32.xlu0 %v2099
        %v2101 = vpop.xlane.xlu0 %2100
        %v2102 = vsel %vm2017, %v1979, 0.0
        %2103 = vadd.xlane.f32.xlu0 %v2102
        %v2104 = vpop.xlane.xlu0 %2103
        %v2105 = vsel %vm2017, %v1980, 0.0
        %2106 = vadd.xlane.f32.xlu0 %v2105
        %v2107 = vpop.xlane.xlu0 %2106
        %v2108 = vsel %vm2017, %v1981, 0.0
        %2109 = vadd.xlane.f32.xlu0 %v2108
        %v2110 = vpop.xlane.xlu0 %2109
        %v2111 = vsel %vm2017, %v1982, 0.0
        %2112 = vadd.xlane.f32.xlu0 %v2111
        %v2113 = vpop.xlane.xlu0 %2112
        %v2114 = vsel %vm2017, %v1983, 0.0
        %2115 = vadd.xlane.f32.xlu0 %v2114
        %v2116 = vpop.xlane.xlu0 %2115
        %v2117 = vsel %vm2017, %v1984, 0.0
        %2118 = vadd.xlane.f32.xlu0 %v2117
        %v2119 = vpop.xlane.xlu0 %2118
        %v2120 = vsel %vm2017, %v1985, 0.0
        %2121 = vadd.xlane.f32.xlu0 %v2120
        %v2122 = vpop.xlane.xlu0 %2121
        %v2123 = vsel %vm2017, %v1986, 0.0
        %2124 = vadd.xlane.f32.xlu0 %v2123
        %v2125 = vpop.xlane.xlu0 %2124
        %v2126 = vsel %vm2017, %v1987, 0.0
        %2127 = vadd.xlane.f32.xlu0 %v2126
        %v2128 = vpop.xlane.xlu0 %2127
        %v2129 = vsel %vm2017, %v1988, 0.0
        %2130 = vadd.xlane.f32.xlu0 %v2129
        %v2131 = vpop.xlane.xlu0 %2130
        %v2132 = vsel %vm2017, %v1989, 0.0
        %2133 = vadd.xlane.f32.xlu0 %v2132
        %v2134 = vpop.xlane.xlu0 %2133
        %v2135 = vsel %vm2017, %v1990, 0.0
        %2136 = vadd.xlane.f32.xlu0 %v2135
        %v2137 = vpop.xlane.xlu0 %2136
        %v2138 = vsel %vm2017, %v1991, 0.0
        %2139 = vadd.xlane.f32.xlu0 %v2138
        %v2140 = vpop.xlane.xlu0 %2139
        %v2141 = vsel %vm2017, %v1992, 0.0
        %2142 = vadd.xlane.f32.xlu0 %v2141
        %v2143 = vpop.xlane.xlu0 %2142
        %v2144 = vsel %vm2017, %v1993, 0.0
        %2145 = vadd.xlane.f32.xlu0 %v2144
        %v2146 = vpop.xlane.xlu0 %2145
        %v2147 = vsel %vm2017, %v1994, 0.0
        %2148 = vadd.xlane.f32.xlu0 %v2147
        %v2149 = vpop.xlane.xlu0 %2148
        %v2150 = vsel %vm2017, %v1995, 0.0
        %2151 = vadd.xlane.f32.xlu0 %v2150
        %v2152 = vpop.xlane.xlu0 %2151
        %v2153 = vsel %vm2017, %v1996, 0.0
        %2154 = vadd.xlane.f32.xlu0 %v2153
        %v2155 = vpop.xlane.xlu0 %2154
        %v2156 = vsel %vm2017, %v1997, 0.0
        %2157 = vadd.xlane.f32.xlu0 %v2156
        %v2158 = vpop.xlane.xlu0 %2157
        %v2159 = vsel %vm2017, %v1998, 0.0
        %2160 = vadd.xlane.f32.xlu0 %v2159
        %v2161 = vpop.xlane.xlu0 %2160
        %v2162 = vsel %vm2017, %v1999, 0.0
        %2163 = vadd.xlane.f32.xlu0 %v2162
        %v2164 = vpop.xlane.xlu0 %2163
        %v2165 = vsel %vm2017, %v2000, 0.0
        %2166 = vadd.xlane.f32.xlu0 %v2165
        %v2167 = vpop.xlane.xlu0 %2166
        %v2168 = vsel %vm2017, %v2001, 0.0
        %2169 = vadd.xlane.f32.xlu0 %v2168
        %v2170 = vpop.xlane.xlu0 %2169
        %v2171 = vsel %vm2017, %v2002, 0.0
        %2172 = vadd.xlane.f32.xlu0 %v2171
        %v2173 = vpop.xlane.xlu0 %2172
        %v2174 = vsel %vm2017, %v2003, 0.0
        %2175 = vadd.xlane.f32.xlu0 %v2174
        %v2176 = vpop.xlane.xlu0 %2175
        %v2177 = vsel %vm2017, %v2004, 0.0
        %2178 = vadd.xlane.f32.xlu0 %v2177
        %v2179 = vpop.xlane.xlu0 %2178
        %v2180 = vsel %vm2017, %v2005, 0.0
        %2181 = vadd.xlane.f32.xlu0 %v2180
        %v2182 = vpop.xlane.xlu0 %2181
        %v2183 = vsel %vm2017, %v2006, 0.0
        %2184 = vadd.xlane.f32.xlu0 %v2183
        %v2185 = vpop.xlane.xlu0 %2184
        %v2186 = vsel %vm2017, %v2007, 0.0
        %2187 = vadd.xlane.f32.xlu0 %v2186
        %v2188 = vpop.xlane.xlu0 %2187
        %v2189 = vsel %vm2017, %v2008, 0.0
        %2190 = vadd.xlane.f32.xlu0 %v2189
        %v2191 = vpop.xlane.xlu0 %2190
        %v2192 = vsel %vm2017, %v2009, 0.0
        %2193 = vadd.xlane.f32.xlu0 %v2192
        %v2194 = vpop.xlane.xlu0 %2193
        %v2195 = vsel %vm2017, %v2010, 0.0
        %2196 = vadd.xlane.f32.xlu0 %v2195
        %v2197 = vpop.xlane.xlu0 %2196
        %v2198 = vsel %vm2017, %v2011, 0.0
        %2199 = vadd.xlane.f32.xlu0 %v2198
        %v2200 = vpop.xlane.xlu0 %2199
        %v2201 = vsel %vm2017, %v2012, 0.0
        %2202 = vadd.xlane.f32.xlu0 %v2201
        %v2203 = vpop.xlane.xlu0 %2202
        %v2204 = vsel %vm2017, %v2013, 0.0
        %2205 = vadd.xlane.f32.xlu0 %v2204
        %v2206 = vpop.xlane.xlu0 %2205
        %v2207 = vsel %vm2017, %v2014, 0.0
        %2208 = vadd.xlane.f32.xlu0 %v2207
        %v2209 = vpop.xlane.xlu0 %2208
        %v2210 = vrcp.pop 16.0
        %v2211 = vmul.f32 %v2020, %v2210
        %v2212 = vmul.f32 %v2023, %v2210
        %v2213 = vmul.f32 %v2026, %v2210
        %v2214 = vmul.f32 %v2029, %v2210
        %v2215 = vmul.f32 %v2032, %v2210
        %v2216 = vmul.f32 %v2035, %v2210
        %v2217 = vmul.f32 %v2038, %v2210
        %v2218 = vmul.f32 %v2041, %v2210
        %v2219 = vmul.f32 %v2044, %v2210
        %v2220 = vmul.f32 %v2047, %v2210
        %v2221 = vmul.f32 %v2050, %v2210
        %v2222 = vmul.f32 %v2053, %v2210
        %v2223 = vmul.f32 %v2056, %v2210
        %v2224 = vmul.f32 %v2059, %v2210
        %v2225 = vmul.f32 %v2062, %v2210
        %v2226 = vmul.f32 %v2065, %v2210
        %v2227 = vmul.f32 %v2068, %v2210
        %v2228 = vmul.f32 %v2071, %v2210
        %v2229 = vmul.f32 %v2074, %v2210
        %v2230 = vmul.f32 %v2077, %v2210
        %v2231 = vmul.f32 %v2080, %v2210
        %v2232 = vmul.f32 %v2083, %v2210
        %v2233 = vmul.f32 %v2086, %v2210
        %v2234 = vmul.f32 %v2089, %v2210
        %v2235 = vmul.f32 %v2092, %v2210
        %v2236 = vmul.f32 %v2095, %v2210
        %v2237 = vmul.f32 %v2098, %v2210
        %v2238 = vmul.f32 %v2101, %v2210
        %v2239 = vmul.f32 %v2104, %v2210
        %v2240 = vmul.f32 %v2107, %v2210
        %v2241 = vmul.f32 %v2110, %v2210
        %v2242 = vmul.f32 %v2113, %v2210
        %v2243 = vmul.f32 %v2116, %v2210
        %v2244 = vmul.f32 %v2119, %v2210
        %v2245 = vmul.f32 %v2122, %v2210
        %v2246 = vmul.f32 %v2125, %v2210
        %v2247 = vmul.f32 %v2128, %v2210
        %v2248 = vmul.f32 %v2131, %v2210
        %v2249 = vmul.f32 %v2134, %v2210
        %v2250 = vmul.f32 %v2137, %v2210
        %v2251 = vmul.f32 %v2140, %v2210
        %v2252 = vmul.f32 %v2143, %v2210
        %v2253 = vmul.f32 %v2146, %v2210
        %v2254 = vmul.f32 %v2149, %v2210
        %v2255 = vmul.f32 %v2152, %v2210
        %v2256 = vmul.f32 %v2155, %v2210
        %v2257 = vmul.f32 %v2158, %v2210
        %v2258 = vmul.f32 %v2161, %v2210
        %v2259 = vmul.f32 %v2164, %v2210
        %v2260 = vmul.f32 %v2167, %v2210
        %v2261 = vmul.f32 %v2170, %v2210
        %v2262 = vmul.f32 %v2173, %v2210
        %v2263 = vmul.f32 %v2176, %v2210
        %v2264 = vmul.f32 %v2179, %v2210
        %v2265 = vmul.f32 %v2182, %v2210
        %v2266 = vmul.f32 %v2185, %v2210
        %v2267 = vmul.f32 %v2188, %v2210
        %v2268 = vmul.f32 %v2191, %v2210
        %v2269 = vmul.f32 %v2194, %v2210
        %v2270 = vmul.f32 %v2197, %v2210
        %v2271 = vmul.f32 %v2200, %v2210
        %v2272 = vmul.f32 %v2203, %v2210
        %v2273 = vmul.f32 %v2206, %v2210
        %v2274 = vmul.f32 %v2209, %v2210
        %v2275 = vsub.f32 %v1951, %v2211
        %v2276 = vsub.f32 %v1952, %v2212
        %v2277 = vsub.f32 %v1953, %v2213
        %v2278 = vsub.f32 %v1954, %v2214
        %v2279 = vsub.f32 %v1955, %v2215
        %v2280 = vsub.f32 %v1956, %v2216
        %v2281 = vsub.f32 %v1957, %v2217
        %v2282 = vsub.f32 %v1958, %v2218
        %v2283 = vsub.f32 %v1959, %v2219
        %v2284 = vsub.f32 %v1960, %v2220
        %v2285 = vsub.f32 %v1961, %v2221
        %v2286 = vsub.f32 %v1962, %v2222
        %v2287 = vsub.f32 %v1963, %v2223
        %v2288 = vsub.f32 %v1964, %v2224
        %v2289 = vsub.f32 %v1965, %v2225
        %v2290 = vsub.f32 %v1966, %v2226
        %v2291 = vsub.f32 %v1967, %v2227
        %v2292 = vsub.f32 %v1968, %v2228
        %v2293 = vsub.f32 %v1969, %v2229
        %v2294 = vsub.f32 %v1970, %v2230
        %v2295 = vsub.f32 %v1971, %v2231
        %v2296 = vsub.f32 %v1972, %v2232
        %v2297 = vsub.f32 %v1973, %v2233
        %v2298 = vsub.f32 %v1974, %v2234
        %v2299 = vsub.f32 %v1975, %v2235
        %v2300 = vsub.f32 %v1976, %v2236
        %v2301 = vsub.f32 %v1977, %v2237
        %v2302 = vsub.f32 %v1978, %v2238
        %v2303 = vsub.f32 %v1979, %v2239
        %v2304 = vsub.f32 %v1980, %v2240
        %v2305 = vsub.f32 %v1981, %v2241
        %v2306 = vsub.f32 %v1982, %v2242
        %v2307 = vsub.f32 %v1983, %v2243
        %v2308 = vsub.f32 %v1984, %v2244
        %v2309 = vsub.f32 %v1985, %v2245
        %v2310 = vsub.f32 %v1986, %v2246
        %v2311 = vsub.f32 %v1987, %v2247
        %v2312 = vsub.f32 %v1988, %v2248
        %v2313 = vsub.f32 %v1989, %v2249
        %v2314 = vsub.f32 %v1990, %v2250
        %v2315 = vsub.f32 %v1991, %v2251
        %v2316 = vsub.f32 %v1992, %v2252
        %v2317 = vsub.f32 %v1993, %v2253
        %v2318 = vsub.f32 %v1994, %v2254
        %v2319 = vsub.f32 %v1995, %v2255
        %v2320 = vsub.f32 %v1996, %v2256
        %v2321 = vsub.f32 %v1997, %v2257
        %v2322 = vsub.f32 %v1998, %v2258
        %v2323 = vsub.f32 %v1999, %v2259
        %v2324 = vsub.f32 %v2000, %v2260
        %v2325 = vsub.f32 %v2001, %v2261
        %v2326 = vsub.f32 %v2002, %v2262
        %v2327 = vsub.f32 %v2003, %v2263
        %v2328 = vsub.f32 %v2004, %v2264
        %v2329 = vsub.f32 %v2005, %v2265
        %v2330 = vsub.f32 %v2006, %v2266
        %v2331 = vsub.f32 %v2007, %v2267
        %v2332 = vsub.f32 %v2008, %v2268
        %v2333 = vsub.f32 %v2009, %v2269
        %v2334 = vsub.f32 %v2010, %v2270
        %v2335 = vsub.f32 %v2011, %v2271
        %v2336 = vsub.f32 %v2012, %v2272
        %v2337 = vsub.f32 %v2013, %v2273
        %v2338 = vsub.f32 %v2014, %v2274
        %v2339 = vmul.f32 %v2275, %v2275
        %v2340 = vmul.f32 %v2276, %v2276
        %v2341 = vmul.f32 %v2277, %v2277
        %v2342 = vmul.f32 %v2278, %v2278
        %v2343 = vmul.f32 %v2279, %v2279
        %v2344 = vmul.f32 %v2280, %v2280
        %v2345 = vmul.f32 %v2281, %v2281
        %v2346 = vmul.f32 %v2282, %v2282
        %v2347 = vmul.f32 %v2283, %v2283
        %v2348 = vmul.f32 %v2284, %v2284
        %v2349 = vmul.f32 %v2285, %v2285
        %v2350 = vmul.f32 %v2286, %v2286
        %v2351 = vmul.f32 %v2287, %v2287
        %v2352 = vmul.f32 %v2288, %v2288
        %v2353 = vmul.f32 %v2289, %v2289
        %v2354 = vmul.f32 %v2290, %v2290
        %v2355 = vmul.f32 %v2291, %v2291
        %v2356 = vmul.f32 %v2292, %v2292
        %v2357 = vmul.f32 %v2293, %v2293
        %v2358 = vmul.f32 %v2294, %v2294
        %v2359 = vmul.f32 %v2295, %v2295
        %v2360 = vmul.f32 %v2296, %v2296
        %v2361 = vmul.f32 %v2297, %v2297
        %v2362 = vmul.f32 %v2298, %v2298
        %v2363 = vmul.f32 %v2299, %v2299
        %v2364 = vmul.f32 %v2300, %v2300
        %v2365 = vmul.f32 %v2301, %v2301
        %v2366 = vmul.f32 %v2302, %v2302
        %v2367 = vmul.f32 %v2303, %v2303
        %v2368 = vmul.f32 %v2304, %v2304
        %v2369 = vmul.f32 %v2305, %v2305
        %v2370 = vmul.f32 %v2306, %v2306
        %v2371 = vmul.f32 %v2307, %v2307
        %v2372 = vmul.f32 %v2308, %v2308
        %v2373 = vmul.f32 %v2309, %v2309
        %v2374 = vmul.f32 %v2310, %v2310
        %v2375 = vmul.f32 %v2311, %v2311
        %v2376 = vmul.f32 %v2312, %v2312
        %v2377 = vmul.f32 %v2313, %v2313
        %v2378 = vmul.f32 %v2314, %v2314
        %v2379 = vmul.f32 %v2315, %v2315
        %v2380 = vmul.f32 %v2316, %v2316
        %v2381 = vmul.f32 %v2317, %v2317
        %v2382 = vmul.f32 %v2318, %v2318
        %v2383 = vmul.f32 %v2319, %v2319
        %v2384 = vmul.f32 %v2320, %v2320
        %v2385 = vmul.f32 %v2321, %v2321
        %v2386 = vmul.f32 %v2322, %v2322
        %v2387 = vmul.f32 %v2323, %v2323
        %v2388 = vmul.f32 %v2324, %v2324
        %v2389 = vmul.f32 %v2325, %v2325
        %v2390 = vmul.f32 %v2326, %v2326
        %v2391 = vmul.f32 %v2327, %v2327
        %v2392 = vmul.f32 %v2328, %v2328
        %v2393 = vmul.f32 %v2329, %v2329
        %v2394 = vmul.f32 %v2330, %v2330
        %v2395 = vmul.f32 %v2331, %v2331
        %v2396 = vmul.f32 %v2332, %v2332
        %v2397 = vmul.f32 %v2333, %v2333
        %v2398 = vmul.f32 %v2334, %v2334
        %v2399 = vmul.f32 %v2335, %v2335
        %v2400 = vmul.f32 %v2336, %v2336
        %v2401 = vmul.f32 %v2337, %v2337
        %v2402 = vmul.f32 %v2338, %v2338
        %v2403 = vsel %vm2017, %v2339, 0.0
        %2404 = vadd.xlane.f32.xlu0 %v2403
        %v2405 = vpop.xlane.xlu0 %2404
        %v2406 = vsel %vm2017, %v2340, 0.0
        %2407 = vadd.xlane.f32.xlu0 %v2406
        %v2408 = vpop.xlane.xlu0 %2407
        %v2409 = vsel %vm2017, %v2341, 0.0
        %2410 = vadd.xlane.f32.xlu0 %v2409
        %v2411 = vpop.xlane.xlu0 %2410
        %v2412 = vsel %vm2017, %v2342, 0.0
        %2413 = vadd.xlane.f32.xlu0 %v2412
        %v2414 = vpop.xlane.xlu0 %2413
        %v2415 = vsel %vm2017, %v2343, 0.0
        %2416 = vadd.xlane.f32.xlu0 %v2415
        %v2417 = vpop.xlane.xlu0 %2416
        %v2418 = vsel %vm2017, %v2344, 0.0
        %2419 = vadd.xlane.f32.xlu0 %v2418
        %v2420 = vpop.xlane.xlu0 %2419
        %v2421 = vsel %vm2017, %v2345, 0.0
        %2422 = vadd.xlane.f32.xlu0 %v2421
        %v2423 = vpop.xlane.xlu0 %2422
        %v2424 = vsel %vm2017, %v2346, 0.0
        %2425 = vadd.xlane.f32.xlu0 %v2424
        %v2426 = vpop.xlane.xlu0 %2425
        %v2427 = vsel %vm2017, %v2347, 0.0
        %2428 = vadd.xlane.f32.xlu0 %v2427
        %v2429 = vpop.xlane.xlu0 %2428
        %v2430 = vsel %vm2017, %v2348, 0.0
        %2431 = vadd.xlane.f32.xlu0 %v2430
        %v2432 = vpop.xlane.xlu0 %2431
        %v2433 = vsel %vm2017, %v2349, 0.0
        %2434 = vadd.xlane.f32.xlu0 %v2433
        %v2435 = vpop.xlane.xlu0 %2434
        %v2436 = vsel %vm2017, %v2350, 0.0
        %2437 = vadd.xlane.f32.xlu0 %v2436
        %v2438 = vpop.xlane.xlu0 %2437
        %v2439 = vsel %vm2017, %v2351, 0.0
        %2440 = vadd.xlane.f32.xlu0 %v2439
        %v2441 = vpop.xlane.xlu0 %2440
        %v2442 = vsel %vm2017, %v2352, 0.0
        %2443 = vadd.xlane.f32.xlu0 %v2442
        %v2444 = vpop.xlane.xlu0 %2443
        %v2445 = vsel %vm2017, %v2353, 0.0
        %2446 = vadd.xlane.f32.xlu0 %v2445
        %v2447 = vpop.xlane.xlu0 %2446
        %v2448 = vsel %vm2017, %v2354, 0.0
        %2449 = vadd.xlane.f32.xlu0 %v2448
        %v2450 = vpop.xlane.xlu0 %2449
        %v2451 = vsel %vm2017, %v2355, 0.0
        %2452 = vadd.xlane.f32.xlu0 %v2451
        %v2453 = vpop.xlane.xlu0 %2452
        %v2454 = vsel %vm2017, %v2356, 0.0
        %2455 = vadd.xlane.f32.xlu0 %v2454
        %v2456 = vpop.xlane.xlu0 %2455
        %v2457 = vsel %vm2017, %v2357, 0.0
        %2458 = vadd.xlane.f32.xlu0 %v2457
        %v2459 = vpop.xlane.xlu0 %2458
        %v2460 = vsel %vm2017, %v2358, 0.0
        %2461 = vadd.xlane.f32.xlu0 %v2460
        %v2462 = vpop.xlane.xlu0 %2461
        %v2463 = vsel %vm2017, %v2359, 0.0
        %2464 = vadd.xlane.f32.xlu0 %v2463
        %v2465 = vpop.xlane.xlu0 %2464
        %v2466 = vsel %vm2017, %v2360, 0.0
        %2467 = vadd.xlane.f32.xlu0 %v2466
        %v2468 = vpop.xlane.xlu0 %2467
        %v2469 = vsel %vm2017, %v2361, 0.0
        %2470 = vadd.xlane.f32.xlu0 %v2469
        %v2471 = vpop.xlane.xlu0 %2470
        %v2472 = vsel %vm2017, %v2362, 0.0
        %2473 = vadd.xlane.f32.xlu0 %v2472
        %v2474 = vpop.xlane.xlu0 %2473
        %v2475 = vsel %vm2017, %v2363, 0.0
        %2476 = vadd.xlane.f32.xlu0 %v2475
        %v2477 = vpop.xlane.xlu0 %2476
        %v2478 = vsel %vm2017, %v2364, 0.0
        %2479 = vadd.xlane.f32.xlu0 %v2478
        %v2480 = vpop.xlane.xlu0 %2479
        %v2481 = vsel %vm2017, %v2365, 0.0
        %2482 = vadd.xlane.f32.xlu0 %v2481
        %v2483 = vpop.xlane.xlu0 %2482
        %v2484 = vsel %vm2017, %v2366, 0.0
        %2485 = vadd.xlane.f32.xlu0 %v2484
        %v2486 = vpop.xlane.xlu0 %2485
        %v2487 = vsel %vm2017, %v2367, 0.0
        %2488 = vadd.xlane.f32.xlu0 %v2487
        %v2489 = vpop.xlane.xlu0 %2488
        %v2490 = vsel %vm2017, %v2368, 0.0
        %2491 = vadd.xlane.f32.xlu0 %v2490
        %v2492 = vpop.xlane.xlu0 %2491
        %v2493 = vsel %vm2017, %v2369, 0.0
        %2494 = vadd.xlane.f32.xlu0 %v2493
        %v2495 = vpop.xlane.xlu0 %2494
        %v2496 = vsel %vm2017, %v2370, 0.0
        %2497 = vadd.xlane.f32.xlu0 %v2496
        %v2498 = vpop.xlane.xlu0 %2497
        %v2499 = vsel %vm2017, %v2371, 0.0
        %2500 = vadd.xlane.f32.xlu0 %v2499
        %v2501 = vpop.xlane.xlu0 %2500
        %v2502 = vsel %vm2017, %v2372, 0.0
        %2503 = vadd.xlane.f32.xlu0 %v2502
        %v2504 = vpop.xlane.xlu0 %2503
        %v2505 = vsel %vm2017, %v2373, 0.0
        %2506 = vadd.xlane.f32.xlu0 %v2505
        %v2507 = vpop.xlane.xlu0 %2506
        %v2508 = vsel %vm2017, %v2374, 0.0
        %2509 = vadd.xlane.f32.xlu0 %v2508
        %v2510 = vpop.xlane.xlu0 %2509
        %v2511 = vsel %vm2017, %v2375, 0.0
        %2512 = vadd.xlane.f32.xlu0 %v2511
        %v2513 = vpop.xlane.xlu0 %2512
        %v2514 = vsel %vm2017, %v2376, 0.0
        %2515 = vadd.xlane.f32.xlu0 %v2514
        %v2516 = vpop.xlane.xlu0 %2515
        %v2517 = vsel %vm2017, %v2377, 0.0
        %2518 = vadd.xlane.f32.xlu0 %v2517
        %v2519 = vpop.xlane.xlu0 %2518
        %v2520 = vsel %vm2017, %v2378, 0.0
        %2521 = vadd.xlane.f32.xlu0 %v2520
        %v2522 = vpop.xlane.xlu0 %2521
        %v2523 = vsel %vm2017, %v2379, 0.0
        %2524 = vadd.xlane.f32.xlu0 %v2523
        %v2525 = vpop.xlane.xlu0 %2524
        %v2526 = vsel %vm2017, %v2380, 0.0
        %2527 = vadd.xlane.f32.xlu0 %v2526
        %v2528 = vpop.xlane.xlu0 %2527
        %v2529 = vsel %vm2017, %v2381, 0.0
        %2530 = vadd.xlane.f32.xlu0 %v2529
        %v2531 = vpop.xlane.xlu0 %2530
        %v2532 = vsel %vm2017, %v2382, 0.0
        %2533 = vadd.xlane.f32.xlu0 %v2532
        %v2534 = vpop.xlane.xlu0 %2533
        %v2535 = vsel %vm2017, %v2383, 0.0
        %2536 = vadd.xlane.f32.xlu0 %v2535
        %v2537 = vpop.xlane.xlu0 %2536
        %v2538 = vsel %vm2017, %v2384, 0.0
        %2539 = vadd.xlane.f32.xlu0 %v2538
        %v2540 = vpop.xlane.xlu0 %2539
        %v2541 = vsel %vm2017, %v2385, 0.0
        %2542 = vadd.xlane.f32.xlu0 %v2541
        %v2543 = vpop.xlane.xlu0 %2542
        %v2544 = vsel %vm2017, %v2386, 0.0
        %2545 = vadd.xlane.f32.xlu0 %v2544
        %v2546 = vpop.xlane.xlu0 %2545
        %v2547 = vsel %vm2017, %v2387, 0.0
        %2548 = vadd.xlane.f32.xlu0 %v2547
        %v2549 = vpop.xlane.xlu0 %2548
        %v2550 = vsel %vm2017, %v2388, 0.0
        %2551 = vadd.xlane.f32.xlu0 %v2550
        %v2552 = vpop.xlane.xlu0 %2551
        %v2553 = vsel %vm2017, %v2389, 0.0
        %2554 = vadd.xlane.f32.xlu0 %v2553
        %v2555 = vpop.xlane.xlu0 %2554
        %v2556 = vsel %vm2017, %v2390, 0.0
        %2557 = vadd.xlane.f32.xlu0 %v2556
        %v2558 = vpop.xlane.xlu0 %2557
        %v2559 = vsel %vm2017, %v2391, 0.0
        %2560 = vadd.xlane.f32.xlu0 %v2559
        %v2561 = vpop.xlane.xlu0 %2560
        %v2562 = vsel %vm2017, %v2392, 0.0
        %2563 = vadd.xlane.f32.xlu0 %v2562
        %v2564 = vpop.xlane.xlu0 %2563
        %v2565 = vsel %vm2017, %v2393, 0.0
        %2566 = vadd.xlane.f32.xlu0 %v2565
        %v2567 = vpop.xlane.xlu0 %2566
        %v2568 = vsel %vm2017, %v2394, 0.0
        %2569 = vadd.xlane.f32.xlu0 %v2568
        %v2570 = vpop.xlane.xlu0 %2569
        %v2571 = vsel %vm2017, %v2395, 0.0
        %2572 = vadd.xlane.f32.xlu0 %v2571
        %v2573 = vpop.xlane.xlu0 %2572
        %v2574 = vsel %vm2017, %v2396, 0.0
        %2575 = vadd.xlane.f32.xlu0 %v2574
        %v2576 = vpop.xlane.xlu0 %2575
        %v2577 = vsel %vm2017, %v2397, 0.0
        %2578 = vadd.xlane.f32.xlu0 %v2577
        %v2579 = vpop.xlane.xlu0 %2578
        %v2580 = vsel %vm2017, %v2398, 0.0
        %2581 = vadd.xlane.f32.xlu0 %v2580
        %v2582 = vpop.xlane.xlu0 %2581
        %v2583 = vsel %vm2017, %v2399, 0.0
        %2584 = vadd.xlane.f32.xlu0 %v2583
        %v2585 = vpop.xlane.xlu0 %2584
        %v2586 = vsel %vm2017, %v2400, 0.0
        %2587 = vadd.xlane.f32.xlu0 %v2586
        %v2588 = vpop.xlane.xlu0 %2587
        %v2589 = vsel %vm2017, %v2401, 0.0
        %2590 = vadd.xlane.f32.xlu0 %v2589
        %v2591 = vpop.xlane.xlu0 %2590
        %v2592 = vsel %vm2017, %v2402, 0.0
        %2593 = vadd.xlane.f32.xlu0 %v2592
        %v2594 = vpop.xlane.xlu0 %2593
        %v2595 = vmul.f32 %v2405, %v2210
        %v2596 = vmul.f32 %v2408, %v2210
        %v2597 = vmul.f32 %v2411, %v2210
        %v2598 = vmul.f32 %v2414, %v2210
        %v2599 = vmul.f32 %v2417, %v2210
        %v2600 = vmul.f32 %v2420, %v2210
        %v2601 = vmul.f32 %v2423, %v2210
        %v2602 = vmul.f32 %v2426, %v2210
        %v2603 = vmul.f32 %v2429, %v2210
        %v2604 = vmul.f32 %v2432, %v2210
        %v2605 = vmul.f32 %v2435, %v2210
        %v2606 = vmul.f32 %v2438, %v2210
        %v2607 = vmul.f32 %v2441, %v2210
        %v2608 = vmul.f32 %v2444, %v2210
        %v2609 = vmul.f32 %v2447, %v2210
        %v2610 = vmul.f32 %v2450, %v2210
        %v2611 = vmul.f32 %v2453, %v2210
        %v2612 = vmul.f32 %v2456, %v2210
        %v2613 = vmul.f32 %v2459, %v2210
        %v2614 = vmul.f32 %v2462, %v2210
        %v2615 = vmul.f32 %v2465, %v2210
        %v2616 = vmul.f32 %v2468, %v2210
        %v2617 = vmul.f32 %v2471, %v2210
        %v2618 = vmul.f32 %v2474, %v2210
        %v2619 = vmul.f32 %v2477, %v2210
        %v2620 = vmul.f32 %v2480, %v2210
        %v2621 = vmul.f32 %v2483, %v2210
        %v2622 = vmul.f32 %v2486, %v2210
        %v2623 = vmul.f32 %v2489, %v2210
        %v2624 = vmul.f32 %v2492, %v2210
        %v2625 = vmul.f32 %v2495, %v2210
        %v2626 = vmul.f32 %v2498, %v2210
        %v2627 = vmul.f32 %v2501, %v2210
        %v2628 = vmul.f32 %v2504, %v2210
        %v2629 = vmul.f32 %v2507, %v2210
        %v2630 = vmul.f32 %v2510, %v2210
        %v2631 = vmul.f32 %v2513, %v2210
        %v2632 = vmul.f32 %v2516, %v2210
        %v2633 = vmul.f32 %v2519, %v2210
        %v2634 = vmul.f32 %v2522, %v2210
        %v2635 = vmul.f32 %v2525, %v2210
        %v2636 = vmul.f32 %v2528, %v2210
        %v2637 = vmul.f32 %v2531, %v2210
        %v2638 = vmul.f32 %v2534, %v2210
        %v2639 = vmul.f32 %v2537, %v2210
        %v2640 = vmul.f32 %v2540, %v2210
        %v2641 = vmul.f32 %v2543, %v2210
        %v2642 = vmul.f32 %v2546, %v2210
        %v2643 = vmul.f32 %v2549, %v2210
        %v2644 = vmul.f32 %v2552, %v2210
        %v2645 = vmul.f32 %v2555, %v2210
        %v2646 = vmul.f32 %v2558, %v2210
        %v2647 = vmul.f32 %v2561, %v2210
        %v2648 = vmul.f32 %v2564, %v2210
        %v2649 = vmul.f32 %v2567, %v2210
        %v2650 = vmul.f32 %v2570, %v2210
        %v2651 = vmul.f32 %v2573, %v2210
        %v2652 = vmul.f32 %v2576, %v2210
        %v2653 = vmul.f32 %v2579, %v2210
        %v2654 = vmul.f32 %v2582, %v2210
        %v2655 = vmul.f32 %v2585, %v2210
        %v2656 = vmul.f32 %v2588, %v2210
        %v2657 = vmul.f32 %v2591, %v2210
        %v2658 = vmul.f32 %v2594, %v2210
        %v2659 = vadd.f32 %v2595, 1e-05
        %v2660 = vadd.f32 %v2596, 1e-05
        %v2661 = vadd.f32 %v2597, 1e-05
        %v2662 = vadd.f32 %v2598, 1e-05
        %v2663 = vadd.f32 %v2599, 1e-05
        %v2664 = vadd.f32 %v2600, 1e-05
        %v2665 = vadd.f32 %v2601, 1e-05
        %v2666 = vadd.f32 %v2602, 1e-05
        %v2667 = vadd.f32 %v2603, 1e-05
        %v2668 = vadd.f32 %v2604, 1e-05
        %v2669 = vadd.f32 %v2605, 1e-05
        %v2670 = vadd.f32 %v2606, 1e-05
        %v2671 = vadd.f32 %v2607, 1e-05
        %v2672 = vadd.f32 %v2608, 1e-05
        %v2673 = vadd.f32 %v2609, 1e-05
        %v2674 = vadd.f32 %v2610, 1e-05
        %v2675 = vadd.f32 %v2611, 1e-05
        %v2676 = vadd.f32 %v2612, 1e-05
        %v2677 = vadd.f32 %v2613, 1e-05
        %v2678 = vadd.f32 %v2614, 1e-05
        %v2679 = vadd.f32 %v2615, 1e-05
        %v2680 = vadd.f32 %v2616, 1e-05
        %v2681 = vadd.f32 %v2617, 1e-05
        %v2682 = vadd.f32 %v2618, 1e-05
        %v2683 = vadd.f32 %v2619, 1e-05
        %v2684 = vadd.f32 %v2620, 1e-05
        %v2685 = vadd.f32 %v2621, 1e-05
        %v2686 = vadd.f32 %v2622, 1e-05
        %v2687 = vadd.f32 %v2623, 1e-05
        %v2688 = vadd.f32 %v2624, 1e-05
        %v2689 = vadd.f32 %v2625, 1e-05
        %v2690 = vadd.f32 %v2626, 1e-05
        %v2691 = vadd.f32 %v2627, 1e-05
        %v2692 = vadd.f32 %v2628, 1e-05
        %v2693 = vadd.f32 %v2629, 1e-05
        %v2694 = vadd.f32 %v2630, 1e-05
        %v2695 = vadd.f32 %v2631, 1e-05
        %v2696 = vadd.f32 %v2632, 1e-05
        %v2697 = vadd.f32 %v2633, 1e-05
        %v2698 = vadd.f32 %v2634, 1e-05
        %v2699 = vadd.f32 %v2635, 1e-05
        %v2700 = vadd.f32 %v2636, 1e-05
        %v2701 = vadd.f32 %v2637, 1e-05
        %v2702 = vadd.f32 %v2638, 1e-05
        %v2703 = vadd.f32 %v2639, 1e-05
        %v2704 = vadd.f32 %v2640, 1e-05
        %v2705 = vadd.f32 %v2641, 1e-05
        %v2706 = vadd.f32 %v2642, 1e-05
        %v2707 = vadd.f32 %v2643, 1e-05
        %v2708 = vadd.f32 %v2644, 1e-05
        %v2709 = vadd.f32 %v2645, 1e-05
        %v2710 = vadd.f32 %v2646, 1e-05
        %v2711 = vadd.f32 %v2647, 1e-05
        %v2712 = vadd.f32 %v2648, 1e-05
        %v2713 = vadd.f32 %v2649, 1e-05
        %v2714 = vadd.f32 %v2650, 1e-05
        %v2715 = vadd.f32 %v2651, 1e-05
        %v2716 = vadd.f32 %v2652, 1e-05
        %v2717 = vadd.f32 %v2653, 1e-05
        %v2718 = vadd.f32 %v2654, 1e-05
        %v2719 = vadd.f32 %v2655, 1e-05
        %v2720 = vadd.f32 %v2656, 1e-05
        %v2721 = vadd.f32 %v2657, 1e-05
        %v2722 = vadd.f32 %v2658, 1e-05
        %v2723 = vrsqrt.pop %v2659
        %v2724 = vrsqrt.pop %v2660
        %v2725 = vrsqrt.pop %v2661
        %v2726 = vrsqrt.pop %v2662
        %v2727 = vrsqrt.pop %v2663
        %v2728 = vrsqrt.pop %v2664
        %v2729 = vrsqrt.pop %v2665
        %v2730 = vrsqrt.pop %v2666
        %v2731 = vrsqrt.pop %v2667
        %v2732 = vrsqrt.pop %v2668
        %v2733 = vrsqrt.pop %v2669
        %v2734 = vrsqrt.pop %v2670
        %v2735 = vrsqrt.pop %v2671
        %v2736 = vrsqrt.pop %v2672
        %v2737 = vrsqrt.pop %v2673
        %v2738 = vrsqrt.pop %v2674
        %v2739 = vrsqrt.pop %v2675
        %v2740 = vrsqrt.pop %v2676
        %v2741 = vrsqrt.pop %v2677
        %v2742 = vrsqrt.pop %v2678
        %v2743 = vrsqrt.pop %v2679
        %v2744 = vrsqrt.pop %v2680
        %v2745 = vrsqrt.pop %v2681
        %v2746 = vrsqrt.pop %v2682
        %v2747 = vrsqrt.pop %v2683
        %v2748 = vrsqrt.pop %v2684
        %v2749 = vrsqrt.pop %v2685
        %v2750 = vrsqrt.pop %v2686
        %v2751 = vrsqrt.pop %v2687
        %v2752 = vrsqrt.pop %v2688
        %v2753 = vrsqrt.pop %v2689
        %v2754 = vrsqrt.pop %v2690
        %v2755 = vrsqrt.pop %v2691
        %v2756 = vrsqrt.pop %v2692
        %v2757 = vrsqrt.pop %v2693
        %v2758 = vrsqrt.pop %v2694
        %v2759 = vrsqrt.pop %v2695
        %v2760 = vrsqrt.pop %v2696
        %v2761 = vrsqrt.pop %v2697
        %v2762 = vrsqrt.pop %v2698
        %v2763 = vrsqrt.pop %v2699
        %v2764 = vrsqrt.pop %v2700
        %v2765 = vrsqrt.pop %v2701
        %v2766 = vrsqrt.pop %v2702
        %v2767 = vrsqrt.pop %v2703
        %v2768 = vrsqrt.pop %v2704
        %v2769 = vrsqrt.pop %v2705
        %v2770 = vrsqrt.pop %v2706
        %v2771 = vrsqrt.pop %v2707
        %v2772 = vrsqrt.pop %v2708
        %v2773 = vrsqrt.pop %v2709
        %v2774 = vrsqrt.pop %v2710
        %v2775 = vrsqrt.pop %v2711
        %v2776 = vrsqrt.pop %v2712
        %v2777 = vrsqrt.pop %v2713
        %v2778 = vrsqrt.pop %v2714
        %v2779 = vrsqrt.pop %v2715
        %v2780 = vrsqrt.pop %v2716
        %v2781 = vrsqrt.pop %v2717
        %v2782 = vrsqrt.pop %v2718
        %v2783 = vrsqrt.pop %v2719
        %v2784 = vrsqrt.pop %v2720
        %v2785 = vrsqrt.pop %v2721
        %v2786 = vrsqrt.pop %v2722
        %v2787 = vmul.f32 %v2275, %v2723
        %v2788 = vmul.f32 %v2276, %v2724
        %v2789 = vmul.f32 %v2277, %v2725
        %v2790 = vmul.f32 %v2278, %v2726
        %v2791 = vmul.f32 %v2279, %v2727
        %v2792 = vmul.f32 %v2280, %v2728
        %v2793 = vmul.f32 %v2281, %v2729
        %v2794 = vmul.f32 %v2282, %v2730
        %v2795 = vmul.f32 %v2283, %v2731
        %v2796 = vmul.f32 %v2284, %v2732
        %v2797 = vmul.f32 %v2285, %v2733
        %v2798 = vmul.f32 %v2286, %v2734
        %v2799 = vmul.f32 %v2287, %v2735
        %v2800 = vmul.f32 %v2288, %v2736
        %v2801 = vmul.f32 %v2289, %v2737
        %v2802 = vmul.f32 %v2290, %v2738
        %v2803 = vmul.f32 %v2291, %v2739
        %v2804 = vmul.f32 %v2292, %v2740
        %v2805 = vmul.f32 %v2293, %v2741
        %v2806 = vmul.f32 %v2294, %v2742
        %v2807 = vmul.f32 %v2295, %v2743
        %v2808 = vmul.f32 %v2296, %v2744
        %v2809 = vmul.f32 %v2297, %v2745
        %v2810 = vmul.f32 %v2298, %v2746
        %v2811 = vmul.f32 %v2299, %v2747
        %v2812 = vmul.f32 %v2300, %v2748
        %v2813 = vmul.f32 %v2301, %v2749
        %v2814 = vmul.f32 %v2302, %v2750
        %v2815 = vmul.f32 %v2303, %v2751
        %v2816 = vmul.f32 %v2304, %v2752
        %v2817 = vmul.f32 %v2305, %v2753
        %v2818 = vmul.f32 %v2306, %v2754
        %v2819 = vmul.f32 %v2307, %v2755
        %v2820 = vmul.f32 %v2308, %v2756
        %v2821 = vmul.f32 %v2309, %v2757
        %v2822 = vmul.f32 %v2310, %v2758
        %v2823 = vmul.f32 %v2311, %v2759
        %v2824 = vmul.f32 %v2312, %v2760
        %v2825 = vmul.f32 %v2313, %v2761
        %v2826 = vmul.f32 %v2314, %v2762
        %v2827 = vmul.f32 %v2315, %v2763
        %v2828 = vmul.f32 %v2316, %v2764
        %v2829 = vmul.f32 %v2317, %v2765
        %v2830 = vmul.f32 %v2318, %v2766
        %v2831 = vmul.f32 %v2319, %v2767
        %v2832 = vmul.f32 %v2320, %v2768
        %v2833 = vmul.f32 %v2321, %v2769
        %v2834 = vmul.f32 %v2322, %v2770
        %v2835 = vmul.f32 %v2323, %v2771
        %v2836 = vmul.f32 %v2324, %v2772
        %v2837 = vmul.f32 %v2325, %v2773
        %v2838 = vmul.f32 %v2326, %v2774
        %v2839 = vmul.f32 %v2327, %v2775
        %v2840 = vmul.f32 %v2328, %v2776
        %v2841 = vmul.f32 %v2329, %v2777
        %v2842 = vmul.f32 %v2330, %v2778
        %v2843 = vmul.f32 %v2331, %v2779
        %v2844 = vmul.f32 %v2332, %v2780
        %v2845 = vmul.f32 %v2333, %v2781
        %v2846 = vmul.f32 %v2334, %v2782
        %v2847 = vmul.f32 %v2335, %v2783
        %v2848 = vmul.f32 %v2336, %v2784
        %v2849 = vmul.f32 %v2337, %v2785
        %v2850 = vmul.f32 %v2338, %v2786
        %v2852 = vlaneseq
        %v2853 = vshrl.u32 %v2852, 7
        %v2854 = vsub.s32 0, %v2853
        %v2855 = vrot.slane %v2015, %v2854
        %v2857 = vmul.f32 %v2787, %v2855
        %v2858 = vmul.f32 %v2788, %v2855
        %v2859 = vmul.f32 %v2789, %v2855
        %v2860 = vmul.f32 %v2790, %v2855
        %v2861 = vmul.f32 %v2791, %v2855
        %v2862 = vmul.f32 %v2792, %v2855
        %v2863 = vmul.f32 %v2793, %v2855
        %v2864 = vmul.f32 %v2794, %v2855
        %v2865 = vmul.f32 %v2795, %v2855
        %v2866 = vmul.f32 %v2796, %v2855
        %v2867 = vmul.f32 %v2797, %v2855
        %v2868 = vmul.f32 %v2798, %v2855
        %v2869 = vmul.f32 %v2799, %v2855
        %v2870 = vmul.f32 %v2800, %v2855
        %v2871 = vmul.f32 %v2801, %v2855
        %v2872 = vmul.f32 %v2802, %v2855
        %v2873 = vmul.f32 %v2803, %v2855
        %v2874 = vmul.f32 %v2804, %v2855
        %v2875 = vmul.f32 %v2805, %v2855
        %v2876 = vmul.f32 %v2806, %v2855
        %v2877 = vmul.f32 %v2807, %v2855
        %v2878 = vmul.f32 %v2808, %v2855
        %v2879 = vmul.f32 %v2809, %v2855
        %v2880 = vmul.f32 %v2810, %v2855
        %v2881 = vmul.f32 %v2811, %v2855
        %v2882 = vmul.f32 %v2812, %v2855
        %v2883 = vmul.f32 %v2813, %v2855
        %v2884 = vmul.f32 %v2814, %v2855
        %v2885 = vmul.f32 %v2815, %v2855
        %v2886 = vmul.f32 %v2816, %v2855
        %v2887 = vmul.f32 %v2817, %v2855
        %v2888 = vmul.f32 %v2818, %v2855
        %v2889 = vmul.f32 %v2819, %v2855
        %v2890 = vmul.f32 %v2820, %v2855
        %v2891 = vmul.f32 %v2821, %v2855
        %v2892 = vmul.f32 %v2822, %v2855
        %v2893 = vmul.f32 %v2823, %v2855
        %v2894 = vmul.f32 %v2824, %v2855
        %v2895 = vmul.f32 %v2825, %v2855
        %v2896 = vmul.f32 %v2826, %v2855
        %v2897 = vmul.f32 %v2827, %v2855
        %v2898 = vmul.f32 %v2828, %v2855
        %v2899 = vmul.f32 %v2829, %v2855
        %v2900 = vmul.f32 %v2830, %v2855
        %v2901 = vmul.f32 %v2831, %v2855
        %v2902 = vmul.f32 %v2832, %v2855
        %v2903 = vmul.f32 %v2833, %v2855
        %v2904 = vmul.f32 %v2834, %v2855
        %v2905 = vmul.f32 %v2835, %v2855
        %v2906 = vmul.f32 %v2836, %v2855
        %v2907 = vmul.f32 %v2837, %v2855
        %v2908 = vmul.f32 %v2838, %v2855
        %v2909 = vmul.f32 %v2839, %v2855
        %v2910 = vmul.f32 %v2840, %v2855
        %v2911 = vmul.f32 %v2841, %v2855
        %v2912 = vmul.f32 %v2842, %v2855
        %v2913 = vmul.f32 %v2843, %v2855
        %v2914 = vmul.f32 %v2844, %v2855
        %v2915 = vmul.f32 %v2845, %v2855
        %v2916 = vmul.f32 %v2846, %v2855
        %v2917 = vmul.f32 %v2847, %v2855
        %v2918 = vmul.f32 %v2848, %v2855
        %v2919 = vmul.f32 %v2849, %v2855
        %v2920 = vmul.f32 %v2850, %v2855
        %v2922 = vlaneseq
        %v2923 = vshrl.u32 %v2922, 7
        %v2924 = vsub.s32 0, %v2923
        %v2925 = vrot.slane %v2016, %v2924
        %v2927 = vadd.f32 %v2857, %v2925
        %v2928 = vadd.f32 %v2858, %v2925
        %v2929 = vadd.f32 %v2859, %v2925
        %v2930 = vadd.f32 %v2860, %v2925
        %v2931 = vadd.f32 %v2861, %v2925
        %v2932 = vadd.f32 %v2862, %v2925
        %v2933 = vadd.f32 %v2863, %v2925
        %v2934 = vadd.f32 %v2864, %v2925
        %v2935 = vadd.f32 %v2865, %v2925
        %v2936 = vadd.f32 %v2866, %v2925
        %v2937 = vadd.f32 %v2867, %v2925
        %v2938 = vadd.f32 %v2868, %v2925
        %v2939 = vadd.f32 %v2869, %v2925
        %v2940 = vadd.f32 %v2870, %v2925
        %v2941 = vadd.f32 %v2871, %v2925
        %v2942 = vadd.f32 %v2872, %v2925
        %v2943 = vadd.f32 %v2873, %v2925
        %v2944 = vadd.f32 %v2874, %v2925
        %v2945 = vadd.f32 %v2875, %v2925
        %v2946 = vadd.f32 %v2876, %v2925
        %v2947 = vadd.f32 %v2877, %v2925
        %v2948 = vadd.f32 %v2878, %v2925
        %v2949 = vadd.f32 %v2879, %v2925
        %v2950 = vadd.f32 %v2880, %v2925
        %v2951 = vadd.f32 %v2881, %v2925
        %v2952 = vadd.f32 %v2882, %v2925
        %v2953 = vadd.f32 %v2883, %v2925
        %v2954 = vadd.f32 %v2884, %v2925
        %v2955 = vadd.f32 %v2885, %v2925
        %v2956 = vadd.f32 %v2886, %v2925
        %v2957 = vadd.f32 %v2887, %v2925
        %v2958 = vadd.f32 %v2888, %v2925
        %v2959 = vadd.f32 %v2889, %v2925
        %v2960 = vadd.f32 %v2890, %v2925
        %v2961 = vadd.f32 %v2891, %v2925
        %v2962 = vadd.f32 %v2892, %v2925
        %v2963 = vadd.f32 %v2893, %v2925
        %v2964 = vadd.f32 %v2894, %v2925
        %v2965 = vadd.f32 %v2895, %v2925
        %v2966 = vadd.f32 %v2896, %v2925
        %v2967 = vadd.f32 %v2897, %v2925
        %v2968 = vadd.f32 %v2898, %v2925
        %v2969 = vadd.f32 %v2899, %v2925
        %v2970 = vadd.f32 %v2900, %v2925
        %v2971 = vadd.f32 %v2901, %v2925
        %v2972 = vadd.f32 %v2902, %v2925
        %v2973 = vadd.f32 %v2903, %v2925
        %v2974 = vadd.f32 %v2904, %v2925
        %v2975 = vadd.f32 %v2905, %v2925
        %v2976 = vadd.f32 %v2906, %v2925
        %v2977 = vadd.f32 %v2907, %v2925
        %v2978 = vadd.f32 %v2908, %v2925
        %v2979 = vadd.f32 %v2909, %v2925
        %v2980 = vadd.f32 %v2910, %v2925
        %v2981 = vadd.f32 %v2911, %v2925
        %v2982 = vadd.f32 %v2912, %v2925
        %v2983 = vadd.f32 %v2913, %v2925
        %v2984 = vadd.f32 %v2914, %v2925
        %v2985 = vadd.f32 %v2915, %v2925
        %v2986 = vadd.f32 %v2916, %v2925
        %v2987 = vadd.f32 %v2917, %v2925
        %v2988 = vadd.f32 %v2918, %v2925
        %v2989 = vadd.f32 %v2919, %v2925
        %v2990 = vadd.f32 %v2920, %v2925
        %v2991 = vld [vmem:[%s7] sm:$0xff]
        %v2992 = vld [vmem:[%s7 + $0x8] sm:$0xff]
        %v2993 = vld [vmem:[%s8] sm:$0x1]
        %v2995 = vlaneseq
        %v2996 = vshrl.u32 %v2995, 7
        %v2997 = vsub.s32 0, %v2996
        %v2998 = vrot.slane %v2993, %v2997
        %v3001 = vsel %vm2017, %v2927, 0
        %v3004 = vsel %vm2017, %v2928, 0
        %v3007 = vsel %vm2017, %v2929, 0
        %v3010 = vsel %vm2017, %v2930, 0
        %v3013 = vsel %vm2017, %v2931, 0
        %v3016 = vsel %vm2017, %v2932, 0
        %v3019 = vsel %vm2017, %v2933, 0
        %v3022 = vsel %vm2017, %v2934, 0
        %v3025 = vsel %vm2017, %v2935, 0
        %v3028 = vsel %vm2017, %v2936, 0
        %v3031 = vsel %vm2017, %v2937, 0
        %v3034 = vsel %vm2017, %v2938, 0
        %v3037 = vsel %vm2017, %v2939, 0
        %v3040 = vsel %vm2017, %v2940, 0
        %v3043 = vsel %vm2017, %v2941, 0
        %v3046 = vsel %vm2017, %v2942, 0
        %v3049 = vsel %vm2017, %v2943, 0
        %v3052 = vsel %vm2017, %v2944, 0
        %v3055 = vsel %vm2017, %v2945, 0
        %v3058 = vsel %vm2017, %v2946, 0
        %v3061 = vsel %vm2017, %v2947, 0
        %v3064 = vsel %vm2017, %v2948, 0
        %v3067 = vsel %vm2017, %v2949, 0
        %v3070 = vsel %vm2017, %v2950, 0
        %v3073 = vsel %vm2017, %v2951, 0
        %v3076 = vsel %vm2017, %v2952, 0
        %v3079 = vsel %vm2017, %v2953, 0
        %v3082 = vsel %vm2017, %v2954, 0
        %v3085 = vsel %vm2017, %v2955, 0
        %v3088 = vsel %vm2017, %v2956, 0
        %v3091 = vsel %vm2017, %v2957, 0
        %v3094 = vsel %vm2017, %v2958, 0
        %v3097 = vsel %vm2017, %v2959, 0
        %v3100 = vsel %vm2017, %v2960, 0
        %v3103 = vsel %vm2017, %v2961, 0
        %v3106 = vsel %vm2017, %v2962, 0
        %v3109 = vsel %vm2017, %v2963, 0
        %v3112 = vsel %vm2017, %v2964, 0
        %v3115 = vsel %vm2017, %v2965, 0
        %v3118 = vsel %vm2017, %v2966, 0
        %v3121 = vsel %vm2017, %v2967, 0
        %v3124 = vsel %vm2017, %v2968, 0
        %v3127 = vsel %vm2017, %v2969, 0
        %v3130 = vsel %vm2017, %v2970, 0
        %v3133 = vsel %vm2017, %v2971, 0
        %v3136 = vsel %vm2017, %v2972, 0
        %v3139 = vsel %vm2017, %v2973, 0
        %v3142 = vsel %vm2017, %v2974, 0
        %v3145 = vsel %vm2017, %v2975, 0
        %v3148 = vsel %vm2017, %v2976, 0
        %v3151 = vsel %vm2017, %v2977, 0
        %v3154 = vsel %vm2017, %v2978, 0
        %v3157 = vsel %vm2017, %v2979, 0
        %v3160 = vsel %vm2017, %v2980, 0
        %v3163 = vsel %vm2017, %v2981, 0
        %v3166 = vsel %vm2017, %v2982, 0
        %v3169 = vsel %vm2017, %v2983, 0
        %v3172 = vsel %vm2017, %v2984, 0
        %v3175 = vsel %vm2017, %v2985, 0
        %v3178 = vsel %vm2017, %v2986, 0
        %v3181 = vsel %vm2017, %v2987, 0
        %v3184 = vsel %vm2017, %v2988, 0
        %v3187 = vsel %vm2017, %v2989, 0
        %v3190 = vsel %vm2017, %v2990, 0
        %3192 = vmatprep.subr.mxu0 0.0
        %3193 = vmatpush1.msra.mxu0 0.0
        %3194 = vmatprep.subr.mxu0 0.0
        %3195 = vmatpush1.msra.mxu0 0.0
        %3196 = vmatprep.subr.mxu0 0.0
        %3197 = vmatpush1.msra.mxu0 0.0
        %3198 = vmatprep.subr.mxu0 0.0
        %3199 = vmatpush1.msra.mxu0 0.0
        %3200 = vmatprep.subr.mxu0 0.0
        %3201 = vmatpush1.msra.mxu0 0.0
        %3202 = vmatprep.subr.mxu0 0.0
        %3203 = vmatpush1.msra.mxu0 0.0
        %3204 = vmatprep.subr.mxu0 0.0
        %3205 = vmatpush1.msra.mxu0 0.0
        %3206 = vmatprep.subr.mxu0 0.0
        %3207 = vmatpush1.msra.mxu0 0.0
        %3208 = vmatprep.subr.mxu0 0.0
        %3209 = vmatpush1.msra.mxu0 0.0
        %3210 = vmatprep.subr.mxu0 0.0
        %3211 = vmatpush1.msra.mxu0 0.0
        %3212 = vmatprep.subr.mxu0 0.0
        %3213 = vmatpush1.msra.mxu0 0.0
        %3214 = vmatprep.subr.mxu0 0.0
        %3215 = vmatpush1.msra.mxu0 0.0
        %3216 = vmatprep.subr.mxu0 0.0
        %3217 = vmatpush1.msra.mxu0 0.0
        %3218 = vmatprep.subr.mxu0 0.0
        %3219 = vmatpush1.msra.mxu0 0.0
        %3220 = vmatprep.subr.mxu0 0.0
        %3221 = vmatpush1.msra.mxu0 %v2992
        %3222 = vmatprep.subr.mxu0 0.0
        %3223 = vmatpush1.msra.mxu0 %v2991
        %3224 = vmatprep.subr.mxu0 0.0
        %3225 = vmatpush2.msra.mxu0 0.0
        %3226 = vmatprep.subr.mxu0 0.0
        %3227 = vmatpush2.msra.mxu0 0.0
        %3228 = vmatprep.subr.mxu0 0.0
        %3229 = vmatpush2.msra.mxu0 0.0
        %3230 = vmatprep.subr.mxu0 0.0
        %3231 = vmatpush2.msra.mxu0 0.0
        %3232 = vmatprep.subr.mxu0 0.0
        %3233 = vmatpush2.msra.mxu0 0.0
        %3234 = vmatprep.subr.mxu0 0.0
        %3235 = vmatpush2.msra.mxu0 0.0
        %3236 = vmatprep.subr.mxu0 0.0
        %3237 = vmatpush2.msra.mxu0 0.0
        %3238 = vmatprep.subr.mxu0 0.0
        %3239 = vmatpush2.msra.mxu0 0.0
        %3240 = vmatprep.subr.mxu0 0.0
        %3241 = vmatpush2.msra.mxu0 0.0
        %3242 = vmatprep.subr.mxu0 0.0
        %3243 = vmatpush2.msra.mxu0 0.0
        %3244 = vmatprep.subr.mxu0 0.0
        %3245 = vmatpush2.msra.mxu0 0.0
        %3246 = vmatprep.subr.mxu0 0.0
        %3247 = vmatpush2.msra.mxu0 0.0
        %3248 = vmatprep.subr.mxu0 0.0
        %3249 = vmatpush2.msra.mxu0 0.0
        %3250 = vmatprep.subr.mxu0 0.0
        %3251 = vmatpush2.msra.mxu0 0.0
        %3252 = vmatprep.subr.mxu0 0.0
        %3253 = vmatpush2.msra.mxu0 0.0
        %3254 = vmatprep.subr.mxu0 0.0
        %3255 = vmatpush2.msra.mxu0 0.0
        %3256 = vmatprep.mubr.f32.mxu0 0.0
        %3257 = vmatmul.mubr.f32.gmra.mxu0 %v3001
        %v3258 = vpop.f32.mrf.mxu0
        %v3259 = vadd.f32 %v2998, %v3258
        %v3260 = vpop.f32.mrf.mxu0
        %3261 = vmatprep.mubr.f32.mxu0 0.0
        %3262 = vmatmul.mubr.f32.gmra.mxu0 %v3004
        %v3263 = vpop.f32.mrf.mxu0
        %v3264 = vadd.f32 %v2998, %v3263
        %v3265 = vpop.f32.mrf.mxu0
        %3266 = vmatprep.mubr.f32.mxu0 0.0
        %3267 = vmatmul.mubr.f32.gmra.mxu0 %v3007
        %v3268 = vpop.f32.mrf.mxu0
        %v3269 = vadd.f32 %v2998, %v3268
        %v3270 = vpop.f32.mrf.mxu0
        %3271 = vmatprep.mubr.f32.mxu0 0.0
        %3272 = vmatmul.mubr.f32.gmra.mxu0 %v3010
        %v3273 = vpop.f32.mrf.mxu0
        %v3274 = vadd.f32 %v2998, %v3273
        %v3275 = vpop.f32.mrf.mxu0
        %3276 = vmatprep.mubr.f32.mxu0 0.0
        %3277 = vmatmul.mubr.f32.gmra.mxu0 %v3013
        %v3278 = vpop.f32.mrf.mxu0
        %v3279 = vadd.f32 %v2998, %v3278
        %v3280 = vpop.f32.mrf.mxu0
        %3281 = vmatprep.mubr.f32.mxu0 0.0
        %3282 = vmatmul.mubr.f32.gmra.mxu0 %v3016
        %v3283 = vpop.f32.mrf.mxu0
        %v3284 = vadd.f32 %v2998, %v3283
        %v3285 = vpop.f32.mrf.mxu0
        %3286 = vmatprep.mubr.f32.mxu0 0.0
        %3287 = vmatmul.mubr.f32.gmra.mxu0 %v3019
        %v3288 = vpop.f32.mrf.mxu0
        %v3289 = vadd.f32 %v2998, %v3288
        %v3290 = vpop.f32.mrf.mxu0
        %3291 = vmatprep.mubr.f32.mxu0 0.0
        %3292 = vmatmul.mubr.f32.gmra.mxu0 %v3022
        %v3293 = vpop.f32.mrf.mxu0
        %v3294 = vadd.f32 %v2998, %v3293
        %v3295 = vpop.f32.mrf.mxu0
        %3296 = vmatprep.mubr.f32.mxu0 0.0
        %3297 = vmatmul.mubr.f32.gmra.mxu0 %v3025
        %v3298 = vpop.f32.mrf.mxu0
        %v3299 = vadd.f32 %v2998, %v3298
        %v3300 = vpop.f32.mrf.mxu0
        %3301 = vmatprep.mubr.f32.mxu0 0.0
        %3302 = vmatmul.mubr.f32.gmra.mxu0 %v3028
        %v3303 = vpop.f32.mrf.mxu0
        %v3304 = vadd.f32 %v2998, %v3303
        %v3305 = vpop.f32.mrf.mxu0
        %3306 = vmatprep.mubr.f32.mxu0 0.0
        %3307 = vmatmul.mubr.f32.gmra.mxu0 %v3031
        %v3308 = vpop.f32.mrf.mxu0
        %v3309 = vadd.f32 %v2998, %v3308
        %v3310 = vpop.f32.mrf.mxu0
        %3311 = vmatprep.mubr.f32.mxu0 0.0
        %3312 = vmatmul.mubr.f32.gmra.mxu0 %v3034
        %v3313 = vpop.f32.mrf.mxu0
        %v3314 = vadd.f32 %v2998, %v3313
        %v3315 = vpop.f32.mrf.mxu0
        %3316 = vmatprep.mubr.f32.mxu0 0.0
        %3317 = vmatmul.mubr.f32.gmra.mxu0 %v3037
        %v3318 = vpop.f32.mrf.mxu0
        %v3319 = vadd.f32 %v2998, %v3318
        %v3320 = vpop.f32.mrf.mxu0
        %3321 = vmatprep.mubr.f32.mxu0 0.0
        %3322 = vmatmul.mubr.f32.gmra.mxu0 %v3040
        %v3323 = vpop.f32.mrf.mxu0
        %v3324 = vadd.f32 %v2998, %v3323
        %v3325 = vpop.f32.mrf.mxu0
        %3326 = vmatprep.mubr.f32.mxu0 0.0
        %3327 = vmatmul.mubr.f32.gmra.mxu0 %v3043
        %v3328 = vpop.f32.mrf.mxu0
        %v3329 = vadd.f32 %v2998, %v3328
        %v3330 = vpop.f32.mrf.mxu0
        %3331 = vmatprep.mubr.f32.mxu0 0.0
        %3332 = vmatmul.mubr.f32.gmra.mxu0 %v3046
        %v3333 = vpop.f32.mrf.mxu0
        %v3334 = vadd.f32 %v2998, %v3333
        %v3335 = vpop.f32.mrf.mxu0
        %3336 = vmatprep.mubr.f32.mxu0 0.0
        %3337 = vmatmul.mubr.f32.gmra.mxu0 %v3049
        %v3338 = vpop.f32.mrf.mxu0
        %v3339 = vadd.f32 %v2998, %v3338
        %v3340 = vpop.f32.mrf.mxu0
        %3341 = vmatprep.mubr.f32.mxu0 0.0
        %3342 = vmatmul.mubr.f32.gmra.mxu0 %v3052
        %v3343 = vpop.f32.mrf.mxu0
        %v3344 = vadd.f32 %v2998, %v3343
        %v3345 = vpop.f32.mrf.mxu0
        %3346 = vmatprep.mubr.f32.mxu0 0.0
        %3347 = vmatmul.mubr.f32.gmra.mxu0 %v3055
        %v3348 = vpop.f32.mrf.mxu0
        %v3349 = vadd.f32 %v2998, %v3348
        %v3350 = vpop.f32.mrf.mxu0
        %3351 = vmatprep.mubr.f32.mxu0 0.0
        %3352 = vmatmul.mubr.f32.gmra.mxu0 %v3058
        %v3353 = vpop.f32.mrf.mxu0
        %v3354 = vadd.f32 %v2998, %v3353
        %v3355 = vpop.f32.mrf.mxu0
        %3356 = vmatprep.mubr.f32.mxu0 0.0
        %3357 = vmatmul.mubr.f32.gmra.mxu0 %v3061
        %v3358 = vpop.f32.mrf.mxu0
        %v3359 = vadd.f32 %v2998, %v3358
        %v3360 = vpop.f32.mrf.mxu0
        %3361 = vmatprep.mubr.f32.mxu0 0.0
        %3362 = vmatmul.mubr.f32.gmra.mxu0 %v3064
        %v3363 = vpop.f32.mrf.mxu0
        %v3364 = vadd.f32 %v2998, %v3363
        %v3365 = vpop.f32.mrf.mxu0
        %3366 = vmatprep.mubr.f32.mxu0 0.0
        %3367 = vmatmul.mubr.f32.gmra.mxu0 %v3067
        %v3368 = vpop.f32.mrf.mxu0
        %v3369 = vadd.f32 %v2998, %v3368
        %v3370 = vpop.f32.mrf.mxu0
        %3371 = vmatprep.mubr.f32.mxu0 0.0
        %3372 = vmatmul.mubr.f32.gmra.mxu0 %v3070
        %v3373 = vpop.f32.mrf.mxu0
        %v3374 = vadd.f32 %v2998, %v3373
        %v3375 = vpop.f32.mrf.mxu0
        %3376 = vmatprep.mubr.f32.mxu0 0.0
        %3377 = vmatmul.mubr.f32.gmra.mxu0 %v3073
        %v3378 = vpop.f32.mrf.mxu0
        %v3379 = vadd.f32 %v2998, %v3378
        %v3380 = vpop.f32.mrf.mxu0
        %3381 = vmatprep.mubr.f32.mxu0 0.0
        %3382 = vmatmul.mubr.f32.gmra.mxu0 %v3076
        %v3383 = vpop.f32.mrf.mxu0
        %v3384 = vadd.f32 %v2998, %v3383
        %v3385 = vpop.f32.mrf.mxu0
        %3386 = vmatprep.mubr.f32.mxu0 0.0
        %3387 = vmatmul.mubr.f32.gmra.mxu0 %v3079
        %v3388 = vpop.f32.mrf.mxu0
        %v3389 = vadd.f32 %v2998, %v3388
        %v3390 = vpop.f32.mrf.mxu0
        %3391 = vmatprep.mubr.f32.mxu0 0.0
        %3392 = vmatmul.mubr.f32.gmra.mxu0 %v3082
        %v3393 = vpop.f32.mrf.mxu0
        %v3394 = vadd.f32 %v2998, %v3393
        %v3395 = vpop.f32.mrf.mxu0
        %3396 = vmatprep.mubr.f32.mxu0 0.0
        %3397 = vmatmul.mubr.f32.gmra.mxu0 %v3085
        %v3398 = vpop.f32.mrf.mxu0
        %v3399 = vadd.f32 %v2998, %v3398
        %v3400 = vpop.f32.mrf.mxu0
        %3401 = vmatprep.mubr.f32.mxu0 0.0
        %3402 = vmatmul.mubr.f32.gmra.mxu0 %v3088
        %v3403 = vpop.f32.mrf.mxu0
        %v3404 = vadd.f32 %v2998, %v3403
        %v3405 = vpop.f32.mrf.mxu0
        %3406 = vmatprep.mubr.f32.mxu0 0.0
        %3407 = vmatmul.mubr.f32.gmra.mxu0 %v3091
        %v3408 = vpop.f32.mrf.mxu0
        %v3409 = vadd.f32 %v2998, %v3408
        %v3410 = vpop.f32.mrf.mxu0
        %3411 = vmatprep.mubr.f32.mxu0 0.0
        %3412 = vmatmul.mubr.f32.gmra.mxu0 %v3094
        %v3413 = vpop.f32.mrf.mxu0
        %v3414 = vadd.f32 %v2998, %v3413
        %v3415 = vpop.f32.mrf.mxu0
        %3416 = vmatprep.mubr.f32.mxu0 0.0
        %3417 = vmatmul.mubr.f32.gmra.mxu0 %v3097
        %v3418 = vpop.f32.mrf.mxu0
        %v3419 = vadd.f32 %v2998, %v3418
        %v3420 = vpop.f32.mrf.mxu0
        %3421 = vmatprep.mubr.f32.mxu0 0.0
        %3422 = vmatmul.mubr.f32.gmra.mxu0 %v3100
        %v3423 = vpop.f32.mrf.mxu0
        %v3424 = vadd.f32 %v2998, %v3423
        %v3425 = vpop.f32.mrf.mxu0
        %3426 = vmatprep.mubr.f32.mxu0 0.0
        %3427 = vmatmul.mubr.f32.gmra.mxu0 %v3103
        %v3428 = vpop.f32.mrf.mxu0
        %v3429 = vadd.f32 %v2998, %v3428
        %v3430 = vpop.f32.mrf.mxu0
        %3431 = vmatprep.mubr.f32.mxu0 0.0
        %3432 = vmatmul.mubr.f32.gmra.mxu0 %v3106
        %v3433 = vpop.f32.mrf.mxu0
        %v3434 = vadd.f32 %v2998, %v3433
        %v3435 = vpop.f32.mrf.mxu0
        %3436 = vmatprep.mubr.f32.mxu0 0.0
        %3437 = vmatmul.mubr.f32.gmra.mxu0 %v3109
        %v3438 = vpop.f32.mrf.mxu0
        %v3439 = vadd.f32 %v2998, %v3438
        %v3440 = vpop.f32.mrf.mxu0
        %3441 = vmatprep.mubr.f32.mxu0 0.0
        %3442 = vmatmul.mubr.f32.gmra.mxu0 %v3112
        %v3443 = vpop.f32.mrf.mxu0
        %v3444 = vadd.f32 %v2998, %v3443
        %v3445 = vpop.f32.mrf.mxu0
        %3446 = vmatprep.mubr.f32.mxu0 0.0
        %3447 = vmatmul.mubr.f32.gmra.mxu0 %v3115
        %v3448 = vpop.f32.mrf.mxu0
        %v3449 = vadd.f32 %v2998, %v3448
        %v3450 = vpop.f32.mrf.mxu0
        %3451 = vmatprep.mubr.f32.mxu0 0.0
        %3452 = vmatmul.mubr.f32.gmra.mxu0 %v3118
        %v3453 = vpop.f32.mrf.mxu0
        %v3454 = vadd.f32 %v2998, %v3453
        %v3455 = vpop.f32.mrf.mxu0
        %3456 = vmatprep.mubr.f32.mxu0 0.0
        %3457 = vmatmul.mubr.f32.gmra.mxu0 %v3121
        %v3458 = vpop.f32.mrf.mxu0
        %v3459 = vadd.f32 %v2998, %v3458
        %v3460 = vpop.f32.mrf.mxu0
        %3461 = vmatprep.mubr.f32.mxu0 0.0
        %3462 = vmatmul.mubr.f32.gmra.mxu0 %v3124
        %v3463 = vpop.f32.mrf.mxu0
        %v3464 = vadd.f32 %v2998, %v3463
        %v3465 = vpop.f32.mrf.mxu0
        %3466 = vmatprep.mubr.f32.mxu0 0.0
        %3467 = vmatmul.mubr.f32.gmra.mxu0 %v3127
        %v3468 = vpop.f32.mrf.mxu0
        %v3469 = vadd.f32 %v2998, %v3468
        %v3470 = vpop.f32.mrf.mxu0
        %3471 = vmatprep.mubr.f32.mxu0 0.0
        %3472 = vmatmul.mubr.f32.gmra.mxu0 %v3130
        %v3473 = vpop.f32.mrf.mxu0
        %v3474 = vadd.f32 %v2998, %v3473
        %v3475 = vpop.f32.mrf.mxu0
        %3476 = vmatprep.mubr.f32.mxu0 0.0
        %3477 = vmatmul.mubr.f32.gmra.mxu0 %v3133
        %v3478 = vpop.f32.mrf.mxu0
        %v3479 = vadd.f32 %v2998, %v3478
        %v3480 = vpop.f32.mrf.mxu0
        %3481 = vmatprep.mubr.f32.mxu0 0.0
        %3482 = vmatmul.mubr.f32.gmra.mxu0 %v3136
        %v3483 = vpop.f32.mrf.mxu0
        %v3484 = vadd.f32 %v2998, %v3483
        %v3485 = vpop.f32.mrf.mxu0
        %3486 = vmatprep.mubr.f32.mxu0 0.0
        %3487 = vmatmul.mubr.f32.gmra.mxu0 %v3139
        %v3488 = vpop.f32.mrf.mxu0
        %v3489 = vadd.f32 %v2998, %v3488
        %v3490 = vpop.f32.mrf.mxu0
        %3491 = vmatprep.mubr.f32.mxu0 0.0
        %3492 = vmatmul.mubr.f32.gmra.mxu0 %v3142
        %v3493 = vpop.f32.mrf.mxu0
        %v3494 = vadd.f32 %v2998, %v3493
        %v3495 = vpop.f32.mrf.mxu0
        %3496 = vmatprep.mubr.f32.mxu0 0.0
        %3497 = vmatmul.mubr.f32.gmra.mxu0 %v3145
        %v3498 = vpop.f32.mrf.mxu0
        %v3499 = vadd.f32 %v2998, %v3498
        %v3500 = vpop.f32.mrf.mxu0
        %3501 = vmatprep.mubr.f32.mxu0 0.0
        %3502 = vmatmul.mubr.f32.gmra.mxu0 %v3148
        %v3503 = vpop.f32.mrf.mxu0
        %v3504 = vadd.f32 %v2998, %v3503
        %v3505 = vpop.f32.mrf.mxu0
        %3506 = vmatprep.mubr.f32.mxu0 0.0
        %3507 = vmatmul.mubr.f32.gmra.mxu0 %v3151
        %v3508 = vpop.f32.mrf.mxu0
        %v3509 = vadd.f32 %v2998, %v3508
        %v3510 = vpop.f32.mrf.mxu0
        %3511 = vmatprep.mubr.f32.mxu0 0.0
        %3512 = vmatmul.mubr.f32.gmra.mxu0 %v3154
        %v3513 = vpop.f32.mrf.mxu0
        %v3514 = vadd.f32 %v2998, %v3513
        %v3515 = vpop.f32.mrf.mxu0
        %3516 = vmatprep.mubr.f32.mxu0 0.0
        %3517 = vmatmul.mubr.f32.gmra.mxu0 %v3157
        %v3518 = vpop.f32.mrf.mxu0
        %v3519 = vadd.f32 %v2998, %v3518
        %v3520 = vpop.f32.mrf.mxu0
        %3521 = vmatprep.mubr.f32.mxu0 0.0
        %3522 = vmatmul.mubr.f32.gmra.mxu0 %v3160
        %v3523 = vpop.f32.mrf.mxu0
        %v3524 = vadd.f32 %v2998, %v3523
        %v3525 = vpop.f32.mrf.mxu0
        %3526 = vmatprep.mubr.f32.mxu0 0.0
        %3527 = vmatmul.mubr.f32.gmra.mxu0 %v3163
        %v3528 = vpop.f32.mrf.mxu0
        %v3529 = vadd.f32 %v2998, %v3528
        %v3530 = vpop.f32.mrf.mxu0
        %3531 = vmatprep.mubr.f32.mxu0 0.0
        %3532 = vmatmul.mubr.f32.gmra.mxu0 %v3166
        %v3533 = vpop.f32.mrf.mxu0
        %v3534 = vadd.f32 %v2998, %v3533
        %v3535 = vpop.f32.mrf.mxu0
        %3536 = vmatprep.mubr.f32.mxu0 0.0
        %3537 = vmatmul.mubr.f32.gmra.mxu0 %v3169
        %v3538 = vpop.f32.mrf.mxu0
        %v3539 = vadd.f32 %v2998, %v3538
        %v3540 = vpop.f32.mrf.mxu0
        %3541 = vmatprep.mubr.f32.mxu0 0.0
        %3542 = vmatmul.mubr.f32.gmra.mxu0 %v3172
        %v3543 = vpop.f32.mrf.mxu0
        %v3544 = vadd.f32 %v2998, %v3543
        %v3545 = vpop.f32.mrf.mxu0
        %3546 = vmatprep.mubr.f32.mxu0 0.0
        %3547 = vmatmul.mubr.f32.gmra.mxu0 %v3175
        %v3548 = vpop.f32.mrf.mxu0
        %v3549 = vadd.f32 %v2998, %v3548
        %v3550 = vpop.f32.mrf.mxu0
        %3551 = vmatprep.mubr.f32.mxu0 0.0
        %3552 = vmatmul.mubr.f32.gmra.mxu0 %v3178
        %v3553 = vpop.f32.mrf.mxu0
        %v3554 = vadd.f32 %v2998, %v3553
        %v3555 = vpop.f32.mrf.mxu0
        %3556 = vmatprep.mubr.f32.mxu0 0.0
        %3557 = vmatmul.mubr.f32.gmra.mxu0 %v3181
        %v3558 = vpop.f32.mrf.mxu0
        %v3559 = vadd.f32 %v2998, %v3558
        %v3560 = vpop.f32.mrf.mxu0
        %3561 = vmatprep.mubr.f32.mxu0 0.0
        %3562 = vmatmul.mubr.f32.gmra.mxu0 %v3184
        %v3563 = vpop.f32.mrf.mxu0
        %v3564 = vadd.f32 %v2998, %v3563
        %v3565 = vpop.f32.mrf.mxu0
        %3566 = vmatprep.mubr.f32.mxu0 0.0
        %3567 = vmatmul.mubr.f32.gmra.mxu0 %v3187
        %v3568 = vpop.f32.mrf.mxu0
        %v3569 = vadd.f32 %v2998, %v3568
        %v3570 = vpop.f32.mrf.mxu0
        %3571 = vmatprep.mubr.f32.mxu0 0.0
        %3572 = vmatmul.mubr.f32.gmra.mxu0 %v3190
        %v3573 = vpop.f32.mrf.mxu0
        %v3574 = vadd.f32 %v2998, %v3573
        %v3575 = vpop.f32.mrf.mxu0
        %3576 = vdwg.mxu0
        %v3577 = vmax.f32 %v3259, 0.0
        %v3578 = vmax.f32 %v3264, 0.0
        %v3579 = vmax.f32 %v3269, 0.0
        %v3580 = vmax.f32 %v3274, 0.0
        %v3581 = vmax.f32 %v3279, 0.0
        %v3582 = vmax.f32 %v3284, 0.0
        %v3583 = vmax.f32 %v3289, 0.0
        %v3584 = vmax.f32 %v3294, 0.0
        %v3585 = vmax.f32 %v3299, 0.0
        %v3586 = vmax.f32 %v3304, 0.0
        %v3587 = vmax.f32 %v3309, 0.0
        %v3588 = vmax.f32 %v3314, 0.0
        %v3589 = vmax.f32 %v3319, 0.0
        %v3590 = vmax.f32 %v3324, 0.0
        %v3591 = vmax.f32 %v3329, 0.0
        %v3592 = vmax.f32 %v3334, 0.0
        %v3593 = vmax.f32 %v3339, 0.0
        %v3594 = vmax.f32 %v3344, 0.0
        %v3595 = vmax.f32 %v3349, 0.0
        %v3596 = vmax.f32 %v3354, 0.0
        %v3597 = vmax.f32 %v3359, 0.0
        %v3598 = vmax.f32 %v3364, 0.0
        %v3599 = vmax.f32 %v3369, 0.0
        %v3600 = vmax.f32 %v3374, 0.0
        %v3601 = vmax.f32 %v3379, 0.0
        %v3602 = vmax.f32 %v3384, 0.0
        %v3603 = vmax.f32 %v3389, 0.0
        %v3604 = vmax.f32 %v3394, 0.0
        %v3605 = vmax.f32 %v3399, 0.0
        %v3606 = vmax.f32 %v3404, 0.0
        %v3607 = vmax.f32 %v3409, 0.0
        %v3608 = vmax.f32 %v3414, 0.0
        %v3609 = vmax.f32 %v3419, 0.0
        %v3610 = vmax.f32 %v3424, 0.0
        %v3611 = vmax.f32 %v3429, 0.0
        %v3612 = vmax.f32 %v3434, 0.0
        %v3613 = vmax.f32 %v3439, 0.0
        %v3614 = vmax.f32 %v3444, 0.0
        %v3615 = vmax.f32 %v3449, 0.0
        %v3616 = vmax.f32 %v3454, 0.0
        %v3617 = vmax.f32 %v3459, 0.0
        %v3618 = vmax.f32 %v3464, 0.0
        %v3619 = vmax.f32 %v3469, 0.0
        %v3620 = vmax.f32 %v3474, 0.0
        %v3621 = vmax.f32 %v3479, 0.0
        %v3622 = vmax.f32 %v3484, 0.0
        %v3623 = vmax.f32 %v3489, 0.0
        %v3624 = vmax.f32 %v3494, 0.0
        %v3625 = vmax.f32 %v3499, 0.0
        %v3626 = vmax.f32 %v3504, 0.0
        %v3627 = vmax.f32 %v3509, 0.0
        %v3628 = vmax.f32 %v3514, 0.0
        %v3629 = vmax.f32 %v3519, 0.0
        %v3630 = vmax.f32 %v3524, 0.0
        %v3631 = vmax.f32 %v3529, 0.0
        %v3632 = vmax.f32 %v3534, 0.0
        %v3633 = vmax.f32 %v3539, 0.0
        %v3634 = vmax.f32 %v3544, 0.0
        %v3635 = vmax.f32 %v3549, 0.0
        %v3636 = vmax.f32 %v3554, 0.0
        %v3637 = vmax.f32 %v3559, 0.0
        %v3638 = vmax.f32 %v3564, 0.0
        %v3639 = vmax.f32 %v3569, 0.0
        %v3640 = vmax.f32 %v3574, 0.0
        %v3641 = vld [vmem:[%s9] sm:$0x1]
        %v3642 = vld [vmem:[%s10] sm:$0x1]
        %v3643 = vsel %vm2017, %v3577, 0.0
        %3644 = vadd.xlane.f32.xlu0 %v3643
        %v3645 = vpop.xlane.xlu0 %3644
        %v3646 = vsel %vm2017, %v3578, 0.0
        %3647 = vadd.xlane.f32.xlu0 %v3646
        %v3648 = vpop.xlane.xlu0 %3647
        %v3649 = vsel %vm2017, %v3579, 0.0
        %3650 = vadd.xlane.f32.xlu0 %v3649
        %v3651 = vpop.xlane.xlu0 %3650
        %v3652 = vsel %vm2017, %v3580, 0.0
        %3653 = vadd.xlane.f32.xlu0 %v3652
        %v3654 = vpop.xlane.xlu0 %3653
        %v3655 = vsel %vm2017, %v3581, 0.0
        %3656 = vadd.xlane.f32.xlu0 %v3655
        %v3657 = vpop.xlane.xlu0 %3656
        %v3658 = vsel %vm2017, %v3582, 0.0
        %3659 = vadd.xlane.f32.xlu0 %v3658
        %v3660 = vpop.xlane.xlu0 %3659
        %v3661 = vsel %vm2017, %v3583, 0.0
        %3662 = vadd.xlane.f32.xlu0 %v3661
        %v3663 = vpop.xlane.xlu0 %3662
        %v3664 = vsel %vm2017, %v3584, 0.0
        %3665 = vadd.xlane.f32.xlu0 %v3664
        %v3666 = vpop.xlane.xlu0 %3665
        %v3667 = vsel %vm2017, %v3585, 0.0
        %3668 = vadd.xlane.f32.xlu0 %v3667
        %v3669 = vpop.xlane.xlu0 %3668
        %v3670 = vsel %vm2017, %v3586, 0.0
        %3671 = vadd.xlane.f32.xlu0 %v3670
        %v3672 = vpop.xlane.xlu0 %3671
        %v3673 = vsel %vm2017, %v3587, 0.0
        %3674 = vadd.xlane.f32.xlu0 %v3673
        %v3675 = vpop.xlane.xlu0 %3674
        %v3676 = vsel %vm2017, %v3588, 0.0
        %3677 = vadd.xlane.f32.xlu0 %v3676
        %v3678 = vpop.xlane.xlu0 %3677
        %v3679 = vsel %vm2017, %v3589, 0.0
        %3680 = vadd.xlane.f32.xlu0 %v3679
        %v3681 = vpop.xlane.xlu0 %3680
        %v3682 = vsel %vm2017, %v3590, 0.0
        %3683 = vadd.xlane.f32.xlu0 %v3682
        %v3684 = vpop.xlane.xlu0 %3683
        %v3685 = vsel %vm2017, %v3591, 0.0
        %3686 = vadd.xlane.f32.xlu0 %v3685
        %v3687 = vpop.xlane.xlu0 %3686
        %v3688 = vsel %vm2017, %v3592, 0.0
        %3689 = vadd.xlane.f32.xlu0 %v3688
        %v3690 = vpop.xlane.xlu0 %3689
        %v3691 = vsel %vm2017, %v3593, 0.0
        %3692 = vadd.xlane.f32.xlu0 %v3691
        %v3693 = vpop.xlane.xlu0 %3692
        %v3694 = vsel %vm2017, %v3594, 0.0
        %3695 = vadd.xlane.f32.xlu0 %v3694
        %v3696 = vpop.xlane.xlu0 %3695
        %v3697 = vsel %vm2017, %v3595, 0.0
        %3698 = vadd.xlane.f32.xlu0 %v3697
        %v3699 = vpop.xlane.xlu0 %3698
        %v3700 = vsel %vm2017, %v3596, 0.0
        %3701 = vadd.xlane.f32.xlu0 %v3700
        %v3702 = vpop.xlane.xlu0 %3701
        %v3703 = vsel %vm2017, %v3597, 0.0
        %3704 = vadd.xlane.f32.xlu0 %v3703
        %v3705 = vpop.xlane.xlu0 %3704
        %v3706 = vsel %vm2017, %v3598, 0.0
        %3707 = vadd.xlane.f32.xlu0 %v3706
        %v3708 = vpop.xlane.xlu0 %3707
        %v3709 = vsel %vm2017, %v3599, 0.0
        %3710 = vadd.xlane.f32.xlu0 %v3709
        %v3711 = vpop.xlane.xlu0 %3710
        %v3712 = vsel %vm2017, %v3600, 0.0
        %3713 = vadd.xlane.f32.xlu0 %v3712
        %v3714 = vpop.xlane.xlu0 %3713
        %v3715 = vsel %vm2017, %v3601, 0.0
        %3716 = vadd.xlane.f32.xlu0 %v3715
        %v3717 = vpop.xlane.xlu0 %3716
        %v3718 = vsel %vm2017, %v3602, 0.0
        %3719 = vadd.xlane.f32.xlu0 %v3718
        %v3720 = vpop.xlane.xlu0 %3719
        %v3721 = vsel %vm2017, %v3603, 0.0
        %3722 = vadd.xlane.f32.xlu0 %v3721
        %v3723 = vpop.xlane.xlu0 %3722
        %v3724 = vsel %vm2017, %v3604, 0.0
        %3725 = vadd.xlane.f32.xlu0 %v3724
        %v3726 = vpop.xlane.xlu0 %3725
        %v3727 = vsel %vm2017, %v3605, 0.0
        %3728 = vadd.xlane.f32.xlu0 %v3727
        %v3729 = vpop.xlane.xlu0 %3728
        %v3730 = vsel %vm2017, %v3606, 0.0
        %3731 = vadd.xlane.f32.xlu0 %v3730
        %v3732 = vpop.xlane.xlu0 %3731
        %v3733 = vsel %vm2017, %v3607, 0.0
        %3734 = vadd.xlane.f32.xlu0 %v3733
        %v3735 = vpop.xlane.xlu0 %3734
        %v3736 = vsel %vm2017, %v3608, 0.0
        %3737 = vadd.xlane.f32.xlu0 %v3736
        %v3738 = vpop.xlane.xlu0 %3737
        %v3739 = vsel %vm2017, %v3609, 0.0
        %3740 = vadd.xlane.f32.xlu0 %v3739
        %v3741 = vpop.xlane.xlu0 %3740
        %v3742 = vsel %vm2017, %v3610, 0.0
        %3743 = vadd.xlane.f32.xlu0 %v3742
        %v3744 = vpop.xlane.xlu0 %3743
        %v3745 = vsel %vm2017, %v3611, 0.0
        %3746 = vadd.xlane.f32.xlu0 %v3745
        %v3747 = vpop.xlane.xlu0 %3746
        %v3748 = vsel %vm2017, %v3612, 0.0
        %3749 = vadd.xlane.f32.xlu0 %v3748
        %v3750 = vpop.xlane.xlu0 %3749
        %v3751 = vsel %vm2017, %v3613, 0.0
        %3752 = vadd.xlane.f32.xlu0 %v3751
        %v3753 = vpop.xlane.xlu0 %3752
        %v3754 = vsel %vm2017, %v3614, 0.0
        %3755 = vadd.xlane.f32.xlu0 %v3754
        %v3756 = vpop.xlane.xlu0 %3755
        %v3757 = vsel %vm2017, %v3615, 0.0
        %3758 = vadd.xlane.f32.xlu0 %v3757
        %v3759 = vpop.xlane.xlu0 %3758
        %v3760 = vsel %vm2017, %v3616, 0.0
        %3761 = vadd.xlane.f32.xlu0 %v3760
        %v3762 = vpop.xlane.xlu0 %3761
        %v3763 = vsel %vm2017, %v3617, 0.0
        %3764 = vadd.xlane.f32.xlu0 %v3763
        %v3765 = vpop.xlane.xlu0 %3764
        %v3766 = vsel %vm2017, %v3618, 0.0
        %3767 = vadd.xlane.f32.xlu0 %v3766
        %v3768 = vpop.xlane.xlu0 %3767
        %v3769 = vsel %vm2017, %v3619, 0.0
        %3770 = vadd.xlane.f32.xlu0 %v3769
        %v3771 = vpop.xlane.xlu0 %3770
        %v3772 = vsel %vm2017, %v3620, 0.0
        %3773 = vadd.xlane.f32.xlu0 %v3772
        %v3774 = vpop.xlane.xlu0 %3773
        %v3775 = vsel %vm2017, %v3621, 0.0
        %3776 = vadd.xlane.f32.xlu0 %v3775
        %v3777 = vpop.xlane.xlu0 %3776
        %v3778 = vsel %vm2017, %v3622, 0.0
        %3779 = vadd.xlane.f32.xlu0 %v3778
        %v3780 = vpop.xlane.xlu0 %3779
        %v3781 = vsel %vm2017, %v3623, 0.0
        %3782 = vadd.xlane.f32.xlu0 %v3781
        %v3783 = vpop.xlane.xlu0 %3782
        %v3784 = vsel %vm2017, %v3624, 0.0
        %3785 = vadd.xlane.f32.xlu0 %v3784
        %v3786 = vpop.xlane.xlu0 %3785
        %v3787 = vsel %vm2017, %v3625, 0.0
        %3788 = vadd.xlane.f32.xlu0 %v3787
        %v3789 = vpop.xlane.xlu0 %3788
        %v3790 = vsel %vm2017, %v3626, 0.0
        %3791 = vadd.xlane.f32.xlu0 %v3790
        %v3792 = vpop.xlane.xlu0 %3791
        %v3793 = vsel %vm2017, %v3627, 0.0
        %3794 = vadd.xlane.f32.xlu0 %v3793
        %v3795 = vpop.xlane.xlu0 %3794
        %v3796 = vsel %vm2017, %v3628, 0.0
        %3797 = vadd.xlane.f32.xlu0 %v3796
        %v3798 = vpop.xlane.xlu0 %3797
        %v3799 = vsel %vm2017, %v3629, 0.0
        %3800 = vadd.xlane.f32.xlu0 %v3799
        %v3801 = vpop.xlane.xlu0 %3800
        %v3802 = vsel %vm2017, %v3630, 0.0
        %3803 = vadd.xlane.f32.xlu0 %v3802
        %v3804 = vpop.xlane.xlu0 %3803
        %v3805 = vsel %vm2017, %v3631, 0.0
        %3806 = vadd.xlane.f32.xlu0 %v3805
        %v3807 = vpop.xlane.xlu0 %3806
        %v3808 = vsel %vm2017, %v3632, 0.0
        %3809 = vadd.xlane.f32.xlu0 %v3808
        %v3810 = vpop.xlane.xlu0 %3809
        %v3811 = vsel %vm2017, %v3633, 0.0
        %3812 = vadd.xlane.f32.xlu0 %v3811
        %v3813 = vpop.xlane.xlu0 %3812
        %v3814 = vsel %vm2017, %v3634, 0.0
        %3815 = vadd.xlane.f32.xlu0 %v3814
        %v3816 = vpop.xlane.xlu0 %3815
        %v3817 = vsel %vm2017, %v3635, 0.0
        %3818 = vadd.xlane.f32.xlu0 %v3817
        %v3819 = vpop.xlane.xlu0 %3818
        %v3820 = vsel %vm2017, %v3636, 0.0
        %3821 = vadd.xlane.f32.xlu0 %v3820
        %v3822 = vpop.xlane.xlu0 %3821
        %v3823 = vsel %vm2017, %v3637, 0.0
        %3824 = vadd.xlane.f32.xlu0 %v3823
        %v3825 = vpop.xlane.xlu0 %3824
        %v3826 = vsel %vm2017, %v3638, 0.0
        %3827 = vadd.xlane.f32.xlu0 %v3826
        %v3828 = vpop.xlane.xlu0 %3827
        %v3829 = vsel %vm2017, %v3639, 0.0
        %3830 = vadd.xlane.f32.xlu0 %v3829
        %v3831 = vpop.xlane.xlu0 %3830
        %v3832 = vsel %vm2017, %v3640, 0.0
        %3833 = vadd.xlane.f32.xlu0 %v3832
        %v3834 = vpop.xlane.xlu0 %3833
        %v3835 = vmul.f32 %v3645, %v2210
        %v3836 = vmul.f32 %v3648, %v2210
        %v3837 = vmul.f32 %v3651, %v2210
        %v3838 = vmul.f32 %v3654, %v2210
        %v3839 = vmul.f32 %v3657, %v2210
        %v3840 = vmul.f32 %v3660, %v2210
        %v3841 = vmul.f32 %v3663, %v2210
        %v3842 = vmul.f32 %v3666, %v2210
        %v3843 = vmul.f32 %v3669, %v2210
        %v3844 = vmul.f32 %v3672, %v2210
        %v3845 = vmul.f32 %v3675, %v2210
        %v3846 = vmul.f32 %v3678, %v2210
        %v3847 = vmul.f32 %v3681, %v2210
        %v3848 = vmul.f32 %v3684, %v2210
        %v3849 = vmul.f32 %v3687, %v2210
        %v3850 = vmul.f32 %v3690, %v2210
        %v3851 = vmul.f32 %v3693, %v2210
        %v3852 = vmul.f32 %v3696, %v2210
        %v3853 = vmul.f32 %v3699, %v2210
        %v3854 = vmul.f32 %v3702, %v2210
        %v3855 = vmul.f32 %v3705, %v2210
        %v3856 = vmul.f32 %v3708, %v2210
        %v3857 = vmul.f32 %v3711, %v2210
        %v3858 = vmul.f32 %v3714, %v2210
        %v3859 = vmul.f32 %v3717, %v2210
        %v3860 = vmul.f32 %v3720, %v2210
        %v3861 = vmul.f32 %v3723, %v2210
        %v3862 = vmul.f32 %v3726, %v2210
        %v3863 = vmul.f32 %v3729, %v2210
        %v3864 = vmul.f32 %v3732, %v2210
        %v3865 = vmul.f32 %v3735, %v2210
        %v3866 = vmul.f32 %v3738, %v2210
        %v3867 = vmul.f32 %v3741, %v2210
        %v3868 = vmul.f32 %v3744, %v2210
        %v3869 = vmul.f32 %v3747, %v2210
        %v3870 = vmul.f32 %v3750, %v2210
        %v3871 = vmul.f32 %v3753, %v2210
        %v3872 = vmul.f32 %v3756, %v2210
        %v3873 = vmul.f32 %v3759, %v2210
        %v3874 = vmul.f32 %v3762, %v2210
        %v3875 = vmul.f32 %v3765, %v2210
        %v3876 = vmul.f32 %v3768, %v2210
        %v3877 = vmul.f32 %v3771, %v2210
        %v3878 = vmul.f32 %v3774, %v2210
        %v3879 = vmul.f32 %v3777, %v2210
        %v3880 = vmul.f32 %v3780, %v2210
        %v3881 = vmul.f32 %v3783, %v2210
        %v3882 = vmul.f32 %v3786, %v2210
        %v3883 = vmul.f32 %v3789, %v2210
        %v3884 = vmul.f32 %v3792, %v2210
        %v3885 = vmul.f32 %v3795, %v2210
        %v3886 = vmul.f32 %v3798, %v2210
        %v3887 = vmul.f32 %v3801, %v2210
        %v3888 = vmul.f32 %v3804, %v2210
        %v3889 = vmul.f32 %v3807, %v2210
        %v3890 = vmul.f32 %v3810, %v2210
        %v3891 = vmul.f32 %v3813, %v2210
        %v3892 = vmul.f32 %v3816, %v2210
        %v3893 = vmul.f32 %v3819, %v2210
        %v3894 = vmul.f32 %v3822, %v2210
        %v3895 = vmul.f32 %v3825, %v2210
        %v3896 = vmul.f32 %v3828, %v2210
        %v3897 = vmul.f32 %v3831, %v2210
        %v3898 = vmul.f32 %v3834, %v2210
        %v3899 = vsub.f32 %v3577, %v3835
        %v3900 = vsub.f32 %v3578, %v3836
        %v3901 = vsub.f32 %v3579, %v3837
        %v3902 = vsub.f32 %v3580, %v3838
        %v3903 = vsub.f32 %v3581, %v3839
        %v3904 = vsub.f32 %v3582, %v3840
        %v3905 = vsub.f32 %v3583, %v3841
        %v3906 = vsub.f32 %v3584, %v3842
        %v3907 = vsub.f32 %v3585, %v3843
        %v3908 = vsub.f32 %v3586, %v3844
        %v3909 = vsub.f32 %v3587, %v3845
        %v3910 = vsub.f32 %v3588, %v3846
        %v3911 = vsub.f32 %v3589, %v3847
        %v3912 = vsub.f32 %v3590, %v3848
        %v3913 = vsub.f32 %v3591, %v3849
        %v3914 = vsub.f32 %v3592, %v3850
        %v3915 = vsub.f32 %v3593, %v3851
        %v3916 = vsub.f32 %v3594, %v3852
        %v3917 = vsub.f32 %v3595, %v3853
        %v3918 = vsub.f32 %v3596, %v3854
        %v3919 = vsub.f32 %v3597, %v3855
        %v3920 = vsub.f32 %v3598, %v3856
        %v3921 = vsub.f32 %v3599, %v3857
        %v3922 = vsub.f32 %v3600, %v3858
        %v3923 = vsub.f32 %v3601, %v3859
        %v3924 = vsub.f32 %v3602, %v3860
        %v3925 = vsub.f32 %v3603, %v3861
        %v3926 = vsub.f32 %v3604, %v3862
        %v3927 = vsub.f32 %v3605, %v3863
        %v3928 = vsub.f32 %v3606, %v3864
        %v3929 = vsub.f32 %v3607, %v3865
        %v3930 = vsub.f32 %v3608, %v3866
        %v3931 = vsub.f32 %v3609, %v3867
        %v3932 = vsub.f32 %v3610, %v3868
        %v3933 = vsub.f32 %v3611, %v3869
        %v3934 = vsub.f32 %v3612, %v3870
        %v3935 = vsub.f32 %v3613, %v3871
        %v3936 = vsub.f32 %v3614, %v3872
        %v3937 = vsub.f32 %v3615, %v3873
        %v3938 = vsub.f32 %v3616, %v3874
        %v3939 = vsub.f32 %v3617, %v3875
        %v3940 = vsub.f32 %v3618, %v3876
        %v3941 = vsub.f32 %v3619, %v3877
        %v3942 = vsub.f32 %v3620, %v3878
        %v3943 = vsub.f32 %v3621, %v3879
        %v3944 = vsub.f32 %v3622, %v3880
        %v3945 = vsub.f32 %v3623, %v3881
        %v3946 = vsub.f32 %v3624, %v3882
        %v3947 = vsub.f32 %v3625, %v3883
        %v3948 = vsub.f32 %v3626, %v3884
        %v3949 = vsub.f32 %v3627, %v3885
        %v3950 = vsub.f32 %v3628, %v3886
        %v3951 = vsub.f32 %v3629, %v3887
        %v3952 = vsub.f32 %v3630, %v3888
        %v3953 = vsub.f32 %v3631, %v3889
        %v3954 = vsub.f32 %v3632, %v3890
        %v3955 = vsub.f32 %v3633, %v3891
        %v3956 = vsub.f32 %v3634, %v3892
        %v3957 = vsub.f32 %v3635, %v3893
        %v3958 = vsub.f32 %v3636, %v3894
        %v3959 = vsub.f32 %v3637, %v3895
        %v3960 = vsub.f32 %v3638, %v3896
        %v3961 = vsub.f32 %v3639, %v3897
        %v3962 = vsub.f32 %v3640, %v3898
        %v3963 = vmul.f32 %v3899, %v3899
        %v3964 = vmul.f32 %v3900, %v3900
        %v3965 = vmul.f32 %v3901, %v3901
        %v3966 = vmul.f32 %v3902, %v3902
        %v3967 = vmul.f32 %v3903, %v3903
        %v3968 = vmul.f32 %v3904, %v3904
        %v3969 = vmul.f32 %v3905, %v3905
        %v3970 = vmul.f32 %v3906, %v3906
        %v3971 = vmul.f32 %v3907, %v3907
        %v3972 = vmul.f32 %v3908, %v3908
        %v3973 = vmul.f32 %v3909, %v3909
        %v3974 = vmul.f32 %v3910, %v3910
        %v3975 = vmul.f32 %v3911, %v3911
        %v3976 = vmul.f32 %v3912, %v3912
        %v3977 = vmul.f32 %v3913, %v3913
        %v3978 = vmul.f32 %v3914, %v3914
        %v3979 = vmul.f32 %v3915, %v3915
        %v3980 = vmul.f32 %v3916, %v3916
        %v3981 = vmul.f32 %v3917, %v3917
        %v3982 = vmul.f32 %v3918, %v3918
        %v3983 = vmul.f32 %v3919, %v3919
        %v3984 = vmul.f32 %v3920, %v3920
        %v3985 = vmul.f32 %v3921, %v3921
        %v3986 = vmul.f32 %v3922, %v3922
        %v3987 = vmul.f32 %v3923, %v3923
        %v3988 = vmul.f32 %v3924, %v3924
        %v3989 = vmul.f32 %v3925, %v3925
        %v3990 = vmul.f32 %v3926, %v3926
        %v3991 = vmul.f32 %v3927, %v3927
        %v3992 = vmul.f32 %v3928, %v3928
        %v3993 = vmul.f32 %v3929, %v3929
        %v3994 = vmul.f32 %v3930, %v3930
        %v3995 = vmul.f32 %v3931, %v3931
        %v3996 = vmul.f32 %v3932, %v3932
        %v3997 = vmul.f32 %v3933, %v3933
        %v3998 = vmul.f32 %v3934, %v3934
        %v3999 = vmul.f32 %v3935, %v3935
        %v4000 = vmul.f32 %v3936, %v3936
        %v4001 = vmul.f32 %v3937, %v3937
        %v4002 = vmul.f32 %v3938, %v3938
        %v4003 = vmul.f32 %v3939, %v3939
        %v4004 = vmul.f32 %v3940, %v3940
        %v4005 = vmul.f32 %v3941, %v3941
        %v4006 = vmul.f32 %v3942, %v3942
        %v4007 = vmul.f32 %v3943, %v3943
        %v4008 = vmul.f32 %v3944, %v3944
        %v4009 = vmul.f32 %v3945, %v3945
        %v4010 = vmul.f32 %v3946, %v3946
        %v4011 = vmul.f32 %v3947, %v3947
        %v4012 = vmul.f32 %v3948, %v3948
        %v4013 = vmul.f32 %v3949, %v3949
        %v4014 = vmul.f32 %v3950, %v3950
        %v4015 = vmul.f32 %v3951, %v3951
        %v4016 = vmul.f32 %v3952, %v3952
        %v4017 = vmul.f32 %v3953, %v3953
        %v4018 = vmul.f32 %v3954, %v3954
        %v4019 = vmul.f32 %v3955, %v3955
        %v4020 = vmul.f32 %v3956, %v3956
        %v4021 = vmul.f32 %v3957, %v3957
        %v4022 = vmul.f32 %v3958, %v3958
        %v4023 = vmul.f32 %v3959, %v3959
        %v4024 = vmul.f32 %v3960, %v3960
        %v4025 = vmul.f32 %v3961, %v3961
        %v4026 = vmul.f32 %v3962, %v3962
        %v4027 = vsel %vm2017, %v3963, 0.0
        %4028 = vadd.xlane.f32.xlu0 %v4027
        %v4029 = vpop.xlane.xlu0 %4028
        %v4030 = vsel %vm2017, %v3964, 0.0
        %4031 = vadd.xlane.f32.xlu0 %v4030
        %v4032 = vpop.xlane.xlu0 %4031
        %v4033 = vsel %vm2017, %v3965, 0.0
        %4034 = vadd.xlane.f32.xlu0 %v4033
        %v4035 = vpop.xlane.xlu0 %4034
        %v4036 = vsel %vm2017, %v3966, 0.0
        %4037 = vadd.xlane.f32.xlu0 %v4036
        %v4038 = vpop.xlane.xlu0 %4037
        %v4039 = vsel %vm2017, %v3967, 0.0
        %4040 = vadd.xlane.f32.xlu0 %v4039
        %v4041 = vpop.xlane.xlu0 %4040
        %v4042 = vsel %vm2017, %v3968, 0.0
        %4043 = vadd.xlane.f32.xlu0 %v4042
        %v4044 = vpop.xlane.xlu0 %4043
        %v4045 = vsel %vm2017, %v3969, 0.0
        %4046 = vadd.xlane.f32.xlu0 %v4045
        %v4047 = vpop.xlane.xlu0 %4046
        %v4048 = vsel %vm2017, %v3970, 0.0
        %4049 = vadd.xlane.f32.xlu0 %v4048
        %v4050 = vpop.xlane.xlu0 %4049
        %v4051 = vsel %vm2017, %v3971, 0.0
        %4052 = vadd.xlane.f32.xlu0 %v4051
        %v4053 = vpop.xlane.xlu0 %4052
        %v4054 = vsel %vm2017, %v3972, 0.0
        %4055 = vadd.xlane.f32.xlu0 %v4054
        %v4056 = vpop.xlane.xlu0 %4055
        %v4057 = vsel %vm2017, %v3973, 0.0
        %4058 = vadd.xlane.f32.xlu0 %v4057
        %v4059 = vpop.xlane.xlu0 %4058
        %v4060 = vsel %vm2017, %v3974, 0.0
        %4061 = vadd.xlane.f32.xlu0 %v4060
        %v4062 = vpop.xlane.xlu0 %4061
        %v4063 = vsel %vm2017, %v3975, 0.0
        %4064 = vadd.xlane.f32.xlu0 %v4063
        %v4065 = vpop.xlane.xlu0 %4064
        %v4066 = vsel %vm2017, %v3976, 0.0
        %4067 = vadd.xlane.f32.xlu0 %v4066
        %v4068 = vpop.xlane.xlu0 %4067
        %v4069 = vsel %vm2017, %v3977, 0.0
        %4070 = vadd.xlane.f32.xlu0 %v4069
        %v4071 = vpop.xlane.xlu0 %4070
        %v4072 = vsel %vm2017, %v3978, 0.0
        %4073 = vadd.xlane.f32.xlu0 %v4072
        %v4074 = vpop.xlane.xlu0 %4073
        %v4075 = vsel %vm2017, %v3979, 0.0
        %4076 = vadd.xlane.f32.xlu0 %v4075
        %v4077 = vpop.xlane.xlu0 %4076
        %v4078 = vsel %vm2017, %v3980, 0.0
        %4079 = vadd.xlane.f32.xlu0 %v4078
        %v4080 = vpop.xlane.xlu0 %4079
        %v4081 = vsel %vm2017, %v3981, 0.0
        %4082 = vadd.xlane.f32.xlu0 %v4081
        %v4083 = vpop.xlane.xlu0 %4082
        %v4084 = vsel %vm2017, %v3982, 0.0
        %4085 = vadd.xlane.f32.xlu0 %v4084
        %v4086 = vpop.xlane.xlu0 %4085
        %v4087 = vsel %vm2017, %v3983, 0.0
        %4088 = vadd.xlane.f32.xlu0 %v4087
        %v4089 = vpop.xlane.xlu0 %4088
        %v4090 = vsel %vm2017, %v3984, 0.0
        %4091 = vadd.xlane.f32.xlu0 %v4090
        %v4092 = vpop.xlane.xlu0 %4091
        %v4093 = vsel %vm2017, %v3985, 0.0
        %4094 = vadd.xlane.f32.xlu0 %v4093
        %v4095 = vpop.xlane.xlu0 %4094
        %v4096 = vsel %vm2017, %v3986, 0.0
        %4097 = vadd.xlane.f32.xlu0 %v4096
        %v4098 = vpop.xlane.xlu0 %4097
        %v4099 = vsel %vm2017, %v3987, 0.0
        %4100 = vadd.xlane.f32.xlu0 %v4099
        %v4101 = vpop.xlane.xlu0 %4100
        %v4102 = vsel %vm2017, %v3988, 0.0
        %4103 = vadd.xlane.f32.xlu0 %v4102
        %v4104 = vpop.xlane.xlu0 %4103
        %v4105 = vsel %vm2017, %v3989, 0.0
        %4106 = vadd.xlane.f32.xlu0 %v4105
        %v4107 = vpop.xlane.xlu0 %4106
        %v4108 = vsel %vm2017, %v3990, 0.0
        %4109 = vadd.xlane.f32.xlu0 %v4108
        %v4110 = vpop.xlane.xlu0 %4109
        %v4111 = vsel %vm2017, %v3991, 0.0
        %4112 = vadd.xlane.f32.xlu0 %v4111
        %v4113 = vpop.xlane.xlu0 %4112
        %v4114 = vsel %vm2017, %v3992, 0.0
        %4115 = vadd.xlane.f32.xlu0 %v4114
        %v4116 = vpop.xlane.xlu0 %4115
        %v4117 = vsel %vm2017, %v3993, 0.0
        %4118 = vadd.xlane.f32.xlu0 %v4117
        %v4119 = vpop.xlane.xlu0 %4118
        %v4120 = vsel %vm2017, %v3994, 0.0
        %4121 = vadd.xlane.f32.xlu0 %v4120
        %v4122 = vpop.xlane.xlu0 %4121
        %v4123 = vsel %vm2017, %v3995, 0.0
        %4124 = vadd.xlane.f32.xlu0 %v4123
        %v4125 = vpop.xlane.xlu0 %4124
        %v4126 = vsel %vm2017, %v3996, 0.0
        %4127 = vadd.xlane.f32.xlu0 %v4126
        %v4128 = vpop.xlane.xlu0 %4127
        %v4129 = vsel %vm2017, %v3997, 0.0
        %4130 = vadd.xlane.f32.xlu0 %v4129
        %v4131 = vpop.xlane.xlu0 %4130
        %v4132 = vsel %vm2017, %v3998, 0.0
        %4133 = vadd.xlane.f32.xlu0 %v4132
        %v4134 = vpop.xlane.xlu0 %4133
        %v4135 = vsel %vm2017, %v3999, 0.0
        %4136 = vadd.xlane.f32.xlu0 %v4135
        %v4137 = vpop.xlane.xlu0 %4136
        %v4138 = vsel %vm2017, %v4000, 0.0
        %4139 = vadd.xlane.f32.xlu0 %v4138
        %v4140 = vpop.xlane.xlu0 %4139
        %v4141 = vsel %vm2017, %v4001, 0.0
        %4142 = vadd.xlane.f32.xlu0 %v4141
        %v4143 = vpop.xlane.xlu0 %4142
        %v4144 = vsel %vm2017, %v4002, 0.0
        %4145 = vadd.xlane.f32.xlu0 %v4144
        %v4146 = vpop.xlane.xlu0 %4145
        %v4147 = vsel %vm2017, %v4003, 0.0
        %4148 = vadd.xlane.f32.xlu0 %v4147
        %v4149 = vpop.xlane.xlu0 %4148
        %v4150 = vsel %vm2017, %v4004, 0.0
        %4151 = vadd.xlane.f32.xlu0 %v4150
        %v4152 = vpop.xlane.xlu0 %4151
        %v4153 = vsel %vm2017, %v4005, 0.0
        %4154 = vadd.xlane.f32.xlu0 %v4153
        %v4155 = vpop.xlane.xlu0 %4154
        %v4156 = vsel %vm2017, %v4006, 0.0
        %4157 = vadd.xlane.f32.xlu0 %v4156
        %v4158 = vpop.xlane.xlu0 %4157
        %v4159 = vsel %vm2017, %v4007, 0.0
        %4160 = vadd.xlane.f32.xlu0 %v4159
        %v4161 = vpop.xlane.xlu0 %4160
        %v4162 = vsel %vm2017, %v4008, 0.0
        %4163 = vadd.xlane.f32.xlu0 %v4162
        %v4164 = vpop.xlane.xlu0 %4163
        %v4165 = vsel %vm2017, %v4009, 0.0
        %4166 = vadd.xlane.f32.xlu0 %v4165
        %v4167 = vpop.xlane.xlu0 %4166
        %v4168 = vsel %vm2017, %v4010, 0.0
        %4169 = vadd.xlane.f32.xlu0 %v4168
        %v4170 = vpop.xlane.xlu0 %4169
        %v4171 = vsel %vm2017, %v4011, 0.0
        %4172 = vadd.xlane.f32.xlu0 %v4171
        %v4173 = vpop.xlane.xlu0 %4172
        %v4174 = vsel %vm2017, %v4012, 0.0
        %4175 = vadd.xlane.f32.xlu0 %v4174
        %v4176 = vpop.xlane.xlu0 %4175
        %v4177 = vsel %vm2017, %v4013, 0.0
        %4178 = vadd.xlane.f32.xlu0 %v4177
        %v4179 = vpop.xlane.xlu0 %4178
        %v4180 = vsel %vm2017, %v4014, 0.0
        %4181 = vadd.xlane.f32.xlu0 %v4180
        %v4182 = vpop.xlane.xlu0 %4181
        %v4183 = vsel %vm2017, %v4015, 0.0
        %4184 = vadd.xlane.f32.xlu0 %v4183
        %v4185 = vpop.xlane.xlu0 %4184
        %v4186 = vsel %vm2017, %v4016, 0.0
        %4187 = vadd.xlane.f32.xlu0 %v4186
        %v4188 = vpop.xlane.xlu0 %4187
        %v4189 = vsel %vm2017, %v4017, 0.0
        %4190 = vadd.xlane.f32.xlu0 %v4189
        %v4191 = vpop.xlane.xlu0 %4190
        %v4192 = vsel %vm2017, %v4018, 0.0
        %4193 = vadd.xlane.f32.xlu0 %v4192
        %v4194 = vpop.xlane.xlu0 %4193
        %v4195 = vsel %vm2017, %v4019, 0.0
        %4196 = vadd.xlane.f32.xlu0 %v4195
        %v4197 = vpop.xlane.xlu0 %4196
        %v4198 = vsel %vm2017, %v4020, 0.0
        %4199 = vadd.xlane.f32.xlu0 %v4198
        %v4200 = vpop.xlane.xlu0 %4199
        %v4201 = vsel %vm2017, %v4021, 0.0
        %4202 = vadd.xlane.f32.xlu0 %v4201
        %v4203 = vpop.xlane.xlu0 %4202
        %v4204 = vsel %vm2017, %v4022, 0.0
        %4205 = vadd.xlane.f32.xlu0 %v4204
        %v4206 = vpop.xlane.xlu0 %4205
        %v4207 = vsel %vm2017, %v4023, 0.0
        %4208 = vadd.xlane.f32.xlu0 %v4207
        %v4209 = vpop.xlane.xlu0 %4208
        %v4210 = vsel %vm2017, %v4024, 0.0
        %4211 = vadd.xlane.f32.xlu0 %v4210
        %v4212 = vpop.xlane.xlu0 %4211
        %v4213 = vsel %vm2017, %v4025, 0.0
        %4214 = vadd.xlane.f32.xlu0 %v4213
        %v4215 = vpop.xlane.xlu0 %4214
        %v4216 = vsel %vm2017, %v4026, 0.0
        %4217 = vadd.xlane.f32.xlu0 %v4216
        %v4218 = vpop.xlane.xlu0 %4217
        %v4219 = vmul.f32 %v4029, %v2210
        %v4220 = vmul.f32 %v4032, %v2210
        %v4221 = vmul.f32 %v4035, %v2210
        %v4222 = vmul.f32 %v4038, %v2210
        %v4223 = vmul.f32 %v4041, %v2210
        %v4224 = vmul.f32 %v4044, %v2210
        %v4225 = vmul.f32 %v4047, %v2210
        %v4226 = vmul.f32 %v4050, %v2210
        %v4227 = vmul.f32 %v4053, %v2210
        %v4228 = vmul.f32 %v4056, %v2210
        %v4229 = vmul.f32 %v4059, %v2210
        %v4230 = vmul.f32 %v4062, %v2210
        %v4231 = vmul.f32 %v4065, %v2210
        %v4232 = vmul.f32 %v4068, %v2210
        %v4233 = vmul.f32 %v4071, %v2210
        %v4234 = vmul.f32 %v4074, %v2210
        %v4235 = vmul.f32 %v4077, %v2210
        %v4236 = vmul.f32 %v4080, %v2210
        %v4237 = vmul.f32 %v4083, %v2210
        %v4238 = vmul.f32 %v4086, %v2210
        %v4239 = vmul.f32 %v4089, %v2210
        %v4240 = vmul.f32 %v4092, %v2210
        %v4241 = vmul.f32 %v4095, %v2210
        %v4242 = vmul.f32 %v4098, %v2210
        %v4243 = vmul.f32 %v4101, %v2210
        %v4244 = vmul.f32 %v4104, %v2210
        %v4245 = vmul.f32 %v4107, %v2210
        %v4246 = vmul.f32 %v4110, %v2210
        %v4247 = vmul.f32 %v4113, %v2210
        %v4248 = vmul.f32 %v4116, %v2210
        %v4249 = vmul.f32 %v4119, %v2210
        %v4250 = vmul.f32 %v4122, %v2210
        %v4251 = vmul.f32 %v4125, %v2210
        %v4252 = vmul.f32 %v4128, %v2210
        %v4253 = vmul.f32 %v4131, %v2210
        %v4254 = vmul.f32 %v4134, %v2210
        %v4255 = vmul.f32 %v4137, %v2210
        %v4256 = vmul.f32 %v4140, %v2210
        %v4257 = vmul.f32 %v4143, %v2210
        %v4258 = vmul.f32 %v4146, %v2210
        %v4259 = vmul.f32 %v4149, %v2210
        %v4260 = vmul.f32 %v4152, %v2210
        %v4261 = vmul.f32 %v4155, %v2210
        %v4262 = vmul.f32 %v4158, %v2210
        %v4263 = vmul.f32 %v4161, %v2210
        %v4264 = vmul.f32 %v4164, %v2210
        %v4265 = vmul.f32 %v4167, %v2210
        %v4266 = vmul.f32 %v4170, %v2210
        %v4267 = vmul.f32 %v4173, %v2210
        %v4268 = vmul.f32 %v4176, %v2210
        %v4269 = vmul.f32 %v4179, %v2210
        %v4270 = vmul.f32 %v4182, %v2210
        %v4271 = vmul.f32 %v4185, %v2210
        %v4272 = vmul.f32 %v4188, %v2210
        %v4273 = vmul.f32 %v4191, %v2210
        %v4274 = vmul.f32 %v4194, %v2210
        %v4275 = vmul.f32 %v4197, %v2210
        %v4276 = vmul.f32 %v4200, %v2210
        %v4277 = vmul.f32 %v4203, %v2210
        %v4278 = vmul.f32 %v4206, %v2210
        %v4279 = vmul.f32 %v4209, %v2210
        %v4280 = vmul.f32 %v4212, %v2210
        %v4281 = vmul.f32 %v4215, %v2210
        %v4282 = vmul.f32 %v4218, %v2210
        %v4283 = vadd.f32 %v4219, 1e-05
        %v4284 = vadd.f32 %v4220, 1e-05
        %v4285 = vadd.f32 %v4221, 1e-05
        %v4286 = vadd.f32 %v4222, 1e-05
        %v4287 = vadd.f32 %v4223, 1e-05
        %v4288 = vadd.f32 %v4224, 1e-05
        %v4289 = vadd.f32 %v4225, 1e-05
        %v4290 = vadd.f32 %v4226, 1e-05
        %v4291 = vadd.f32 %v4227, 1e-05
        %v4292 = vadd.f32 %v4228, 1e-05
        %v4293 = vadd.f32 %v4229, 1e-05
        %v4294 = vadd.f32 %v4230, 1e-05
        %v4295 = vadd.f32 %v4231, 1e-05
        %v4296 = vadd.f32 %v4232, 1e-05
        %v4297 = vadd.f32 %v4233, 1e-05
        %v4298 = vadd.f32 %v4234, 1e-05
        %v4299 = vadd.f32 %v4235, 1e-05
        %v4300 = vadd.f32 %v4236, 1e-05
        %v4301 = vadd.f32 %v4237, 1e-05
        %v4302 = vadd.f32 %v4238, 1e-05
        %v4303 = vadd.f32 %v4239, 1e-05
        %v4304 = vadd.f32 %v4240, 1e-05
        %v4305 = vadd.f32 %v4241, 1e-05
        %v4306 = vadd.f32 %v4242, 1e-05
        %v4307 = vadd.f32 %v4243, 1e-05
        %v4308 = vadd.f32 %v4244, 1e-05
        %v4309 = vadd.f32 %v4245, 1e-05
        %v4310 = vadd.f32 %v4246, 1e-05
        %v4311 = vadd.f32 %v4247, 1e-05
        %v4312 = vadd.f32 %v4248, 1e-05
        %v4313 = vadd.f32 %v4249, 1e-05
        %v4314 = vadd.f32 %v4250, 1e-05
        %v4315 = vadd.f32 %v4251, 1e-05
        %v4316 = vadd.f32 %v4252, 1e-05
        %v4317 = vadd.f32 %v4253, 1e-05
        %v4318 = vadd.f32 %v4254, 1e-05
        %v4319 = vadd.f32 %v4255, 1e-05
        %v4320 = vadd.f32 %v4256, 1e-05
        %v4321 = vadd.f32 %v4257, 1e-05
        %v4322 = vadd.f32 %v4258, 1e-05
        %v4323 = vadd.f32 %v4259, 1e-05
        %v4324 = vadd.f32 %v4260, 1e-05
        %v4325 = vadd.f32 %v4261, 1e-05
        %v4326 = vadd.f32 %v4262, 1e-05
        %v4327 = vadd.f32 %v4263, 1e-05
        %v4328 = vadd.f32 %v4264, 1e-05
        %v4329 = vadd.f32 %v4265, 1e-05
        %v4330 = vadd.f32 %v4266, 1e-05
        %v4331 = vadd.f32 %v4267, 1e-05
        %v4332 = vadd.f32 %v4268, 1e-05
        %v4333 = vadd.f32 %v4269, 1e-05
        %v4334 = vadd.f32 %v4270, 1e-05
        %v4335 = vadd.f32 %v4271, 1e-05
        %v4336 = vadd.f32 %v4272, 1e-05
        %v4337 = vadd.f32 %v4273, 1e-05
        %v4338 = vadd.f32 %v4274, 1e-05
        %v4339 = vadd.f32 %v4275, 1e-05
        %v4340 = vadd.f32 %v4276, 1e-05
        %v4341 = vadd.f32 %v4277, 1e-05
        %v4342 = vadd.f32 %v4278, 1e-05
        %v4343 = vadd.f32 %v4279, 1e-05
        %v4344 = vadd.f32 %v4280, 1e-05
        %v4345 = vadd.f32 %v4281, 1e-05
        %v4346 = vadd.f32 %v4282, 1e-05
        %v4347 = vrsqrt.pop %v4283
        %v4348 = vrsqrt.pop %v4284
        %v4349 = vrsqrt.pop %v4285
        %v4350 = vrsqrt.pop %v4286
        %v4351 = vrsqrt.pop %v4287
        %v4352 = vrsqrt.pop %v4288
        %v4353 = vrsqrt.pop %v4289
        %v4354 = vrsqrt.pop %v4290
        %v4355 = vrsqrt.pop %v4291
        %v4356 = vrsqrt.pop %v4292
        %v4357 = vrsqrt.pop %v4293
        %v4358 = vrsqrt.pop %v4294
        %v4359 = vrsqrt.pop %v4295
        %v4360 = vrsqrt.pop %v4296
        %v4361 = vrsqrt.pop %v4297
        %v4362 = vrsqrt.pop %v4298
        %v4363 = vrsqrt.pop %v4299
        %v4364 = vrsqrt.pop %v4300
        %v4365 = vrsqrt.pop %v4301
        %v4366 = vrsqrt.pop %v4302
        %v4367 = vrsqrt.pop %v4303
        %v4368 = vrsqrt.pop %v4304
        %v4369 = vrsqrt.pop %v4305
        %v4370 = vrsqrt.pop %v4306
        %v4371 = vrsqrt.pop %v4307
        %v4372 = vrsqrt.pop %v4308
        %v4373 = vrsqrt.pop %v4309
        %v4374 = vrsqrt.pop %v4310
        %v4375 = vrsqrt.pop %v4311
        %v4376 = vrsqrt.pop %v4312
        %v4377 = vrsqrt.pop %v4313
        %v4378 = vrsqrt.pop %v4314
        %v4379 = vrsqrt.pop %v4315
        %v4380 = vrsqrt.pop %v4316
        %v4381 = vrsqrt.pop %v4317
        %v4382 = vrsqrt.pop %v4318
        %v4383 = vrsqrt.pop %v4319
        %v4384 = vrsqrt.pop %v4320
        %v4385 = vrsqrt.pop %v4321
        %v4386 = vrsqrt.pop %v4322
        %v4387 = vrsqrt.pop %v4323
        %v4388 = vrsqrt.pop %v4324
        %v4389 = vrsqrt.pop %v4325
        %v4390 = vrsqrt.pop %v4326
        %v4391 = vrsqrt.pop %v4327
        %v4392 = vrsqrt.pop %v4328
        %v4393 = vrsqrt.pop %v4329
        %v4394 = vrsqrt.pop %v4330
        %v4395 = vrsqrt.pop %v4331
        %v4396 = vrsqrt.pop %v4332
        %v4397 = vrsqrt.pop %v4333
        %v4398 = vrsqrt.pop %v4334
        %v4399 = vrsqrt.pop %v4335
        %v4400 = vrsqrt.pop %v4336
        %v4401 = vrsqrt.pop %v4337
        %v4402 = vrsqrt.pop %v4338
        %v4403 = vrsqrt.pop %v4339
        %v4404 = vrsqrt.pop %v4340
        %v4405 = vrsqrt.pop %v4341
        %v4406 = vrsqrt.pop %v4342
        %v4407 = vrsqrt.pop %v4343
        %v4408 = vrsqrt.pop %v4344
        %v4409 = vrsqrt.pop %v4345
        %v4410 = vrsqrt.pop %v4346
        %v4411 = vmul.f32 %v3899, %v4347
        %v4412 = vmul.f32 %v3900, %v4348
        %v4413 = vmul.f32 %v3901, %v4349
        %v4414 = vmul.f32 %v3902, %v4350
        %v4415 = vmul.f32 %v3903, %v4351
        %v4416 = vmul.f32 %v3904, %v4352
        %v4417 = vmul.f32 %v3905, %v4353
        %v4418 = vmul.f32 %v3906, %v4354
        %v4419 = vmul.f32 %v3907, %v4355
        %v4420 = vmul.f32 %v3908, %v4356
        %v4421 = vmul.f32 %v3909, %v4357
        %v4422 = vmul.f32 %v3910, %v4358
        %v4423 = vmul.f32 %v3911, %v4359
        %v4424 = vmul.f32 %v3912, %v4360
        %v4425 = vmul.f32 %v3913, %v4361
        %v4426 = vmul.f32 %v3914, %v4362
        %v4427 = vmul.f32 %v3915, %v4363
        %v4428 = vmul.f32 %v3916, %v4364
        %v4429 = vmul.f32 %v3917, %v4365
        %v4430 = vmul.f32 %v3918, %v4366
        %v4431 = vmul.f32 %v3919, %v4367
        %v4432 = vmul.f32 %v3920, %v4368
        %v4433 = vmul.f32 %v3921, %v4369
        %v4434 = vmul.f32 %v3922, %v4370
        %v4435 = vmul.f32 %v3923, %v4371
        %v4436 = vmul.f32 %v3924, %v4372
        %v4437 = vmul.f32 %v3925, %v4373
        %v4438 = vmul.f32 %v3926, %v4374
        %v4439 = vmul.f32 %v3927, %v4375
        %v4440 = vmul.f32 %v3928, %v4376
        %v4441 = vmul.f32 %v3929, %v4377
        %v4442 = vmul.f32 %v3930, %v4378
        %v4443 = vmul.f32 %v3931, %v4379
        %v4444 = vmul.f32 %v3932, %v4380
        %v4445 = vmul.f32 %v3933, %v4381
        %v4446 = vmul.f32 %v3934, %v4382
        %v4447 = vmul.f32 %v3935, %v4383
        %v4448 = vmul.f32 %v3936, %v4384
        %v4449 = vmul.f32 %v3937, %v4385
        %v4450 = vmul.f32 %v3938, %v4386
        %v4451 = vmul.f32 %v3939, %v4387
        %v4452 = vmul.f32 %v3940, %v4388
        %v4453 = vmul.f32 %v3941, %v4389
        %v4454 = vmul.f32 %v3942, %v4390
        %v4455 = vmul.f32 %v3943, %v4391
        %v4456 = vmul.f32 %v3944, %v4392
        %v4457 = vmul.f32 %v3945, %v4393
        %v4458 = vmul.f32 %v3946, %v4394
        %v4459 = vmul.f32 %v3947, %v4395
        %v4460 = vmul.f32 %v3948, %v4396
        %v4461 = vmul.f32 %v3949, %v4397
        %v4462 = vmul.f32 %v3950, %v4398
        %v4463 = vmul.f32 %v3951, %v4399
        %v4464 = vmul.f32 %v3952, %v4400
        %v4465 = vmul.f32 %v3953, %v4401
        %v4466 = vmul.f32 %v3954, %v4402
        %v4467 = vmul.f32 %v3955, %v4403
        %v4468 = vmul.f32 %v3956, %v4404
        %v4469 = vmul.f32 %v3957, %v4405
        %v4470 = vmul.f32 %v3958, %v4406
        %v4471 = vmul.f32 %v3959, %v4407
        %v4472 = vmul.f32 %v3960, %v4408
        %v4473 = vmul.f32 %v3961, %v4409
        %v4474 = vmul.f32 %v3962, %v4410
        %v4476 = vlaneseq
        %v4477 = vshrl.u32 %v4476, 7
        %v4478 = vsub.s32 0, %v4477
        %v4479 = vrot.slane %v3641, %v4478
        %v4481 = vmul.f32 %v4411, %v4479
        %v4482 = vmul.f32 %v4412, %v4479
        %v4483 = vmul.f32 %v4413, %v4479
        %v4484 = vmul.f32 %v4414, %v4479
        %v4485 = vmul.f32 %v4415, %v4479
        %v4486 = vmul.f32 %v4416, %v4479
        %v4487 = vmul.f32 %v4417, %v4479
        %v4488 = vmul.f32 %v4418, %v4479
        %v4489 = vmul.f32 %v4419, %v4479
        %v4490 = vmul.f32 %v4420, %v4479
        %v4491 = vmul.f32 %v4421, %v4479
        %v4492 = vmul.f32 %v4422, %v4479
        %v4493 = vmul.f32 %v4423, %v4479
        %v4494 = vmul.f32 %v4424, %v4479
        %v4495 = vmul.f32 %v4425, %v4479
        %v4496 = vmul.f32 %v4426, %v4479
        %v4497 = vmul.f32 %v4427, %v4479
        %v4498 = vmul.f32 %v4428, %v4479
        %v4499 = vmul.f32 %v4429, %v4479
        %v4500 = vmul.f32 %v4430, %v4479
        %v4501 = vmul.f32 %v4431, %v4479
        %v4502 = vmul.f32 %v4432, %v4479
        %v4503 = vmul.f32 %v4433, %v4479
        %v4504 = vmul.f32 %v4434, %v4479
        %v4505 = vmul.f32 %v4435, %v4479
        %v4506 = vmul.f32 %v4436, %v4479
        %v4507 = vmul.f32 %v4437, %v4479
        %v4508 = vmul.f32 %v4438, %v4479
        %v4509 = vmul.f32 %v4439, %v4479
        %v4510 = vmul.f32 %v4440, %v4479
        %v4511 = vmul.f32 %v4441, %v4479
        %v4512 = vmul.f32 %v4442, %v4479
        %v4513 = vmul.f32 %v4443, %v4479
        %v4514 = vmul.f32 %v4444, %v4479
        %v4515 = vmul.f32 %v4445, %v4479
        %v4516 = vmul.f32 %v4446, %v4479
        %v4517 = vmul.f32 %v4447, %v4479
        %v4518 = vmul.f32 %v4448, %v4479
        %v4519 = vmul.f32 %v4449, %v4479
        %v4520 = vmul.f32 %v4450, %v4479
        %v4521 = vmul.f32 %v4451, %v4479
        %v4522 = vmul.f32 %v4452, %v4479
        %v4523 = vmul.f32 %v4453, %v4479
        %v4524 = vmul.f32 %v4454, %v4479
        %v4525 = vmul.f32 %v4455, %v4479
        %v4526 = vmul.f32 %v4456, %v4479
        %v4527 = vmul.f32 %v4457, %v4479
        %v4528 = vmul.f32 %v4458, %v4479
        %v4529 = vmul.f32 %v4459, %v4479
        %v4530 = vmul.f32 %v4460, %v4479
        %v4531 = vmul.f32 %v4461, %v4479
        %v4532 = vmul.f32 %v4462, %v4479
        %v4533 = vmul.f32 %v4463, %v4479
        %v4534 = vmul.f32 %v4464, %v4479
        %v4535 = vmul.f32 %v4465, %v4479
        %v4536 = vmul.f32 %v4466, %v4479
        %v4537 = vmul.f32 %v4467, %v4479
        %v4538 = vmul.f32 %v4468, %v4479
        %v4539 = vmul.f32 %v4469, %v4479
        %v4540 = vmul.f32 %v4470, %v4479
        %v4541 = vmul.f32 %v4471, %v4479
        %v4542 = vmul.f32 %v4472, %v4479
        %v4543 = vmul.f32 %v4473, %v4479
        %v4544 = vmul.f32 %v4474, %v4479
        %v4546 = vlaneseq
        %v4547 = vshrl.u32 %v4546, 7
        %v4548 = vsub.s32 0, %v4547
        %v4549 = vrot.slane %v3642, %v4548
        %v4551 = vadd.f32 %v4481, %v4549
        %v4552 = vadd.f32 %v4482, %v4549
        %v4553 = vadd.f32 %v4483, %v4549
        %v4554 = vadd.f32 %v4484, %v4549
        %v4555 = vadd.f32 %v4485, %v4549
        %v4556 = vadd.f32 %v4486, %v4549
        %v4557 = vadd.f32 %v4487, %v4549
        %v4558 = vadd.f32 %v4488, %v4549
        %v4559 = vadd.f32 %v4489, %v4549
        %v4560 = vadd.f32 %v4490, %v4549
        %v4561 = vadd.f32 %v4491, %v4549
        %v4562 = vadd.f32 %v4492, %v4549
        %v4563 = vadd.f32 %v4493, %v4549
        %v4564 = vadd.f32 %v4494, %v4549
        %v4565 = vadd.f32 %v4495, %v4549
        %v4566 = vadd.f32 %v4496, %v4549
        %v4567 = vadd.f32 %v4497, %v4549
        %v4568 = vadd.f32 %v4498, %v4549
        %v4569 = vadd.f32 %v4499, %v4549
        %v4570 = vadd.f32 %v4500, %v4549
        %v4571 = vadd.f32 %v4501, %v4549
        %v4572 = vadd.f32 %v4502, %v4549
        %v4573 = vadd.f32 %v4503, %v4549
        %v4574 = vadd.f32 %v4504, %v4549
        %v4575 = vadd.f32 %v4505, %v4549
        %v4576 = vadd.f32 %v4506, %v4549
        %v4577 = vadd.f32 %v4507, %v4549
        %v4578 = vadd.f32 %v4508, %v4549
        %v4579 = vadd.f32 %v4509, %v4549
        %v4580 = vadd.f32 %v4510, %v4549
        %v4581 = vadd.f32 %v4511, %v4549
        %v4582 = vadd.f32 %v4512, %v4549
        %v4583 = vadd.f32 %v4513, %v4549
        %v4584 = vadd.f32 %v4514, %v4549
        %v4585 = vadd.f32 %v4515, %v4549
        %v4586 = vadd.f32 %v4516, %v4549
        %v4587 = vadd.f32 %v4517, %v4549
        %v4588 = vadd.f32 %v4518, %v4549
        %v4589 = vadd.f32 %v4519, %v4549
        %v4590 = vadd.f32 %v4520, %v4549
        %v4591 = vadd.f32 %v4521, %v4549
        %v4592 = vadd.f32 %v4522, %v4549
        %v4593 = vadd.f32 %v4523, %v4549
        %v4594 = vadd.f32 %v4524, %v4549
        %v4595 = vadd.f32 %v4525, %v4549
        %v4596 = vadd.f32 %v4526, %v4549
        %v4597 = vadd.f32 %v4527, %v4549
        %v4598 = vadd.f32 %v4528, %v4549
        %v4599 = vadd.f32 %v4529, %v4549
        %v4600 = vadd.f32 %v4530, %v4549
        %v4601 = vadd.f32 %v4531, %v4549
        %v4602 = vadd.f32 %v4532, %v4549
        %v4603 = vadd.f32 %v4533, %v4549
        %v4604 = vadd.f32 %v4534, %v4549
        %v4605 = vadd.f32 %v4535, %v4549
        %v4606 = vadd.f32 %v4536, %v4549
        %v4607 = vadd.f32 %v4537, %v4549
        %v4608 = vadd.f32 %v4538, %v4549
        %v4609 = vadd.f32 %v4539, %v4549
        %v4610 = vadd.f32 %v4540, %v4549
        %v4611 = vadd.f32 %v4541, %v4549
        %v4612 = vadd.f32 %v4542, %v4549
        %v4613 = vadd.f32 %v4543, %v4549
        %v4614 = vadd.f32 %v4544, %v4549
        %vm4615 = vcmp.ne.f32.partialorder %v498, 0.0
        %vm4616 = vcmp.ne.f32.partialorder %v499, 0.0
        %vm4617 = vcmp.ne.f32.partialorder %v500, 0.0
        %vm4618 = vcmp.ne.f32.partialorder %v501, 0.0
        %vm4619 = vcmp.ne.f32.partialorder %v502, 0.0
        %vm4620 = vcmp.ne.f32.partialorder %v503, 0.0
        %vm4621 = vcmp.ne.f32.partialorder %v504, 0.0
        %vm4622 = vcmp.ne.f32.partialorder %v505, 0.0
        %v4623 = vsel %vm4615, 1, 0
        %v4624 = vsel %vm4616, 1, 0
        %v4625 = vsel %vm4617, 1, 0
        %v4626 = vsel %vm4618, 1, 0
        %v4627 = vsel %vm4619, 1, 0
        %v4628 = vsel %vm4620, 1, 0
        %v4629 = vsel %vm4621, 1, 0
        %v4630 = vsel %vm4622, 1, 0
        %v4631 = vcvt.s32.f32 %v4623
        %v4632 = vcvt.s32.f32 %v4624
        %v4633 = vcvt.s32.f32 %v4625
        %v4634 = vcvt.s32.f32 %v4626
        %v4635 = vcvt.s32.f32 %v4627
        %v4636 = vcvt.s32.f32 %v4628
        %v4637 = vcvt.s32.f32 %v4629
        %v4638 = vcvt.s32.f32 %v4630
        %v4639 = vlaneseq
        %v4640 = vshrl.u32 %v4639, 7
        %v4641 = vsub.s32 0, %v4640
        %v4642 = vrot.slane %v4631, %v4641
        %4644 = vbcast.lane.b32.xlu0 %v4642, 256
        %v4645 = vpop.permute.xlu0 %4644
        %v4646 = vlaneseq
        %v4647 = vshrl.u32 %v4646, 7
        %v4648 = vsub.s32 1, %v4647
        %v4649 = vrot.slane %v4631, %v4648
        %4651 = vbcast.lane.b32.xlu0 %v4649, 256
        %v4652 = vpop.permute.xlu0 %4651
        %v4653 = vlaneseq
        %v4654 = vshrl.u32 %v4653, 7
        %v4655 = vsub.s32 2, %v4654
        %v4656 = vrot.slane %v4631, %v4655
        %4658 = vbcast.lane.b32.xlu0 %v4656, 256
        %v4659 = vpop.permute.xlu0 %4658
        %v4660 = vlaneseq
        %v4661 = vshrl.u32 %v4660, 7
        %v4662 = vsub.s32 3, %v4661
        %v4663 = vrot.slane %v4631, %v4662
        %4665 = vbcast.lane.b32.xlu0 %v4663, 256
        %v4666 = vpop.permute.xlu0 %4665
        %v4667 = vlaneseq
        %v4668 = vshrl.u32 %v4667, 7
        %v4669 = vsub.s32 4, %v4668
        %v4670 = vrot.slane %v4631, %v4669
        %4672 = vbcast.lane.b32.xlu0 %v4670, 256
        %v4673 = vpop.permute.xlu0 %4672
        %v4674 = vlaneseq
        %v4675 = vshrl.u32 %v4674, 7
        %v4676 = vsub.s32 5, %v4675
        %v4677 = vrot.slane %v4631, %v4676
        %4679 = vbcast.lane.b32.xlu0 %v4677, 256
        %v4680 = vpop.permute.xlu0 %4679
        %v4681 = vlaneseq
        %v4682 = vshrl.u32 %v4681, 7
        %v4683 = vsub.s32 6, %v4682
        %v4684 = vrot.slane %v4631, %v4683
        %4686 = vbcast.lane.b32.xlu0 %v4684, 256
        %v4687 = vpop.permute.xlu0 %4686
        %v4688 = vlaneseq
        %v4689 = vshrl.u32 %v4688, 7
        %v4690 = vsub.s32 7, %v4689
        %v4691 = vrot.slane %v4631, %v4690
        %4693 = vbcast.lane.b32.xlu0 %v4691, 256
        %v4694 = vpop.permute.xlu0 %4693
        %v4695 = vlaneseq
        %v4696 = vshrl.u32 %v4695, 7
        %v4697 = vsub.s32 0, %v4696
        %v4698 = vrot.slane %v4632, %v4697
        %4700 = vbcast.lane.b32.xlu0 %v4698, 256
        %v4701 = vpop.permute.xlu0 %4700
        %v4702 = vlaneseq
        %v4703 = vshrl.u32 %v4702, 7
        %v4704 = vsub.s32 1, %v4703
        %v4705 = vrot.slane %v4632, %v4704
        %4707 = vbcast.lane.b32.xlu0 %v4705, 256
        %v4708 = vpop.permute.xlu0 %4707
        %v4709 = vlaneseq
        %v4710 = vshrl.u32 %v4709, 7
        %v4711 = vsub.s32 2, %v4710
        %v4712 = vrot.slane %v4632, %v4711
        %4714 = vbcast.lane.b32.xlu0 %v4712, 256
        %v4715 = vpop.permute.xlu0 %4714
        %v4716 = vlaneseq
        %v4717 = vshrl.u32 %v4716, 7
        %v4718 = vsub.s32 3, %v4717
        %v4719 = vrot.slane %v4632, %v4718
        %4721 = vbcast.lane.b32.xlu0 %v4719, 256
        %v4722 = vpop.permute.xlu0 %4721
        %v4723 = vlaneseq
        %v4724 = vshrl.u32 %v4723, 7
        %v4725 = vsub.s32 4, %v4724
        %v4726 = vrot.slane %v4632, %v4725
        %4728 = vbcast.lane.b32.xlu0 %v4726, 256
        %v4729 = vpop.permute.xlu0 %4728
        %v4730 = vlaneseq
        %v4731 = vshrl.u32 %v4730, 7
        %v4732 = vsub.s32 5, %v4731
        %v4733 = vrot.slane %v4632, %v4732
        %4735 = vbcast.lane.b32.xlu0 %v4733, 256
        %v4736 = vpop.permute.xlu0 %4735
        %v4737 = vlaneseq
        %v4738 = vshrl.u32 %v4737, 7
        %v4739 = vsub.s32 6, %v4738
        %v4740 = vrot.slane %v4632, %v4739
        %4742 = vbcast.lane.b32.xlu0 %v4740, 256
        %v4743 = vpop.permute.xlu0 %4742
        %v4744 = vlaneseq
        %v4745 = vshrl.u32 %v4744, 7
        %v4746 = vsub.s32 7, %v4745
        %v4747 = vrot.slane %v4632, %v4746
        %4749 = vbcast.lane.b32.xlu0 %v4747, 256
        %v4750 = vpop.permute.xlu0 %4749
        %v4751 = vlaneseq
        %v4752 = vshrl.u32 %v4751, 7
        %v4753 = vsub.s32 0, %v4752
        %v4754 = vrot.slane %v4633, %v4753
        %4756 = vbcast.lane.b32.xlu0 %v4754, 256
        %v4757 = vpop.permute.xlu0 %4756
        %v4758 = vlaneseq
        %v4759 = vshrl.u32 %v4758, 7
        %v4760 = vsub.s32 1, %v4759
        %v4761 = vrot.slane %v4633, %v4760
        %4763 = vbcast.lane.b32.xlu0 %v4761, 256
        %v4764 = vpop.permute.xlu0 %4763
        %v4765 = vlaneseq
        %v4766 = vshrl.u32 %v4765, 7
        %v4767 = vsub.s32 2, %v4766
        %v4768 = vrot.slane %v4633, %v4767
        %4770 = vbcast.lane.b32.xlu0 %v4768, 256
        %v4771 = vpop.permute.xlu0 %4770
        %v4772 = vlaneseq
        %v4773 = vshrl.u32 %v4772, 7
        %v4774 = vsub.s32 3, %v4773
        %v4775 = vrot.slane %v4633, %v4774
        %4777 = vbcast.lane.b32.xlu0 %v4775, 256
        %v4778 = vpop.permute.xlu0 %4777
        %v4779 = vlaneseq
        %v4780 = vshrl.u32 %v4779, 7
        %v4781 = vsub.s32 4, %v4780
        %v4782 = vrot.slane %v4633, %v4781
        %4784 = vbcast.lane.b32.xlu0 %v4782, 256
        %v4785 = vpop.permute.xlu0 %4784
        %v4786 = vlaneseq
        %v4787 = vshrl.u32 %v4786, 7
        %v4788 = vsub.s32 5, %v4787
        %v4789 = vrot.slane %v4633, %v4788
        %4791 = vbcast.lane.b32.xlu0 %v4789, 256
        %v4792 = vpop.permute.xlu0 %4791
        %v4793 = vlaneseq
        %v4794 = vshrl.u32 %v4793, 7
        %v4795 = vsub.s32 6, %v4794
        %v4796 = vrot.slane %v4633, %v4795
        %4798 = vbcast.lane.b32.xlu0 %v4796, 256
        %v4799 = vpop.permute.xlu0 %4798
        %v4800 = vlaneseq
        %v4801 = vshrl.u32 %v4800, 7
        %v4802 = vsub.s32 7, %v4801
        %v4803 = vrot.slane %v4633, %v4802
        %4805 = vbcast.lane.b32.xlu0 %v4803, 256
        %v4806 = vpop.permute.xlu0 %4805
        %v4807 = vlaneseq
        %v4808 = vshrl.u32 %v4807, 7
        %v4809 = vsub.s32 0, %v4808
        %v4810 = vrot.slane %v4634, %v4809
        %4812 = vbcast.lane.b32.xlu0 %v4810, 256
        %v4813 = vpop.permute.xlu0 %4812
        %v4814 = vlaneseq
        %v4815 = vshrl.u32 %v4814, 7
        %v4816 = vsub.s32 1, %v4815
        %v4817 = vrot.slane %v4634, %v4816
        %4819 = vbcast.lane.b32.xlu0 %v4817, 256
        %v4820 = vpop.permute.xlu0 %4819
        %v4821 = vlaneseq
        %v4822 = vshrl.u32 %v4821, 7
        %v4823 = vsub.s32 2, %v4822
        %v4824 = vrot.slane %v4634, %v4823
        %4826 = vbcast.lane.b32.xlu0 %v4824, 256
        %v4827 = vpop.permute.xlu0 %4826
        %v4828 = vlaneseq
        %v4829 = vshrl.u32 %v4828, 7
        %v4830 = vsub.s32 3, %v4829
        %v4831 = vrot.slane %v4634, %v4830
        %4833 = vbcast.lane.b32.xlu0 %v4831, 256
        %v4834 = vpop.permute.xlu0 %4833
        %v4835 = vlaneseq
        %v4836 = vshrl.u32 %v4835, 7
        %v4837 = vsub.s32 4, %v4836
        %v4838 = vrot.slane %v4634, %v4837
        %4840 = vbcast.lane.b32.xlu0 %v4838, 256
        %v4841 = vpop.permute.xlu0 %4840
        %v4842 = vlaneseq
        %v4843 = vshrl.u32 %v4842, 7
        %v4844 = vsub.s32 5, %v4843
        %v4845 = vrot.slane %v4634, %v4844
        %4847 = vbcast.lane.b32.xlu0 %v4845, 256
        %v4848 = vpop.permute.xlu0 %4847
        %v4849 = vlaneseq
        %v4850 = vshrl.u32 %v4849, 7
        %v4851 = vsub.s32 6, %v4850
        %v4852 = vrot.slane %v4634, %v4851
        %4854 = vbcast.lane.b32.xlu0 %v4852, 256
        %v4855 = vpop.permute.xlu0 %4854
        %v4856 = vlaneseq
        %v4857 = vshrl.u32 %v4856, 7
        %v4858 = vsub.s32 7, %v4857
        %v4859 = vrot.slane %v4634, %v4858
        %4861 = vbcast.lane.b32.xlu0 %v4859, 256
        %v4862 = vpop.permute.xlu0 %4861
        %v4863 = vlaneseq
        %v4864 = vshrl.u32 %v4863, 7
        %v4865 = vsub.s32 0, %v4864
        %v4866 = vrot.slane %v4635, %v4865
        %4868 = vbcast.lane.b32.xlu0 %v4866, 256
        %v4869 = vpop.permute.xlu0 %4868
        %v4870 = vlaneseq
        %v4871 = vshrl.u32 %v4870, 7
        %v4872 = vsub.s32 1, %v4871
        %v4873 = vrot.slane %v4635, %v4872
        %4875 = vbcast.lane.b32.xlu0 %v4873, 256
        %v4876 = vpop.permute.xlu0 %4875
        %v4877 = vlaneseq
        %v4878 = vshrl.u32 %v4877, 7
        %v4879 = vsub.s32 2, %v4878
        %v4880 = vrot.slane %v4635, %v4879
        %4882 = vbcast.lane.b32.xlu0 %v4880, 256
        %v4883 = vpop.permute.xlu0 %4882
        %v4884 = vlaneseq
        %v4885 = vshrl.u32 %v4884, 7
        %v4886 = vsub.s32 3, %v4885
        %v4887 = vrot.slane %v4635, %v4886
        %4889 = vbcast.lane.b32.xlu0 %v4887, 256
        %v4890 = vpop.permute.xlu0 %4889
        %v4891 = vlaneseq
        %v4892 = vshrl.u32 %v4891, 7
        %v4893 = vsub.s32 4, %v4892
        %v4894 = vrot.slane %v4635, %v4893
        %4896 = vbcast.lane.b32.xlu0 %v4894, 256
        %v4897 = vpop.permute.xlu0 %4896
        %v4898 = vlaneseq
        %v4899 = vshrl.u32 %v4898, 7
        %v4900 = vsub.s32 5, %v4899
        %v4901 = vrot.slane %v4635, %v4900
        %4903 = vbcast.lane.b32.xlu0 %v4901, 256
        %v4904 = vpop.permute.xlu0 %4903
        %v4905 = vlaneseq
        %v4906 = vshrl.u32 %v4905, 7
        %v4907 = vsub.s32 6, %v4906
        %v4908 = vrot.slane %v4635, %v4907
        %4910 = vbcast.lane.b32.xlu0 %v4908, 256
        %v4911 = vpop.permute.xlu0 %4910
        %v4912 = vlaneseq
        %v4913 = vshrl.u32 %v4912, 7
        %v4914 = vsub.s32 7, %v4913
        %v4915 = vrot.slane %v4635, %v4914
        %4917 = vbcast.lane.b32.xlu0 %v4915, 256
        %v4918 = vpop.permute.xlu0 %4917
        %v4919 = vlaneseq
        %v4920 = vshrl.u32 %v4919, 7
        %v4921 = vsub.s32 0, %v4920
        %v4922 = vrot.slane %v4636, %v4921
        %4924 = vbcast.lane.b32.xlu0 %v4922, 256
        %v4925 = vpop.permute.xlu0 %4924
        %v4926 = vlaneseq
        %v4927 = vshrl.u32 %v4926, 7
        %v4928 = vsub.s32 1, %v4927
        %v4929 = vrot.slane %v4636, %v4928
        %4931 = vbcast.lane.b32.xlu0 %v4929, 256
        %v4932 = vpop.permute.xlu0 %4931
        %v4933 = vlaneseq
        %v4934 = vshrl.u32 %v4933, 7
        %v4935 = vsub.s32 2, %v4934
        %v4936 = vrot.slane %v4636, %v4935
        %4938 = vbcast.lane.b32.xlu0 %v4936, 256
        %v4939 = vpop.permute.xlu0 %4938
        %v4940 = vlaneseq
        %v4941 = vshrl.u32 %v4940, 7
        %v4942 = vsub.s32 3, %v4941
        %v4943 = vrot.slane %v4636, %v4942
        %4945 = vbcast.lane.b32.xlu0 %v4943, 256
        %v4946 = vpop.permute.xlu0 %4945
        %v4947 = vlaneseq
        %v4948 = vshrl.u32 %v4947, 7
        %v4949 = vsub.s32 4, %v4948
        %v4950 = vrot.slane %v4636, %v4949
        %4952 = vbcast.lane.b32.xlu0 %v4950, 256
        %v4953 = vpop.permute.xlu0 %4952
        %v4954 = vlaneseq
        %v4955 = vshrl.u32 %v4954, 7
        %v4956 = vsub.s32 5, %v4955
        %v4957 = vrot.slane %v4636, %v4956
        %4959 = vbcast.lane.b32.xlu0 %v4957, 256
        %v4960 = vpop.permute.xlu0 %4959
        %v4961 = vlaneseq
        %v4962 = vshrl.u32 %v4961, 7
        %v4963 = vsub.s32 6, %v4962
        %v4964 = vrot.slane %v4636, %v4963
        %4966 = vbcast.lane.b32.xlu0 %v4964, 256
        %v4967 = vpop.permute.xlu0 %4966
        %v4968 = vlaneseq
        %v4969 = vshrl.u32 %v4968, 7
        %v4970 = vsub.s32 7, %v4969
        %v4971 = vrot.slane %v4636, %v4970
        %4973 = vbcast.lane.b32.xlu0 %v4971, 256
        %v4974 = vpop.permute.xlu0 %4973
        %v4975 = vlaneseq
        %v4976 = vshrl.u32 %v4975, 7
        %v4977 = vsub.s32 0, %v4976
        %v4978 = vrot.slane %v4637, %v4977
        %4980 = vbcast.lane.b32.xlu0 %v4978, 256
        %v4981 = vpop.permute.xlu0 %4980
        %v4982 = vlaneseq
        %v4983 = vshrl.u32 %v4982, 7
        %v4984 = vsub.s32 1, %v4983
        %v4985 = vrot.slane %v4637, %v4984
        %4987 = vbcast.lane.b32.xlu0 %v4985, 256
        %v4988 = vpop.permute.xlu0 %4987
        %v4989 = vlaneseq
        %v4990 = vshrl.u32 %v4989, 7
        %v4991 = vsub.s32 2, %v4990
        %v4992 = vrot.slane %v4637, %v4991
        %4994 = vbcast.lane.b32.xlu0 %v4992, 256
        %v4995 = vpop.permute.xlu0 %4994
        %v4996 = vlaneseq
        %v4997 = vshrl.u32 %v4996, 7
        %v4998 = vsub.s32 3, %v4997
        %v4999 = vrot.slane %v4637, %v4998
        %5001 = vbcast.lane.b32.xlu0 %v4999, 256
        %v5002 = vpop.permute.xlu0 %5001
        %v5003 = vlaneseq
        %v5004 = vshrl.u32 %v5003, 7
        %v5005 = vsub.s32 4, %v5004
        %v5006 = vrot.slane %v4637, %v5005
        %5008 = vbcast.lane.b32.xlu0 %v5006, 256
        %v5009 = vpop.permute.xlu0 %5008
        %v5010 = vlaneseq
        %v5011 = vshrl.u32 %v5010, 7
        %v5012 = vsub.s32 5, %v5011
        %v5013 = vrot.slane %v4637, %v5012
        %5015 = vbcast.lane.b32.xlu0 %v5013, 256
        %v5016 = vpop.permute.xlu0 %5015
        %v5017 = vlaneseq
        %v5018 = vshrl.u32 %v5017, 7
        %v5019 = vsub.s32 6, %v5018
        %v5020 = vrot.slane %v4637, %v5019
        %5022 = vbcast.lane.b32.xlu0 %v5020, 256
        %v5023 = vpop.permute.xlu0 %5022
        %v5024 = vlaneseq
        %v5025 = vshrl.u32 %v5024, 7
        %v5026 = vsub.s32 7, %v5025
        %v5027 = vrot.slane %v4637, %v5026
        %5029 = vbcast.lane.b32.xlu0 %v5027, 256
        %v5030 = vpop.permute.xlu0 %5029
        %v5031 = vlaneseq
        %v5032 = vshrl.u32 %v5031, 7
        %v5033 = vsub.s32 0, %v5032
        %v5034 = vrot.slane %v4638, %v5033
        %5036 = vbcast.lane.b32.xlu0 %v5034, 256
        %v5037 = vpop.permute.xlu0 %5036
        %v5038 = vlaneseq
        %v5039 = vshrl.u32 %v5038, 7
        %v5040 = vsub.s32 1, %v5039
        %v5041 = vrot.slane %v4638, %v5040
        %5043 = vbcast.lane.b32.xlu0 %v5041, 256
        %v5044 = vpop.permute.xlu0 %5043
        %v5045 = vlaneseq
        %v5046 = vshrl.u32 %v5045, 7
        %v5047 = vsub.s32 2, %v5046
        %v5048 = vrot.slane %v4638, %v5047
        %5050 = vbcast.lane.b32.xlu0 %v5048, 256
        %v5051 = vpop.permute.xlu0 %5050
        %v5052 = vlaneseq
        %v5053 = vshrl.u32 %v5052, 7
        %v5054 = vsub.s32 3, %v5053
        %v5055 = vrot.slane %v4638, %v5054
        %5057 = vbcast.lane.b32.xlu0 %v5055, 256
        %v5058 = vpop.permute.xlu0 %5057
        %v5059 = vlaneseq
        %v5060 = vshrl.u32 %v5059, 7
        %v5061 = vsub.s32 4, %v5060
        %v5062 = vrot.slane %v4638, %v5061
        %5064 = vbcast.lane.b32.xlu0 %v5062, 256
        %v5065 = vpop.permute.xlu0 %5064
        %v5066 = vlaneseq
        %v5067 = vshrl.u32 %v5066, 7
        %v5068 = vsub.s32 5, %v5067
        %v5069 = vrot.slane %v4638, %v5068
        %5071 = vbcast.lane.b32.xlu0 %v5069, 256
        %v5072 = vpop.permute.xlu0 %5071
        %v5073 = vlaneseq
        %v5074 = vshrl.u32 %v5073, 7
        %v5075 = vsub.s32 6, %v5074
        %v5076 = vrot.slane %v4638, %v5075
        %5078 = vbcast.lane.b32.xlu0 %v5076, 256
        %v5079 = vpop.permute.xlu0 %5078
        %v5080 = vlaneseq
        %v5081 = vshrl.u32 %v5080, 7
        %v5082 = vsub.s32 7, %v5081
        %v5083 = vrot.slane %v4638, %v5082
        %5085 = vbcast.lane.b32.xlu0 %v5083, 256
        %v5086 = vpop.permute.xlu0 %5085
        %v5087 = vmul.f32 %v4551, %v4645
        %v5088 = vmul.f32 %v4552, %v4652
        %v5089 = vmul.f32 %v4553, %v4659
        %v5090 = vmul.f32 %v4554, %v4666
        %v5091 = vmul.f32 %v4555, %v4673
        %v5092 = vmul.f32 %v4556, %v4680
        %v5093 = vmul.f32 %v4557, %v4687
        %v5094 = vmul.f32 %v4558, %v4694
        %v5095 = vmul.f32 %v4559, %v4701
        %v5096 = vmul.f32 %v4560, %v4708
        %v5097 = vmul.f32 %v4561, %v4715
        %v5098 = vmul.f32 %v4562, %v4722
        %v5099 = vmul.f32 %v4563, %v4729
        %v5100 = vmul.f32 %v4564, %v4736
        %v5101 = vmul.f32 %v4565, %v4743
        %v5102 = vmul.f32 %v4566, %v4750
        %v5103 = vmul.f32 %v4567, %v4757
        %v5104 = vmul.f32 %v4568, %v4764
        %v5105 = vmul.f32 %v4569, %v4771
        %v5106 = vmul.f32 %v4570, %v4778
        %v5107 = vmul.f32 %v4571, %v4785
        %v5108 = vmul.f32 %v4572, %v4792
        %v5109 = vmul.f32 %v4573, %v4799
        %v5110 = vmul.f32 %v4574, %v4806
        %v5111 = vmul.f32 %v4575, %v4813
        %v5112 = vmul.f32 %v4576, %v4820
        %v5113 = vmul.f32 %v4577, %v4827
        %v5114 = vmul.f32 %v4578, %v4834
        %v5115 = vmul.f32 %v4579, %v4841
        %v5116 = vmul.f32 %v4580, %v4848
        %v5117 = vmul.f32 %v4581, %v4855
        %v5118 = vmul.f32 %v4582, %v4862
        %v5119 = vmul.f32 %v4583, %v4869
        %v5120 = vmul.f32 %v4584, %v4876
        %v5121 = vmul.f32 %v4585, %v4883
        %v5122 = vmul.f32 %v4586, %v4890
        %v5123 = vmul.f32 %v4587, %v4897
        %v5124 = vmul.f32 %v4588, %v4904
        %v5125 = vmul.f32 %v4589, %v4911
        %v5126 = vmul.f32 %v4590, %v4918
        %v5127 = vmul.f32 %v4591, %v4925
        %v5128 = vmul.f32 %v4592, %v4932
        %v5129 = vmul.f32 %v4593, %v4939
        %v5130 = vmul.f32 %v4594, %v4946
        %v5131 = vmul.f32 %v4595, %v4953
        %v5132 = vmul.f32 %v4596, %v4960
        %v5133 = vmul.f32 %v4597, %v4967
        %v5134 = vmul.f32 %v4598, %v4974
        %v5135 = vmul.f32 %v4599, %v4981
        %v5136 = vmul.f32 %v4600, %v4988
        %v5137 = vmul.f32 %v4601, %v4995
        %v5138 = vmul.f32 %v4602, %v5002
        %v5139 = vmul.f32 %v4603, %v5009
        %v5140 = vmul.f32 %v4604, %v5016
        %v5141 = vmul.f32 %v4605, %v5023
        %v5142 = vmul.f32 %v4606, %v5030
        %v5143 = vmul.f32 %v4607, %v5037
        %v5144 = vmul.f32 %v4608, %v5044
        %v5145 = vmul.f32 %v4609, %v5051
        %v5146 = vmul.f32 %v4610, %v5058
        %v5147 = vmul.f32 %v4611, %v5065
        %v5148 = vmul.f32 %v4612, %v5072
        %v5149 = vmul.f32 %v4613, %v5079
        %v5150 = vmul.f32 %v4614, %v5086
        %v5151 = vsel %vm2017, %v5087, 0.0
        %v5152 = vsel %vm2017, %v5088, 0.0
        %v5153 = vadd.f32 %v5151, %v5152
        %v5154 = vsel %vm2017, %v5089, 0.0
        %v5155 = vadd.f32 %v5153, %v5154
        %v5156 = vsel %vm2017, %v5090, 0.0
        %v5157 = vadd.f32 %v5155, %v5156
        %v5158 = vsel %vm2017, %v5091, 0.0
        %v5159 = vadd.f32 %v5157, %v5158
        %v5160 = vsel %vm2017, %v5092, 0.0
        %v5161 = vadd.f32 %v5159, %v5160
        %v5162 = vsel %vm2017, %v5093, 0.0
        %v5163 = vadd.f32 %v5161, %v5162
        %v5164 = vsel %vm2017, %v5094, 0.0
        %v5165 = vadd.f32 %v5163, %v5164
        %v5166 = vsel %vm2017, %v5095, 0.0
        %v5167 = vsel %vm2017, %v5096, 0.0
        %v5168 = vadd.f32 %v5166, %v5167
        %v5169 = vsel %vm2017, %v5097, 0.0
        %v5170 = vadd.f32 %v5168, %v5169
        %v5171 = vsel %vm2017, %v5098, 0.0
        %v5172 = vadd.f32 %v5170, %v5171
        %v5173 = vsel %vm2017, %v5099, 0.0
        %v5174 = vadd.f32 %v5172, %v5173
        %v5175 = vsel %vm2017, %v5100, 0.0
        %v5176 = vadd.f32 %v5174, %v5175
        %v5177 = vsel %vm2017, %v5101, 0.0
        %v5178 = vadd.f32 %v5176, %v5177
        %v5179 = vsel %vm2017, %v5102, 0.0
        %v5180 = vadd.f32 %v5178, %v5179
        %v5181 = vsel %vm2017, %v5103, 0.0
        %v5182 = vsel %vm2017, %v5104, 0.0
        %v5183 = vadd.f32 %v5181, %v5182
        %v5184 = vsel %vm2017, %v5105, 0.0
        %v5185 = vadd.f32 %v5183, %v5184
        %v5186 = vsel %vm2017, %v5106, 0.0
        %v5187 = vadd.f32 %v5185, %v5186
        %v5188 = vsel %vm2017, %v5107, 0.0
        %v5189 = vadd.f32 %v5187, %v5188
        %v5190 = vsel %vm2017, %v5108, 0.0
        %v5191 = vadd.f32 %v5189, %v5190
        %v5192 = vsel %vm2017, %v5109, 0.0
        %v5193 = vadd.f32 %v5191, %v5192
        %v5194 = vsel %vm2017, %v5110, 0.0
        %v5195 = vadd.f32 %v5193, %v5194
        %v5196 = vsel %vm2017, %v5111, 0.0
        %v5197 = vsel %vm2017, %v5112, 0.0
        %v5198 = vadd.f32 %v5196, %v5197
        %v5199 = vsel %vm2017, %v5113, 0.0
        %v5200 = vadd.f32 %v5198, %v5199
        %v5201 = vsel %vm2017, %v5114, 0.0
        %v5202 = vadd.f32 %v5200, %v5201
        %v5203 = vsel %vm2017, %v5115, 0.0
        %v5204 = vadd.f32 %v5202, %v5203
        %v5205 = vsel %vm2017, %v5116, 0.0
        %v5206 = vadd.f32 %v5204, %v5205
        %v5207 = vsel %vm2017, %v5117, 0.0
        %v5208 = vadd.f32 %v5206, %v5207
        %v5209 = vsel %vm2017, %v5118, 0.0
        %v5210 = vadd.f32 %v5208, %v5209
        %v5211 = vsel %vm2017, %v5119, 0.0
        %v5212 = vsel %vm2017, %v5120, 0.0
        %v5213 = vadd.f32 %v5211, %v5212
        %v5214 = vsel %vm2017, %v5121, 0.0
        %v5215 = vadd.f32 %v5213, %v5214
        %v5216 = vsel %vm2017, %v5122, 0.0
        %v5217 = vadd.f32 %v5215, %v5216
        %v5218 = vsel %vm2017, %v5123, 0.0
        %v5219 = vadd.f32 %v5217, %v5218
        %v5220 = vsel %vm2017, %v5124, 0.0
        %v5221 = vadd.f32 %v5219, %v5220
        %v5222 = vsel %vm2017, %v5125, 0.0
        %v5223 = vadd.f32 %v5221, %v5222
        %v5224 = vsel %vm2017, %v5126, 0.0
        %v5225 = vadd.f32 %v5223, %v5224
        %v5226 = vsel %vm2017, %v5127, 0.0
        %v5227 = vsel %vm2017, %v5128, 0.0
        %v5228 = vadd.f32 %v5226, %v5227
        %v5229 = vsel %vm2017, %v5129, 0.0
        %v5230 = vadd.f32 %v5228, %v5229
        %v5231 = vsel %vm2017, %v5130, 0.0
        %v5232 = vadd.f32 %v5230, %v5231
        %v5233 = vsel %vm2017, %v5131, 0.0
        %v5234 = vadd.f32 %v5232, %v5233
        %v5235 = vsel %vm2017, %v5132, 0.0
        %v5236 = vadd.f32 %v5234, %v5235
        %v5237 = vsel %vm2017, %v5133, 0.0
        %v5238 = vadd.f32 %v5236, %v5237
        %v5239 = vsel %vm2017, %v5134, 0.0
        %v5240 = vadd.f32 %v5238, %v5239
        %v5241 = vsel %vm2017, %v5135, 0.0
        %v5242 = vsel %vm2017, %v5136, 0.0
        %v5243 = vadd.f32 %v5241, %v5242
        %v5244 = vsel %vm2017, %v5137, 0.0
        %v5245 = vadd.f32 %v5243, %v5244
        %v5246 = vsel %vm2017, %v5138, 0.0
        %v5247 = vadd.f32 %v5245, %v5246
        %v5248 = vsel %vm2017, %v5139, 0.0
        %v5249 = vadd.f32 %v5247, %v5248
        %v5250 = vsel %vm2017, %v5140, 0.0
        %v5251 = vadd.f32 %v5249, %v5250
        %v5252 = vsel %vm2017, %v5141, 0.0
        %v5253 = vadd.f32 %v5251, %v5252
        %v5254 = vsel %vm2017, %v5142, 0.0
        %v5255 = vadd.f32 %v5253, %v5254
        %v5256 = vsel %vm2017, %v5143, 0.0
        %v5257 = vsel %vm2017, %v5144, 0.0
        %v5258 = vadd.f32 %v5256, %v5257
        %v5259 = vsel %vm2017, %v5145, 0.0
        %v5260 = vadd.f32 %v5258, %v5259
        %v5261 = vsel %vm2017, %v5146, 0.0
        %v5262 = vadd.f32 %v5260, %v5261
        %v5263 = vsel %vm2017, %v5147, 0.0
        %v5264 = vadd.f32 %v5262, %v5263
        %v5265 = vsel %vm2017, %v5148, 0.0
        %v5266 = vadd.f32 %v5264, %v5265
        %v5267 = vsel %vm2017, %v5149, 0.0
        %v5268 = vadd.f32 %v5266, %v5267
        %v5269 = vsel %vm2017, %v5150, 0.0
        %v5270 = vadd.f32 %v5268, %v5269
        %5271 = vxpose.xlu0.b32.start [1/16] %v498, 128
        %5272 = vxpose.xlu0.b32.cont [2/16] 0.0, 128
        %5273 = vxpose.xlu0.b32.cont [3/16] 0.0, 128
        %5274 = vxpose.xlu0.b32.cont [4/16] 0.0, 128
        %5275 = vxpose.xlu0.b32.cont [5/16] 0.0, 128
        %5276 = vxpose.xlu0.b32.cont [6/16] 0.0, 128
        %5277 = vxpose.xlu0.b32.cont [7/16] 0.0, 128
        %5278 = vxpose.xlu0.b32.cont [8/16] 0.0, 128
        %5279 = vxpose.xlu0.b32.cont [9/16] 0.0, 128
        %5280 = vxpose.xlu0.b32.cont [10/16] 0.0, 128
        %5281 = vxpose.xlu0.b32.cont [11/16] 0.0, 128
        %5282 = vxpose.xlu0.b32.cont [12/16] 0.0, 128
        %5283 = vxpose.xlu0.b32.cont [13/16] 0.0, 128
        %5284 = vxpose.xlu0.b32.cont [14/16] 0.0, 128
        %5285 = vxpose.xlu0.b32.cont [15/16] 0.0, 128
        %5286 = vxpose.xlu0.b32.end [16/16] 0.0, 128
        %v5287 = vpop.trf.xlu0
        %v5288 = vpop.trf.xlu0
        %v5289 = vpop.trf.xlu0
        %v5290 = vpop.trf.xlu0
        %v5291 = vpop.trf.xlu0
        %v5292 = vpop.trf.xlu0
        %v5293 = vpop.trf.xlu0
        %v5294 = vpop.trf.xlu0
        %v5295 = vpop.trf.xlu0
        %v5296 = vpop.trf.xlu0
        %v5297 = vpop.trf.xlu0
        %v5298 = vpop.trf.xlu0
        %v5299 = vpop.trf.xlu0
        %v5300 = vpop.trf.xlu0
        %v5301 = vpop.trf.xlu0
        %v5302 = vpop.trf.xlu0
        %5303 = vxpose.xlu0.b32.start [1/16] %v499, 128
        %5304 = vxpose.xlu0.b32.cont [2/16] 0.0, 128
        %5305 = vxpose.xlu0.b32.cont [3/16] 0.0, 128
        %5306 = vxpose.xlu0.b32.cont [4/16] 0.0, 128
        %5307 = vxpose.xlu0.b32.cont [5/16] 0.0, 128
        %5308 = vxpose.xlu0.b32.cont [6/16] 0.0, 128
        %5309 = vxpose.xlu0.b32.cont [7/16] 0.0, 128
        %5310 = vxpose.xlu0.b32.cont [8/16] 0.0, 128
        %5311 = vxpose.xlu0.b32.cont [9/16] 0.0, 128
        %5312 = vxpose.xlu0.b32.cont [10/16] 0.0, 128
        %5313 = vxpose.xlu0.b32.cont [11/16] 0.0, 128
        %5314 = vxpose.xlu0.b32.cont [12/16] 0.0, 128
        %5315 = vxpose.xlu0.b32.cont [13/16] 0.0, 128
        %5316 = vxpose.xlu0.b32.cont [14/16] 0.0, 128
        %5317 = vxpose.xlu0.b32.cont [15/16] 0.0, 128
        %5318 = vxpose.xlu0.b32.end [16/16] 0.0, 128
        %v5319 = vpop.trf.xlu0
        %v5320 = vpop.trf.xlu0
        %v5321 = vpop.trf.xlu0
        %v5322 = vpop.trf.xlu0
        %v5323 = vpop.trf.xlu0
        %v5324 = vpop.trf.xlu0
        %v5325 = vpop.trf.xlu0
        %v5326 = vpop.trf.xlu0
        %v5327 = vpop.trf.xlu0
        %v5328 = vpop.trf.xlu0
        %v5329 = vpop.trf.xlu0
        %v5330 = vpop.trf.xlu0
        %v5331 = vpop.trf.xlu0
        %v5332 = vpop.trf.xlu0
        %v5333 = vpop.trf.xlu0
        %v5334 = vpop.trf.xlu0
        %5335 = vxpose.xlu0.b32.start [1/16] %v500, 128
        %5336 = vxpose.xlu0.b32.cont [2/16] 0.0, 128
        %5337 = vxpose.xlu0.b32.cont [3/16] 0.0, 128
        %5338 = vxpose.xlu0.b32.cont [4/16] 0.0, 128
        %5339 = vxpose.xlu0.b32.cont [5/16] 0.0, 128
        %5340 = vxpose.xlu0.b32.cont [6/16] 0.0, 128
        %5341 = vxpose.xlu0.b32.cont [7/16] 0.0, 128
        %5342 = vxpose.xlu0.b32.cont [8/16] 0.0, 128
        %5343 = vxpose.xlu0.b32.cont [9/16] 0.0, 128
        %5344 = vxpose.xlu0.b32.cont [10/16] 0.0, 128
        %5345 = vxpose.xlu0.b32.cont [11/16] 0.0, 128
        %5346 = vxpose.xlu0.b32.cont [12/16] 0.0, 128
        %5347 = vxpose.xlu0.b32.cont [13/16] 0.0, 128
        %5348 = vxpose.xlu0.b32.cont [14/16] 0.0, 128
        %5349 = vxpose.xlu0.b32.cont [15/16] 0.0, 128
        %5350 = vxpose.xlu0.b32.end [16/16] 0.0, 128
        %v5351 = vpop.trf.xlu0
        %v5352 = vpop.trf.xlu0
        %v5353 = vpop.trf.xlu0
        %v5354 = vpop.trf.xlu0
        %v5355 = vpop.trf.xlu0
        %v5356 = vpop.trf.xlu0
        %v5357 = vpop.trf.xlu0
        %v5358 = vpop.trf.xlu0
        %v5359 = vpop.trf.xlu0
        %v5360 = vpop.trf.xlu0
        %v5361 = vpop.trf.xlu0
        %v5362 = vpop.trf.xlu0
        %v5363 = vpop.trf.xlu0
        %v5364 = vpop.trf.xlu0
        %v5365 = vpop.trf.xlu0
        %v5366 = vpop.trf.xlu0
        %5367 = vxpose.xlu0.b32.start [1/16] %v501, 128
        %5368 = vxpose.xlu0.b32.cont [2/16] 0.0, 128
        %5369 = vxpose.xlu0.b32.cont [3/16] 0.0, 128
        %5370 = vxpose.xlu0.b32.cont [4/16] 0.0, 128
        %5371 = vxpose.xlu0.b32.cont [5/16] 0.0, 128
        %5372 = vxpose.xlu0.b32.cont [6/16] 0.0, 128
        %5373 = vxpose.xlu0.b32.cont [7/16] 0.0, 128
        %5374 = vxpose.xlu0.b32.cont [8/16] 0.0, 128
        %5375 = vxpose.xlu0.b32.cont [9/16] 0.0, 128
        %5376 = vxpose.xlu0.b32.cont [10/16] 0.0, 128
        %5377 = vxpose.xlu0.b32.cont [11/16] 0.0, 128
        %5378 = vxpose.xlu0.b32.cont [12/16] 0.0, 128
        %5379 = vxpose.xlu0.b32.cont [13/16] 0.0, 128
        %5380 = vxpose.xlu0.b32.cont [14/16] 0.0, 128
        %5381 = vxpose.xlu0.b32.cont [15/16] 0.0, 128
        %5382 = vxpose.xlu0.b32.end [16/16] 0.0, 128
        %v5383 = vpop.trf.xlu0
        %v5384 = vpop.trf.xlu0
        %v5385 = vpop.trf.xlu0
        %v5386 = vpop.trf.xlu0
        %v5387 = vpop.trf.xlu0
        %v5388 = vpop.trf.xlu0
        %v5389 = vpop.trf.xlu0
        %v5390 = vpop.trf.xlu0
        %v5391 = vpop.trf.xlu0
        %v5392 = vpop.trf.xlu0
        %v5393 = vpop.trf.xlu0
        %v5394 = vpop.trf.xlu0
        %v5395 = vpop.trf.xlu0
        %v5396 = vpop.trf.xlu0
        %v5397 = vpop.trf.xlu0
        %v5398 = vpop.trf.xlu0
        %5399 = vxpose.xlu0.b32.start [1/16] %v502, 128
        %5400 = vxpose.xlu0.b32.cont [2/16] 0.0, 128
        %5401 = vxpose.xlu0.b32.cont [3/16] 0.0, 128
        %5402 = vxpose.xlu0.b32.cont [4/16] 0.0, 128
        %5403 = vxpose.xlu0.b32.cont [5/16] 0.0, 128
        %5404 = vxpose.xlu0.b32.cont [6/16] 0.0, 128
        %5405 = vxpose.xlu0.b32.cont [7/16] 0.0, 128
        %5406 = vxpose.xlu0.b32.cont [8/16] 0.0, 128
        %5407 = vxpose.xlu0.b32.cont [9/16] 0.0, 128
        %5408 = vxpose.xlu0.b32.cont [10/16] 0.0, 128
        %5409 = vxpose.xlu0.b32.cont [11/16] 0.0, 128
        %5410 = vxpose.xlu0.b32.cont [12/16] 0.0, 128
        %5411 = vxpose.xlu0.b32.cont [13/16] 0.0, 128
        %5412 = vxpose.xlu0.b32.cont [14/16] 0.0, 128
        %5413 = vxpose.xlu0.b32.cont [15/16] 0.0, 128
        %5414 = vxpose.xlu0.b32.end [16/16] 0.0, 128
        %v5415 = vpop.trf.xlu0
        %v5416 = vpop.trf.xlu0
        %v5417 = vpop.trf.xlu0
        %v5418 = vpop.trf.xlu0
        %v5419 = vpop.trf.xlu0
        %v5420 = vpop.trf.xlu0
        %v5421 = vpop.trf.xlu0
        %v5422 = vpop.trf.xlu0
        %v5423 = vpop.trf.xlu0
        %v5424 = vpop.trf.xlu0
        %v5425 = vpop.trf.xlu0
        %v5426 = vpop.trf.xlu0
        %v5427 = vpop.trf.xlu0
        %v5428 = vpop.trf.xlu0
        %v5429 = vpop.trf.xlu0
        %v5430 = vpop.trf.xlu0
        %5431 = vxpose.xlu0.b32.start [1/16] %v503, 128
        %5432 = vxpose.xlu0.b32.cont [2/16] 0.0, 128
        %5433 = vxpose.xlu0.b32.cont [3/16] 0.0, 128
        %5434 = vxpose.xlu0.b32.cont [4/16] 0.0, 128
        %5435 = vxpose.xlu0.b32.cont [5/16] 0.0, 128
        %5436 = vxpose.xlu0.b32.cont [6/16] 0.0, 128
        %5437 = vxpose.xlu0.b32.cont [7/16] 0.0, 128
        %5438 = vxpose.xlu0.b32.cont [8/16] 0.0, 128
        %5439 = vxpose.xlu0.b32.cont [9/16] 0.0, 128
        %5440 = vxpose.xlu0.b32.cont [10/16] 0.0, 128
        %5441 = vxpose.xlu0.b32.cont [11/16] 0.0, 128
        %5442 = vxpose.xlu0.b32.cont [12/16] 0.0, 128
        %5443 = vxpose.xlu0.b32.cont [13/16] 0.0, 128
        %5444 = vxpose.xlu0.b32.cont [14/16] 0.0, 128
        %5445 = vxpose.xlu0.b32.cont [15/16] 0.0, 128
        %5446 = vxpose.xlu0.b32.end [16/16] 0.0, 128
        %v5447 = vpop.trf.xlu0
        %v5448 = vpop.trf.xlu0
        %v5449 = vpop.trf.xlu0
        %v5450 = vpop.trf.xlu0
        %v5451 = vpop.trf.xlu0
        %v5452 = vpop.trf.xlu0
        %v5453 = vpop.trf.xlu0
        %v5454 = vpop.trf.xlu0
        %v5455 = vpop.trf.xlu0
        %v5456 = vpop.trf.xlu0
        %v5457 = vpop.trf.xlu0
        %v5458 = vpop.trf.xlu0
        %v5459 = vpop.trf.xlu0
        %v5460 = vpop.trf.xlu0
        %v5461 = vpop.trf.xlu0
        %v5462 = vpop.trf.xlu0
        %5463 = vxpose.xlu0.b32.start [1/16] %v504, 128
        %5464 = vxpose.xlu0.b32.cont [2/16] 0.0, 128
        %5465 = vxpose.xlu0.b32.cont [3/16] 0.0, 128
        %5466 = vxpose.xlu0.b32.cont [4/16] 0.0, 128
        %5467 = vxpose.xlu0.b32.cont [5/16] 0.0, 128
        %5468 = vxpose.xlu0.b32.cont [6/16] 0.0, 128
        %5469 = vxpose.xlu0.b32.cont [7/16] 0.0, 128
        %5470 = vxpose.xlu0.b32.cont [8/16] 0.0, 128
        %5471 = vxpose.xlu0.b32.cont [9/16] 0.0, 128
        %5472 = vxpose.xlu0.b32.cont [10/16] 0.0, 128
        %5473 = vxpose.xlu0.b32.cont [11/16] 0.0, 128
        %5474 = vxpose.xlu0.b32.cont [12/16] 0.0, 128
        %5475 = vxpose.xlu0.b32.cont [13/16] 0.0, 128
        %5476 = vxpose.xlu0.b32.cont [14/16] 0.0, 128
        %5477 = vxpose.xlu0.b32.cont [15/16] 0.0, 128
        %5478 = vxpose.xlu0.b32.end [16/16] 0.0, 128
        %v5479 = vpop.trf.xlu0
        %v5480 = vpop.trf.xlu0
        %v5481 = vpop.trf.xlu0
        %v5482 = vpop.trf.xlu0
        %v5483 = vpop.trf.xlu0
        %v5484 = vpop.trf.xlu0
        %v5485 = vpop.trf.xlu0
        %v5486 = vpop.trf.xlu0
        %v5487 = vpop.trf.xlu0
        %v5488 = vpop.trf.xlu0
        %v5489 = vpop.trf.xlu0
        %v5490 = vpop.trf.xlu0
        %v5491 = vpop.trf.xlu0
        %v5492 = vpop.trf.xlu0
        %v5493 = vpop.trf.xlu0
        %v5494 = vpop.trf.xlu0
        %5495 = vxpose.xlu0.b32.start [1/16] %v505, 128
        %5496 = vxpose.xlu0.b32.cont [2/16] 0.0, 128
        %5497 = vxpose.xlu0.b32.cont [3/16] 0.0, 128
        %5498 = vxpose.xlu0.b32.cont [4/16] 0.0, 128
        %5499 = vxpose.xlu0.b32.cont [5/16] 0.0, 128
        %5500 = vxpose.xlu0.b32.cont [6/16] 0.0, 128
        %5501 = vxpose.xlu0.b32.cont [7/16] 0.0, 128
        %5502 = vxpose.xlu0.b32.cont [8/16] 0.0, 128
        %5503 = vxpose.xlu0.b32.cont [9/16] 0.0, 128
        %5504 = vxpose.xlu0.b32.cont [10/16] 0.0, 128
        %5505 = vxpose.xlu0.b32.cont [11/16] 0.0, 128
        %5506 = vxpose.xlu0.b32.cont [12/16] 0.0, 128
        %5507 = vxpose.xlu0.b32.cont [13/16] 0.0, 128
        %5508 = vxpose.xlu0.b32.cont [14/16] 0.0, 128
        %5509 = vxpose.xlu0.b32.cont [15/16] 0.0, 128
        %5510 = vxpose.xlu0.b32.end [16/16] 0.0, 128
        %v5511 = vpop.trf.xlu0
        %v5512 = vpop.trf.xlu0
        %v5513 = vpop.trf.xlu0
        %v5514 = vpop.trf.xlu0
        %v5515 = vpop.trf.xlu0
        %v5516 = vpop.trf.xlu0
        %v5517 = vpop.trf.xlu0
        %v5518 = vpop.trf.xlu0
        %v5519 = vpop.trf.xlu0
        %v5520 = vpop.trf.xlu0
        %v5521 = vpop.trf.xlu0
        %v5522 = vpop.trf.xlu0
        %v5523 = vpop.trf.xlu0
        %v5524 = vpop.trf.xlu0
        %v5525 = vpop.trf.xlu0
        %v5526 = vpop.trf.xlu0
        %vm5527 = vcmp.ne.f32.partialorder %v5287, 0.0
        %vm5528 = vcmp.ne.f32.partialorder %v5319, 0.0
        %vm5529 = vcmp.ne.f32.partialorder %v5351, 0.0
        %vm5530 = vcmp.ne.f32.partialorder %v5383, 0.0
        %vm5531 = vcmp.ne.f32.partialorder %v5415, 0.0
        %vm5532 = vcmp.ne.f32.partialorder %v5447, 0.0
        %vm5533 = vcmp.ne.f32.partialorder %v5479, 0.0
        %vm5534 = vcmp.ne.f32.partialorder %v5511, 0.0
        %v5535 = vsel %vm5527, 1, 0
        %v5536 = vsel %vm5528, 1, 0
        %v5537 = vsel %vm5529, 1, 0
        %v5538 = vsel %vm5530, 1, 0
        %v5539 = vsel %vm5531, 1, 0
        %v5540 = vsel %vm5532, 1, 0
        %v5541 = vsel %vm5533, 1, 0
        %v5542 = vsel %vm5534, 1, 0
        %v5543 = vcvt.s32.f32 %v5535
        %v5544 = vcvt.s32.f32 %v5536
        %v5545 = vcvt.s32.f32 %v5537
        %v5546 = vcvt.s32.f32 %v5538
        %v5547 = vcvt.s32.f32 %v5539
        %v5548 = vcvt.s32.f32 %v5540
        %v5549 = vcvt.s32.f32 %v5541
        %v5550 = vcvt.s32.f32 %v5542
        %v5551 = vld [vmem:[%s11] sm:$0xff]
        %v5552 = vld [vmem:[%s11 + $0x8] sm:$0xff]
        %v5553 = vld [vmem:[%s11 + $0x10] sm:$0xff]
        %v5554 = vld [vmem:[%s11 + $0x18] sm:$0xff]
        %v5555 = vld [vmem:[%s11 + $0x20] sm:$0xff]
        %v5556 = vld [vmem:[%s11 + $0x28] sm:$0xff]
        %v5557 = vld [vmem:[%s12] sm:$0x7]
        %v5559 = vlaneseq
        %v5560 = vshrl.u32 %v5559, 7
        %v5561 = vsub.s32 0, %v5560
        %v5562 = vrot.slane %v5557, %v5561
        %v5563 = vlaneseq
        %v5564 = vshrl.u32 %v5563, 7
        %v5565 = vsub.s32 1, %v5564
        %v5566 = vrot.slane %v5557, %v5565
        %v5567 = vlaneseq
        %v5568 = vshrl.u32 %v5567, 7
        %v5569 = vsub.s32 2, %v5568
        %v5570 = vrot.slane %v5557, %v5569
        %v5575 = vsel %vm2017, %v5165, 0
        %v5578 = vsel %vm2017, %v5180, 0
        %v5581 = vsel %vm2017, %v5195, 0
        %v5584 = vsel %vm2017, %v5210, 0
        %v5587 = vsel %vm2017, %v5225, 0
        %v5590 = vsel %vm2017, %v5240, 0
        %v5593 = vsel %vm2017, %v5255, 0
        %v5596 = vsel %vm2017, %v5270, 0
        %5598 = vmatprep.subr.mxu0 0.0
        %5599 = vmatpush1.msra.mxu0 0.0
        %5600 = vmatprep.subr.mxu0 0.0
        %5601 = vmatpush1.msra.mxu0 0.0
        %5602 = vmatprep.subr.mxu0 0.0
        %5603 = vmatpush1.msra.mxu0 0.0
        %5604 = vmatprep.subr.mxu0 0.0
        %5605 = vmatpush1.msra.mxu0 0.0
        %5606 = vmatprep.subr.mxu0 0.0
        %5607 = vmatpush1.msra.mxu0 0.0
        %5608 = vmatprep.subr.mxu0 0.0
        %5609 = vmatpush1.msra.mxu0 0.0
        %5610 = vmatprep.subr.mxu0 0.0
        %5611 = vmatpush1.msra.mxu0 0.0
        %5612 = vmatprep.subr.mxu0 0.0
        %5613 = vmatpush1.msra.mxu0 0.0
        %5614 = vmatprep.subr.mxu0 0.0
        %5615 = vmatpush1.msra.mxu0 0.0
        %5616 = vmatprep.subr.mxu0 0.0
        %5617 = vmatpush1.msra.mxu0 0.0
        %5618 = vmatprep.subr.mxu0 0.0
        %5619 = vmatpush1.msra.mxu0 0.0
        %5620 = vmatprep.subr.mxu0 0.0
        %5621 = vmatpush1.msra.mxu0 0.0
        %5622 = vmatprep.subr.mxu0 0.0
        %5623 = vmatpush1.msra.mxu0 0.0
        %5624 = vmatprep.subr.mxu0 0.0
        %5625 = vmatpush1.msra.mxu0 0.0
        %5626 = vmatprep.subr.mxu0 %v5555
        %5627 = vmatpush1.msra.mxu0 %v5554
        %5628 = vmatprep.subr.mxu0 %v5552
        %5629 = vmatpush1.msra.mxu0 %v5551
        %5630 = vmatprep.subr.mxu0 0.0
        %5631 = vmatpush2.msra.mxu0 0.0
        %5632 = vmatprep.subr.mxu0 0.0
        %5633 = vmatpush2.msra.mxu0 0.0
        %5634 = vmatprep.subr.mxu0 0.0
        %5635 = vmatpush2.msra.mxu0 0.0
        %5636 = vmatprep.subr.mxu0 0.0
        %5637 = vmatpush2.msra.mxu0 0.0
        %5638 = vmatprep.subr.mxu0 0.0
        %5639 = vmatpush2.msra.mxu0 0.0
        %5640 = vmatprep.subr.mxu0 0.0
        %5641 = vmatpush2.msra.mxu0 0.0
        %5642 = vmatprep.subr.mxu0 0.0
        %5643 = vmatpush2.msra.mxu0 0.0
        %5644 = vmatprep.subr.mxu0 0.0
        %5645 = vmatpush2.msra.mxu0 0.0
        %5646 = vmatprep.subr.mxu0 0.0
        %5647 = vmatpush2.msra.mxu0 0.0
        %5648 = vmatprep.subr.mxu0 0.0
        %5649 = vmatpush2.msra.mxu0 0.0
        %5650 = vmatprep.subr.mxu0 0.0
        %5651 = vmatpush2.msra.mxu0 0.0
        %5652 = vmatprep.subr.mxu0 0.0
        %5653 = vmatpush2.msra.mxu0 0.0
        %5654 = vmatprep.subr.mxu0 0.0
        %5655 = vmatpush2.msra.mxu0 0.0
        %5656 = vmatprep.subr.mxu0 0.0
        %5657 = vmatpush2.msra.mxu0 0.0
        %5658 = vmatprep.subr.mxu0 0.0
        %5659 = vmatpush2.msra.mxu0 0.0
        %5660 = vmatprep.subr.mxu0 0.0
        %5661 = vmatpush2.msra.mxu0 0.0
        %5662 = vmatprep.mubr.f32.mxu0 0.0
        %5663 = vmatmul.mubr.f32.gmra.mxu0 %v5575
        %v5664 = vpop.f32.mrf.mxu0
        %v5665 = vadd.f32 %v5562, %v5664
        %v5666 = vpop.f32.mrf.mxu0
        %v5667 = vadd.f32 %v5566, %v5666
        %5668 = vmatprep.mubr.f32.mxu0 0.0
        %5669 = vmatmul.mubr.f32.gmra.mxu0 %v5578
        %v5670 = vpop.f32.mrf.mxu0
        %v5671 = vadd.f32 %v5562, %v5670
        %v5672 = vpop.f32.mrf.mxu0
        %v5673 = vadd.f32 %v5566, %v5672
        %5674 = vmatprep.mubr.f32.mxu0 0.0
        %5675 = vmatmul.mubr.f32.gmra.mxu0 %v5581
        %v5676 = vpop.f32.mrf.mxu0
        %v5677 = vadd.f32 %v5562, %v5676
        %v5678 = vpop.f32.mrf.mxu0
        %v5679 = vadd.f32 %v5566, %v5678
        %5680 = vmatprep.mubr.f32.mxu0 0.0
        %5681 = vmatmul.mubr.f32.gmra.mxu0 %v5584
        %v5682 = vpop.f32.mrf.mxu0
        %v5683 = vadd.f32 %v5562, %v5682
        %v5684 = vpop.f32.mrf.mxu0
        %v5685 = vadd.f32 %v5566, %v5684
        %5686 = vmatprep.mubr.f32.mxu0 0.0
        %5687 = vmatmul.mubr.f32.gmra.mxu0 %v5587
        %v5688 = vpop.f32.mrf.mxu0
        %v5689 = vadd.f32 %v5562, %v5688
        %v5690 = vpop.f32.mrf.mxu0
        %v5691 = vadd.f32 %v5566, %v5690
        %5692 = vmatprep.mubr.f32.mxu0 0.0
        %5693 = vmatmul.mubr.f32.gmra.mxu0 %v5590
        %v5694 = vpop.f32.mrf.mxu0
        %v5695 = vadd.f32 %v5562, %v5694
        %v5696 = vpop.f32.mrf.mxu0
        %v5697 = vadd.f32 %v5566, %v5696
        %5698 = vmatprep.mubr.f32.mxu0 0.0
        %5699 = vmatmul.mubr.f32.gmra.mxu0 %v5593
        %v5700 = vpop.f32.mrf.mxu0
        %v5701 = vadd.f32 %v5562, %v5700
        %v5702 = vpop.f32.mrf.mxu0
        %v5703 = vadd.f32 %v5566, %v5702
        %5704 = vmatprep.mubr.f32.mxu0 0.0
        %5705 = vmatmul.mubr.f32.gmra.mxu0 %v5596
        %v5706 = vpop.f32.mrf.mxu0
        %v5707 = vadd.f32 %v5562, %v5706
        %v5708 = vpop.f32.mrf.mxu0
        %v5709 = vadd.f32 %v5566, %v5708
        %5710 = vdwg.mxu0
        %5711 = vmatprep.subr.mxu0 0.0
        %5712 = vmatpush1.msra.mxu0 0.0
        %5713 = vmatprep.subr.mxu0 0.0
        %5714 = vmatpush1.msra.mxu0 0.0
        %5715 = vmatprep.subr.mxu0 0.0
        %5716 = vmatpush1.msra.mxu0 0.0
        %5717 = vmatprep.subr.mxu0 0.0
        %5718 = vmatpush1.msra.mxu0 0.0
        %5719 = vmatprep.subr.mxu0 0.0
        %5720 = vmatpush1.msra.mxu0 0.0
        %5721 = vmatprep.subr.mxu0 0.0
        %5722 = vmatpush1.msra.mxu0 0.0
        %5723 = vmatprep.subr.mxu0 0.0
        %5724 = vmatpush1.msra.mxu0 0.0
        %5725 = vmatprep.subr.mxu0 0.0
        %5726 = vmatpush1.msra.mxu0 0.0
        %5727 = vmatprep.subr.mxu0 0.0
        %5728 = vmatpush1.msra.mxu0 0.0
        %5729 = vmatprep.subr.mxu0 0.0
        %5730 = vmatpush1.msra.mxu0 0.0
        %5731 = vmatprep.subr.mxu0 0.0
        %5732 = vmatpush1.msra.mxu0 0.0
        %5733 = vmatprep.subr.mxu0 0.0
        %5734 = vmatpush1.msra.mxu0 0.0
        %5735 = vmatprep.subr.mxu0 0.0
        %5736 = vmatpush1.msra.mxu0 0.0
        %5737 = vmatprep.subr.mxu0 0.0
        %5738 = vmatpush1.msra.mxu0 0.0
        %5739 = vmatprep.subr.mxu0 0.0
        %5740 = vmatpush1.msra.mxu0 %v5556
        %5741 = vmatprep.subr.mxu0 0.0
        %5742 = vmatpush1.msra.mxu0 %v5553
        %5743 = vmatprep.subr.mxu0 0.0
        %5744 = vmatpush2.msra.mxu0 0.0
        %5745 = vmatprep.subr.mxu0 0.0
        %5746 = vmatpush2.msra.mxu0 0.0
        %5747 = vmatprep.subr.mxu0 0.0
        %5748 = vmatpush2.msra.mxu0 0.0
        %5749 = vmatprep.subr.mxu0 0.0
        %5750 = vmatpush2.msra.mxu0 0.0
        %5751 = vmatprep.subr.mxu0 0.0
        %5752 = vmatpush2.msra.mxu0 0.0
        %5753 = vmatprep.subr.mxu0 0.0
        %5754 = vmatpush2.msra.mxu0 0.0
        %5755 = vmatprep.subr.mxu0 0.0
        %5756 = vmatpush2.msra.mxu0 0.0
        %5757 = vmatprep.subr.mxu0 0.0
        %5758 = vmatpush2.msra.mxu0 0.0
        %5759 = vmatprep.subr.mxu0 0.0
        %5760 = vmatpush2.msra.mxu0 0.0
        %5761 = vmatprep.subr.mxu0 0.0
        %5762 = vmatpush2.msra.mxu0 0.0
        %5763 = vmatprep.subr.mxu0 0.0
        %5764 = vmatpush2.msra.mxu0 0.0
        %5765 = vmatprep.subr.mxu0 0.0
        %5766 = vmatpush2.msra.mxu0 0.0
        %5767 = vmatprep.subr.mxu0 0.0
        %5768 = vmatpush2.msra.mxu0 0.0
        %5769 = vmatprep.subr.mxu0 0.0
        %5770 = vmatpush2.msra.mxu0 0.0
        %5771 = vmatprep.subr.mxu0 0.0
        %5772 = vmatpush2.msra.mxu0 0.0
        %5773 = vmatprep.subr.mxu0 0.0
        %5774 = vmatpush2.msra.mxu0 0.0
        %5775 = vmatprep.mubr.f32.mxu0 0.0
        %5776 = vmatmul.mubr.f32.gmra.mxu0 %v5575
        %v5777 = vpop.f32.mrf.mxu0
        %v5778 = vadd.f32 %v5570, %v5777
        %v5779 = vpop.f32.mrf.mxu0
        %5780 = vmatprep.mubr.f32.mxu0 0.0
        %5781 = vmatmul.mubr.f32.gmra.mxu0 %v5578
        %v5782 = vpop.f32.mrf.mxu0
        %v5783 = vadd.f32 %v5570, %v5782
        %v5784 = vpop.f32.mrf.mxu0
        %5785 = vmatprep.mubr.f32.mxu0 0.0
        %5786 = vmatmul.mubr.f32.gmra.mxu0 %v5581
        %v5787 = vpop.f32.mrf.mxu0
        %v5788 = vadd.f32 %v5570, %v5787
        %v5789 = vpop.f32.mrf.mxu0
        %5790 = vmatprep.mubr.f32.mxu0 0.0
        %5791 = vmatmul.mubr.f32.gmra.mxu0 %v5584
        %v5792 = vpop.f32.mrf.mxu0
        %v5793 = vadd.f32 %v5570, %v5792
        %v5794 = vpop.f32.mrf.mxu0
        %5795 = vmatprep.mubr.f32.mxu0 0.0
        %5796 = vmatmul.mubr.f32.gmra.mxu0 %v5587
        %v5797 = vpop.f32.mrf.mxu0
        %v5798 = vadd.f32 %v5570, %v5797
        %v5799 = vpop.f32.mrf.mxu0
        %5800 = vmatprep.mubr.f32.mxu0 0.0
        %5801 = vmatmul.mubr.f32.gmra.mxu0 %v5590
        %v5802 = vpop.f32.mrf.mxu0
        %v5803 = vadd.f32 %v5570, %v5802
        %v5804 = vpop.f32.mrf.mxu0
        %5805 = vmatprep.mubr.f32.mxu0 0.0
        %5806 = vmatmul.mubr.f32.gmra.mxu0 %v5593
        %v5807 = vpop.f32.mrf.mxu0
        %v5808 = vadd.f32 %v5570, %v5807
        %v5809 = vpop.f32.mrf.mxu0
        %5810 = vmatprep.mubr.f32.mxu0 0.0
        %5811 = vmatmul.mubr.f32.gmra.mxu0 %v5596
        %v5812 = vpop.f32.mrf.mxu0
        %v5813 = vadd.f32 %v5570, %v5812
        %v5814 = vpop.f32.mrf.mxu0
        %5815 = vdwg.mxu0
        %v5816 = vld [vmem:[%s13] sm:$0x7]
        %v5817 = vlaneseq
        %v5818 = vshrl.u32 %v5817, 7
        %v5819 = vsub.s32 0, %v5818
        %v5820 = vrot.slane %v5816, %v5819
        %v5821 = vmul.f32 %v5665, %v5820
        %v5822 = vmul.f32 %v5671, %v5820
        %v5823 = vmul.f32 %v5677, %v5820
        %v5824 = vmul.f32 %v5683, %v5820
        %v5825 = vmul.f32 %v5689, %v5820
        %v5826 = vmul.f32 %v5695, %v5820
        %v5827 = vmul.f32 %v5701, %v5820
        %v5828 = vmul.f32 %v5707, %v5820
        %vm5829 = vcmask 261120
        %v5830 = vsel %vm5829, %v5821, 0.0
        %5831 = vadd.xlane.f32.xlu0 %v5830
        %v5832 = vpop.xlane.xlu0 %5831
        %v5833 = vsel %vm5829, %v5822, 0.0
        %5834 = vadd.xlane.f32.xlu0 %v5833
        %v5835 = vpop.xlane.xlu0 %5834
        %v5836 = vsel %vm5829, %v5823, 0.0
        %5837 = vadd.xlane.f32.xlu0 %v5836
        %v5838 = vpop.xlane.xlu0 %5837
        %v5839 = vsel %vm5829, %v5824, 0.0
        %5840 = vadd.xlane.f32.xlu0 %v5839
        %v5841 = vpop.xlane.xlu0 %5840
        %v5842 = vsel %vm5829, %v5825, 0.0
        %5843 = vadd.xlane.f32.xlu0 %v5842
        %v5844 = vpop.xlane.xlu0 %5843
        %v5845 = vsel %vm5829, %v5826, 0.0
        %5846 = vadd.xlane.f32.xlu0 %v5845
        %v5847 = vpop.xlane.xlu0 %5846
        %v5848 = vsel %vm5829, %v5827, 0.0
        %5849 = vadd.xlane.f32.xlu0 %v5848
        %v5850 = vpop.xlane.xlu0 %5849
        %v5851 = vsel %vm5829, %v5828, 0.0
        %5852 = vadd.xlane.f32.xlu0 %v5851
        %v5853 = vpop.xlane.xlu0 %5852
        %v5854 = vmul.f32 %v5287, %v5832
        %v5855 = vmul.f32 %v5319, %v5835
        %v5856 = vmul.f32 %v5351, %v5838
        %v5857 = vmul.f32 %v5383, %v5841
        %v5858 = vmul.f32 %v5415, %v5844
        %v5859 = vmul.f32 %v5447, %v5847
        %v5860 = vmul.f32 %v5479, %v5850
        %v5861 = vmul.f32 %v5511, %v5853
        %5863 = vrot.lane.b32.xlu0 %v5665, 32
        %v5864 = vpop.permute.xlu0 %5863
        %v5865 = vsel %vm5829, %v5665, 0
        %v5867 = vsel %vm5829, %v5864, 0
        %5869 = vmatprep.subr.mxu0 0.0
        %5870 = vmatpush1.xpose.msra.mxu0 0.0
        %5871 = vmatprep.subr.mxu0 0.0
        %5872 = vmatpush1.xpose.msra.mxu0 0.0
        %5873 = vmatprep.subr.mxu0 0.0
        %5874 = vmatpush1.xpose.msra.mxu0 0.0
        %5875 = vmatprep.subr.mxu0 0.0
        %5876 = vmatpush1.xpose.msra.mxu0 0.0
        %5877 = vmatprep.subr.mxu0 0.0
        %5878 = vmatpush1.xpose.msra.mxu0 0.0
        %5879 = vmatprep.subr.mxu0 0.0
        %5880 = vmatpush1.xpose.msra.mxu0 0.0
        %5881 = vmatprep.subr.mxu0 0.0
        %5882 = vmatpush1.xpose.msra.mxu0 0.0
        %5883 = vmatprep.subr.mxu0 0.0
        %5884 = vmatpush1.xpose.msra.mxu0 0.0
        %5885 = vmatprep.subr.mxu0 0.0
        %5886 = vmatpush1.xpose.msra.mxu0 0.0
        %5887 = vmatprep.subr.mxu0 0.0
        %5888 = vmatpush1.xpose.msra.mxu0 0.0
        %5889 = vmatprep.subr.mxu0 0.0
        %5890 = vmatpush1.xpose.msra.mxu0 0.0
        %5891 = vmatprep.subr.mxu0 0.0
        %5892 = vmatpush1.xpose.msra.mxu0 0.0
        %5893 = vmatprep.subr.mxu0 0.0
        %5894 = vmatpush1.xpose.msra.mxu0 0.0
        %5895 = vmatprep.subr.mxu0 0.0
        %5896 = vmatpush1.xpose.msra.mxu0 0.0
        %5897 = vmatprep.subr.mxu0 0.0
        %5898 = vmatpush1.xpose.msra.mxu0 0.0
        %5899 = vmatprep.subr.mxu0 0.0
        %5900 = vmatpush1.xpose.msra.mxu0 %v5867
        %5901 = vmatprep.subr.mxu0 0.0
        %5902 = vmatpush2.xpose.msra.mxu0 0.0
        %5903 = vmatprep.subr.mxu0 0.0
        %5904 = vmatpush2.xpose.msra.mxu0 0.0
        %5905 = vmatprep.subr.mxu0 0.0
        %5906 = vmatpush2.xpose.msra.mxu0 0.0
        %5907 = vmatprep.subr.mxu0 0.0
        %5908 = vmatpush2.xpose.msra.mxu0 0.0
        %5909 = vmatprep.subr.mxu0 0.0
        %5910 = vmatpush2.xpose.msra.mxu0 0.0
        %5911 = vmatprep.subr.mxu0 0.0
        %5912 = vmatpush2.xpose.msra.mxu0 0.0
        %5913 = vmatprep.subr.mxu0 0.0
        %5914 = vmatpush2.xpose.msra.mxu0 0.0
        %5915 = vmatprep.subr.mxu0 0.0
        %5916 = vmatpush2.xpose.msra.mxu0 0.0
        %5917 = vmatprep.subr.mxu0 0.0
        %5918 = vmatpush2.xpose.msra.mxu0 0.0
        %5919 = vmatprep.subr.mxu0 0.0
        %5920 = vmatpush2.xpose.msra.mxu0 0.0
        %5921 = vmatprep.subr.mxu0 0.0
        %5922 = vmatpush2.xpose.msra.mxu0 0.0
        %5923 = vmatprep.subr.mxu0 0.0
        %5924 = vmatpush2.xpose.msra.mxu0 0.0
        %5925 = vmatprep.subr.mxu0 0.0
        %5926 = vmatpush2.xpose.msra.mxu0 0.0
        %5927 = vmatprep.subr.mxu0 0.0
        %5928 = vmatpush2.xpose.msra.mxu0 0.0
        %5929 = vmatprep.subr.mxu0 0.0
        %5930 = vmatpush2.xpose.msra.mxu0 0.0
        %5931 = vmatprep.subr.mxu0 0.0
        %5932 = vmatpush2.xpose.msra.mxu0 0.0
        %5933 = vmatprep.mubr.f32.mxu0 0.0
        %5934 = vmatmul.mubr.f32.gmra.mxu0 %v5865
        %v5935 = vpop.f32.mrf.mxu0
        %v5936 = vadd.f32 %v5854, %v5935
        %v5937 = vpop.f32.mrf.mxu0
        %5938 = vdwg.mxu0
        %5940 = vrot.lane.b32.xlu0 %v5671, 32
        %v5941 = vpop.permute.xlu0 %5940
        %v5942 = vsel %vm5829, %v5671, 0
        %v5944 = vsel %vm5829, %v5941, 0
        %5946 = vmatprep.subr.mxu0 0.0
        %5947 = vmatpush1.xpose.msra.mxu0 0.0
        %5948 = vmatprep.subr.mxu0 0.0
        %5949 = vmatpush1.xpose.msra.mxu0 0.0
        %5950 = vmatprep.subr.mxu0 0.0
        %5951 = vmatpush1.xpose.msra.mxu0 0.0
        %5952 = vmatprep.subr.mxu0 0.0
        %5953 = vmatpush1.xpose.msra.mxu0 0.0
        %5954 = vmatprep.subr.mxu0 0.0
        %5955 = vmatpush1.xpose.msra.mxu0 0.0
        %5956 = vmatprep.subr.mxu0 0.0
        %5957 = vmatpush1.xpose.msra.mxu0 0.0
        %5958 = vmatprep.subr.mxu0 0.0
        %5959 = vmatpush1.xpose.msra.mxu0 0.0
        %5960 = vmatprep.subr.mxu0 0.0
        %5961 = vmatpush1.xpose.msra.mxu0 0.0
        %5962 = vmatprep.subr.mxu0 0.0
        %5963 = vmatpush1.xpose.msra.mxu0 0.0
        %5964 = vmatprep.subr.mxu0 0.0
        %5965 = vmatpush1.xpose.msra.mxu0 0.0
        %5966 = vmatprep.subr.mxu0 0.0
        %5967 = vmatpush1.xpose.msra.mxu0 0.0
        %5968 = vmatprep.subr.mxu0 0.0
        %5969 = vmatpush1.xpose.msra.mxu0 0.0
        %5970 = vmatprep.subr.mxu0 0.0
        %5971 = vmatpush1.xpose.msra.mxu0 0.0
        %5972 = vmatprep.subr.mxu0 0.0
        %5973 = vmatpush1.xpose.msra.mxu0 0.0
        %5974 = vmatprep.subr.mxu0 0.0
        %5975 = vmatpush1.xpose.msra.mxu0 0.0
        %5976 = vmatprep.subr.mxu0 0.0
        %5977 = vmatpush1.xpose.msra.mxu0 %v5944
        %5978 = vmatprep.subr.mxu0 0.0
        %5979 = vmatpush2.xpose.msra.mxu0 0.0
        %5980 = vmatprep.subr.mxu0 0.0
        %5981 = vmatpush2.xpose.msra.mxu0 0.0
        %5982 = vmatprep.subr.mxu0 0.0
        %5983 = vmatpush2.xpose.msra.mxu0 0.0
        %5984 = vmatprep.subr.mxu0 0.0
        %5985 = vmatpush2.xpose.msra.mxu0 0.0
        %5986 = vmatprep.subr.mxu0 0.0
        %5987 = vmatpush2.xpose.msra.mxu0 0.0
        %5988 = vmatprep.subr.mxu0 0.0
        %5989 = vmatpush2.xpose.msra.mxu0 0.0
        %5990 = vmatprep.subr.mxu0 0.0
        %5991 = vmatpush2.xpose.msra.mxu0 0.0
        %5992 = vmatprep.subr.mxu0 0.0
        %5993 = vmatpush2.xpose.msra.mxu0 0.0
        %5994 = vmatprep.subr.mxu0 0.0
        %5995 = vmatpush2.xpose.msra.mxu0 0.0
        %5996 = vmatprep.subr.mxu0 0.0
        %5997 = vmatpush2.xpose.msra.mxu0 0.0
        %5998 = vmatprep.subr.mxu0 0.0
        %5999 = vmatpush2.xpose.msra.mxu0 0.0
        %6000 = vmatprep.subr.mxu0 0.0
        %6001 = vmatpush2.xpose.msra.mxu0 0.0
        %6002 = vmatprep.subr.mxu0 0.0
        %6003 = vmatpush2.xpose.msra.mxu0 0.0
        %6004 = vmatprep.subr.mxu0 0.0
        %6005 = vmatpush2.xpose.msra.mxu0 0.0
        %6006 = vmatprep.subr.mxu0 0.0
        %6007 = vmatpush2.xpose.msra.mxu0 0.0
        %6008 = vmatprep.subr.mxu0 0.0
        %6009 = vmatpush2.xpose.msra.mxu0 0.0
        %6010 = vmatprep.mubr.f32.mxu0 0.0
        %6011 = vmatmul.mubr.f32.gmra.mxu0 %v5942
        %v6012 = vpop.f32.mrf.mxu0
        %v6013 = vadd.f32 %v5855, %v6012
        %v6014 = vpop.f32.mrf.mxu0
        %6015 = vdwg.mxu0
        %6017 = vrot.lane.b32.xlu0 %v5677, 32
        %v6018 = vpop.permute.xlu0 %6017
        %v6019 = vsel %vm5829, %v5677, 0
        %v6021 = vsel %vm5829, %v6018, 0
        %6023 = vmatprep.subr.mxu0 0.0
        %6024 = vmatpush1.xpose.msra.mxu0 0.0
        %6025 = vmatprep.subr.mxu0 0.0
        %6026 = vmatpush1.xpose.msra.mxu0 0.0
        %6027 = vmatprep.subr.mxu0 0.0
        %6028 = vmatpush1.xpose.msra.mxu0 0.0
        %6029 = vmatprep.subr.mxu0 0.0
        %6030 = vmatpush1.xpose.msra.mxu0 0.0
        %6031 = vmatprep.subr.mxu0 0.0
        %6032 = vmatpush1.xpose.msra.mxu0 0.0
        %6033 = vmatprep.subr.mxu0 0.0
        %6034 = vmatpush1.xpose.msra.mxu0 0.0
        %6035 = vmatprep.subr.mxu0 0.0
        %6036 = vmatpush1.xpose.msra.mxu0 0.0
        %6037 = vmatprep.subr.mxu0 0.0
        %6038 = vmatpush1.xpose.msra.mxu0 0.0
        %6039 = vmatprep.subr.mxu0 0.0
        %6040 = vmatpush1.xpose.msra.mxu0 0.0
        %6041 = vmatprep.subr.mxu0 0.0
        %6042 = vmatpush1.xpose.msra.mxu0 0.0
        %6043 = vmatprep.subr.mxu0 0.0
        %6044 = vmatpush1.xpose.msra.mxu0 0.0
        %6045 = vmatprep.subr.mxu0 0.0
        %6046 = vmatpush1.xpose.msra.mxu0 0.0
        %6047 = vmatprep.subr.mxu0 0.0
        %6048 = vmatpush1.xpose.msra.mxu0 0.0
        %6049 = vmatprep.subr.mxu0 0.0
        %6050 = vmatpush1.xpose.msra.mxu0 0.0
        %6051 = vmatprep.subr.mxu0 0.0
        %6052 = vmatpush1.xpose.msra.mxu0 0.0
        %6053 = vmatprep.subr.mxu0 0.0
        %6054 = vmatpush1.xpose.msra.mxu0 %v6021
        %6055 = vmatprep.subr.mxu0 0.0
        %6056 = vmatpush2.xpose.msra.mxu0 0.0
        %6057 = vmatprep.subr.mxu0 0.0
        %6058 = vmatpush2.xpose.msra.mxu0 0.0
        %6059 = vmatprep.subr.mxu0 0.0
        %6060 = vmatpush2.xpose.msra.mxu0 0.0
        %6061 = vmatprep.subr.mxu0 0.0
        %6062 = vmatpush2.xpose.msra.mxu0 0.0
        %6063 = vmatprep.subr.mxu0 0.0
        %6064 = vmatpush2.xpose.msra.mxu0 0.0
        %6065 = vmatprep.subr.mxu0 0.0
        %6066 = vmatpush2.xpose.msra.mxu0 0.0
        %6067 = vmatprep.subr.mxu0 0.0
        %6068 = vmatpush2.xpose.msra.mxu0 0.0
        %6069 = vmatprep.subr.mxu0 0.0
        %6070 = vmatpush2.xpose.msra.mxu0 0.0
        %6071 = vmatprep.subr.mxu0 0.0
        %6072 = vmatpush2.xpose.msra.mxu0 0.0
        %6073 = vmatprep.subr.mxu0 0.0
        %6074 = vmatpush2.xpose.msra.mxu0 0.0
        %6075 = vmatprep.subr.mxu0 0.0
        %6076 = vmatpush2.xpose.msra.mxu0 0.0
        %6077 = vmatprep.subr.mxu0 0.0
        %6078 = vmatpush2.xpose.msra.mxu0 0.0
        %6079 = vmatprep.subr.mxu0 0.0
        %6080 = vmatpush2.xpose.msra.mxu0 0.0
        %6081 = vmatprep.subr.mxu0 0.0
        %6082 = vmatpush2.xpose.msra.mxu0 0.0
        %6083 = vmatprep.subr.mxu0 0.0
        %6084 = vmatpush2.xpose.msra.mxu0 0.0
        %6085 = vmatprep.subr.mxu0 0.0
        %6086 = vmatpush2.xpose.msra.mxu0 0.0
        %6087 = vmatprep.mubr.f32.mxu0 0.0
        %6088 = vmatmul.mubr.f32.gmra.mxu0 %v6019
        %v6089 = vpop.f32.mrf.mxu0
        %v6090 = vadd.f32 %v5856, %v6089
        %v6091 = vpop.f32.mrf.mxu0
        %6092 = vdwg.mxu0
        %6094 = vrot.lane.b32.xlu0 %v5683, 32
        %v6095 = vpop.permute.xlu0 %6094
        %v6096 = vsel %vm5829, %v5683, 0
        %v6098 = vsel %vm5829, %v6095, 0
        %6100 = vmatprep.subr.mxu0 0.0
        %6101 = vmatpush1.xpose.msra.mxu0 0.0
        %6102 = vmatprep.subr.mxu0 0.0
        %6103 = vmatpush1.xpose.msra.mxu0 0.0
        %6104 = vmatprep.subr.mxu0 0.0
        %6105 = vmatpush1.xpose.msra.mxu0 0.0
        %6106 = vmatprep.subr.mxu0 0.0
        %6107 = vmatpush1.xpose.msra.mxu0 0.0
        %6108 = vmatprep.subr.mxu0 0.0
        %6109 = vmatpush1.xpose.msra.mxu0 0.0
        %6110 = vmatprep.subr.mxu0 0.0
        %6111 = vmatpush1.xpose.msra.mxu0 0.0
        %6112 = vmatprep.subr.mxu0 0.0
        %6113 = vmatpush1.xpose.msra.mxu0 0.0
        %6114 = vmatprep.subr.mxu0 0.0
        %6115 = vmatpush1.xpose.msra.mxu0 0.0
        %6116 = vmatprep.subr.mxu0 0.0
        %6117 = vmatpush1.xpose.msra.mxu0 0.0
        %6118 = vmatprep.subr.mxu0 0.0
        %6119 = vmatpush1.xpose.msra.mxu0 0.0
        %6120 = vmatprep.subr.mxu0 0.0
        %6121 = vmatpush1.xpose.msra.mxu0 0.0
        %6122 = vmatprep.subr.mxu0 0.0
        %6123 = vmatpush1.xpose.msra.mxu0 0.0
        %6124 = vmatprep.subr.mxu0 0.0
        %6125 = vmatpush1.xpose.msra.mxu0 0.0
        %6126 = vmatprep.subr.mxu0 0.0
        %6127 = vmatpush1.xpose.msra.mxu0 0.0
        %6128 = vmatprep.subr.mxu0 0.0
        %6129 = vmatpush1.xpose.msra.mxu0 0.0
        %6130 = vmatprep.subr.mxu0 0.0
        %6131 = vmatpush1.xpose.msra.mxu0 %v6098
        %6132 = vmatprep.subr.mxu0 0.0
        %6133 = vmatpush2.xpose.msra.mxu0 0.0
        %6134 = vmatprep.subr.mxu0 0.0
        %6135 = vmatpush2.xpose.msra.mxu0 0.0
        %6136 = vmatprep.subr.mxu0 0.0
        %6137 = vmatpush2.xpose.msra.mxu0 0.0
        %6138 = vmatprep.subr.mxu0 0.0
        %6139 = vmatpush2.xpose.msra.mxu0 0.0
        %6140 = vmatprep.subr.mxu0 0.0
        %6141 = vmatpush2.xpose.msra.mxu0 0.0
        %6142 = vmatprep.subr.mxu0 0.0
        %6143 = vmatpush2.xpose.msra.mxu0 0.0
        %6144 = vmatprep.subr.mxu0 0.0
        %6145 = vmatpush2.xpose.msra.mxu0 0.0
        %6146 = vmatprep.subr.mxu0 0.0
        %6147 = vmatpush2.xpose.msra.mxu0 0.0
        %6148 = vmatprep.subr.mxu0 0.0
        %6149 = vmatpush2.xpose.msra.mxu0 0.0
        %6150 = vmatprep.subr.mxu0 0.0
        %6151 = vmatpush2.xpose.msra.mxu0 0.0
        %6152 = vmatprep.subr.mxu0 0.0
        %6153 = vmatpush2.xpose.msra.mxu0 0.0
        %6154 = vmatprep.subr.mxu0 0.0
        %6155 = vmatpush2.xpose.msra.mxu0 0.0
        %6156 = vmatprep.subr.mxu0 0.0
        %6157 = vmatpush2.xpose.msra.mxu0 0.0
        %6158 = vmatprep.subr.mxu0 0.0
        %6159 = vmatpush2.xpose.msra.mxu0 0.0
        %6160 = vmatprep.subr.mxu0 0.0
        %6161 = vmatpush2.xpose.msra.mxu0 0.0
        %6162 = vmatprep.subr.mxu0 0.0
        %6163 = vmatpush2.xpose.msra.mxu0 0.0
        %6164 = vmatprep.mubr.f32.mxu0 0.0
        %6165 = vmatmul.mubr.f32.gmra.mxu0 %v6096
        %v6166 = vpop.f32.mrf.mxu0
        %v6167 = vadd.f32 %v5857, %v6166
        %v6168 = vpop.f32.mrf.mxu0
        %6169 = vdwg.mxu0
        %6171 = vrot.lane.b32.xlu0 %v5689, 32
        %v6172 = vpop.permute.xlu0 %6171
        %v6173 = vsel %vm5829, %v5689, 0
        %v6175 = vsel %vm5829, %v6172, 0
        %6177 = vmatprep.subr.mxu0 0.0
        %6178 = vmatpush1.xpose.msra.mxu0 0.0
        %6179 = vmatprep.subr.mxu0 0.0
        %6180 = vmatpush1.xpose.msra.mxu0 0.0
        %6181 = vmatprep.subr.mxu0 0.0
        %6182 = vmatpush1.xpose.msra.mxu0 0.0
        %6183 = vmatprep.subr.mxu0 0.0
        %6184 = vmatpush1.xpose.msra.mxu0 0.0
        %6185 = vmatprep.subr.mxu0 0.0
        %6186 = vmatpush1.xpose.msra.mxu0 0.0
        %6187 = vmatprep.subr.mxu0 0.0
        %6188 = vmatpush1.xpose.msra.mxu0 0.0
        %6189 = vmatprep.subr.mxu0 0.0
        %6190 = vmatpush1.xpose.msra.mxu0 0.0
        %6191 = vmatprep.subr.mxu0 0.0
        %6192 = vmatpush1.xpose.msra.mxu0 0.0
        %6193 = vmatprep.subr.mxu0 0.0
        %6194 = vmatpush1.xpose.msra.mxu0 0.0
        %6195 = vmatprep.subr.mxu0 0.0
        %6196 = vmatpush1.xpose.msra.mxu0 0.0
        %6197 = vmatprep.subr.mxu0 0.0
        %6198 = vmatpush1.xpose.msra.mxu0 0.0
        %6199 = vmatprep.subr.mxu0 0.0
        %6200 = vmatpush1.xpose.msra.mxu0 0.0
        %6201 = vmatprep.subr.mxu0 0.0
        %6202 = vmatpush1.xpose.msra.mxu0 0.0
        %6203 = vmatprep.subr.mxu0 0.0
        %6204 = vmatpush1.xpose.msra.mxu0 0.0
        %6205 = vmatprep.subr.mxu0 0.0
        %6206 = vmatpush1.xpose.msra.mxu0 0.0
        %6207 = vmatprep.subr.mxu0 0.0
        %6208 = vmatpush1.xpose.msra.mxu0 %v6175
        %6209 = vmatprep.subr.mxu0 0.0
        %6210 = vmatpush2.xpose.msra.mxu0 0.0
        %6211 = vmatprep.subr.mxu0 0.0
        %6212 = vmatpush2.xpose.msra.mxu0 0.0
        %6213 = vmatprep.subr.mxu0 0.0
        %6214 = vmatpush2.xpose.msra.mxu0 0.0
        %6215 = vmatprep.subr.mxu0 0.0
        %6216 = vmatpush2.xpose.msra.mxu0 0.0
        %6217 = vmatprep.subr.mxu0 0.0
        %6218 = vmatpush2.xpose.msra.mxu0 0.0
        %6219 = vmatprep.subr.mxu0 0.0
        %6220 = vmatpush2.xpose.msra.mxu0 0.0
        %6221 = vmatprep.subr.mxu0 0.0
        %6222 = vmatpush2.xpose.msra.mxu0 0.0
        %6223 = vmatprep.subr.mxu0 0.0
        %6224 = vmatpush2.xpose.msra.mxu0 0.0
        %6225 = vmatprep.subr.mxu0 0.0
        %6226 = vmatpush2.xpose.msra.mxu0 0.0
        %6227 = vmatprep.subr.mxu0 0.0
        %6228 = vmatpush2.xpose.msra.mxu0 0.0
        %6229 = vmatprep.subr.mxu0 0.0
        %6230 = vmatpush2.xpose.msra.mxu0 0.0
        %6231 = vmatprep.subr.mxu0 0.0
        %6232 = vmatpush2.xpose.msra.mxu0 0.0
        %6233 = vmatprep.subr.mxu0 0.0
        %6234 = vmatpush2.xpose.msra.mxu0 0.0
        %6235 = vmatprep.subr.mxu0 0.0
        %6236 = vmatpush2.xpose.msra.mxu0 0.0
        %6237 = vmatprep.subr.mxu0 0.0
        %6238 = vmatpush2.xpose.msra.mxu0 0.0
        %6239 = vmatprep.subr.mxu0 0.0
        %6240 = vmatpush2.xpose.msra.mxu0 0.0
        %6241 = vmatprep.mubr.f32.mxu0 0.0
        %6242 = vmatmul.mubr.f32.gmra.mxu0 %v6173
        %v6243 = vpop.f32.mrf.mxu0
        %v6244 = vadd.f32 %v5858, %v6243
        %v6245 = vpop.f32.mrf.mxu0
        %6246 = vdwg.mxu0
        %6248 = vrot.lane.b32.xlu0 %v5695, 32
        %v6249 = vpop.permute.xlu0 %6248
        %v6250 = vsel %vm5829, %v5695, 0
        %v6252 = vsel %vm5829, %v6249, 0
        %6254 = vmatprep.subr.mxu0 0.0
        %6255 = vmatpush1.xpose.msra.mxu0 0.0
        %6256 = vmatprep.subr.mxu0 0.0
        %6257 = vmatpush1.xpose.msra.mxu0 0.0
        %6258 = vmatprep.subr.mxu0 0.0
        %6259 = vmatpush1.xpose.msra.mxu0 0.0
        %6260 = vmatprep.subr.mxu0 0.0
        %6261 = vmatpush1.xpose.msra.mxu0 0.0
        %6262 = vmatprep.subr.mxu0 0.0
        %6263 = vmatpush1.xpose.msra.mxu0 0.0
        %6264 = vmatprep.subr.mxu0 0.0
        %6265 = vmatpush1.xpose.msra.mxu0 0.0
        %6266 = vmatprep.subr.mxu0 0.0
        %6267 = vmatpush1.xpose.msra.mxu0 0.0
        %6268 = vmatprep.subr.mxu0 0.0
        %6269 = vmatpush1.xpose.msra.mxu0 0.0
        %6270 = vmatprep.subr.mxu0 0.0
        %6271 = vmatpush1.xpose.msra.mxu0 0.0
        %6272 = vmatprep.subr.mxu0 0.0
        %6273 = vmatpush1.xpose.msra.mxu0 0.0
        %6274 = vmatprep.subr.mxu0 0.0
        %6275 = vmatpush1.xpose.msra.mxu0 0.0
        %6276 = vmatprep.subr.mxu0 0.0
        %6277 = vmatpush1.xpose.msra.mxu0 0.0
        %6278 = vmatprep.subr.mxu0 0.0
        %6279 = vmatpush1.xpose.msra.mxu0 0.0
        %6280 = vmatprep.subr.mxu0 0.0
        %6281 = vmatpush1.xpose.msra.mxu0 0.0
        %6282 = vmatprep.subr.mxu0 0.0
        %6283 = vmatpush1.xpose.msra.mxu0 0.0
        %6284 = vmatprep.subr.mxu0 0.0
        %6285 = vmatpush1.xpose.msra.mxu0 %v6252
        %6286 = vmatprep.subr.mxu0 0.0
        %6287 = vmatpush2.xpose.msra.mxu0 0.0
        %6288 = vmatprep.subr.mxu0 0.0
        %6289 = vmatpush2.xpose.msra.mxu0 0.0
        %6290 = vmatprep.subr.mxu0 0.0
        %6291 = vmatpush2.xpose.msra.mxu0 0.0
        %6292 = vmatprep.subr.mxu0 0.0
        %6293 = vmatpush2.xpose.msra.mxu0 0.0
        %6294 = vmatprep.subr.mxu0 0.0
        %6295 = vmatpush2.xpose.msra.mxu0 0.0
        %6296 = vmatprep.subr.mxu0 0.0
        %6297 = vmatpush2.xpose.msra.mxu0 0.0
        %6298 = vmatprep.subr.mxu0 0.0
        %6299 = vmatpush2.xpose.msra.mxu0 0.0
        %6300 = vmatprep.subr.mxu0 0.0
        %6301 = vmatpush2.xpose.msra.mxu0 0.0
        %6302 = vmatprep.subr.mxu0 0.0
        %6303 = vmatpush2.xpose.msra.mxu0 0.0
        %6304 = vmatprep.subr.mxu0 0.0
        %6305 = vmatpush2.xpose.msra.mxu0 0.0
        %6306 = vmatprep.subr.mxu0 0.0
        %6307 = vmatpush2.xpose.msra.mxu0 0.0
        %6308 = vmatprep.subr.mxu0 0.0
        %6309 = vmatpush2.xpose.msra.mxu0 0.0
        %6310 = vmatprep.subr.mxu0 0.0
        %6311 = vmatpush2.xpose.msra.mxu0 0.0
        %6312 = vmatprep.subr.mxu0 0.0
        %6313 = vmatpush2.xpose.msra.mxu0 0.0
        %6314 = vmatprep.subr.mxu0 0.0
        %6315 = vmatpush2.xpose.msra.mxu0 0.0
        %6316 = vmatprep.subr.mxu0 0.0
        %6317 = vmatpush2.xpose.msra.mxu0 0.0
        %6318 = vmatprep.mubr.f32.mxu0 0.0
        %6319 = vmatmul.mubr.f32.gmra.mxu0 %v6250
        %v6320 = vpop.f32.mrf.mxu0
        %v6321 = vadd.f32 %v5859, %v6320
        %v6322 = vpop.f32.mrf.mxu0
        %6323 = vdwg.mxu0
        %6325 = vrot.lane.b32.xlu0 %v5701, 32
        %v6326 = vpop.permute.xlu0 %6325
        %v6327 = vsel %vm5829, %v5701, 0
        %v6329 = vsel %vm5829, %v6326, 0
        %6331 = vmatprep.subr.mxu0 0.0
        %6332 = vmatpush1.xpose.msra.mxu0 0.0
        %6333 = vmatprep.subr.mxu0 0.0
        %6334 = vmatpush1.xpose.msra.mxu0 0.0
        %6335 = vmatprep.subr.mxu0 0.0
        %6336 = vmatpush1.xpose.msra.mxu0 0.0
        %6337 = vmatprep.subr.mxu0 0.0
        %6338 = vmatpush1.xpose.msra.mxu0 0.0
        %6339 = vmatprep.subr.mxu0 0.0
        %6340 = vmatpush1.xpose.msra.mxu0 0.0
        %6341 = vmatprep.subr.mxu0 0.0
        %6342 = vmatpush1.xpose.msra.mxu0 0.0
        %6343 = vmatprep.subr.mxu0 0.0
        %6344 = vmatpush1.xpose.msra.mxu0 0.0
        %6345 = vmatprep.subr.mxu0 0.0
        %6346 = vmatpush1.xpose.msra.mxu0 0.0
        %6347 = vmatprep.subr.mxu0 0.0
        %6348 = vmatpush1.xpose.msra.mxu0 0.0
        %6349 = vmatprep.subr.mxu0 0.0
        %6350 = vmatpush1.xpose.msra.mxu0 0.0
        %6351 = vmatprep.subr.mxu0 0.0
        %6352 = vmatpush1.xpose.msra.mxu0 0.0
        %6353 = vmatprep.subr.mxu0 0.0
        %6354 = vmatpush1.xpose.msra.mxu0 0.0
        %6355 = vmatprep.subr.mxu0 0.0
        %6356 = vmatpush1.xpose.msra.mxu0 0.0
        %6357 = vmatprep.subr.mxu0 0.0
        %6358 = vmatpush1.xpose.msra.mxu0 0.0
        %6359 = vmatprep.subr.mxu0 0.0
        %6360 = vmatpush1.xpose.msra.mxu0 0.0
        %6361 = vmatprep.subr.mxu0 0.0
        %6362 = vmatpush1.xpose.msra.mxu0 %v6329
        %6363 = vmatprep.subr.mxu0 0.0
        %6364 = vmatpush2.xpose.msra.mxu0 0.0
        %6365 = vmatprep.subr.mxu0 0.0
        %6366 = vmatpush2.xpose.msra.mxu0 0.0
        %6367 = vmatprep.subr.mxu0 0.0
        %6368 = vmatpush2.xpose.msra.mxu0 0.0
        %6369 = vmatprep.subr.mxu0 0.0
        %6370 = vmatpush2.xpose.msra.mxu0 0.0
        %6371 = vmatprep.subr.mxu0 0.0
        %6372 = vmatpush2.xpose.msra.mxu0 0.0
        %6373 = vmatprep.subr.mxu0 0.0
        %6374 = vmatpush2.xpose.msra.mxu0 0.0
        %6375 = vmatprep.subr.mxu0 0.0
        %6376 = vmatpush2.xpose.msra.mxu0 0.0
        %6377 = vmatprep.subr.mxu0 0.0
        %6378 = vmatpush2.xpose.msra.mxu0 0.0
        %6379 = vmatprep.subr.mxu0 0.0
        %6380 = vmatpush2.xpose.msra.mxu0 0.0
        %6381 = vmatprep.subr.mxu0 0.0
        %6382 = vmatpush2.xpose.msra.mxu0 0.0
        %6383 = vmatprep.subr.mxu0 0.0
        %6384 = vmatpush2.xpose.msra.mxu0 0.0
        %6385 = vmatprep.subr.mxu0 0.0
        %6386 = vmatpush2.xpose.msra.mxu0 0.0
        %6387 = vmatprep.subr.mxu0 0.0
        %6388 = vmatpush2.xpose.msra.mxu0 0.0
        %6389 = vmatprep.subr.mxu0 0.0
        %6390 = vmatpush2.xpose.msra.mxu0 0.0
        %6391 = vmatprep.subr.mxu0 0.0
        %6392 = vmatpush2.xpose.msra.mxu0 0.0
        %6393 = vmatprep.subr.mxu0 0.0
        %6394 = vmatpush2.xpose.msra.mxu0 0.0
        %6395 = vmatprep.mubr.f32.mxu0 0.0
        %6396 = vmatmul.mubr.f32.gmra.mxu0 %v6327
        %v6397 = vpop.f32.mrf.mxu0
        %v6398 = vadd.f32 %v5860, %v6397
        %v6399 = vpop.f32.mrf.mxu0
        %6400 = vdwg.mxu0
        %6402 = vrot.lane.b32.xlu0 %v5707, 32
        %v6403 = vpop.permute.xlu0 %6402
        %v6404 = vsel %vm5829, %v5707, 0
        %v6406 = vsel %vm5829, %v6403, 0
        %6408 = vmatprep.subr.mxu0 0.0
        %6409 = vmatpush1.xpose.msra.mxu0 0.0
        %6410 = vmatprep.subr.mxu0 0.0
        %6411 = vmatpush1.xpose.msra.mxu0 0.0
        %6412 = vmatprep.subr.mxu0 0.0
        %6413 = vmatpush1.xpose.msra.mxu0 0.0
        %6414 = vmatprep.subr.mxu0 0.0
        %6415 = vmatpush1.xpose.msra.mxu0 0.0
        %6416 = vmatprep.subr.mxu0 0.0
        %6417 = vmatpush1.xpose.msra.mxu0 0.0
        %6418 = vmatprep.subr.mxu0 0.0
        %6419 = vmatpush1.xpose.msra.mxu0 0.0
        %6420 = vmatprep.subr.mxu0 0.0
        %6421 = vmatpush1.xpose.msra.mxu0 0.0
        %6422 = vmatprep.subr.mxu0 0.0
        %6423 = vmatpush1.xpose.msra.mxu0 0.0
        %6424 = vmatprep.subr.mxu0 0.0
        %6425 = vmatpush1.xpose.msra.mxu0 0.0
        %6426 = vmatprep.subr.mxu0 0.0
        %6427 = vmatpush1.xpose.msra.mxu0 0.0
        %6428 = vmatprep.subr.mxu0 0.0
        %6429 = vmatpush1.xpose.msra.mxu0 0.0
        %6430 = vmatprep.subr.mxu0 0.0
        %6431 = vmatpush1.xpose.msra.mxu0 0.0
        %6432 = vmatprep.subr.mxu0 0.0
        %6433 = vmatpush1.xpose.msra.mxu0 0.0
        %6434 = vmatprep.subr.mxu0 0.0
        %6435 = vmatpush1.xpose.msra.mxu0 0.0
        %6436 = vmatprep.subr.mxu0 0.0
        %6437 = vmatpush1.xpose.msra.mxu0 0.0
        %6438 = vmatprep.subr.mxu0 0.0
        %6439 = vmatpush1.xpose.msra.mxu0 %v6406
        %6440 = vmatprep.subr.mxu0 0.0
        %6441 = vmatpush2.xpose.msra.mxu0 0.0
        %6442 = vmatprep.subr.mxu0 0.0
        %6443 = vmatpush2.xpose.msra.mxu0 0.0
        %6444 = vmatprep.subr.mxu0 0.0
        %6445 = vmatpush2.xpose.msra.mxu0 0.0
        %6446 = vmatprep.subr.mxu0 0.0
        %6447 = vmatpush2.xpose.msra.mxu0 0.0
        %6448 = vmatprep.subr.mxu0 0.0
        %6449 = vmatpush2.xpose.msra.mxu0 0.0
        %6450 = vmatprep.subr.mxu0 0.0
        %6451 = vmatpush2.xpose.msra.mxu0 0.0
        %6452 = vmatprep.subr.mxu0 0.0
        %6453 = vmatpush2.xpose.msra.mxu0 0.0
        %6454 = vmatprep.subr.mxu0 0.0
        %6455 = vmatpush2.xpose.msra.mxu0 0.0
        %6456 = vmatprep.subr.mxu0 0.0
        %6457 = vmatpush2.xpose.msra.mxu0 0.0
        %6458 = vmatprep.subr.mxu0 0.0
        %6459 = vmatpush2.xpose.msra.mxu0 0.0
        %6460 = vmatprep.subr.mxu0 0.0
        %6461 = vmatpush2.xpose.msra.mxu0 0.0
        %6462 = vmatprep.subr.mxu0 0.0
        %6463 = vmatpush2.xpose.msra.mxu0 0.0
        %6464 = vmatprep.subr.mxu0 0.0
        %6465 = vmatpush2.xpose.msra.mxu0 0.0
        %6466 = vmatprep.subr.mxu0 0.0
        %6467 = vmatpush2.xpose.msra.mxu0 0.0
        %6468 = vmatprep.subr.mxu0 0.0
        %6469 = vmatpush2.xpose.msra.mxu0 0.0
        %6470 = vmatprep.subr.mxu0 0.0
        %6471 = vmatpush2.xpose.msra.mxu0 0.0
        %6472 = vmatprep.mubr.f32.mxu0 0.0
        %6473 = vmatmul.mubr.f32.gmra.mxu0 %v6404
        %v6474 = vpop.f32.mrf.mxu0
        %v6475 = vadd.f32 %v5861, %v6474
        %v6476 = vpop.f32.mrf.mxu0
        %6477 = vdwg.mxu0
        %v6478 = vmul.f32 %v5936, 0.17677669
        %v6479 = vmul.f32 %v6013, 0.17677669
        %v6480 = vmul.f32 %v6090, 0.17677669
        %v6481 = vmul.f32 %v6167, 0.17677669
        %v6482 = vmul.f32 %v6244, 0.17677669
        %v6483 = vmul.f32 %v6321, 0.17677669
        %v6484 = vmul.f32 %v6398, 0.17677669
        %v6485 = vmul.f32 %v6475, 0.17677669
        %v6486 = vsel %vm5527, %v6478, -1e+30
        %v6487 = vsel %vm5528, %v6479, -1e+30
        %v6488 = vsel %vm5529, %v6480, -1e+30
        %v6489 = vsel %vm5530, %v6481, -1e+30
        %v6490 = vsel %vm5531, %v6482, -1e+30
        %v6491 = vsel %vm5532, %v6483, -1e+30
        %v6492 = vsel %vm5533, %v6484, -1e+30
        %v6493 = vsel %vm5534, %v6485, -1e+30
        %vm6494 = vcmask 64512
        %v6495 = vsel %vm6494, %v6486, -inf
        %6496 = vmax.xlane.f32.xlu0 %v6495
        %v6497 = vpop.xlane.xlu0 %6496
        %v6498 = vsel %vm6494, %v6487, -inf
        %6499 = vmax.xlane.f32.xlu0 %v6498
        %v6500 = vpop.xlane.xlu0 %6499
        %v6501 = vsel %vm6494, %v6488, -inf
        %6502 = vmax.xlane.f32.xlu0 %v6501
        %v6503 = vpop.xlane.xlu0 %6502
        %v6504 = vsel %vm6494, %v6489, -inf
        %6505 = vmax.xlane.f32.xlu0 %v6504
        %v6506 = vpop.xlane.xlu0 %6505
        %v6507 = vsel %vm6494, %v6490, -inf
        %6508 = vmax.xlane.f32.xlu0 %v6507
        %v6509 = vpop.xlane.xlu0 %6508
        %v6510 = vsel %vm6494, %v6491, -inf
        %6511 = vmax.xlane.f32.xlu0 %v6510
        %v6512 = vpop.xlane.xlu0 %6511
        %v6513 = vsel %vm6494, %v6492, -inf
        %6514 = vmax.xlane.f32.xlu0 %v6513
        %v6515 = vpop.xlane.xlu0 %6514
        %v6516 = vsel %vm6494, %v6493, -inf
        %6517 = vmax.xlane.f32.xlu0 %v6516
        %v6518 = vpop.xlane.xlu0 %6517
        %v6519 = vsub.f32 %v6486, %v6497
        %v6520 = vsub.f32 %v6487, %v6500
        %v6521 = vsub.f32 %v6488, %v6503
        %v6522 = vsub.f32 %v6489, %v6506
        %v6523 = vsub.f32 %v6490, %v6509
        %v6524 = vsub.f32 %v6491, %v6512
        %v6525 = vsub.f32 %v6492, %v6515
        %v6526 = vsub.f32 %v6493, %v6518
        %v6527 = vmul.f32 %v6519, 1.442695
        %v6528 = vpow.pop %v6527
        %v6529 = vmul.f32 %v6520, 1.442695
        %v6530 = vpow.pop %v6529
        %v6531 = vmul.f32 %v6521, 1.442695
        %v6532 = vpow.pop %v6531
        %v6533 = vmul.f32 %v6522, 1.442695
        %v6534 = vpow.pop %v6533
        %v6535 = vmul.f32 %v6523, 1.442695
        %v6536 = vpow.pop %v6535
        %v6537 = vmul.f32 %v6524, 1.442695
        %v6538 = vpow.pop %v6537
        %v6539 = vmul.f32 %v6525, 1.442695
        %v6540 = vpow.pop %v6539
        %v6541 = vmul.f32 %v6526, 1.442695
        %v6542 = vpow.pop %v6541
        %v6543 = vmul.f32 %v6528, %v5543
        %v6544 = vmul.f32 %v6530, %v5544
        %v6545 = vmul.f32 %v6532, %v5545
        %v6546 = vmul.f32 %v6534, %v5546
        %v6547 = vmul.f32 %v6536, %v5547
        %v6548 = vmul.f32 %v6538, %v5548
        %v6549 = vmul.f32 %v6540, %v5549
        %v6550 = vmul.f32 %v6542, %v5550
        %v6551 = vsel %vm6494, %v6543, 0.0
        %6552 = vadd.xlane.f32.xlu0 %v6551
        %v6553 = vpop.xlane.xlu0 %6552
        %v6554 = vsel %vm6494, %v6544, 0.0
        %6555 = vadd.xlane.f32.xlu0 %v6554
        %v6556 = vpop.xlane.xlu0 %6555
        %v6557 = vsel %vm6494, %v6545, 0.0
        %6558 = vadd.xlane.f32.xlu0 %v6557
        %v6559 = vpop.xlane.xlu0 %6558
        %v6560 = vsel %vm6494, %v6546, 0.0
        %6561 = vadd.xlane.f32.xlu0 %v6560
        %v6562 = vpop.xlane.xlu0 %6561
        %v6563 = vsel %vm6494, %v6547, 0.0
        %6564 = vadd.xlane.f32.xlu0 %v6563
        %v6565 = vpop.xlane.xlu0 %6564
        %v6566 = vsel %vm6494, %v6548, 0.0
        %6567 = vadd.xlane.f32.xlu0 %v6566
        %v6568 = vpop.xlane.xlu0 %6567
        %v6569 = vsel %vm6494, %v6549, 0.0
        %6570 = vadd.xlane.f32.xlu0 %v6569
        %v6571 = vpop.xlane.xlu0 %6570
        %v6572 = vsel %vm6494, %v6550, 0.0
        %6573 = vadd.xlane.f32.xlu0 %v6572
        %v6574 = vpop.xlane.xlu0 %6573
        %v6575 = vmax.f32 %v6553, 1e-16
        %v6576 = vmax.f32 %v6556, 1e-16
        %v6577 = vmax.f32 %v6559, 1e-16
        %v6578 = vmax.f32 %v6562, 1e-16
        %v6579 = vmax.f32 %v6565, 1e-16
        %v6580 = vmax.f32 %v6568, 1e-16
        %v6581 = vmax.f32 %v6571, 1e-16
        %v6582 = vmax.f32 %v6574, 1e-16
        %v6583 = vrcp.pop %v6575
        %v6584 = vrcp.pop %v6576
        %v6585 = vrcp.pop %v6577
        %v6586 = vrcp.pop %v6578
        %v6587 = vrcp.pop %v6579
        %v6588 = vrcp.pop %v6580
        %v6589 = vrcp.pop %v6581
        %v6590 = vrcp.pop %v6582
        %v6591 = vmul.f32 %v6575, %v6583
        %v6592 = vmul.f32 %v6576, %v6584
        %v6593 = vmul.f32 %v6577, %v6585
        %v6594 = vmul.f32 %v6578, %v6586
        %v6595 = vmul.f32 %v6579, %v6587
        %v6596 = vmul.f32 %v6580, %v6588
        %v6597 = vmul.f32 %v6581, %v6589
        %v6598 = vmul.f32 %v6582, %v6590
        %v6599 = vsub.f32 2.0, %v6591
        %v6600 = vsub.f32 2.0, %v6592
        %v6601 = vsub.f32 2.0, %v6593
        %v6602 = vsub.f32 2.0, %v6594
        %v6603 = vsub.f32 2.0, %v6595
        %v6604 = vsub.f32 2.0, %v6596
        %v6605 = vsub.f32 2.0, %v6597
        %v6606 = vsub.f32 2.0, %v6598
        %v6607 = vmul.f32 %v6583, %v6599
        %v6608 = vmul.f32 %v6584, %v6600
        %v6609 = vmul.f32 %v6585, %v6601
        %v6610 = vmul.f32 %v6586, %v6602
        %v6611 = vmul.f32 %v6587, %v6603
        %v6612 = vmul.f32 %v6588, %v6604
        %v6613 = vmul.f32 %v6589, %v6605
        %v6614 = vmul.f32 %v6590, %v6606
        %v6615 = vmul.f32 %v6543, %v6607
        %v6616 = vmul.f32 %v6544, %v6608
        %v6617 = vmul.f32 %v6545, %v6609
        %v6618 = vmul.f32 %v6546, %v6610
        %v6619 = vmul.f32 %v6547, %v6611
        %v6620 = vmul.f32 %v6548, %v6612
        %v6621 = vmul.f32 %v6549, %v6613
        %v6622 = vmul.f32 %v6550, %v6614
        %v6623 = vmul.f32 %v6615, %v5287
        %v6624 = vmul.f32 %v6616, %v5319
        %v6625 = vmul.f32 %v6617, %v5351
        %v6626 = vmul.f32 %v6618, %v5383
        %v6627 = vmul.f32 %v6619, %v5415
        %v6628 = vmul.f32 %v6620, %v5447
        %v6629 = vmul.f32 %v6621, %v5479
        %v6630 = vmul.f32 %v6622, %v5511
        %v6631 = vsel %vm6494, %v6623, 0.0
        %6632 = vadd.xlane.f32.xlu0 %v6631
        %v6633 = vpop.xlane.xlu0 %6632
        %v6634 = vsel %vm6494, %v6624, 0.0
        %6635 = vadd.xlane.f32.xlu0 %v6634
        %v6636 = vpop.xlane.xlu0 %6635
        %v6637 = vsel %vm6494, %v6625, 0.0
        %6638 = vadd.xlane.f32.xlu0 %v6637
        %v6639 = vpop.xlane.xlu0 %6638
        %v6640 = vsel %vm6494, %v6626, 0.0
        %6641 = vadd.xlane.f32.xlu0 %v6640
        %v6642 = vpop.xlane.xlu0 %6641
        %v6643 = vsel %vm6494, %v6627, 0.0
        %6644 = vadd.xlane.f32.xlu0 %v6643
        %v6645 = vpop.xlane.xlu0 %6644
        %v6646 = vsel %vm6494, %v6628, 0.0
        %6647 = vadd.xlane.f32.xlu0 %v6646
        %v6648 = vpop.xlane.xlu0 %6647
        %v6649 = vsel %vm6494, %v6629, 0.0
        %6650 = vadd.xlane.f32.xlu0 %v6649
        %v6651 = vpop.xlane.xlu0 %6650
        %v6652 = vsel %vm6494, %v6630, 0.0
        %6653 = vadd.xlane.f32.xlu0 %v6652
        %v6654 = vpop.xlane.xlu0 %6653
        %v6655 = vmul.f32 %v6633, %v5820
        %v6656 = vmul.f32 %v6636, %v5820
        %v6657 = vmul.f32 %v6639, %v5820
        %v6658 = vmul.f32 %v6642, %v5820
        %v6659 = vmul.f32 %v6645, %v5820
        %v6660 = vmul.f32 %v6648, %v5820
        %v6661 = vmul.f32 %v6651, %v5820
        %v6662 = vmul.f32 %v6654, %v5820
        %6664 = vrot.lane.b32.xlu0 %v5667, 64
        %v6665 = vpop.permute.xlu0 %6664
        %v6668 = vsel %vm6494, %v6615, 0
        %6670 = vmatprep.subr.mxu0 0.0
        %6671 = vmatpush1.msra.mxu0 0.0
        %6672 = vmatprep.subr.mxu0 0.0
        %6673 = vmatpush1.msra.mxu0 0.0
        %6674 = vmatprep.subr.mxu0 0.0
        %6675 = vmatpush1.msra.mxu0 0.0
        %6676 = vmatprep.subr.mxu0 0.0
        %6677 = vmatpush1.msra.mxu0 0.0
        %6678 = vmatprep.subr.mxu0 0.0
        %6679 = vmatpush1.msra.mxu0 0.0
        %6680 = vmatprep.subr.mxu0 0.0
        %6681 = vmatpush1.msra.mxu0 0.0
        %6682 = vmatprep.subr.mxu0 0.0
        %6683 = vmatpush1.msra.mxu0 0.0
        %6684 = vmatprep.subr.mxu0 0.0
        %6685 = vmatpush1.msra.mxu0 0.0
        %6686 = vmatprep.subr.mxu0 0.0
        %6687 = vmatpush1.msra.mxu0 0.0
        %6688 = vmatprep.subr.mxu0 0.0
        %6689 = vmatpush1.msra.mxu0 0.0
        %6690 = vmatprep.subr.mxu0 0.0
        %6691 = vmatpush1.msra.mxu0 0.0
        %6692 = vmatprep.subr.mxu0 0.0
        %6693 = vmatpush1.msra.mxu0 0.0
        %6694 = vmatprep.subr.mxu0 0.0
        %6695 = vmatpush1.msra.mxu0 0.0
        %6696 = vmatprep.subr.mxu0 0.0
        %6697 = vmatpush1.msra.mxu0 0.0
        %6698 = vmatprep.subr.mxu0 0.0
        %6699 = vmatpush1.msra.mxu0 0.0
        %6700 = vmatprep.subr.mxu0 0.0
        %6701 = vmatpush1.msra.mxu0 %v6665
        %6702 = vmatprep.subr.mxu0 0.0
        %6703 = vmatpush2.msra.mxu0 0.0
        %6704 = vmatprep.subr.mxu0 0.0
        %6705 = vmatpush2.msra.mxu0 0.0
        %6706 = vmatprep.subr.mxu0 0.0
        %6707 = vmatpush2.msra.mxu0 0.0
        %6708 = vmatprep.subr.mxu0 0.0
        %6709 = vmatpush2.msra.mxu0 0.0
        %6710 = vmatprep.subr.mxu0 0.0
        %6711 = vmatpush2.msra.mxu0 0.0
        %6712 = vmatprep.subr.mxu0 0.0
        %6713 = vmatpush2.msra.mxu0 0.0
        %6714 = vmatprep.subr.mxu0 0.0
        %6715 = vmatpush2.msra.mxu0 0.0
        %6716 = vmatprep.subr.mxu0 0.0
        %6717 = vmatpush2.msra.mxu0 0.0
        %6718 = vmatprep.subr.mxu0 0.0
        %6719 = vmatpush2.msra.mxu0 0.0
        %6720 = vmatprep.subr.mxu0 0.0
        %6721 = vmatpush2.msra.mxu0 0.0
        %6722 = vmatprep.subr.mxu0 0.0
        %6723 = vmatpush2.msra.mxu0 0.0
        %6724 = vmatprep.subr.mxu0 0.0
        %6725 = vmatpush2.msra.mxu0 0.0
        %6726 = vmatprep.subr.mxu0 0.0
        %6727 = vmatpush2.msra.mxu0 0.0
        %6728 = vmatprep.subr.mxu0 0.0
        %6729 = vmatpush2.msra.mxu0 0.0
        %6730 = vmatprep.subr.mxu0 0.0
        %6731 = vmatpush2.msra.mxu0 0.0
        %6732 = vmatprep.subr.mxu0 0.0
        %6733 = vmatpush2.msra.mxu0 0.0
        %6734 = vmatprep.mubr.f32.mxu0 0.0
        %6735 = vmatmul.mubr.f32.gmra.mxu0 %v6668
        %v6736 = vpop.f32.mrf.mxu0
        %v6737 = vadd.f32 %v6655, %v6736
        %v6738 = vpop.f32.mrf.mxu0
        %6739 = vdwg.mxu0
        %6741 = vrot.lane.b32.xlu0 %v5673, 64
        %v6742 = vpop.permute.xlu0 %6741
        %v6745 = vsel %vm6494, %v6616, 0
        %6747 = vmatprep.subr.mxu0 0.0
        %6748 = vmatpush1.msra.mxu0 0.0
        %6749 = vmatprep.subr.mxu0 0.0
        %6750 = vmatpush1.msra.mxu0 0.0
        %6751 = vmatprep.subr.mxu0 0.0
        %6752 = vmatpush1.msra.mxu0 0.0
        %6753 = vmatprep.subr.mxu0 0.0
        %6754 = vmatpush1.msra.mxu0 0.0
        %6755 = vmatprep.subr.mxu0 0.0
        %6756 = vmatpush1.msra.mxu0 0.0
        %6757 = vmatprep.subr.mxu0 0.0
        %6758 = vmatpush1.msra.mxu0 0.0
        %6759 = vmatprep.subr.mxu0 0.0
        %6760 = vmatpush1.msra.mxu0 0.0
        %6761 = vmatprep.subr.mxu0 0.0
        %6762 = vmatpush1.msra.mxu0 0.0
        %6763 = vmatprep.subr.mxu0 0.0
        %6764 = vmatpush1.msra.mxu0 0.0
        %6765 = vmatprep.subr.mxu0 0.0
        %6766 = vmatpush1.msra.mxu0 0.0
        %6767 = vmatprep.subr.mxu0 0.0
        %6768 = vmatpush1.msra.mxu0 0.0
        %6769 = vmatprep.subr.mxu0 0.0
        %6770 = vmatpush1.msra.mxu0 0.0
        %6771 = vmatprep.subr.mxu0 0.0
        %6772 = vmatpush1.msra.mxu0 0.0
        %6773 = vmatprep.subr.mxu0 0.0
        %6774 = vmatpush1.msra.mxu0 0.0
        %6775 = vmatprep.subr.mxu0 0.0
        %6776 = vmatpush1.msra.mxu0 0.0
        %6777 = vmatprep.subr.mxu0 0.0
        %6778 = vmatpush1.msra.mxu0 %v6742
        %6779 = vmatprep.subr.mxu0 0.0
        %6780 = vmatpush2.msra.mxu0 0.0
        %6781 = vmatprep.subr.mxu0 0.0
        %6782 = vmatpush2.msra.mxu0 0.0
        %6783 = vmatprep.subr.mxu0 0.0
        %6784 = vmatpush2.msra.mxu0 0.0
        %6785 = vmatprep.subr.mxu0 0.0
        %6786 = vmatpush2.msra.mxu0 0.0
        %6787 = vmatprep.subr.mxu0 0.0
        %6788 = vmatpush2.msra.mxu0 0.0
        %6789 = vmatprep.subr.mxu0 0.0
        %6790 = vmatpush2.msra.mxu0 0.0
        %6791 = vmatprep.subr.mxu0 0.0
        %6792 = vmatpush2.msra.mxu0 0.0
        %6793 = vmatprep.subr.mxu0 0.0
        %6794 = vmatpush2.msra.mxu0 0.0
        %6795 = vmatprep.subr.mxu0 0.0
        %6796 = vmatpush2.msra.mxu0 0.0
        %6797 = vmatprep.subr.mxu0 0.0
        %6798 = vmatpush2.msra.mxu0 0.0
        %6799 = vmatprep.subr.mxu0 0.0
        %6800 = vmatpush2.msra.mxu0 0.0
        %6801 = vmatprep.subr.mxu0 0.0
        %6802 = vmatpush2.msra.mxu0 0.0
        %6803 = vmatprep.subr.mxu0 0.0
        %6804 = vmatpush2.msra.mxu0 0.0
        %6805 = vmatprep.subr.mxu0 0.0
        %6806 = vmatpush2.msra.mxu0 0.0
        %6807 = vmatprep.subr.mxu0 0.0
        %6808 = vmatpush2.msra.mxu0 0.0
        %6809 = vmatprep.subr.mxu0 0.0
        %6810 = vmatpush2.msra.mxu0 0.0
        %6811 = vmatprep.mubr.f32.mxu0 0.0
        %6812 = vmatmul.mubr.f32.gmra.mxu0 %v6745
        %v6813 = vpop.f32.mrf.mxu0
        %v6814 = vadd.f32 %v6656, %v6813
        %v6815 = vpop.f32.mrf.mxu0
        %6816 = vdwg.mxu0
        %6818 = vrot.lane.b32.xlu0 %v5679, 64
        %v6819 = vpop.permute.xlu0 %6818
        %v6822 = vsel %vm6494, %v6617, 0
        %6824 = vmatprep.subr.mxu0 0.0
        %6825 = vmatpush1.msra.mxu0 0.0
        %6826 = vmatprep.subr.mxu0 0.0
        %6827 = vmatpush1.msra.mxu0 0.0
        %6828 = vmatprep.subr.mxu0 0.0
        %6829 = vmatpush1.msra.mxu0 0.0
        %6830 = vmatprep.subr.mxu0 0.0
        %6831 = vmatpush1.msra.mxu0 0.0
        %6832 = vmatprep.subr.mxu0 0.0
        %6833 = vmatpush1.msra.mxu0 0.0
        %6834 = vmatprep.subr.mxu0 0.0
        %6835 = vmatpush1.msra.mxu0 0.0
        %6836 = vmatprep.subr.mxu0 0.0
        %6837 = vmatpush1.msra.mxu0 0.0
        %6838 = vmatprep.subr.mxu0 0.0
        %6839 = vmatpush1.msra.mxu0 0.0
        %6840 = vmatprep.subr.mxu0 0.0
        %6841 = vmatpush1.msra.mxu0 0.0
        %6842 = vmatprep.subr.mxu0 0.0
        %6843 = vmatpush1.msra.mxu0 0.0
        %6844 = vmatprep.subr.mxu0 0.0
        %6845 = vmatpush1.msra.mxu0 0.0
        %6846 = vmatprep.subr.mxu0 0.0
        %6847 = vmatpush1.msra.mxu0 0.0
        %6848 = vmatprep.subr.mxu0 0.0
        %6849 = vmatpush1.msra.mxu0 0.0
        %6850 = vmatprep.subr.mxu0 0.0
        %6851 = vmatpush1.msra.mxu0 0.0
        %6852 = vmatprep.subr.mxu0 0.0
        %6853 = vmatpush1.msra.mxu0 0.0
        %6854 = vmatprep.subr.mxu0 0.0
        %6855 = vmatpush1.msra.mxu0 %v6819
        %6856 = vmatprep.subr.mxu0 0.0
        %6857 = vmatpush2.msra.mxu0 0.0
        %6858 = vmatprep.subr.mxu0 0.0
        %6859 = vmatpush2.msra.mxu0 0.0
        %6860 = vmatprep.subr.mxu0 0.0
        %6861 = vmatpush2.msra.mxu0 0.0
        %6862 = vmatprep.subr.mxu0 0.0
        %6863 = vmatpush2.msra.mxu0 0.0
        %6864 = vmatprep.subr.mxu0 0.0
        %6865 = vmatpush2.msra.mxu0 0.0
        %6866 = vmatprep.subr.mxu0 0.0
        %6867 = vmatpush2.msra.mxu0 0.0
        %6868 = vmatprep.subr.mxu0 0.0
        %6869 = vmatpush2.msra.mxu0 0.0
        %6870 = vmatprep.subr.mxu0 0.0
        %6871 = vmatpush2.msra.mxu0 0.0
        %6872 = vmatprep.subr.mxu0 0.0
        %6873 = vmatpush2.msra.mxu0 0.0
        %6874 = vmatprep.subr.mxu0 0.0
        %6875 = vmatpush2.msra.mxu0 0.0
        %6876 = vmatprep.subr.mxu0 0.0
        %6877 = vmatpush2.msra.mxu0 0.0
        %6878 = vmatprep.subr.mxu0 0.0
        %6879 = vmatpush2.msra.mxu0 0.0
        %6880 = vmatprep.subr.mxu0 0.0
        %6881 = vmatpush2.msra.mxu0 0.0
        %6882 = vmatprep.subr.mxu0 0.0
        %6883 = vmatpush2.msra.mxu0 0.0
        %6884 = vmatprep.subr.mxu0 0.0
        %6885 = vmatpush2.msra.mxu0 0.0
        %6886 = vmatprep.subr.mxu0 0.0
        %6887 = vmatpush2.msra.mxu0 0.0
        %6888 = vmatprep.mubr.f32.mxu0 0.0
        %6889 = vmatmul.mubr.f32.gmra.mxu0 %v6822
        %v6890 = vpop.f32.mrf.mxu0
        %v6891 = vadd.f32 %v6657, %v6890
        %v6892 = vpop.f32.mrf.mxu0
        %6893 = vdwg.mxu0
        %6895 = vrot.lane.b32.xlu0 %v5685, 64
        %v6896 = vpop.permute.xlu0 %6895
        %v6899 = vsel %vm6494, %v6618, 0
        %6901 = vmatprep.subr.mxu0 0.0
        %6902 = vmatpush1.msra.mxu0 0.0
        %6903 = vmatprep.subr.mxu0 0.0
        %6904 = vmatpush1.msra.mxu0 0.0
        %6905 = vmatprep.subr.mxu0 0.0
        %6906 = vmatpush1.msra.mxu0 0.0
        %6907 = vmatprep.subr.mxu0 0.0
        %6908 = vmatpush1.msra.mxu0 0.0
        %6909 = vmatprep.subr.mxu0 0.0
        %6910 = vmatpush1.msra.mxu0 0.0
        %6911 = vmatprep.subr.mxu0 0.0
        %6912 = vmatpush1.msra.mxu0 0.0
        %6913 = vmatprep.subr.mxu0 0.0
        %6914 = vmatpush1.msra.mxu0 0.0
        %6915 = vmatprep.subr.mxu0 0.0
        %6916 = vmatpush1.msra.mxu0 0.0
        %6917 = vmatprep.subr.mxu0 0.0
        %6918 = vmatpush1.msra.mxu0 0.0
        %6919 = vmatprep.subr.mxu0 0.0
        %6920 = vmatpush1.msra.mxu0 0.0
        %6921 = vmatprep.subr.mxu0 0.0
        %6922 = vmatpush1.msra.mxu0 0.0
        %6923 = vmatprep.subr.mxu0 0.0
        %6924 = vmatpush1.msra.mxu0 0.0
        %6925 = vmatprep.subr.mxu0 0.0
        %6926 = vmatpush1.msra.mxu0 0.0
        %6927 = vmatprep.subr.mxu0 0.0
        %6928 = vmatpush1.msra.mxu0 0.0
        %6929 = vmatprep.subr.mxu0 0.0
        %6930 = vmatpush1.msra.mxu0 0.0
        %6931 = vmatprep.subr.mxu0 0.0
        %6932 = vmatpush1.msra.mxu0 %v6896
        %6933 = vmatprep.subr.mxu0 0.0
        %6934 = vmatpush2.msra.mxu0 0.0
        %6935 = vmatprep.subr.mxu0 0.0
        %6936 = vmatpush2.msra.mxu0 0.0
        %6937 = vmatprep.subr.mxu0 0.0
        %6938 = vmatpush2.msra.mxu0 0.0
        %6939 = vmatprep.subr.mxu0 0.0
        %6940 = vmatpush2.msra.mxu0 0.0
        %6941 = vmatprep.subr.mxu0 0.0
        %6942 = vmatpush2.msra.mxu0 0.0
        %6943 = vmatprep.subr.mxu0 0.0
        %6944 = vmatpush2.msra.mxu0 0.0
        %6945 = vmatprep.subr.mxu0 0.0
        %6946 = vmatpush2.msra.mxu0 0.0
        %6947 = vmatprep.subr.mxu0 0.0
        %6948 = vmatpush2.msra.mxu0 0.0
        %6949 = vmatprep.subr.mxu0 0.0
        %6950 = vmatpush2.msra.mxu0 0.0
        %6951 = vmatprep.subr.mxu0 0.0
        %6952 = vmatpush2.msra.mxu0 0.0
        %6953 = vmatprep.subr.mxu0 0.0
        %6954 = vmatpush2.msra.mxu0 0.0
        %6955 = vmatprep.subr.mxu0 0.0
        %6956 = vmatpush2.msra.mxu0 0.0
        %6957 = vmatprep.subr.mxu0 0.0
        %6958 = vmatpush2.msra.mxu0 0.0
        %6959 = vmatprep.subr.mxu0 0.0
        %6960 = vmatpush2.msra.mxu0 0.0
        %6961 = vmatprep.subr.mxu0 0.0
        %6962 = vmatpush2.msra.mxu0 0.0
        %6963 = vmatprep.subr.mxu0 0.0
        %6964 = vmatpush2.msra.mxu0 0.0
        %6965 = vmatprep.mubr.f32.mxu0 0.0
        %6966 = vmatmul.mubr.f32.gmra.mxu0 %v6899
        %v6967 = vpop.f32.mrf.mxu0
        %v6968 = vadd.f32 %v6658, %v6967
        %v6969 = vpop.f32.mrf.mxu0
        %6970 = vdwg.mxu0
        %6972 = vrot.lane.b32.xlu0 %v5691, 64
        %v6973 = vpop.permute.xlu0 %6972
        %v6976 = vsel %vm6494, %v6619, 0
        %6978 = vmatprep.subr.mxu0 0.0
        %6979 = vmatpush1.msra.mxu0 0.0
        %6980 = vmatprep.subr.mxu0 0.0
        %6981 = vmatpush1.msra.mxu0 0.0
        %6982 = vmatprep.subr.mxu0 0.0
        %6983 = vmatpush1.msra.mxu0 0.0
        %6984 = vmatprep.subr.mxu0 0.0
        %6985 = vmatpush1.msra.mxu0 0.0
        %6986 = vmatprep.subr.mxu0 0.0
        %6987 = vmatpush1.msra.mxu0 0.0
        %6988 = vmatprep.subr.mxu0 0.0
        %6989 = vmatpush1.msra.mxu0 0.0
        %6990 = vmatprep.subr.mxu0 0.0
        %6991 = vmatpush1.msra.mxu0 0.0
        %6992 = vmatprep.subr.mxu0 0.0
        %6993 = vmatpush1.msra.mxu0 0.0
        %6994 = vmatprep.subr.mxu0 0.0
        %6995 = vmatpush1.msra.mxu0 0.0
        %6996 = vmatprep.subr.mxu0 0.0
        %6997 = vmatpush1.msra.mxu0 0.0
        %6998 = vmatprep.subr.mxu0 0.0
        %6999 = vmatpush1.msra.mxu0 0.0
        %7000 = vmatprep.subr.mxu0 0.0
        %7001 = vmatpush1.msra.mxu0 0.0
        %7002 = vmatprep.subr.mxu0 0.0
        %7003 = vmatpush1.msra.mxu0 0.0
        %7004 = vmatprep.subr.mxu0 0.0
        %7005 = vmatpush1.msra.mxu0 0.0
        %7006 = vmatprep.subr.mxu0 0.0
        %7007 = vmatpush1.msra.mxu0 0.0
        %7008 = vmatprep.subr.mxu0 0.0
        %7009 = vmatpush1.msra.mxu0 %v6973
        %7010 = vmatprep.subr.mxu0 0.0
        %7011 = vmatpush2.msra.mxu0 0.0
        %7012 = vmatprep.subr.mxu0 0.0
        %7013 = vmatpush2.msra.mxu0 0.0
        %7014 = vmatprep.subr.mxu0 0.0
        %7015 = vmatpush2.msra.mxu0 0.0
        %7016 = vmatprep.subr.mxu0 0.0
        %7017 = vmatpush2.msra.mxu0 0.0
        %7018 = vmatprep.subr.mxu0 0.0
        %7019 = vmatpush2.msra.mxu0 0.0
        %7020 = vmatprep.subr.mxu0 0.0
        %7021 = vmatpush2.msra.mxu0 0.0
        %7022 = vmatprep.subr.mxu0 0.0
        %7023 = vmatpush2.msra.mxu0 0.0
        %7024 = vmatprep.subr.mxu0 0.0
        %7025 = vmatpush2.msra.mxu0 0.0
        %7026 = vmatprep.subr.mxu0 0.0
        %7027 = vmatpush2.msra.mxu0 0.0
        %7028 = vmatprep.subr.mxu0 0.0
        %7029 = vmatpush2.msra.mxu0 0.0
        %7030 = vmatprep.subr.mxu0 0.0
        %7031 = vmatpush2.msra.mxu0 0.0
        %7032 = vmatprep.subr.mxu0 0.0
        %7033 = vmatpush2.msra.mxu0 0.0
        %7034 = vmatprep.subr.mxu0 0.0
        %7035 = vmatpush2.msra.mxu0 0.0
        %7036 = vmatprep.subr.mxu0 0.0
        %7037 = vmatpush2.msra.mxu0 0.0
        %7038 = vmatprep.subr.mxu0 0.0
        %7039 = vmatpush2.msra.mxu0 0.0
        %7040 = vmatprep.subr.mxu0 0.0
        %7041 = vmatpush2.msra.mxu0 0.0
        %7042 = vmatprep.mubr.f32.mxu0 0.0
        %7043 = vmatmul.mubr.f32.gmra.mxu0 %v6976
        %v7044 = vpop.f32.mrf.mxu0
        %v7045 = vadd.f32 %v6659, %v7044
        %v7046 = vpop.f32.mrf.mxu0
        %7047 = vdwg.mxu0
        %7049 = vrot.lane.b32.xlu0 %v5697, 64
        %v7050 = vpop.permute.xlu0 %7049
        %v7053 = vsel %vm6494, %v6620, 0
        %7055 = vmatprep.subr.mxu0 0.0
        %7056 = vmatpush1.msra.mxu0 0.0
        %7057 = vmatprep.subr.mxu0 0.0
        %7058 = vmatpush1.msra.mxu0 0.0
        %7059 = vmatprep.subr.mxu0 0.0
        %7060 = vmatpush1.msra.mxu0 0.0
        %7061 = vmatprep.subr.mxu0 0.0
        %7062 = vmatpush1.msra.mxu0 0.0
        %7063 = vmatprep.subr.mxu0 0.0
        %7064 = vmatpush1.msra.mxu0 0.0
        %7065 = vmatprep.subr.mxu0 0.0
        %7066 = vmatpush1.msra.mxu0 0.0
        %7067 = vmatprep.subr.mxu0 0.0
        %7068 = vmatpush1.msra.mxu0 0.0
        %7069 = vmatprep.subr.mxu0 0.0
        %7070 = vmatpush1.msra.mxu0 0.0
        %7071 = vmatprep.subr.mxu0 0.0
        %7072 = vmatpush1.msra.mxu0 0.0
        %7073 = vmatprep.subr.mxu0 0.0
        %7074 = vmatpush1.msra.mxu0 0.0
        %7075 = vmatprep.subr.mxu0 0.0
        %7076 = vmatpush1.msra.mxu0 0.0
        %7077 = vmatprep.subr.mxu0 0.0
        %7078 = vmatpush1.msra.mxu0 0.0
        %7079 = vmatprep.subr.mxu0 0.0
        %7080 = vmatpush1.msra.mxu0 0.0
        %7081 = vmatprep.subr.mxu0 0.0
        %7082 = vmatpush1.msra.mxu0 0.0
        %7083 = vmatprep.subr.mxu0 0.0
        %7084 = vmatpush1.msra.mxu0 0.0
        %7085 = vmatprep.subr.mxu0 0.0
        %7086 = vmatpush1.msra.mxu0 %v7050
        %7087 = vmatprep.subr.mxu0 0.0
        %7088 = vmatpush2.msra.mxu0 0.0
        %7089 = vmatprep.subr.mxu0 0.0
        %7090 = vmatpush2.msra.mxu0 0.0
        %7091 = vmatprep.subr.mxu0 0.0
        %7092 = vmatpush2.msra.mxu0 0.0
        %7093 = vmatprep.subr.mxu0 0.0
        %7094 = vmatpush2.msra.mxu0 0.0
        %7095 = vmatprep.subr.mxu0 0.0
        %7096 = vmatpush2.msra.mxu0 0.0
        %7097 = vmatprep.subr.mxu0 0.0
        %7098 = vmatpush2.msra.mxu0 0.0
        %7099 = vmatprep.subr.mxu0 0.0
        %7100 = vmatpush2.msra.mxu0 0.0
        %7101 = vmatprep.subr.mxu0 0.0
        %7102 = vmatpush2.msra.mxu0 0.0
        %7103 = vmatprep.subr.mxu0 0.0
        %7104 = vmatpush2.msra.mxu0 0.0
        %7105 = vmatprep.subr.mxu0 0.0
        %7106 = vmatpush2.msra.mxu0 0.0
        %7107 = vmatprep.subr.mxu0 0.0
        %7108 = vmatpush2.msra.mxu0 0.0
        %7109 = vmatprep.subr.mxu0 0.0
        %7110 = vmatpush2.msra.mxu0 0.0
        %7111 = vmatprep.subr.mxu0 0.0
        %7112 = vmatpush2.msra.mxu0 0.0
        %7113 = vmatprep.subr.mxu0 0.0
        %7114 = vmatpush2.msra.mxu0 0.0
        %7115 = vmatprep.subr.mxu0 0.0
        %7116 = vmatpush2.msra.mxu0 0.0
        %7117 = vmatprep.subr.mxu0 0.0
        %7118 = vmatpush2.msra.mxu0 0.0
        %7119 = vmatprep.mubr.f32.mxu0 0.0
        %7120 = vmatmul.mubr.f32.gmra.mxu0 %v7053
        %v7121 = vpop.f32.mrf.mxu0
        %v7122 = vadd.f32 %v6660, %v7121
        %v7123 = vpop.f32.mrf.mxu0
        %7124 = vdwg.mxu0
        %7126 = vrot.lane.b32.xlu0 %v5703, 64
        %v7127 = vpop.permute.xlu0 %7126
        %v7130 = vsel %vm6494, %v6621, 0
        %7132 = vmatprep.subr.mxu0 0.0
        %7133 = vmatpush1.msra.mxu0 0.0
        %7134 = vmatprep.subr.mxu0 0.0
        %7135 = vmatpush1.msra.mxu0 0.0
        %7136 = vmatprep.subr.mxu0 0.0
        %7137 = vmatpush1.msra.mxu0 0.0
        %7138 = vmatprep.subr.mxu0 0.0
        %7139 = vmatpush1.msra.mxu0 0.0
        %7140 = vmatprep.subr.mxu0 0.0
        %7141 = vmatpush1.msra.mxu0 0.0
        %7142 = vmatprep.subr.mxu0 0.0
        %7143 = vmatpush1.msra.mxu0 0.0
        %7144 = vmatprep.subr.mxu0 0.0
        %7145 = vmatpush1.msra.mxu0 0.0
        %7146 = vmatprep.subr.mxu0 0.0
        %7147 = vmatpush1.msra.mxu0 0.0
        %7148 = vmatprep.subr.mxu0 0.0
        %7149 = vmatpush1.msra.mxu0 0.0
        %7150 = vmatprep.subr.mxu0 0.0
        %7151 = vmatpush1.msra.mxu0 0.0
        %7152 = vmatprep.subr.mxu0 0.0
        %7153 = vmatpush1.msra.mxu0 0.0
        %7154 = vmatprep.subr.mxu0 0.0
        %7155 = vmatpush1.msra.mxu0 0.0
        %7156 = vmatprep.subr.mxu0 0.0
        %7157 = vmatpush1.msra.mxu0 0.0
        %7158 = vmatprep.subr.mxu0 0.0
        %7159 = vmatpush1.msra.mxu0 0.0
        %7160 = vmatprep.subr.mxu0 0.0
        %7161 = vmatpush1.msra.mxu0 0.0
        %7162 = vmatprep.subr.mxu0 0.0
        %7163 = vmatpush1.msra.mxu0 %v7127
        %7164 = vmatprep.subr.mxu0 0.0
        %7165 = vmatpush2.msra.mxu0 0.0
        %7166 = vmatprep.subr.mxu0 0.0
        %7167 = vmatpush2.msra.mxu0 0.0
        %7168 = vmatprep.subr.mxu0 0.0
        %7169 = vmatpush2.msra.mxu0 0.0
        %7170 = vmatprep.subr.mxu0 0.0
        %7171 = vmatpush2.msra.mxu0 0.0
        %7172 = vmatprep.subr.mxu0 0.0
        %7173 = vmatpush2.msra.mxu0 0.0
        %7174 = vmatprep.subr.mxu0 0.0
        %7175 = vmatpush2.msra.mxu0 0.0
        %7176 = vmatprep.subr.mxu0 0.0
        %7177 = vmatpush2.msra.mxu0 0.0
        %7178 = vmatprep.subr.mxu0 0.0
        %7179 = vmatpush2.msra.mxu0 0.0
        %7180 = vmatprep.subr.mxu0 0.0
        %7181 = vmatpush2.msra.mxu0 0.0
        %7182 = vmatprep.subr.mxu0 0.0
        %7183 = vmatpush2.msra.mxu0 0.0
        %7184 = vmatprep.subr.mxu0 0.0
        %7185 = vmatpush2.msra.mxu0 0.0
        %7186 = vmatprep.subr.mxu0 0.0
        %7187 = vmatpush2.msra.mxu0 0.0
        %7188 = vmatprep.subr.mxu0 0.0
        %7189 = vmatpush2.msra.mxu0 0.0
        %7190 = vmatprep.subr.mxu0 0.0
        %7191 = vmatpush2.msra.mxu0 0.0
        %7192 = vmatprep.subr.mxu0 0.0
        %7193 = vmatpush2.msra.mxu0 0.0
        %7194 = vmatprep.subr.mxu0 0.0
        %7195 = vmatpush2.msra.mxu0 0.0
        %7196 = vmatprep.mubr.f32.mxu0 0.0
        %7197 = vmatmul.mubr.f32.gmra.mxu0 %v7130
        %v7198 = vpop.f32.mrf.mxu0
        %v7199 = vadd.f32 %v6661, %v7198
        %v7200 = vpop.f32.mrf.mxu0
        %7201 = vdwg.mxu0
        %7203 = vrot.lane.b32.xlu0 %v5709, 64
        %v7204 = vpop.permute.xlu0 %7203
        %v7207 = vsel %vm6494, %v6622, 0
        %7209 = vmatprep.subr.mxu0 0.0
        %7210 = vmatpush1.msra.mxu0 0.0
        %7211 = vmatprep.subr.mxu0 0.0
        %7212 = vmatpush1.msra.mxu0 0.0
        %7213 = vmatprep.subr.mxu0 0.0
        %7214 = vmatpush1.msra.mxu0 0.0
        %7215 = vmatprep.subr.mxu0 0.0
        %7216 = vmatpush1.msra.mxu0 0.0
        %7217 = vmatprep.subr.mxu0 0.0
        %7218 = vmatpush1.msra.mxu0 0.0
        %7219 = vmatprep.subr.mxu0 0.0
        %7220 = vmatpush1.msra.mxu0 0.0
        %7221 = vmatprep.subr.mxu0 0.0
        %7222 = vmatpush1.msra.mxu0 0.0
        %7223 = vmatprep.subr.mxu0 0.0
        %7224 = vmatpush1.msra.mxu0 0.0
        %7225 = vmatprep.subr.mxu0 0.0
        %7226 = vmatpush1.msra.mxu0 0.0
        %7227 = vmatprep.subr.mxu0 0.0
        %7228 = vmatpush1.msra.mxu0 0.0
        %7229 = vmatprep.subr.mxu0 0.0
        %7230 = vmatpush1.msra.mxu0 0.0
        %7231 = vmatprep.subr.mxu0 0.0
        %7232 = vmatpush1.msra.mxu0 0.0
        %7233 = vmatprep.subr.mxu0 0.0
        %7234 = vmatpush1.msra.mxu0 0.0
        %7235 = vmatprep.subr.mxu0 0.0
        %7236 = vmatpush1.msra.mxu0 0.0
        %7237 = vmatprep.subr.mxu0 0.0
        %7238 = vmatpush1.msra.mxu0 0.0
        %7239 = vmatprep.subr.mxu0 0.0
        %7240 = vmatpush1.msra.mxu0 %v7204
        %7241 = vmatprep.subr.mxu0 0.0
        %7242 = vmatpush2.msra.mxu0 0.0
        %7243 = vmatprep.subr.mxu0 0.0
        %7244 = vmatpush2.msra.mxu0 0.0
        %7245 = vmatprep.subr.mxu0 0.0
        %7246 = vmatpush2.msra.mxu0 0.0
        %7247 = vmatprep.subr.mxu0 0.0
        %7248 = vmatpush2.msra.mxu0 0.0
        %7249 = vmatprep.subr.mxu0 0.0
        %7250 = vmatpush2.msra.mxu0 0.0
        %7251 = vmatprep.subr.mxu0 0.0
        %7252 = vmatpush2.msra.mxu0 0.0
        %7253 = vmatprep.subr.mxu0 0.0
        %7254 = vmatpush2.msra.mxu0 0.0
        %7255 = vmatprep.subr.mxu0 0.0
        %7256 = vmatpush2.msra.mxu0 0.0
        %7257 = vmatprep.subr.mxu0 0.0
        %7258 = vmatpush2.msra.mxu0 0.0
        %7259 = vmatprep.subr.mxu0 0.0
        %7260 = vmatpush2.msra.mxu0 0.0
        %7261 = vmatprep.subr.mxu0 0.0
        %7262 = vmatpush2.msra.mxu0 0.0
        %7263 = vmatprep.subr.mxu0 0.0
        %7264 = vmatpush2.msra.mxu0 0.0
        %7265 = vmatprep.subr.mxu0 0.0
        %7266 = vmatpush2.msra.mxu0 0.0
        %7267 = vmatprep.subr.mxu0 0.0
        %7268 = vmatpush2.msra.mxu0 0.0
        %7269 = vmatprep.subr.mxu0 0.0
        %7270 = vmatpush2.msra.mxu0 0.0
        %7271 = vmatprep.subr.mxu0 0.0
        %7272 = vmatpush2.msra.mxu0 0.0
        %7273 = vmatprep.mubr.f32.mxu0 0.0
        %7274 = vmatmul.mubr.f32.gmra.mxu0 %v7207
        %v7275 = vpop.f32.mrf.mxu0
        %v7276 = vadd.f32 %v6662, %v7275
        %v7277 = vpop.f32.mrf.mxu0
        %7278 = vdwg.mxu0
        %v7279 = vlaneseq
        %v7280 = vshrl.u32 %v7279, 7
        %v7281 = vsub.s32 1, %v7280
        %v7282 = vrot.slane %v5816, %v7281
        %7284 = vrot.lane.b32.xlu0 %v7282, 32
        %v7285 = vpop.permute.xlu0 %7284
        %v7287 = vmul.f32 %v5665, %v7285
        %v7288 = vmul.f32 %v5671, %v7285
        %v7289 = vmul.f32 %v5677, %v7285
        %v7290 = vmul.f32 %v5683, %v7285
        %v7291 = vmul.f32 %v5689, %v7285
        %v7292 = vmul.f32 %v5695, %v7285
        %v7293 = vmul.f32 %v5701, %v7285
        %v7294 = vmul.f32 %v5707, %v7285
        %7303 = vrot.lane.b32.xlu0 %v7287, 96
        %v7304 = vpop.permute.xlu0 %7303
        %7305 = vrot.lane.b32.xlu0 %v7288, 96
        %v7306 = vpop.permute.xlu0 %7305
        %7307 = vrot.lane.b32.xlu0 %v7289, 96
        %v7308 = vpop.permute.xlu0 %7307
        %7309 = vrot.lane.b32.xlu0 %v7290, 96
        %v7310 = vpop.permute.xlu0 %7309
        %7311 = vrot.lane.b32.xlu0 %v7291, 96
        %v7312 = vpop.permute.xlu0 %7311
        %7313 = vrot.lane.b32.xlu0 %v7292, 96
        %v7314 = vpop.permute.xlu0 %7313
        %7315 = vrot.lane.b32.xlu0 %v7293, 96
        %v7316 = vpop.permute.xlu0 %7315
        %7317 = vrot.lane.b32.xlu0 %v7294, 96
        %v7318 = vpop.permute.xlu0 %7317
        %v7327 = vsel %vm5829, %v7304, 0.0
        %7328 = vadd.xlane.f32.xlu0 %v7327
        %v7329 = vpop.xlane.xlu0 %7328
        %v7330 = vsel %vm5829, %v7306, 0.0
        %7331 = vadd.xlane.f32.xlu0 %v7330
        %v7332 = vpop.xlane.xlu0 %7331
        %v7333 = vsel %vm5829, %v7308, 0.0
        %7334 = vadd.xlane.f32.xlu0 %v7333
        %v7335 = vpop.xlane.xlu0 %7334
        %v7336 = vsel %vm5829, %v7310, 0.0
        %7337 = vadd.xlane.f32.xlu0 %v7336
        %v7338 = vpop.xlane.xlu0 %7337
        %v7339 = vsel %vm5829, %v7312, 0.0
        %7340 = vadd.xlane.f32.xlu0 %v7339
        %v7341 = vpop.xlane.xlu0 %7340
        %v7342 = vsel %vm5829, %v7314, 0.0
        %7343 = vadd.xlane.f32.xlu0 %v7342
        %v7344 = vpop.xlane.xlu0 %7343
        %v7345 = vsel %vm5829, %v7316, 0.0
        %7346 = vadd.xlane.f32.xlu0 %v7345
        %v7347 = vpop.xlane.xlu0 %7346
        %v7348 = vsel %vm5829, %v7318, 0.0
        %7349 = vadd.xlane.f32.xlu0 %v7348
        %v7350 = vpop.xlane.xlu0 %7349
        %v7351 = vmul.f32 %v5287, %v7329
        %v7352 = vmul.f32 %v5319, %v7332
        %v7353 = vmul.f32 %v5351, %v7335
        %v7354 = vmul.f32 %v5383, %v7338
        %v7355 = vmul.f32 %v5415, %v7341
        %v7356 = vmul.f32 %v5447, %v7344
        %v7357 = vmul.f32 %v5479, %v7347
        %v7358 = vmul.f32 %v5511, %v7350
        %7359 = vrot.lane.b32.xlu0 %v5665, 96
        %v7360 = vpop.permute.xlu0 %7359
        %v7361 = vsel %vm5829, %v7360, 0
        %v7363 = vsel %vm5829, %v5667, 0
        %7365 = vmatprep.subr.mxu0 0.0
        %7366 = vmatpush1.xpose.msra.mxu0 0.0
        %7367 = vmatprep.subr.mxu0 0.0
        %7368 = vmatpush1.xpose.msra.mxu0 0.0
        %7369 = vmatprep.subr.mxu0 0.0
        %7370 = vmatpush1.xpose.msra.mxu0 0.0
        %7371 = vmatprep.subr.mxu0 0.0
        %7372 = vmatpush1.xpose.msra.mxu0 0.0
        %7373 = vmatprep.subr.mxu0 0.0
        %7374 = vmatpush1.xpose.msra.mxu0 0.0
        %7375 = vmatprep.subr.mxu0 0.0
        %7376 = vmatpush1.xpose.msra.mxu0 0.0
        %7377 = vmatprep.subr.mxu0 0.0
        %7378 = vmatpush1.xpose.msra.mxu0 0.0
        %7379 = vmatprep.subr.mxu0 0.0
        %7380 = vmatpush1.xpose.msra.mxu0 0.0
        %7381 = vmatprep.subr.mxu0 0.0
        %7382 = vmatpush1.xpose.msra.mxu0 0.0
        %7383 = vmatprep.subr.mxu0 0.0
        %7384 = vmatpush1.xpose.msra.mxu0 0.0
        %7385 = vmatprep.subr.mxu0 0.0
        %7386 = vmatpush1.xpose.msra.mxu0 0.0
        %7387 = vmatprep.subr.mxu0 0.0
        %7388 = vmatpush1.xpose.msra.mxu0 0.0
        %7389 = vmatprep.subr.mxu0 0.0
        %7390 = vmatpush1.xpose.msra.mxu0 0.0
        %7391 = vmatprep.subr.mxu0 0.0
        %7392 = vmatpush1.xpose.msra.mxu0 0.0
        %7393 = vmatprep.subr.mxu0 0.0
        %7394 = vmatpush1.xpose.msra.mxu0 0.0
        %7395 = vmatprep.subr.mxu0 0.0
        %7396 = vmatpush1.xpose.msra.mxu0 %v7363
        %7397 = vmatprep.subr.mxu0 0.0
        %7398 = vmatpush2.xpose.msra.mxu0 0.0
        %7399 = vmatprep.subr.mxu0 0.0
        %7400 = vmatpush2.xpose.msra.mxu0 0.0
        %7401 = vmatprep.subr.mxu0 0.0
        %7402 = vmatpush2.xpose.msra.mxu0 0.0
        %7403 = vmatprep.subr.mxu0 0.0
        %7404 = vmatpush2.xpose.msra.mxu0 0.0
        %7405 = vmatprep.subr.mxu0 0.0
        %7406 = vmatpush2.xpose.msra.mxu0 0.0
        %7407 = vmatprep.subr.mxu0 0.0
        %7408 = vmatpush2.xpose.msra.mxu0 0.0
        %7409 = vmatprep.subr.mxu0 0.0
        %7410 = vmatpush2.xpose.msra.mxu0 0.0
        %7411 = vmatprep.subr.mxu0 0.0
        %7412 = vmatpush2.xpose.msra.mxu0 0.0
        %7413 = vmatprep.subr.mxu0 0.0
        %7414 = vmatpush2.xpose.msra.mxu0 0.0
        %7415 = vmatprep.subr.mxu0 0.0
        %7416 = vmatpush2.xpose.msra.mxu0 0.0
        %7417 = vmatprep.subr.mxu0 0.0
        %7418 = vmatpush2.xpose.msra.mxu0 0.0
        %7419 = vmatprep.subr.mxu0 0.0
        %7420 = vmatpush2.xpose.msra.mxu0 0.0
        %7421 = vmatprep.subr.mxu0 0.0
        %7422 = vmatpush2.xpose.msra.mxu0 0.0
        %7423 = vmatprep.subr.mxu0 0.0
        %7424 = vmatpush2.xpose.msra.mxu0 0.0
        %7425 = vmatprep.subr.mxu0 0.0
        %7426 = vmatpush2.xpose.msra.mxu0 0.0
        %7427 = vmatprep.subr.mxu0 0.0
        %7428 = vmatpush2.xpose.msra.mxu0 0.0
        %7429 = vmatprep.mubr.f32.mxu0 0.0
        %7430 = vmatmul.mubr.f32.gmra.mxu0 %v7361
        %v7431 = vpop.f32.mrf.mxu0
        %v7432 = vadd.f32 %v7351, %v7431
        %v7433 = vpop.f32.mrf.mxu0
        %7434 = vdwg.mxu0
        %7435 = vrot.lane.b32.xlu0 %v5671, 96
        %v7436 = vpop.permute.xlu0 %7435
        %v7437 = vsel %vm5829, %v7436, 0
        %v7439 = vsel %vm5829, %v5673, 0
        %7441 = vmatprep.subr.mxu0 0.0
        %7442 = vmatpush1.xpose.msra.mxu0 0.0
        %7443 = vmatprep.subr.mxu0 0.0
        %7444 = vmatpush1.xpose.msra.mxu0 0.0
        %7445 = vmatprep.subr.mxu0 0.0
        %7446 = vmatpush1.xpose.msra.mxu0 0.0
        %7447 = vmatprep.subr.mxu0 0.0
        %7448 = vmatpush1.xpose.msra.mxu0 0.0
        %7449 = vmatprep.subr.mxu0 0.0
        %7450 = vmatpush1.xpose.msra.mxu0 0.0
        %7451 = vmatprep.subr.mxu0 0.0
        %7452 = vmatpush1.xpose.msra.mxu0 0.0
        %7453 = vmatprep.subr.mxu0 0.0
        %7454 = vmatpush1.xpose.msra.mxu0 0.0
        %7455 = vmatprep.subr.mxu0 0.0
        %7456 = vmatpush1.xpose.msra.mxu0 0.0
        %7457 = vmatprep.subr.mxu0 0.0
        %7458 = vmatpush1.xpose.msra.mxu0 0.0
        %7459 = vmatprep.subr.mxu0 0.0
        %7460 = vmatpush1.xpose.msra.mxu0 0.0
        %7461 = vmatprep.subr.mxu0 0.0
        %7462 = vmatpush1.xpose.msra.mxu0 0.0
        %7463 = vmatprep.subr.mxu0 0.0
        %7464 = vmatpush1.xpose.msra.mxu0 0.0
        %7465 = vmatprep.subr.mxu0 0.0
        %7466 = vmatpush1.xpose.msra.mxu0 0.0
        %7467 = vmatprep.subr.mxu0 0.0
        %7468 = vmatpush1.xpose.msra.mxu0 0.0
        %7469 = vmatprep.subr.mxu0 0.0
        %7470 = vmatpush1.xpose.msra.mxu0 0.0
        %7471 = vmatprep.subr.mxu0 0.0
        %7472 = vmatpush1.xpose.msra.mxu0 %v7439
        %7473 = vmatprep.subr.mxu0 0.0
        %7474 = vmatpush2.xpose.msra.mxu0 0.0
        %7475 = vmatprep.subr.mxu0 0.0
        %7476 = vmatpush2.xpose.msra.mxu0 0.0
        %7477 = vmatprep.subr.mxu0 0.0
        %7478 = vmatpush2.xpose.msra.mxu0 0.0
        %7479 = vmatprep.subr.mxu0 0.0
        %7480 = vmatpush2.xpose.msra.mxu0 0.0
        %7481 = vmatprep.subr.mxu0 0.0
        %7482 = vmatpush2.xpose.msra.mxu0 0.0
        %7483 = vmatprep.subr.mxu0 0.0
        %7484 = vmatpush2.xpose.msra.mxu0 0.0
        %7485 = vmatprep.subr.mxu0 0.0
        %7486 = vmatpush2.xpose.msra.mxu0 0.0
        %7487 = vmatprep.subr.mxu0 0.0
        %7488 = vmatpush2.xpose.msra.mxu0 0.0
        %7489 = vmatprep.subr.mxu0 0.0
        %7490 = vmatpush2.xpose.msra.mxu0 0.0
        %7491 = vmatprep.subr.mxu0 0.0
        %7492 = vmatpush2.xpose.msra.mxu0 0.0
        %7493 = vmatprep.subr.mxu0 0.0
        %7494 = vmatpush2.xpose.msra.mxu0 0.0
        %7495 = vmatprep.subr.mxu0 0.0
        %7496 = vmatpush2.xpose.msra.mxu0 0.0
        %7497 = vmatprep.subr.mxu0 0.0
        %7498 = vmatpush2.xpose.msra.mxu0 0.0
        %7499 = vmatprep.subr.mxu0 0.0
        %7500 = vmatpush2.xpose.msra.mxu0 0.0
        %7501 = vmatprep.subr.mxu0 0.0
        %7502 = vmatpush2.xpose.msra.mxu0 0.0
        %7503 = vmatprep.subr.mxu0 0.0
        %7504 = vmatpush2.xpose.msra.mxu0 0.0
        %7505 = vmatprep.mubr.f32.mxu0 0.0
        %7506 = vmatmul.mubr.f32.gmra.mxu0 %v7437
        %v7507 = vpop.f32.mrf.mxu0
        %v7508 = vadd.f32 %v7352, %v7507
        %v7509 = vpop.f32.mrf.mxu0
        %7510 = vdwg.mxu0
        %7511 = vrot.lane.b32.xlu0 %v5677, 96
        %v7512 = vpop.permute.xlu0 %7511
        %v7513 = vsel %vm5829, %v7512, 0
        %v7515 = vsel %vm5829, %v5679, 0
        %7517 = vmatprep.subr.mxu0 0.0
        %7518 = vmatpush1.xpose.msra.mxu0 0.0
        %7519 = vmatprep.subr.mxu0 0.0
        %7520 = vmatpush1.xpose.msra.mxu0 0.0
        %7521 = vmatprep.subr.mxu0 0.0
        %7522 = vmatpush1.xpose.msra.mxu0 0.0
        %7523 = vmatprep.subr.mxu0 0.0
        %7524 = vmatpush1.xpose.msra.mxu0 0.0
        %7525 = vmatprep.subr.mxu0 0.0
        %7526 = vmatpush1.xpose.msra.mxu0 0.0
        %7527 = vmatprep.subr.mxu0 0.0
        %7528 = vmatpush1.xpose.msra.mxu0 0.0
        %7529 = vmatprep.subr.mxu0 0.0
        %7530 = vmatpush1.xpose.msra.mxu0 0.0
        %7531 = vmatprep.subr.mxu0 0.0
        %7532 = vmatpush1.xpose.msra.mxu0 0.0
        %7533 = vmatprep.subr.mxu0 0.0
        %7534 = vmatpush1.xpose.msra.mxu0 0.0
        %7535 = vmatprep.subr.mxu0 0.0
        %7536 = vmatpush1.xpose.msra.mxu0 0.0
        %7537 = vmatprep.subr.mxu0 0.0
        %7538 = vmatpush1.xpose.msra.mxu0 0.0
        %7539 = vmatprep.subr.mxu0 0.0
        %7540 = vmatpush1.xpose.msra.mxu0 0.0
        %7541 = vmatprep.subr.mxu0 0.0
        %7542 = vmatpush1.xpose.msra.mxu0 0.0
        %7543 = vmatprep.subr.mxu0 0.0
        %7544 = vmatpush1.xpose.msra.mxu0 0.0
        %7545 = vmatprep.subr.mxu0 0.0
        %7546 = vmatpush1.xpose.msra.mxu0 0.0
        %7547 = vmatprep.subr.mxu0 0.0
        %7548 = vmatpush1.xpose.msra.mxu0 %v7515
        %7549 = vmatprep.subr.mxu0 0.0
        %7550 = vmatpush2.xpose.msra.mxu0 0.0
        %7551 = vmatprep.subr.mxu0 0.0
        %7552 = vmatpush2.xpose.msra.mxu0 0.0
        %7553 = vmatprep.subr.mxu0 0.0
        %7554 = vmatpush2.xpose.msra.mxu0 0.0
        %7555 = vmatprep.subr.mxu0 0.0
        %7556 = vmatpush2.xpose.msra.mxu0 0.0
        %7557 = vmatprep.subr.mxu0 0.0
        %7558 = vmatpush2.xpose.msra.mxu0 0.0
        %7559 = vmatprep.subr.mxu0 0.0
        %7560 = vmatpush2.xpose.msra.mxu0 0.0
        %7561 = vmatprep.subr.mxu0 0.0
        %7562 = vmatpush2.xpose.msra.mxu0 0.0
        %7563 = vmatprep.subr.mxu0 0.0
        %7564 = vmatpush2.xpose.msra.mxu0 0.0
        %7565 = vmatprep.subr.mxu0 0.0
        %7566 = vmatpush2.xpose.msra.mxu0 0.0
        %7567 = vmatprep.subr.mxu0 0.0
        %7568 = vmatpush2.xpose.msra.mxu0 0.0
        %7569 = vmatprep.subr.mxu0 0.0
        %7570 = vmatpush2.xpose.msra.mxu0 0.0
        %7571 = vmatprep.subr.mxu0 0.0
        %7572 = vmatpush2.xpose.msra.mxu0 0.0
        %7573 = vmatprep.subr.mxu0 0.0
        %7574 = vmatpush2.xpose.msra.mxu0 0.0
        %7575 = vmatprep.subr.mxu0 0.0
        %7576 = vmatpush2.xpose.msra.mxu0 0.0
        %7577 = vmatprep.subr.mxu0 0.0
        %7578 = vmatpush2.xpose.msra.mxu0 0.0
        %7579 = vmatprep.subr.mxu0 0.0
        %7580 = vmatpush2.xpose.msra.mxu0 0.0
        %7581 = vmatprep.mubr.f32.mxu0 0.0
        %7582 = vmatmul.mubr.f32.gmra.mxu0 %v7513
        %v7583 = vpop.f32.mrf.mxu0
        %v7584 = vadd.f32 %v7353, %v7583
        %v7585 = vpop.f32.mrf.mxu0
        %7586 = vdwg.mxu0
        %7587 = vrot.lane.b32.xlu0 %v5683, 96
        %v7588 = vpop.permute.xlu0 %7587
        %v7589 = vsel %vm5829, %v7588, 0
        %v7591 = vsel %vm5829, %v5685, 0
        %7593 = vmatprep.subr.mxu0 0.0
        %7594 = vmatpush1.xpose.msra.mxu0 0.0
        %7595 = vmatprep.subr.mxu0 0.0
        %7596 = vmatpush1.xpose.msra.mxu0 0.0
        %7597 = vmatprep.subr.mxu0 0.0
        %7598 = vmatpush1.xpose.msra.mxu0 0.0
        %7599 = vmatprep.subr.mxu0 0.0
        %7600 = vmatpush1.xpose.msra.mxu0 0.0
        %7601 = vmatprep.subr.mxu0 0.0
        %7602 = vmatpush1.xpose.msra.mxu0 0.0
        %7603 = vmatprep.subr.mxu0 0.0
        %7604 = vmatpush1.xpose.msra.mxu0 0.0
        %7605 = vmatprep.subr.mxu0 0.0
        %7606 = vmatpush1.xpose.msra.mxu0 0.0
        %7607 = vmatprep.subr.mxu0 0.0
        %7608 = vmatpush1.xpose.msra.mxu0 0.0
        %7609 = vmatprep.subr.mxu0 0.0
        %7610 = vmatpush1.xpose.msra.mxu0 0.0
        %7611 = vmatprep.subr.mxu0 0.0
        %7612 = vmatpush1.xpose.msra.mxu0 0.0
        %7613 = vmatprep.subr.mxu0 0.0
        %7614 = vmatpush1.xpose.msra.mxu0 0.0
        %7615 = vmatprep.subr.mxu0 0.0
        %7616 = vmatpush1.xpose.msra.mxu0 0.0
        %7617 = vmatprep.subr.mxu0 0.0
        %7618 = vmatpush1.xpose.msra.mxu0 0.0
        %7619 = vmatprep.subr.mxu0 0.0
        %7620 = vmatpush1.xpose.msra.mxu0 0.0
        %7621 = vmatprep.subr.mxu0 0.0
        %7622 = vmatpush1.xpose.msra.mxu0 0.0
        %7623 = vmatprep.subr.mxu0 0.0
        %7624 = vmatpush1.xpose.msra.mxu0 %v7591
        %7625 = vmatprep.subr.mxu0 0.0
        %7626 = vmatpush2.xpose.msra.mxu0 0.0
        %7627 = vmatprep.subr.mxu0 0.0
        %7628 = vmatpush2.xpose.msra.mxu0 0.0
        %7629 = vmatprep.subr.mxu0 0.0
        %7630 = vmatpush2.xpose.msra.mxu0 0.0
        %7631 = vmatprep.subr.mxu0 0.0
        %7632 = vmatpush2.xpose.msra.mxu0 0.0
        %7633 = vmatprep.subr.mxu0 0.0
        %7634 = vmatpush2.xpose.msra.mxu0 0.0
        %7635 = vmatprep.subr.mxu0 0.0
        %7636 = vmatpush2.xpose.msra.mxu0 0.0
        %7637 = vmatprep.subr.mxu0 0.0
        %7638 = vmatpush2.xpose.msra.mxu0 0.0
        %7639 = vmatprep.subr.mxu0 0.0
        %7640 = vmatpush2.xpose.msra.mxu0 0.0
        %7641 = vmatprep.subr.mxu0 0.0
        %7642 = vmatpush2.xpose.msra.mxu0 0.0
        %7643 = vmatprep.subr.mxu0 0.0
        %7644 = vmatpush2.xpose.msra.mxu0 0.0
        %7645 = vmatprep.subr.mxu0 0.0
        %7646 = vmatpush2.xpose.msra.mxu0 0.0
        %7647 = vmatprep.subr.mxu0 0.0
        %7648 = vmatpush2.xpose.msra.mxu0 0.0
        %7649 = vmatprep.subr.mxu0 0.0
        %7650 = vmatpush2.xpose.msra.mxu0 0.0
        %7651 = vmatprep.subr.mxu0 0.0
        %7652 = vmatpush2.xpose.msra.mxu0 0.0
        %7653 = vmatprep.subr.mxu0 0.0
        %7654 = vmatpush2.xpose.msra.mxu0 0.0
        %7655 = vmatprep.subr.mxu0 0.0
        %7656 = vmatpush2.xpose.msra.mxu0 0.0
        %7657 = vmatprep.mubr.f32.mxu0 0.0
        %7658 = vmatmul.mubr.f32.gmra.mxu0 %v7589
        %v7659 = vpop.f32.mrf.mxu0
        %v7660 = vadd.f32 %v7354, %v7659
        %v7661 = vpop.f32.mrf.mxu0
        %7662 = vdwg.mxu0
        %7663 = vrot.lane.b32.xlu0 %v5689, 96
        %v7664 = vpop.permute.xlu0 %7663
        %v7665 = vsel %vm5829, %v7664, 0
        %v7667 = vsel %vm5829, %v5691, 0
        %7669 = vmatprep.subr.mxu0 0.0
        %7670 = vmatpush1.xpose.msra.mxu0 0.0
        %7671 = vmatprep.subr.mxu0 0.0
        %7672 = vmatpush1.xpose.msra.mxu0 0.0
        %7673 = vmatprep.subr.mxu0 0.0
        %7674 = vmatpush1.xpose.msra.mxu0 0.0
        %7675 = vmatprep.subr.mxu0 0.0
        %7676 = vmatpush1.xpose.msra.mxu0 0.0
        %7677 = vmatprep.subr.mxu0 0.0
        %7678 = vmatpush1.xpose.msra.mxu0 0.0
        %7679 = vmatprep.subr.mxu0 0.0
        %7680 = vmatpush1.xpose.msra.mxu0 0.0
        %7681 = vmatprep.subr.mxu0 0.0
        %7682 = vmatpush1.xpose.msra.mxu0 0.0
        %7683 = vmatprep.subr.mxu0 0.0
        %7684 = vmatpush1.xpose.msra.mxu0 0.0
        %7685 = vmatprep.subr.mxu0 0.0
        %7686 = vmatpush1.xpose.msra.mxu0 0.0
        %7687 = vmatprep.subr.mxu0 0.0
        %7688 = vmatpush1.xpose.msra.mxu0 0.0
        %7689 = vmatprep.subr.mxu0 0.0
        %7690 = vmatpush1.xpose.msra.mxu0 0.0
        %7691 = vmatprep.subr.mxu0 0.0
        %7692 = vmatpush1.xpose.msra.mxu0 0.0
        %7693 = vmatprep.subr.mxu0 0.0
        %7694 = vmatpush1.xpose.msra.mxu0 0.0
        %7695 = vmatprep.subr.mxu0 0.0
        %7696 = vmatpush1.xpose.msra.mxu0 0.0
        %7697 = vmatprep.subr.mxu0 0.0
        %7698 = vmatpush1.xpose.msra.mxu0 0.0
        %7699 = vmatprep.subr.mxu0 0.0
        %7700 = vmatpush1.xpose.msra.mxu0 %v7667
        %7701 = vmatprep.subr.mxu0 0.0
        %7702 = vmatpush2.xpose.msra.mxu0 0.0
        %7703 = vmatprep.subr.mxu0 0.0
        %7704 = vmatpush2.xpose.msra.mxu0 0.0
        %7705 = vmatprep.subr.mxu0 0.0
        %7706 = vmatpush2.xpose.msra.mxu0 0.0
        %7707 = vmatprep.subr.mxu0 0.0
        %7708 = vmatpush2.xpose.msra.mxu0 0.0
        %7709 = vmatprep.subr.mxu0 0.0
        %7710 = vmatpush2.xpose.msra.mxu0 0.0
        %7711 = vmatprep.subr.mxu0 0.0
        %7712 = vmatpush2.xpose.msra.mxu0 0.0
        %7713 = vmatprep.subr.mxu0 0.0
        %7714 = vmatpush2.xpose.msra.mxu0 0.0
        %7715 = vmatprep.subr.mxu0 0.0
        %7716 = vmatpush2.xpose.msra.mxu0 0.0
        %7717 = vmatprep.subr.mxu0 0.0
        %7718 = vmatpush2.xpose.msra.mxu0 0.0
        %7719 = vmatprep.subr.mxu0 0.0
        %7720 = vmatpush2.xpose.msra.mxu0 0.0
        %7721 = vmatprep.subr.mxu0 0.0
        %7722 = vmatpush2.xpose.msra.mxu0 0.0
        %7723 = vmatprep.subr.mxu0 0.0
        %7724 = vmatpush2.xpose.msra.mxu0 0.0
        %7725 = vmatprep.subr.mxu0 0.0
        %7726 = vmatpush2.xpose.msra.mxu0 0.0
        %7727 = vmatprep.subr.mxu0 0.0
        %7728 = vmatpush2.xpose.msra.mxu0 0.0
        %7729 = vmatprep.subr.mxu0 0.0
        %7730 = vmatpush2.xpose.msra.mxu0 0.0
        %7731 = vmatprep.subr.mxu0 0.0
        %7732 = vmatpush2.xpose.msra.mxu0 0.0
        %7733 = vmatprep.mubr.f32.mxu0 0.0
        %7734 = vmatmul.mubr.f32.gmra.mxu0 %v7665
        %v7735 = vpop.f32.mrf.mxu0
        %v7736 = vadd.f32 %v7355, %v7735
        %v7737 = vpop.f32.mrf.mxu0
        %7738 = vdwg.mxu0
        %7739 = vrot.lane.b32.xlu0 %v5695, 96
        %v7740 = vpop.permute.xlu0 %7739
        %v7741 = vsel %vm5829, %v7740, 0
        %v7743 = vsel %vm5829, %v5697, 0
        %7745 = vmatprep.subr.mxu0 0.0
        %7746 = vmatpush1.xpose.msra.mxu0 0.0
        %7747 = vmatprep.subr.mxu0 0.0
        %7748 = vmatpush1.xpose.msra.mxu0 0.0
        %7749 = vmatprep.subr.mxu0 0.0
        %7750 = vmatpush1.xpose.msra.mxu0 0.0
        %7751 = vmatprep.subr.mxu0 0.0
        %7752 = vmatpush1.xpose.msra.mxu0 0.0
        %7753 = vmatprep.subr.mxu0 0.0
        %7754 = vmatpush1.xpose.msra.mxu0 0.0
        %7755 = vmatprep.subr.mxu0 0.0
        %7756 = vmatpush1.xpose.msra.mxu0 0.0
        %7757 = vmatprep.subr.mxu0 0.0
        %7758 = vmatpush1.xpose.msra.mxu0 0.0
        %7759 = vmatprep.subr.mxu0 0.0
        %7760 = vmatpush1.xpose.msra.mxu0 0.0
        %7761 = vmatprep.subr.mxu0 0.0
        %7762 = vmatpush1.xpose.msra.mxu0 0.0
        %7763 = vmatprep.subr.mxu0 0.0
        %7764 = vmatpush1.xpose.msra.mxu0 0.0
        %7765 = vmatprep.subr.mxu0 0.0
        %7766 = vmatpush1.xpose.msra.mxu0 0.0
        %7767 = vmatprep.subr.mxu0 0.0
        %7768 = vmatpush1.xpose.msra.mxu0 0.0
        %7769 = vmatprep.subr.mxu0 0.0
        %7770 = vmatpush1.xpose.msra.mxu0 0.0
        %7771 = vmatprep.subr.mxu0 0.0
        %7772 = vmatpush1.xpose.msra.mxu0 0.0
        %7773 = vmatprep.subr.mxu0 0.0
        %7774 = vmatpush1.xpose.msra.mxu0 0.0
        %7775 = vmatprep.subr.mxu0 0.0
        %7776 = vmatpush1.xpose.msra.mxu0 %v7743
        %7777 = vmatprep.subr.mxu0 0.0
        %7778 = vmatpush2.xpose.msra.mxu0 0.0
        %7779 = vmatprep.subr.mxu0 0.0
        %7780 = vmatpush2.xpose.msra.mxu0 0.0
        %7781 = vmatprep.subr.mxu0 0.0
        %7782 = vmatpush2.xpose.msra.mxu0 0.0
        %7783 = vmatprep.subr.mxu0 0.0
        %7784 = vmatpush2.xpose.msra.mxu0 0.0
        %7785 = vmatprep.subr.mxu0 0.0
        %7786 = vmatpush2.xpose.msra.mxu0 0.0
        %7787 = vmatprep.subr.mxu0 0.0
        %7788 = vmatpush2.xpose.msra.mxu0 0.0
        %7789 = vmatprep.subr.mxu0 0.0
        %7790 = vmatpush2.xpose.msra.mxu0 0.0
        %7791 = vmatprep.subr.mxu0 0.0
        %7792 = vmatpush2.xpose.msra.mxu0 0.0
        %7793 = vmatprep.subr.mxu0 0.0
        %7794 = vmatpush2.xpose.msra.mxu0 0.0
        %7795 = vmatprep.subr.mxu0 0.0
        %7796 = vmatpush2.xpose.msra.mxu0 0.0
        %7797 = vmatprep.subr.mxu0 0.0
        %7798 = vmatpush2.xpose.msra.mxu0 0.0
        %7799 = vmatprep.subr.mxu0 0.0
        %7800 = vmatpush2.xpose.msra.mxu0 0.0
        %7801 = vmatprep.subr.mxu0 0.0
        %7802 = vmatpush2.xpose.msra.mxu0 0.0
        %7803 = vmatprep.subr.mxu0 0.0
        %7804 = vmatpush2.xpose.msra.mxu0 0.0
        %7805 = vmatprep.subr.mxu0 0.0
        %7806 = vmatpush2.xpose.msra.mxu0 0.0
        %7807 = vmatprep.subr.mxu0 0.0
        %7808 = vmatpush2.xpose.msra.mxu0 0.0
        %7809 = vmatprep.mubr.f32.mxu0 0.0
        %7810 = vmatmul.mubr.f32.gmra.mxu0 %v7741
        %v7811 = vpop.f32.mrf.mxu0
        %v7812 = vadd.f32 %v7356, %v7811
        %v7813 = vpop.f32.mrf.mxu0
        %7814 = vdwg.mxu0
        %7815 = vrot.lane.b32.xlu0 %v5701, 96
        %v7816 = vpop.permute.xlu0 %7815
        %v7817 = vsel %vm5829, %v7816, 0
        %v7819 = vsel %vm5829, %v5703, 0
        %7821 = vmatprep.subr.mxu0 0.0
        %7822 = vmatpush1.xpose.msra.mxu0 0.0
        %7823 = vmatprep.subr.mxu0 0.0
        %7824 = vmatpush1.xpose.msra.mxu0 0.0
        %7825 = vmatprep.subr.mxu0 0.0
        %7826 = vmatpush1.xpose.msra.mxu0 0.0
        %7827 = vmatprep.subr.mxu0 0.0
        %7828 = vmatpush1.xpose.msra.mxu0 0.0
        %7829 = vmatprep.subr.mxu0 0.0
        %7830 = vmatpush1.xpose.msra.mxu0 0.0
        %7831 = vmatprep.subr.mxu0 0.0
        %7832 = vmatpush1.xpose.msra.mxu0 0.0
        %7833 = vmatprep.subr.mxu0 0.0
        %7834 = vmatpush1.xpose.msra.mxu0 0.0
        %7835 = vmatprep.subr.mxu0 0.0
        %7836 = vmatpush1.xpose.msra.mxu0 0.0
        %7837 = vmatprep.subr.mxu0 0.0
        %7838 = vmatpush1.xpose.msra.mxu0 0.0
        %7839 = vmatprep.subr.mxu0 0.0
        %7840 = vmatpush1.xpose.msra.mxu0 0.0
        %7841 = vmatprep.subr.mxu0 0.0
        %7842 = vmatpush1.xpose.msra.mxu0 0.0
        %7843 = vmatprep.subr.mxu0 0.0
        %7844 = vmatpush1.xpose.msra.mxu0 0.0
        %7845 = vmatprep.subr.mxu0 0.0
        %7846 = vmatpush1.xpose.msra.mxu0 0.0
        %7847 = vmatprep.subr.mxu0 0.0
        %7848 = vmatpush1.xpose.msra.mxu0 0.0
        %7849 = vmatprep.subr.mxu0 0.0
        %7850 = vmatpush1.xpose.msra.mxu0 0.0
        %7851 = vmatprep.subr.mxu0 0.0
        %7852 = vmatpush1.xpose.msra.mxu0 %v7819
        %7853 = vmatprep.subr.mxu0 0.0
        %7854 = vmatpush2.xpose.msra.mxu0 0.0
        %7855 = vmatprep.subr.mxu0 0.0
        %7856 = vmatpush2.xpose.msra.mxu0 0.0
        %7857 = vmatprep.subr.mxu0 0.0
        %7858 = vmatpush2.xpose.msra.mxu0 0.0
        %7859 = vmatprep.subr.mxu0 0.0
        %7860 = vmatpush2.xpose.msra.mxu0 0.0
        %7861 = vmatprep.subr.mxu0 0.0
        %7862 = vmatpush2.xpose.msra.mxu0 0.0
        %7863 = vmatprep.subr.mxu0 0.0
        %7864 = vmatpush2.xpose.msra.mxu0 0.0
        %7865 = vmatprep.subr.mxu0 0.0
        %7866 = vmatpush2.xpose.msra.mxu0 0.0
        %7867 = vmatprep.subr.mxu0 0.0
        %7868 = vmatpush2.xpose.msra.mxu0 0.0
        %7869 = vmatprep.subr.mxu0 0.0
        %7870 = vmatpush2.xpose.msra.mxu0 0.0
        %7871 = vmatprep.subr.mxu0 0.0
        %7872 = vmatpush2.xpose.msra.mxu0 0.0
        %7873 = vmatprep.subr.mxu0 0.0
        %7874 = vmatpush2.xpose.msra.mxu0 0.0
        %7875 = vmatprep.subr.mxu0 0.0
        %7876 = vmatpush2.xpose.msra.mxu0 0.0
        %7877 = vmatprep.subr.mxu0 0.0
        %7878 = vmatpush2.xpose.msra.mxu0 0.0
        %7879 = vmatprep.subr.mxu0 0.0
        %7880 = vmatpush2.xpose.msra.mxu0 0.0
        %7881 = vmatprep.subr.mxu0 0.0
        %7882 = vmatpush2.xpose.msra.mxu0 0.0
        %7883 = vmatprep.subr.mxu0 0.0
        %7884 = vmatpush2.xpose.msra.mxu0 0.0
        %7885 = vmatprep.mubr.f32.mxu0 0.0
        %7886 = vmatmul.mubr.f32.gmra.mxu0 %v7817
        %v7887 = vpop.f32.mrf.mxu0
        %v7888 = vadd.f32 %v7357, %v7887
        %v7889 = vpop.f32.mrf.mxu0
        %7890 = vdwg.mxu0
        %7891 = vrot.lane.b32.xlu0 %v5707, 96
        %v7892 = vpop.permute.xlu0 %7891
        %v7893 = vsel %vm5829, %v7892, 0
        %v7895 = vsel %vm5829, %v5709, 0
        %7897 = vmatprep.subr.mxu0 0.0
        %7898 = vmatpush1.xpose.msra.mxu0 0.0
        %7899 = vmatprep.subr.mxu0 0.0
        %7900 = vmatpush1.xpose.msra.mxu0 0.0
        %7901 = vmatprep.subr.mxu0 0.0
        %7902 = vmatpush1.xpose.msra.mxu0 0.0
        %7903 = vmatprep.subr.mxu0 0.0
        %7904 = vmatpush1.xpose.msra.mxu0 0.0
        %7905 = vmatprep.subr.mxu0 0.0
        %7906 = vmatpush1.xpose.msra.mxu0 0.0
        %7907 = vmatprep.subr.mxu0 0.0
        %7908 = vmatpush1.xpose.msra.mxu0 0.0
        %7909 = vmatprep.subr.mxu0 0.0
        %7910 = vmatpush1.xpose.msra.mxu0 0.0
        %7911 = vmatprep.subr.mxu0 0.0
        %7912 = vmatpush1.xpose.msra.mxu0 0.0
        %7913 = vmatprep.subr.mxu0 0.0
        %7914 = vmatpush1.xpose.msra.mxu0 0.0
        %7915 = vmatprep.subr.mxu0 0.0
        %7916 = vmatpush1.xpose.msra.mxu0 0.0
        %7917 = vmatprep.subr.mxu0 0.0
        %7918 = vmatpush1.xpose.msra.mxu0 0.0
        %7919 = vmatprep.subr.mxu0 0.0
        %7920 = vmatpush1.xpose.msra.mxu0 0.0
        %7921 = vmatprep.subr.mxu0 0.0
        %7922 = vmatpush1.xpose.msra.mxu0 0.0
        %7923 = vmatprep.subr.mxu0 0.0
        %7924 = vmatpush1.xpose.msra.mxu0 0.0
        %7925 = vmatprep.subr.mxu0 0.0
        %7926 = vmatpush1.xpose.msra.mxu0 0.0
        %7927 = vmatprep.subr.mxu0 0.0
        %7928 = vmatpush1.xpose.msra.mxu0 %v7895
        %7929 = vmatprep.subr.mxu0 0.0
        %7930 = vmatpush2.xpose.msra.mxu0 0.0
        %7931 = vmatprep.subr.mxu0 0.0
        %7932 = vmatpush2.xpose.msra.mxu0 0.0
        %7933 = vmatprep.subr.mxu0 0.0
        %7934 = vmatpush2.xpose.msra.mxu0 0.0
        %7935 = vmatprep.subr.mxu0 0.0
        %7936 = vmatpush2.xpose.msra.mxu0 0.0
        %7937 = vmatprep.subr.mxu0 0.0
        %7938 = vmatpush2.xpose.msra.mxu0 0.0
        %7939 = vmatprep.subr.mxu0 0.0
        %7940 = vmatpush2.xpose.msra.mxu0 0.0
        %7941 = vmatprep.subr.mxu0 0.0
        %7942 = vmatpush2.xpose.msra.mxu0 0.0
        %7943 = vmatprep.subr.mxu0 0.0
        %7944 = vmatpush2.xpose.msra.mxu0 0.0
        %7945 = vmatprep.subr.mxu0 0.0
        %7946 = vmatpush2.xpose.msra.mxu0 0.0
        %7947 = vmatprep.subr.mxu0 0.0
        %7948 = vmatpush2.xpose.msra.mxu0 0.0
        %7949 = vmatprep.subr.mxu0 0.0
        %7950 = vmatpush2.xpose.msra.mxu0 0.0
        %7951 = vmatprep.subr.mxu0 0.0
        %7952 = vmatpush2.xpose.msra.mxu0 0.0
        %7953 = vmatprep.subr.mxu0 0.0
        %7954 = vmatpush2.xpose.msra.mxu0 0.0
        %7955 = vmatprep.subr.mxu0 0.0
        %7956 = vmatpush2.xpose.msra.mxu0 0.0
        %7957 = vmatprep.subr.mxu0 0.0
        %7958 = vmatpush2.xpose.msra.mxu0 0.0
        %7959 = vmatprep.subr.mxu0 0.0
        %7960 = vmatpush2.xpose.msra.mxu0 0.0
        %7961 = vmatprep.mubr.f32.mxu0 0.0
        %7962 = vmatmul.mubr.f32.gmra.mxu0 %v7893
        %v7963 = vpop.f32.mrf.mxu0
        %v7964 = vadd.f32 %v7358, %v7963
        %v7965 = vpop.f32.mrf.mxu0
        %7966 = vdwg.mxu0
        %v7967 = vmul.f32 %v7432, 0.17677669
        %v7968 = vmul.f32 %v7508, 0.17677669
        %v7969 = vmul.f32 %v7584, 0.17677669
        %v7970 = vmul.f32 %v7660, 0.17677669
        %v7971 = vmul.f32 %v7736, 0.17677669
        %v7972 = vmul.f32 %v7812, 0.17677669
        %v7973 = vmul.f32 %v7888, 0.17677669
        %v7974 = vmul.f32 %v7964, 0.17677669
        %v7975 = vsel %vm5527, %v7967, -1e+30
        %v7976 = vsel %vm5528, %v7968, -1e+30
        %v7977 = vsel %vm5529, %v7969, -1e+30
        %v7978 = vsel %vm5530, %v7970, -1e+30
        %v7979 = vsel %vm5531, %v7971, -1e+30
        %v7980 = vsel %vm5532, %v7972, -1e+30
        %v7981 = vsel %vm5533, %v7973, -1e+30
        %v7982 = vsel %vm5534, %v7974, -1e+30
        %v7983 = vsel %vm6494, %v7975, -inf
        %7984 = vmax.xlane.f32.xlu0 %v7983
        %v7985 = vpop.xlane.xlu0 %7984
        %v7986 = vsel %vm6494, %v7976, -inf
        %7987 = vmax.xlane.f32.xlu0 %v7986
        %v7988 = vpop.xlane.xlu0 %7987
        %v7989 = vsel %vm6494, %v7977, -inf
        %7990 = vmax.xlane.f32.xlu0 %v7989
        %v7991 = vpop.xlane.xlu0 %7990
        %v7992 = vsel %vm6494, %v7978, -inf
        %7993 = vmax.xlane.f32.xlu0 %v7992
        %v7994 = vpop.xlane.xlu0 %7993
        %v7995 = vsel %vm6494, %v7979, -inf
        %7996 = vmax.xlane.f32.xlu0 %v7995
        %v7997 = vpop.xlane.xlu0 %7996
        %v7998 = vsel %vm6494, %v7980, -inf
        %7999 = vmax.xlane.f32.xlu0 %v7998
        %v8000 = vpop.xlane.xlu0 %7999
        %v8001 = vsel %vm6494, %v7981, -inf
        %8002 = vmax.xlane.f32.xlu0 %v8001
        %v8003 = vpop.xlane.xlu0 %8002
        %v8004 = vsel %vm6494, %v7982, -inf
        %8005 = vmax.xlane.f32.xlu0 %v8004
        %v8006 = vpop.xlane.xlu0 %8005
        %v8007 = vsub.f32 %v7975, %v7985
        %v8008 = vsub.f32 %v7976, %v7988
        %v8009 = vsub.f32 %v7977, %v7991
        %v8010 = vsub.f32 %v7978, %v7994
        %v8011 = vsub.f32 %v7979, %v7997
        %v8012 = vsub.f32 %v7980, %v8000
        %v8013 = vsub.f32 %v7981, %v8003
        %v8014 = vsub.f32 %v7982, %v8006
        %v8015 = vmul.f32 %v8007, 1.442695
        %v8016 = vpow.pop %v8015
        %v8017 = vmul.f32 %v8008, 1.442695
        %v8018 = vpow.pop %v8017
        %v8019 = vmul.f32 %v8009, 1.442695
        %v8020 = vpow.pop %v8019
        %v8021 = vmul.f32 %v8010, 1.442695
        %v8022 = vpow.pop %v8021
        %v8023 = vmul.f32 %v8011, 1.442695
        %v8024 = vpow.pop %v8023
        %v8025 = vmul.f32 %v8012, 1.442695
        %v8026 = vpow.pop %v8025
        %v8027 = vmul.f32 %v8013, 1.442695
        %v8028 = vpow.pop %v8027
        %v8029 = vmul.f32 %v8014, 1.442695
        %v8030 = vpow.pop %v8029
        %v8031 = vmul.f32 %v8016, %v5543
        %v8032 = vmul.f32 %v8018, %v5544
        %v8033 = vmul.f32 %v8020, %v5545
        %v8034 = vmul.f32 %v8022, %v5546
        %v8035 = vmul.f32 %v8024, %v5547
        %v8036 = vmul.f32 %v8026, %v5548
        %v8037 = vmul.f32 %v8028, %v5549
        %v8038 = vmul.f32 %v8030, %v5550
        %v8039 = vsel %vm6494, %v8031, 0.0
        %8040 = vadd.xlane.f32.xlu0 %v8039
        %v8041 = vpop.xlane.xlu0 %8040
        %v8042 = vsel %vm6494, %v8032, 0.0
        %8043 = vadd.xlane.f32.xlu0 %v8042
        %v8044 = vpop.xlane.xlu0 %8043
        %v8045 = vsel %vm6494, %v8033, 0.0
        %8046 = vadd.xlane.f32.xlu0 %v8045
        %v8047 = vpop.xlane.xlu0 %8046
        %v8048 = vsel %vm6494, %v8034, 0.0
        %8049 = vadd.xlane.f32.xlu0 %v8048
        %v8050 = vpop.xlane.xlu0 %8049
        %v8051 = vsel %vm6494, %v8035, 0.0
        %8052 = vadd.xlane.f32.xlu0 %v8051
        %v8053 = vpop.xlane.xlu0 %8052
        %v8054 = vsel %vm6494, %v8036, 0.0
        %8055 = vadd.xlane.f32.xlu0 %v8054
        %v8056 = vpop.xlane.xlu0 %8055
        %v8057 = vsel %vm6494, %v8037, 0.0
        %8058 = vadd.xlane.f32.xlu0 %v8057
        %v8059 = vpop.xlane.xlu0 %8058
        %v8060 = vsel %vm6494, %v8038, 0.0
        %8061 = vadd.xlane.f32.xlu0 %v8060
        %v8062 = vpop.xlane.xlu0 %8061
        %v8063 = vmax.f32 %v8041, 1e-16
        %v8064 = vmax.f32 %v8044, 1e-16
        %v8065 = vmax.f32 %v8047, 1e-16
        %v8066 = vmax.f32 %v8050, 1e-16
        %v8067 = vmax.f32 %v8053, 1e-16
        %v8068 = vmax.f32 %v8056, 1e-16
        %v8069 = vmax.f32 %v8059, 1e-16
        %v8070 = vmax.f32 %v8062, 1e-16
        %v8071 = vrcp.pop %v8063
        %v8072 = vrcp.pop %v8064
        %v8073 = vrcp.pop %v8065
        %v8074 = vrcp.pop %v8066
        %v8075 = vrcp.pop %v8067
        %v8076 = vrcp.pop %v8068
        %v8077 = vrcp.pop %v8069
        %v8078 = vrcp.pop %v8070
        %v8079 = vmul.f32 %v8063, %v8071
        %v8080 = vmul.f32 %v8064, %v8072
        %v8081 = vmul.f32 %v8065, %v8073
        %v8082 = vmul.f32 %v8066, %v8074
        %v8083 = vmul.f32 %v8067, %v8075
        %v8084 = vmul.f32 %v8068, %v8076
        %v8085 = vmul.f32 %v8069, %v8077
        %v8086 = vmul.f32 %v8070, %v8078
        %v8087 = vsub.f32 2.0, %v8079
        %v8088 = vsub.f32 2.0, %v8080
        %v8089 = vsub.f32 2.0, %v8081
        %v8090 = vsub.f32 2.0, %v8082
        %v8091 = vsub.f32 2.0, %v8083
        %v8092 = vsub.f32 2.0, %v8084
        %v8093 = vsub.f32 2.0, %v8085
        %v8094 = vsub.f32 2.0, %v8086
        %v8095 = vmul.f32 %v8071, %v8087
        %v8096 = vmul.f32 %v8072, %v8088
        %v8097 = vmul.f32 %v8073, %v8089
        %v8098 = vmul.f32 %v8074, %v8090
        %v8099 = vmul.f32 %v8075, %v8091
        %v8100 = vmul.f32 %v8076, %v8092
        %v8101 = vmul.f32 %v8077, %v8093
        %v8102 = vmul.f32 %v8078, %v8094
        %v8103 = vmul.f32 %v8031, %v8095
        %v8104 = vmul.f32 %v8032, %v8096
        %v8105 = vmul.f32 %v8033, %v8097
        %v8106 = vmul.f32 %v8034, %v8098
        %v8107 = vmul.f32 %v8035, %v8099
        %v8108 = vmul.f32 %v8036, %v8100
        %v8109 = vmul.f32 %v8037, %v8101
        %v8110 = vmul.f32 %v8038, %v8102
        %8111 = vrot.lane.b32.xlu0 %v5667, 32
        %v8112 = vpop.permute.xlu0 %8111
        %v8115 = vsel %vm6494, %v8103, 0
        %8117 = vmatprep.subr.mxu0 0.0
        %8118 = vmatpush1.msra.mxu0 0.0
        %8119 = vmatprep.subr.mxu0 0.0
        %8120 = vmatpush1.msra.mxu0 0.0
        %8121 = vmatprep.subr.mxu0 0.0
        %8122 = vmatpush1.msra.mxu0 0.0
        %8123 = vmatprep.subr.mxu0 0.0
        %8124 = vmatpush1.msra.mxu0 0.0
        %8125 = vmatprep.subr.mxu0 0.0
        %8126 = vmatpush1.msra.mxu0 0.0
        %8127 = vmatprep.subr.mxu0 0.0
        %8128 = vmatpush1.msra.mxu0 0.0
        %8129 = vmatprep.subr.mxu0 0.0
        %8130 = vmatpush1.msra.mxu0 0.0
        %8131 = vmatprep.subr.mxu0 0.0
        %8132 = vmatpush1.msra.mxu0 0.0
        %8133 = vmatprep.subr.mxu0 0.0
        %8134 = vmatpush1.msra.mxu0 0.0
        %8135 = vmatprep.subr.mxu0 0.0
        %8136 = vmatpush1.msra.mxu0 0.0
        %8137 = vmatprep.subr.mxu0 0.0
        %8138 = vmatpush1.msra.mxu0 0.0
        %8139 = vmatprep.subr.mxu0 0.0
        %8140 = vmatpush1.msra.mxu0 0.0
        %8141 = vmatprep.subr.mxu0 0.0
        %8142 = vmatpush1.msra.mxu0 0.0
        %8143 = vmatprep.subr.mxu0 0.0
        %8144 = vmatpush1.msra.mxu0 0.0
        %8145 = vmatprep.subr.mxu0 0.0
        %8146 = vmatpush1.msra.mxu0 0.0
        %8147 = vmatprep.subr.mxu0 0.0
        %8148 = vmatpush1.msra.mxu0 %v8112
        %8149 = vmatprep.subr.mxu0 0.0
        %8150 = vmatpush2.msra.mxu0 0.0
        %8151 = vmatprep.subr.mxu0 0.0
        %8152 = vmatpush2.msra.mxu0 0.0
        %8153 = vmatprep.subr.mxu0 0.0
        %8154 = vmatpush2.msra.mxu0 0.0
        %8155 = vmatprep.subr.mxu0 0.0
        %8156 = vmatpush2.msra.mxu0 0.0
        %8157 = vmatprep.subr.mxu0 0.0
        %8158 = vmatpush2.msra.mxu0 0.0
        %8159 = vmatprep.subr.mxu0 0.0
        %8160 = vmatpush2.msra.mxu0 0.0
        %8161 = vmatprep.subr.mxu0 0.0
        %8162 = vmatpush2.msra.mxu0 0.0
        %8163 = vmatprep.subr.mxu0 0.0
        %8164 = vmatpush2.msra.mxu0 0.0
        %8165 = vmatprep.subr.mxu0 0.0
        %8166 = vmatpush2.msra.mxu0 0.0
        %8167 = vmatprep.subr.mxu0 0.0
        %8168 = vmatpush2.msra.mxu0 0.0
        %8169 = vmatprep.subr.mxu0 0.0
        %8170 = vmatpush2.msra.mxu0 0.0
        %8171 = vmatprep.subr.mxu0 0.0
        %8172 = vmatpush2.msra.mxu0 0.0
        %8173 = vmatprep.subr.mxu0 0.0
        %8174 = vmatpush2.msra.mxu0 0.0
        %8175 = vmatprep.subr.mxu0 0.0
        %8176 = vmatpush2.msra.mxu0 0.0
        %8177 = vmatprep.subr.mxu0 0.0
        %8178 = vmatpush2.msra.mxu0 0.0
        %8179 = vmatprep.subr.mxu0 0.0
        %8180 = vmatpush2.msra.mxu0 0.0
        %8181 = vmatprep.mubr.f32.mxu0 0.0
        %8182 = vmatmul.mubr.f32.gmra.mxu0 %v8115
        %v8183 = vpop.f32.mrf.mxu0
        %v8184 = vadd.f32 0.0, %v8183
        %v8185 = vpop.f32.mrf.mxu0
        %8186 = vdwg.mxu0
        %8187 = vrot.lane.b32.xlu0 %v5673, 32
        %v8188 = vpop.permute.xlu0 %8187
        %v8191 = vsel %vm6494, %v8104, 0
        %8193 = vmatprep.subr.mxu0 0.0
        %8194 = vmatpush1.msra.mxu0 0.0
        %8195 = vmatprep.subr.mxu0 0.0
        %8196 = vmatpush1.msra.mxu0 0.0
        %8197 = vmatprep.subr.mxu0 0.0
        %8198 = vmatpush1.msra.mxu0 0.0
        %8199 = vmatprep.subr.mxu0 0.0
        %8200 = vmatpush1.msra.mxu0 0.0
        %8201 = vmatprep.subr.mxu0 0.0
        %8202 = vmatpush1.msra.mxu0 0.0
        %8203 = vmatprep.subr.mxu0 0.0
        %8204 = vmatpush1.msra.mxu0 0.0
        %8205 = vmatprep.subr.mxu0 0.0
        %8206 = vmatpush1.msra.mxu0 0.0
        %8207 = vmatprep.subr.mxu0 0.0
        %8208 = vmatpush1.msra.mxu0 0.0
        %8209 = vmatprep.subr.mxu0 0.0
        %8210 = vmatpush1.msra.mxu0 0.0
        %8211 = vmatprep.subr.mxu0 0.0
        %8212 = vmatpush1.msra.mxu0 0.0
        %8213 = vmatprep.subr.mxu0 0.0
        %8214 = vmatpush1.msra.mxu0 0.0
        %8215 = vmatprep.subr.mxu0 0.0
        %8216 = vmatpush1.msra.mxu0 0.0
        %8217 = vmatprep.subr.mxu0 0.0
        %8218 = vmatpush1.msra.mxu0 0.0
        %8219 = vmatprep.subr.mxu0 0.0
        %8220 = vmatpush1.msra.mxu0 0.0
        %8221 = vmatprep.subr.mxu0 0.0
        %8222 = vmatpush1.msra.mxu0 0.0
        %8223 = vmatprep.subr.mxu0 0.0
        %8224 = vmatpush1.msra.mxu0 %v8188
        %8225 = vmatprep.subr.mxu0 0.0
        %8226 = vmatpush2.msra.mxu0 0.0
        %8227 = vmatprep.subr.mxu0 0.0
        %8228 = vmatpush2.msra.mxu0 0.0
        %8229 = vmatprep.subr.mxu0 0.0
        %8230 = vmatpush2.msra.mxu0 0.0
        %8231 = vmatprep.subr.mxu0 0.0
        %8232 = vmatpush2.msra.mxu0 0.0
        %8233 = vmatprep.subr.mxu0 0.0
        %8234 = vmatpush2.msra.mxu0 0.0
        %8235 = vmatprep.subr.mxu0 0.0
        %8236 = vmatpush2.msra.mxu0 0.0
        %8237 = vmatprep.subr.mxu0 0.0
        %8238 = vmatpush2.msra.mxu0 0.0
        %8239 = vmatprep.subr.mxu0 0.0
        %8240 = vmatpush2.msra.mxu0 0.0
        %8241 = vmatprep.subr.mxu0 0.0
        %8242 = vmatpush2.msra.mxu0 0.0
        %8243 = vmatprep.subr.mxu0 0.0
        %8244 = vmatpush2.msra.mxu0 0.0
        %8245 = vmatprep.subr.mxu0 0.0
        %8246 = vmatpush2.msra.mxu0 0.0
        %8247 = vmatprep.subr.mxu0 0.0
        %8248 = vmatpush2.msra.mxu0 0.0
        %8249 = vmatprep.subr.mxu0 0.0
        %8250 = vmatpush2.msra.mxu0 0.0
        %8251 = vmatprep.subr.mxu0 0.0
        %8252 = vmatpush2.msra.mxu0 0.0
        %8253 = vmatprep.subr.mxu0 0.0
        %8254 = vmatpush2.msra.mxu0 0.0
        %8255 = vmatprep.subr.mxu0 0.0
        %8256 = vmatpush2.msra.mxu0 0.0
        %8257 = vmatprep.mubr.f32.mxu0 0.0
        %8258 = vmatmul.mubr.f32.gmra.mxu0 %v8191
        %v8259 = vpop.f32.mrf.mxu0
        %v8260 = vadd.f32 0.0, %v8259
        %v8261 = vpop.f32.mrf.mxu0
        %8262 = vdwg.mxu0
        %8263 = vrot.lane.b32.xlu0 %v5679, 32
        %v8264 = vpop.permute.xlu0 %8263
        %v8267 = vsel %vm6494, %v8105, 0
        %8269 = vmatprep.subr.mxu0 0.0
        %8270 = vmatpush1.msra.mxu0 0.0
        %8271 = vmatprep.subr.mxu0 0.0
        %8272 = vmatpush1.msra.mxu0 0.0
        %8273 = vmatprep.subr.mxu0 0.0
        %8274 = vmatpush1.msra.mxu0 0.0
        %8275 = vmatprep.subr.mxu0 0.0
        %8276 = vmatpush1.msra.mxu0 0.0
        %8277 = vmatprep.subr.mxu0 0.0
        %8278 = vmatpush1.msra.mxu0 0.0
        %8279 = vmatprep.subr.mxu0 0.0
        %8280 = vmatpush1.msra.mxu0 0.0
        %8281 = vmatprep.subr.mxu0 0.0
        %8282 = vmatpush1.msra.mxu0 0.0
        %8283 = vmatprep.subr.mxu0 0.0
        %8284 = vmatpush1.msra.mxu0 0.0
        %8285 = vmatprep.subr.mxu0 0.0
        %8286 = vmatpush1.msra.mxu0 0.0
        %8287 = vmatprep.subr.mxu0 0.0
        %8288 = vmatpush1.msra.mxu0 0.0
        %8289 = vmatprep.subr.mxu0 0.0
        %8290 = vmatpush1.msra.mxu0 0.0
        %8291 = vmatprep.subr.mxu0 0.0
        %8292 = vmatpush1.msra.mxu0 0.0
        %8293 = vmatprep.subr.mxu0 0.0
        %8294 = vmatpush1.msra.mxu0 0.0
        %8295 = vmatprep.subr.mxu0 0.0
        %8296 = vmatpush1.msra.mxu0 0.0
        %8297 = vmatprep.subr.mxu0 0.0
        %8298 = vmatpush1.msra.mxu0 0.0
        %8299 = vmatprep.subr.mxu0 0.0
        %8300 = vmatpush1.msra.mxu0 %v8264
        %8301 = vmatprep.subr.mxu0 0.0
        %8302 = vmatpush2.msra.mxu0 0.0
        %8303 = vmatprep.subr.mxu0 0.0
        %8304 = vmatpush2.msra.mxu0 0.0
        %8305 = vmatprep.subr.mxu0 0.0
        %8306 = vmatpush2.msra.mxu0 0.0
        %8307 = vmatprep.subr.mxu0 0.0
        %8308 = vmatpush2.msra.mxu0 0.0
        %8309 = vmatprep.subr.mxu0 0.0
        %8310 = vmatpush2.msra.mxu0 0.0
        %8311 = vmatprep.subr.mxu0 0.0
        %8312 = vmatpush2.msra.mxu0 0.0
        %8313 = vmatprep.subr.mxu0 0.0
        %8314 = vmatpush2.msra.mxu0 0.0
        %8315 = vmatprep.subr.mxu0 0.0
        %8316 = vmatpush2.msra.mxu0 0.0
        %8317 = vmatprep.subr.mxu0 0.0
        %8318 = vmatpush2.msra.mxu0 0.0
        %8319 = vmatprep.subr.mxu0 0.0
        %8320 = vmatpush2.msra.mxu0 0.0
        %8321 = vmatprep.subr.mxu0 0.0
        %8322 = vmatpush2.msra.mxu0 0.0
        %8323 = vmatprep.subr.mxu0 0.0
        %8324 = vmatpush2.msra.mxu0 0.0
        %8325 = vmatprep.subr.mxu0 0.0
        %8326 = vmatpush2.msra.mxu0 0.0
        %8327 = vmatprep.subr.mxu0 0.0
        %8328 = vmatpush2.msra.mxu0 0.0
        %8329 = vmatprep.subr.mxu0 0.0
        %8330 = vmatpush2.msra.mxu0 0.0
        %8331 = vmatprep.subr.mxu0 0.0
        %8332 = vmatpush2.msra.mxu0 0.0
        %8333 = vmatprep.mubr.f32.mxu0 0.0
        %8334 = vmatmul.mubr.f32.gmra.mxu0 %v8267
        %v8335 = vpop.f32.mrf.mxu0
        %v8336 = vadd.f32 0.0, %v8335
        %v8337 = vpop.f32.mrf.mxu0
        %8338 = vdwg.mxu0
        %8339 = vrot.lane.b32.xlu0 %v5685, 32
        %v8340 = vpop.permute.xlu0 %8339
        %v8343 = vsel %vm6494, %v8106, 0
        %8345 = vmatprep.subr.mxu0 0.0
        %8346 = vmatpush1.msra.mxu0 0.0
        %8347 = vmatprep.subr.mxu0 0.0
        %8348 = vmatpush1.msra.mxu0 0.0
        %8349 = vmatprep.subr.mxu0 0.0
        %8350 = vmatpush1.msra.mxu0 0.0
        %8351 = vmatprep.subr.mxu0 0.0
        %8352 = vmatpush1.msra.mxu0 0.0
        %8353 = vmatprep.subr.mxu0 0.0
        %8354 = vmatpush1.msra.mxu0 0.0
        %8355 = vmatprep.subr.mxu0 0.0
        %8356 = vmatpush1.msra.mxu0 0.0
        %8357 = vmatprep.subr.mxu0 0.0
        %8358 = vmatpush1.msra.mxu0 0.0
        %8359 = vmatprep.subr.mxu0 0.0
        %8360 = vmatpush1.msra.mxu0 0.0
        %8361 = vmatprep.subr.mxu0 0.0
        %8362 = vmatpush1.msra.mxu0 0.0
        %8363 = vmatprep.subr.mxu0 0.0
        %8364 = vmatpush1.msra.mxu0 0.0
        %8365 = vmatprep.subr.mxu0 0.0
        %8366 = vmatpush1.msra.mxu0 0.0
        %8367 = vmatprep.subr.mxu0 0.0
        %8368 = vmatpush1.msra.mxu0 0.0
        %8369 = vmatprep.subr.mxu0 0.0
        %8370 = vmatpush1.msra.mxu0 0.0
        %8371 = vmatprep.subr.mxu0 0.0
        %8372 = vmatpush1.msra.mxu0 0.0
        %8373 = vmatprep.subr.mxu0 0.0
        %8374 = vmatpush1.msra.mxu0 0.0
        %8375 = vmatprep.subr.mxu0 0.0
        %8376 = vmatpush1.msra.mxu0 %v8340
        %8377 = vmatprep.subr.mxu0 0.0
        %8378 = vmatpush2.msra.mxu0 0.0
        %8379 = vmatprep.subr.mxu0 0.0
        %8380 = vmatpush2.msra.mxu0 0.0
        %8381 = vmatprep.subr.mxu0 0.0
        %8382 = vmatpush2.msra.mxu0 0.0
        %8383 = vmatprep.subr.mxu0 0.0
        %8384 = vmatpush2.msra.mxu0 0.0
        %8385 = vmatprep.subr.mxu0 0.0
        %8386 = vmatpush2.msra.mxu0 0.0
        %8387 = vmatprep.subr.mxu0 0.0
        %8388 = vmatpush2.msra.mxu0 0.0
        %8389 = vmatprep.subr.mxu0 0.0
        %8390 = vmatpush2.msra.mxu0 0.0
        %8391 = vmatprep.subr.mxu0 0.0
        %8392 = vmatpush2.msra.mxu0 0.0
        %8393 = vmatprep.subr.mxu0 0.0
        %8394 = vmatpush2.msra.mxu0 0.0
        %8395 = vmatprep.subr.mxu0 0.0
        %8396 = vmatpush2.msra.mxu0 0.0
        %8397 = vmatprep.subr.mxu0 0.0
        %8398 = vmatpush2.msra.mxu0 0.0
        %8399 = vmatprep.subr.mxu0 0.0
        %8400 = vmatpush2.msra.mxu0 0.0
        %8401 = vmatprep.subr.mxu0 0.0
        %8402 = vmatpush2.msra.mxu0 0.0
        %8403 = vmatprep.subr.mxu0 0.0
        %8404 = vmatpush2.msra.mxu0 0.0
        %8405 = vmatprep.subr.mxu0 0.0
        %8406 = vmatpush2.msra.mxu0 0.0
        %8407 = vmatprep.subr.mxu0 0.0
        %8408 = vmatpush2.msra.mxu0 0.0
        %8409 = vmatprep.mubr.f32.mxu0 0.0
        %8410 = vmatmul.mubr.f32.gmra.mxu0 %v8343
        %v8411 = vpop.f32.mrf.mxu0
        %v8412 = vadd.f32 0.0, %v8411
        %v8413 = vpop.f32.mrf.mxu0
        %8414 = vdwg.mxu0
        %8415 = vrot.lane.b32.xlu0 %v5691, 32
        %v8416 = vpop.permute.xlu0 %8415
        %v8419 = vsel %vm6494, %v8107, 0
        %8421 = vmatprep.subr.mxu0 0.0
        %8422 = vmatpush1.msra.mxu0 0.0
        %8423 = vmatprep.subr.mxu0 0.0
        %8424 = vmatpush1.msra.mxu0 0.0
        %8425 = vmatprep.subr.mxu0 0.0
        %8426 = vmatpush1.msra.mxu0 0.0
        %8427 = vmatprep.subr.mxu0 0.0
        %8428 = vmatpush1.msra.mxu0 0.0
        %8429 = vmatprep.subr.mxu0 0.0
        %8430 = vmatpush1.msra.mxu0 0.0
        %8431 = vmatprep.subr.mxu0 0.0
        %8432 = vmatpush1.msra.mxu0 0.0
        %8433 = vmatprep.subr.mxu0 0.0
        %8434 = vmatpush1.msra.mxu0 0.0
        %8435 = vmatprep.subr.mxu0 0.0
        %8436 = vmatpush1.msra.mxu0 0.0
        %8437 = vmatprep.subr.mxu0 0.0
        %8438 = vmatpush1.msra.mxu0 0.0
        %8439 = vmatprep.subr.mxu0 0.0
        %8440 = vmatpush1.msra.mxu0 0.0
        %8441 = vmatprep.subr.mxu0 0.0
        %8442 = vmatpush1.msra.mxu0 0.0
        %8443 = vmatprep.subr.mxu0 0.0
        %8444 = vmatpush1.msra.mxu0 0.0
        %8445 = vmatprep.subr.mxu0 0.0
        %8446 = vmatpush1.msra.mxu0 0.0
        %8447 = vmatprep.subr.mxu0 0.0
        %8448 = vmatpush1.msra.mxu0 0.0
        %8449 = vmatprep.subr.mxu0 0.0
        %8450 = vmatpush1.msra.mxu0 0.0
        %8451 = vmatprep.subr.mxu0 0.0
        %8452 = vmatpush1.msra.mxu0 %v8416
        %8453 = vmatprep.subr.mxu0 0.0
        %8454 = vmatpush2.msra.mxu0 0.0
        %8455 = vmatprep.subr.mxu0 0.0
        %8456 = vmatpush2.msra.mxu0 0.0
        %8457 = vmatprep.subr.mxu0 0.0
        %8458 = vmatpush2.msra.mxu0 0.0
        %8459 = vmatprep.subr.mxu0 0.0
        %8460 = vmatpush2.msra.mxu0 0.0
        %8461 = vmatprep.subr.mxu0 0.0
        %8462 = vmatpush2.msra.mxu0 0.0
        %8463 = vmatprep.subr.mxu0 0.0
        %8464 = vmatpush2.msra.mxu0 0.0
        %8465 = vmatprep.subr.mxu0 0.0
        %8466 = vmatpush2.msra.mxu0 0.0
        %8467 = vmatprep.subr.mxu0 0.0
        %8468 = vmatpush2.msra.mxu0 0.0
        %8469 = vmatprep.subr.mxu0 0.0
        %8470 = vmatpush2.msra.mxu0 0.0
        %8471 = vmatprep.subr.mxu0 0.0
        %8472 = vmatpush2.msra.mxu0 0.0
        %8473 = vmatprep.subr.mxu0 0.0
        %8474 = vmatpush2.msra.mxu0 0.0
        %8475 = vmatprep.subr.mxu0 0.0
        %8476 = vmatpush2.msra.mxu0 0.0
        %8477 = vmatprep.subr.mxu0 0.0
        %8478 = vmatpush2.msra.mxu0 0.0
        %8479 = vmatprep.subr.mxu0 0.0
        %8480 = vmatpush2.msra.mxu0 0.0
        %8481 = vmatprep.subr.mxu0 0.0
        %8482 = vmatpush2.msra.mxu0 0.0
        %8483 = vmatprep.subr.mxu0 0.0
        %8484 = vmatpush2.msra.mxu0 0.0
        %8485 = vmatprep.mubr.f32.mxu0 0.0
        %8486 = vmatmul.mubr.f32.gmra.mxu0 %v8419
        %v8487 = vpop.f32.mrf.mxu0
        %v8488 = vadd.f32 0.0, %v8487
        %v8489 = vpop.f32.mrf.mxu0
        %8490 = vdwg.mxu0
        %8491 = vrot.lane.b32.xlu0 %v5697, 32
        %v8492 = vpop.permute.xlu0 %8491
        %v8495 = vsel %vm6494, %v8108, 0
        %8497 = vmatprep.subr.mxu0 0.0
        %8498 = vmatpush1.msra.mxu0 0.0
        %8499 = vmatprep.subr.mxu0 0.0
        %8500 = vmatpush1.msra.mxu0 0.0
        %8501 = vmatprep.subr.mxu0 0.0
        %8502 = vmatpush1.msra.mxu0 0.0
        %8503 = vmatprep.subr.mxu0 0.0
        %8504 = vmatpush1.msra.mxu0 0.0
        %8505 = vmatprep.subr.mxu0 0.0
        %8506 = vmatpush1.msra.mxu0 0.0
        %8507 = vmatprep.subr.mxu0 0.0
        %8508 = vmatpush1.msra.mxu0 0.0
        %8509 = vmatprep.subr.mxu0 0.0
        %8510 = vmatpush1.msra.mxu0 0.0
        %8511 = vmatprep.subr.mxu0 0.0
        %8512 = vmatpush1.msra.mxu0 0.0
        %8513 = vmatprep.subr.mxu0 0.0
        %8514 = vmatpush1.msra.mxu0 0.0
        %8515 = vmatprep.subr.mxu0 0.0
        %8516 = vmatpush1.msra.mxu0 0.0
        %8517 = vmatprep.subr.mxu0 0.0
        %8518 = vmatpush1.msra.mxu0 0.0
        %8519 = vmatprep.subr.mxu0 0.0
        %8520 = vmatpush1.msra.mxu0 0.0
        %8521 = vmatprep.subr.mxu0 0.0
        %8522 = vmatpush1.msra.mxu0 0.0
        %8523 = vmatprep.subr.mxu0 0.0
        %8524 = vmatpush1.msra.mxu0 0.0
        %8525 = vmatprep.subr.mxu0 0.0
        %8526 = vmatpush1.msra.mxu0 0.0
        %8527 = vmatprep.subr.mxu0 0.0
        %8528 = vmatpush1.msra.mxu0 %v8492
        %8529 = vmatprep.subr.mxu0 0.0
        %8530 = vmatpush2.msra.mxu0 0.0
        %8531 = vmatprep.subr.mxu0 0.0
        %8532 = vmatpush2.msra.mxu0 0.0
        %8533 = vmatprep.subr.mxu0 0.0
        %8534 = vmatpush2.msra.mxu0 0.0
        %8535 = vmatprep.subr.mxu0 0.0
        %8536 = vmatpush2.msra.mxu0 0.0
        %8537 = vmatprep.subr.mxu0 0.0
        %8538 = vmatpush2.msra.mxu0 0.0
        %8539 = vmatprep.subr.mxu0 0.0
        %8540 = vmatpush2.msra.mxu0 0.0
        %8541 = vmatprep.subr.mxu0 0.0
        %8542 = vmatpush2.msra.mxu0 0.0
        %8543 = vmatprep.subr.mxu0 0.0
        %8544 = vmatpush2.msra.mxu0 0.0
        %8545 = vmatprep.subr.mxu0 0.0
        %8546 = vmatpush2.msra.mxu0 0.0
        %8547 = vmatprep.subr.mxu0 0.0
        %8548 = vmatpush2.msra.mxu0 0.0
        %8549 = vmatprep.subr.mxu0 0.0
        %8550 = vmatpush2.msra.mxu0 0.0
        %8551 = vmatprep.subr.mxu0 0.0
        %8552 = vmatpush2.msra.mxu0 0.0
        %8553 = vmatprep.subr.mxu0 0.0
        %8554 = vmatpush2.msra.mxu0 0.0
        %8555 = vmatprep.subr.mxu0 0.0
        %8556 = vmatpush2.msra.mxu0 0.0
        %8557 = vmatprep.subr.mxu0 0.0
        %8558 = vmatpush2.msra.mxu0 0.0
        %8559 = vmatprep.subr.mxu0 0.0
        %8560 = vmatpush2.msra.mxu0 0.0
        %8561 = vmatprep.mubr.f32.mxu0 0.0
        %8562 = vmatmul.mubr.f32.gmra.mxu0 %v8495
        %v8563 = vpop.f32.mrf.mxu0
        %v8564 = vadd.f32 0.0, %v8563
        %v8565 = vpop.f32.mrf.mxu0
        %8566 = vdwg.mxu0
        %8567 = vrot.lane.b32.xlu0 %v5703, 32
        %v8568 = vpop.permute.xlu0 %8567
        %v8571 = vsel %vm6494, %v8109, 0
        %8573 = vmatprep.subr.mxu0 0.0
        %8574 = vmatpush1.msra.mxu0 0.0
        %8575 = vmatprep.subr.mxu0 0.0
        %8576 = vmatpush1.msra.mxu0 0.0
        %8577 = vmatprep.subr.mxu0 0.0
        %8578 = vmatpush1.msra.mxu0 0.0
        %8579 = vmatprep.subr.mxu0 0.0
        %8580 = vmatpush1.msra.mxu0 0.0
        %8581 = vmatprep.subr.mxu0 0.0
        %8582 = vmatpush1.msra.mxu0 0.0
        %8583 = vmatprep.subr.mxu0 0.0
        %8584 = vmatpush1.msra.mxu0 0.0
        %8585 = vmatprep.subr.mxu0 0.0
        %8586 = vmatpush1.msra.mxu0 0.0
        %8587 = vmatprep.subr.mxu0 0.0
        %8588 = vmatpush1.msra.mxu0 0.0
        %8589 = vmatprep.subr.mxu0 0.0
        %8590 = vmatpush1.msra.mxu0 0.0
        %8591 = vmatprep.subr.mxu0 0.0
        %8592 = vmatpush1.msra.mxu0 0.0
        %8593 = vmatprep.subr.mxu0 0.0
        %8594 = vmatpush1.msra.mxu0 0.0
        %8595 = vmatprep.subr.mxu0 0.0
        %8596 = vmatpush1.msra.mxu0 0.0
        %8597 = vmatprep.subr.mxu0 0.0
        %8598 = vmatpush1.msra.mxu0 0.0
        %8599 = vmatprep.subr.mxu0 0.0
        %8600 = vmatpush1.msra.mxu0 0.0
        %8601 = vmatprep.subr.mxu0 0.0
        %8602 = vmatpush1.msra.mxu0 0.0
        %8603 = vmatprep.subr.mxu0 0.0
        %8604 = vmatpush1.msra.mxu0 %v8568
        %8605 = vmatprep.subr.mxu0 0.0
        %8606 = vmatpush2.msra.mxu0 0.0
        %8607 = vmatprep.subr.mxu0 0.0
        %8608 = vmatpush2.msra.mxu0 0.0
        %8609 = vmatprep.subr.mxu0 0.0
        %8610 = vmatpush2.msra.mxu0 0.0
        %8611 = vmatprep.subr.mxu0 0.0
        %8612 = vmatpush2.msra.mxu0 0.0
        %8613 = vmatprep.subr.mxu0 0.0
        %8614 = vmatpush2.msra.mxu0 0.0
        %8615 = vmatprep.subr.mxu0 0.0
        %8616 = vmatpush2.msra.mxu0 0.0
        %8617 = vmatprep.subr.mxu0 0.0
        %8618 = vmatpush2.msra.mxu0 0.0
        %8619 = vmatprep.subr.mxu0 0.0
        %8620 = vmatpush2.msra.mxu0 0.0
        %8621 = vmatprep.subr.mxu0 0.0
        %8622 = vmatpush2.msra.mxu0 0.0
        %8623 = vmatprep.subr.mxu0 0.0
        %8624 = vmatpush2.msra.mxu0 0.0
        %8625 = vmatprep.subr.mxu0 0.0
        %8626 = vmatpush2.msra.mxu0 0.0
        %8627 = vmatprep.subr.mxu0 0.0
        %8628 = vmatpush2.msra.mxu0 0.0
        %8629 = vmatprep.subr.mxu0 0.0
        %8630 = vmatpush2.msra.mxu0 0.0
        %8631 = vmatprep.subr.mxu0 0.0
        %8632 = vmatpush2.msra.mxu0 0.0
        %8633 = vmatprep.subr.mxu0 0.0
        %8634 = vmatpush2.msra.mxu0 0.0
        %8635 = vmatprep.subr.mxu0 0.0
        %8636 = vmatpush2.msra.mxu0 0.0
        %8637 = vmatprep.mubr.f32.mxu0 0.0
        %8638 = vmatmul.mubr.f32.gmra.mxu0 %v8571
        %v8639 = vpop.f32.mrf.mxu0
        %v8640 = vadd.f32 0.0, %v8639
        %v8641 = vpop.f32.mrf.mxu0
        %8642 = vdwg.mxu0
        %8643 = vrot.lane.b32.xlu0 %v5709, 32
        %v8644 = vpop.permute.xlu0 %8643
        %v8647 = vsel %vm6494, %v8110, 0
        %8649 = vmatprep.subr.mxu0 0.0
        %8650 = vmatpush1.msra.mxu0 0.0
        %8651 = vmatprep.subr.mxu0 0.0
        %8652 = vmatpush1.msra.mxu0 0.0
        %8653 = vmatprep.subr.mxu0 0.0
        %8654 = vmatpush1.msra.mxu0 0.0
        %8655 = vmatprep.subr.mxu0 0.0
        %8656 = vmatpush1.msra.mxu0 0.0
        %8657 = vmatprep.subr.mxu0 0.0
        %8658 = vmatpush1.msra.mxu0 0.0
        %8659 = vmatprep.subr.mxu0 0.0
        %8660 = vmatpush1.msra.mxu0 0.0
        %8661 = vmatprep.subr.mxu0 0.0
        %8662 = vmatpush1.msra.mxu0 0.0
        %8663 = vmatprep.subr.mxu0 0.0
        %8664 = vmatpush1.msra.mxu0 0.0
        %8665 = vmatprep.subr.mxu0 0.0
        %8666 = vmatpush1.msra.mxu0 0.0
        %8667 = vmatprep.subr.mxu0 0.0
        %8668 = vmatpush1.msra.mxu0 0.0
        %8669 = vmatprep.subr.mxu0 0.0
        %8670 = vmatpush1.msra.mxu0 0.0
        %8671 = vmatprep.subr.mxu0 0.0
        %8672 = vmatpush1.msra.mxu0 0.0
        %8673 = vmatprep.subr.mxu0 0.0
        %8674 = vmatpush1.msra.mxu0 0.0
        %8675 = vmatprep.subr.mxu0 0.0
        %8676 = vmatpush1.msra.mxu0 0.0
        %8677 = vmatprep.subr.mxu0 0.0
        %8678 = vmatpush1.msra.mxu0 0.0
        %8679 = vmatprep.subr.mxu0 0.0
        %8680 = vmatpush1.msra.mxu0 %v8644
        %8681 = vmatprep.subr.mxu0 0.0
        %8682 = vmatpush2.msra.mxu0 0.0
        %8683 = vmatprep.subr.mxu0 0.0
        %8684 = vmatpush2.msra.mxu0 0.0
        %8685 = vmatprep.subr.mxu0 0.0
        %8686 = vmatpush2.msra.mxu0 0.0
        %8687 = vmatprep.subr.mxu0 0.0
        %8688 = vmatpush2.msra.mxu0 0.0
        %8689 = vmatprep.subr.mxu0 0.0
        %8690 = vmatpush2.msra.mxu0 0.0
        %8691 = vmatprep.subr.mxu0 0.0
        %8692 = vmatpush2.msra.mxu0 0.0
        %8693 = vmatprep.subr.mxu0 0.0
        %8694 = vmatpush2.msra.mxu0 0.0
        %8695 = vmatprep.subr.mxu0 0.0
        %8696 = vmatpush2.msra.mxu0 0.0
        %8697 = vmatprep.subr.mxu0 0.0
        %8698 = vmatpush2.msra.mxu0 0.0
        %8699 = vmatprep.subr.mxu0 0.0
        %8700 = vmatpush2.msra.mxu0 0.0
        %8701 = vmatprep.subr.mxu0 0.0
        %8702 = vmatpush2.msra.mxu0 0.0
        %8703 = vmatprep.subr.mxu0 0.0
        %8704 = vmatpush2.msra.mxu0 0.0
        %8705 = vmatprep.subr.mxu0 0.0
        %8706 = vmatpush2.msra.mxu0 0.0
        %8707 = vmatprep.subr.mxu0 0.0
        %8708 = vmatpush2.msra.mxu0 0.0
        %8709 = vmatprep.subr.mxu0 0.0
        %8710 = vmatpush2.msra.mxu0 0.0
        %8711 = vmatprep.subr.mxu0 0.0
        %8712 = vmatpush2.msra.mxu0 0.0
        %8713 = vmatprep.mubr.f32.mxu0 0.0
        %8714 = vmatmul.mubr.f32.gmra.mxu0 %v8647
        %v8715 = vpop.f32.mrf.mxu0
        %v8716 = vadd.f32 0.0, %v8715
        %v8717 = vpop.f32.mrf.mxu0
        %8718 = vdwg.mxu0
        %v8719 = vmul.f32 %v8103, %v5287
        %v8720 = vmul.f32 %v8104, %v5319
        %v8721 = vmul.f32 %v8105, %v5351
        %v8722 = vmul.f32 %v8106, %v5383
        %v8723 = vmul.f32 %v8107, %v5415
        %v8724 = vmul.f32 %v8108, %v5447
        %v8725 = vmul.f32 %v8109, %v5479
        %v8726 = vmul.f32 %v8110, %v5511
        %v8727 = vsel %vm6494, %v8719, 0.0
        %8728 = vadd.xlane.f32.xlu0 %v8727
        %v8729 = vpop.xlane.xlu0 %8728
        %v8730 = vsel %vm6494, %v8720, 0.0
        %8731 = vadd.xlane.f32.xlu0 %v8730
        %v8732 = vpop.xlane.xlu0 %8731
        %v8733 = vsel %vm6494, %v8721, 0.0
        %8734 = vadd.xlane.f32.xlu0 %v8733
        %v8735 = vpop.xlane.xlu0 %8734
        %v8736 = vsel %vm6494, %v8722, 0.0
        %8737 = vadd.xlane.f32.xlu0 %v8736
        %v8738 = vpop.xlane.xlu0 %8737
        %v8739 = vsel %vm6494, %v8723, 0.0
        %8740 = vadd.xlane.f32.xlu0 %v8739
        %v8741 = vpop.xlane.xlu0 %8740
        %v8742 = vsel %vm6494, %v8724, 0.0
        %8743 = vadd.xlane.f32.xlu0 %v8742
        %v8744 = vpop.xlane.xlu0 %8743
        %v8745 = vsel %vm6494, %v8725, 0.0
        %8746 = vadd.xlane.f32.xlu0 %v8745
        %v8747 = vpop.xlane.xlu0 %8746
        %v8748 = vsel %vm6494, %v8726, 0.0
        %8749 = vadd.xlane.f32.xlu0 %v8748
        %v8750 = vpop.xlane.xlu0 %8749
        %v8751 = vadd.f32 %v6737, %v8184
        %v8752 = vadd.f32 %v6814, %v8260
        %v8753 = vadd.f32 %v6891, %v8336
        %v8754 = vadd.f32 %v6968, %v8412
        %v8755 = vadd.f32 %v7045, %v8488
        %v8756 = vadd.f32 %v7122, %v8564
        %v8757 = vadd.f32 %v7199, %v8640
        %v8758 = vadd.f32 %v7276, %v8716
        %v8759 = vmul.f32 %v8729, %v7282
        %v8760 = vmul.f32 %v8732, %v7282
        %v8761 = vmul.f32 %v8735, %v7282
        %v8762 = vmul.f32 %v8738, %v7282
        %v8763 = vmul.f32 %v8741, %v7282
        %v8764 = vmul.f32 %v8744, %v7282
        %v8765 = vmul.f32 %v8747, %v7282
        %v8766 = vmul.f32 %v8750, %v7282
        %v8767 = vadd.f32 %v8751, %v8759
        %v8768 = vadd.f32 %v8752, %v8760
        %v8769 = vadd.f32 %v8753, %v8761
        %v8770 = vadd.f32 %v8754, %v8762
        %v8771 = vadd.f32 %v8755, %v8763
        %v8772 = vadd.f32 %v8756, %v8764
        %v8773 = vadd.f32 %v8757, %v8765
        %v8774 = vadd.f32 %v8758, %v8766
        %v8775 = vlaneseq
        %v8776 = vshrl.u32 %v8775, 7
        %v8777 = vsub.s32 2, %v8776
        %v8778 = vrot.slane %v5816, %v8777
        %8780 = vrot.lane.b32.xlu0 %v8778, 64
        %v8781 = vpop.permute.xlu0 %8780
        %v8783 = vmul.f32 %v5665, %v8781
        %v8784 = vmul.f32 %v5671, %v8781
        %v8785 = vmul.f32 %v5677, %v8781
        %v8786 = vmul.f32 %v5683, %v8781
        %v8787 = vmul.f32 %v5689, %v8781
        %v8788 = vmul.f32 %v5695, %v8781
        %v8789 = vmul.f32 %v5701, %v8781
        %v8790 = vmul.f32 %v5707, %v8781
        %8799 = vrot.lane.b32.xlu0 %v8783, 64
        %v8800 = vpop.permute.xlu0 %8799
        %8801 = vrot.lane.b32.xlu0 %v8784, 64
        %v8802 = vpop.permute.xlu0 %8801
        %8803 = vrot.lane.b32.xlu0 %v8785, 64
        %v8804 = vpop.permute.xlu0 %8803
        %8805 = vrot.lane.b32.xlu0 %v8786, 64
        %v8806 = vpop.permute.xlu0 %8805
        %8807 = vrot.lane.b32.xlu0 %v8787, 64
        %v8808 = vpop.permute.xlu0 %8807
        %8809 = vrot.lane.b32.xlu0 %v8788, 64
        %v8810 = vpop.permute.xlu0 %8809
        %8811 = vrot.lane.b32.xlu0 %v8789, 64
        %v8812 = vpop.permute.xlu0 %8811
        %8813 = vrot.lane.b32.xlu0 %v8790, 64
        %v8814 = vpop.permute.xlu0 %8813
        %v8823 = vsel %vm5829, %v8800, 0.0
        %8824 = vadd.xlane.f32.xlu0 %v8823
        %v8825 = vpop.xlane.xlu0 %8824
        %v8826 = vsel %vm5829, %v8802, 0.0
        %8827 = vadd.xlane.f32.xlu0 %v8826
        %v8828 = vpop.xlane.xlu0 %8827
        %v8829 = vsel %vm5829, %v8804, 0.0
        %8830 = vadd.xlane.f32.xlu0 %v8829
        %v8831 = vpop.xlane.xlu0 %8830
        %v8832 = vsel %vm5829, %v8806, 0.0
        %8833 = vadd.xlane.f32.xlu0 %v8832
        %v8834 = vpop.xlane.xlu0 %8833
        %v8835 = vsel %vm5829, %v8808, 0.0
        %8836 = vadd.xlane.f32.xlu0 %v8835
        %v8837 = vpop.xlane.xlu0 %8836
        %v8838 = vsel %vm5829, %v8810, 0.0
        %8839 = vadd.xlane.f32.xlu0 %v8838
        %v8840 = vpop.xlane.xlu0 %8839
        %v8841 = vsel %vm5829, %v8812, 0.0
        %8842 = vadd.xlane.f32.xlu0 %v8841
        %v8843 = vpop.xlane.xlu0 %8842
        %v8844 = vsel %vm5829, %v8814, 0.0
        %8845 = vadd.xlane.f32.xlu0 %v8844
        %v8846 = vpop.xlane.xlu0 %8845
        %v8847 = vmul.f32 %v5287, %v8825
        %v8848 = vmul.f32 %v5319, %v8828
        %v8849 = vmul.f32 %v5351, %v8831
        %v8850 = vmul.f32 %v5383, %v8834
        %v8851 = vmul.f32 %v5415, %v8837
        %v8852 = vmul.f32 %v5447, %v8840
        %v8853 = vmul.f32 %v5479, %v8843
        %v8854 = vmul.f32 %v5511, %v8846
        %8855 = vrot.lane.b32.xlu0 %v5665, 64
        %v8856 = vpop.permute.xlu0 %8855
        %8857 = vrot.lane.b32.xlu0 %v5667, 96
        %v8858 = vpop.permute.xlu0 %8857
        %v8859 = vsel %vm5829, %v8856, 0
        %v8861 = vsel %vm5829, %v8858, 0
        %8863 = vmatprep.subr.mxu0 0.0
        %8864 = vmatpush1.xpose.msra.mxu0 0.0
        %8865 = vmatprep.subr.mxu0 0.0
        %8866 = vmatpush1.xpose.msra.mxu0 0.0
        %8867 = vmatprep.subr.mxu0 0.0
        %8868 = vmatpush1.xpose.msra.mxu0 0.0
        %8869 = vmatprep.subr.mxu0 0.0
        %8870 = vmatpush1.xpose.msra.mxu0 0.0
        %8871 = vmatprep.subr.mxu0 0.0
        %8872 = vmatpush1.xpose.msra.mxu0 0.0
        %8873 = vmatprep.subr.mxu0 0.0
        %8874 = vmatpush1.xpose.msra.mxu0 0.0
        %8875 = vmatprep.subr.mxu0 0.0
        %8876 = vmatpush1.xpose.msra.mxu0 0.0
        %8877 = vmatprep.subr.mxu0 0.0
        %8878 = vmatpush1.xpose.msra.mxu0 0.0
        %8879 = vmatprep.subr.mxu0 0.0
        %8880 = vmatpush1.xpose.msra.mxu0 0.0
        %8881 = vmatprep.subr.mxu0 0.0
        %8882 = vmatpush1.xpose.msra.mxu0 0.0
        %8883 = vmatprep.subr.mxu0 0.0
        %8884 = vmatpush1.xpose.msra.mxu0 0.0
        %8885 = vmatprep.subr.mxu0 0.0
        %8886 = vmatpush1.xpose.msra.mxu0 0.0
        %8887 = vmatprep.subr.mxu0 0.0
        %8888 = vmatpush1.xpose.msra.mxu0 0.0
        %8889 = vmatprep.subr.mxu0 0.0
        %8890 = vmatpush1.xpose.msra.mxu0 0.0
        %8891 = vmatprep.subr.mxu0 0.0
        %8892 = vmatpush1.xpose.msra.mxu0 0.0
        %8893 = vmatprep.subr.mxu0 0.0
        %8894 = vmatpush1.xpose.msra.mxu0 %v8861
        %8895 = vmatprep.subr.mxu0 0.0
        %8896 = vmatpush2.xpose.msra.mxu0 0.0
        %8897 = vmatprep.subr.mxu0 0.0
        %8898 = vmatpush2.xpose.msra.mxu0 0.0
        %8899 = vmatprep.subr.mxu0 0.0
        %8900 = vmatpush2.xpose.msra.mxu0 0.0
        %8901 = vmatprep.subr.mxu0 0.0
        %8902 = vmatpush2.xpose.msra.mxu0 0.0
        %8903 = vmatprep.subr.mxu0 0.0
        %8904 = vmatpush2.xpose.msra.mxu0 0.0
        %8905 = vmatprep.subr.mxu0 0.0
        %8906 = vmatpush2.xpose.msra.mxu0 0.0
        %8907 = vmatprep.subr.mxu0 0.0
        %8908 = vmatpush2.xpose.msra.mxu0 0.0
        %8909 = vmatprep.subr.mxu0 0.0
        %8910 = vmatpush2.xpose.msra.mxu0 0.0
        %8911 = vmatprep.subr.mxu0 0.0
        %8912 = vmatpush2.xpose.msra.mxu0 0.0
        %8913 = vmatprep.subr.mxu0 0.0
        %8914 = vmatpush2.xpose.msra.mxu0 0.0
        %8915 = vmatprep.subr.mxu0 0.0
        %8916 = vmatpush2.xpose.msra.mxu0 0.0
        %8917 = vmatprep.subr.mxu0 0.0
        %8918 = vmatpush2.xpose.msra.mxu0 0.0
        %8919 = vmatprep.subr.mxu0 0.0
        %8920 = vmatpush2.xpose.msra.mxu0 0.0
        %8921 = vmatprep.subr.mxu0 0.0
        %8922 = vmatpush2.xpose.msra.mxu0 0.0
        %8923 = vmatprep.subr.mxu0 0.0
        %8924 = vmatpush2.xpose.msra.mxu0 0.0
        %8925 = vmatprep.subr.mxu0 0.0
        %8926 = vmatpush2.xpose.msra.mxu0 0.0
        %8927 = vmatprep.mubr.f32.mxu0 0.0
        %8928 = vmatmul.mubr.f32.gmra.mxu0 %v8859
        %v8929 = vpop.f32.mrf.mxu0
        %v8930 = vadd.f32 %v8847, %v8929
        %v8931 = vpop.f32.mrf.mxu0
        %8932 = vdwg.mxu0
        %8933 = vrot.lane.b32.xlu0 %v5671, 64
        %v8934 = vpop.permute.xlu0 %8933
        %8935 = vrot.lane.b32.xlu0 %v5673, 96
        %v8936 = vpop.permute.xlu0 %8935
        %v8937 = vsel %vm5829, %v8934, 0
        %v8939 = vsel %vm5829, %v8936, 0
        %8941 = vmatprep.subr.mxu0 0.0
        %8942 = vmatpush1.xpose.msra.mxu0 0.0
        %8943 = vmatprep.subr.mxu0 0.0
        %8944 = vmatpush1.xpose.msra.mxu0 0.0
        %8945 = vmatprep.subr.mxu0 0.0
        %8946 = vmatpush1.xpose.msra.mxu0 0.0
        %8947 = vmatprep.subr.mxu0 0.0
        %8948 = vmatpush1.xpose.msra.mxu0 0.0
        %8949 = vmatprep.subr.mxu0 0.0
        %8950 = vmatpush1.xpose.msra.mxu0 0.0
        %8951 = vmatprep.subr.mxu0 0.0
        %8952 = vmatpush1.xpose.msra.mxu0 0.0
        %8953 = vmatprep.subr.mxu0 0.0
        %8954 = vmatpush1.xpose.msra.mxu0 0.0
        %8955 = vmatprep.subr.mxu0 0.0
        %8956 = vmatpush1.xpose.msra.mxu0 0.0
        %8957 = vmatprep.subr.mxu0 0.0
        %8958 = vmatpush1.xpose.msra.mxu0 0.0
        %8959 = vmatprep.subr.mxu0 0.0
        %8960 = vmatpush1.xpose.msra.mxu0 0.0
        %8961 = vmatprep.subr.mxu0 0.0
        %8962 = vmatpush1.xpose.msra.mxu0 0.0
        %8963 = vmatprep.subr.mxu0 0.0
        %8964 = vmatpush1.xpose.msra.mxu0 0.0
        %8965 = vmatprep.subr.mxu0 0.0
        %8966 = vmatpush1.xpose.msra.mxu0 0.0
        %8967 = vmatprep.subr.mxu0 0.0
        %8968 = vmatpush1.xpose.msra.mxu0 0.0
        %8969 = vmatprep.subr.mxu0 0.0
        %8970 = vmatpush1.xpose.msra.mxu0 0.0
        %8971 = vmatprep.subr.mxu0 0.0
        %8972 = vmatpush1.xpose.msra.mxu0 %v8939
        %8973 = vmatprep.subr.mxu0 0.0
        %8974 = vmatpush2.xpose.msra.mxu0 0.0
        %8975 = vmatprep.subr.mxu0 0.0
        %8976 = vmatpush2.xpose.msra.mxu0 0.0
        %8977 = vmatprep.subr.mxu0 0.0
        %8978 = vmatpush2.xpose.msra.mxu0 0.0
        %8979 = vmatprep.subr.mxu0 0.0
        %8980 = vmatpush2.xpose.msra.mxu0 0.0
        %8981 = vmatprep.subr.mxu0 0.0
        %8982 = vmatpush2.xpose.msra.mxu0 0.0
        %8983 = vmatprep.subr.mxu0 0.0
        %8984 = vmatpush2.xpose.msra.mxu0 0.0
        %8985 = vmatprep.subr.mxu0 0.0
        %8986 = vmatpush2.xpose.msra.mxu0 0.0
        %8987 = vmatprep.subr.mxu0 0.0
        %8988 = vmatpush2.xpose.msra.mxu0 0.0
        %8989 = vmatprep.subr.mxu0 0.0
        %8990 = vmatpush2.xpose.msra.mxu0 0.0
        %8991 = vmatprep.subr.mxu0 0.0
        %8992 = vmatpush2.xpose.msra.mxu0 0.0
        %8993 = vmatprep.subr.mxu0 0.0
        %8994 = vmatpush2.xpose.msra.mxu0 0.0
        %8995 = vmatprep.subr.mxu0 0.0
        %8996 = vmatpush2.xpose.msra.mxu0 0.0
        %8997 = vmatprep.subr.mxu0 0.0
        %8998 = vmatpush2.xpose.msra.mxu0 0.0
        %8999 = vmatprep.subr.mxu0 0.0
        %9000 = vmatpush2.xpose.msra.mxu0 0.0
        %9001 = vmatprep.subr.mxu0 0.0
        %9002 = vmatpush2.xpose.msra.mxu0 0.0
        %9003 = vmatprep.subr.mxu0 0.0
        %9004 = vmatpush2.xpose.msra.mxu0 0.0
        %9005 = vmatprep.mubr.f32.mxu0 0.0
        %9006 = vmatmul.mubr.f32.gmra.mxu0 %v8937
        %v9007 = vpop.f32.mrf.mxu0
        %v9008 = vadd.f32 %v8848, %v9007
        %v9009 = vpop.f32.mrf.mxu0
        %9010 = vdwg.mxu0
        %9011 = vrot.lane.b32.xlu0 %v5677, 64
        %v9012 = vpop.permute.xlu0 %9011
        %9013 = vrot.lane.b32.xlu0 %v5679, 96
        %v9014 = vpop.permute.xlu0 %9013
        %v9015 = vsel %vm5829, %v9012, 0
        %v9017 = vsel %vm5829, %v9014, 0
        %9019 = vmatprep.subr.mxu0 0.0
        %9020 = vmatpush1.xpose.msra.mxu0 0.0
        %9021 = vmatprep.subr.mxu0 0.0
        %9022 = vmatpush1.xpose.msra.mxu0 0.0
        %9023 = vmatprep.subr.mxu0 0.0
        %9024 = vmatpush1.xpose.msra.mxu0 0.0
        %9025 = vmatprep.subr.mxu0 0.0
        %9026 = vmatpush1.xpose.msra.mxu0 0.0
        %9027 = vmatprep.subr.mxu0 0.0
        %9028 = vmatpush1.xpose.msra.mxu0 0.0
        %9029 = vmatprep.subr.mxu0 0.0
        %9030 = vmatpush1.xpose.msra.mxu0 0.0
        %9031 = vmatprep.subr.mxu0 0.0
        %9032 = vmatpush1.xpose.msra.mxu0 0.0
        %9033 = vmatprep.subr.mxu0 0.0
        %9034 = vmatpush1.xpose.msra.mxu0 0.0
        %9035 = vmatprep.subr.mxu0 0.0
        %9036 = vmatpush1.xpose.msra.mxu0 0.0
        %9037 = vmatprep.subr.mxu0 0.0
        %9038 = vmatpush1.xpose.msra.mxu0 0.0
        %9039 = vmatprep.subr.mxu0 0.0
        %9040 = vmatpush1.xpose.msra.mxu0 0.0
        %9041 = vmatprep.subr.mxu0 0.0
        %9042 = vmatpush1.xpose.msra.mxu0 0.0
        %9043 = vmatprep.subr.mxu0 0.0
        %9044 = vmatpush1.xpose.msra.mxu0 0.0
        %9045 = vmatprep.subr.mxu0 0.0
        %9046 = vmatpush1.xpose.msra.mxu0 0.0
        %9047 = vmatprep.subr.mxu0 0.0
        %9048 = vmatpush1.xpose.msra.mxu0 0.0
        %9049 = vmatprep.subr.mxu0 0.0
        %9050 = vmatpush1.xpose.msra.mxu0 %v9017
        %9051 = vmatprep.subr.mxu0 0.0
        %9052 = vmatpush2.xpose.msra.mxu0 0.0
        %9053 = vmatprep.subr.mxu0 0.0
        %9054 = vmatpush2.xpose.msra.mxu0 0.0
        %9055 = vmatprep.subr.mxu0 0.0
        %9056 = vmatpush2.xpose.msra.mxu0 0.0
        %9057 = vmatprep.subr.mxu0 0.0
        %9058 = vmatpush2.xpose.msra.mxu0 0.0
        %9059 = vmatprep.subr.mxu0 0.0
        %9060 = vmatpush2.xpose.msra.mxu0 0.0
        %9061 = vmatprep.subr.mxu0 0.0
        %9062 = vmatpush2.xpose.msra.mxu0 0.0
        %9063 = vmatprep.subr.mxu0 0.0
        %9064 = vmatpush2.xpose.msra.mxu0 0.0
        %9065 = vmatprep.subr.mxu0 0.0
        %9066 = vmatpush2.xpose.msra.mxu0 0.0
        %9067 = vmatprep.subr.mxu0 0.0
        %9068 = vmatpush2.xpose.msra.mxu0 0.0
        %9069 = vmatprep.subr.mxu0 0.0
        %9070 = vmatpush2.xpose.msra.mxu0 0.0
        %9071 = vmatprep.subr.mxu0 0.0
        %9072 = vmatpush2.xpose.msra.mxu0 0.0
        %9073 = vmatprep.subr.mxu0 0.0
        %9074 = vmatpush2.xpose.msra.mxu0 0.0
        %9075 = vmatprep.subr.mxu0 0.0
        %9076 = vmatpush2.xpose.msra.mxu0 0.0
        %9077 = vmatprep.subr.mxu0 0.0
        %9078 = vmatpush2.xpose.msra.mxu0 0.0
        %9079 = vmatprep.subr.mxu0 0.0
        %9080 = vmatpush2.xpose.msra.mxu0 0.0
        %9081 = vmatprep.subr.mxu0 0.0
        %9082 = vmatpush2.xpose.msra.mxu0 0.0
        %9083 = vmatprep.mubr.f32.mxu0 0.0
        %9084 = vmatmul.mubr.f32.gmra.mxu0 %v9015
        %v9085 = vpop.f32.mrf.mxu0
        %v9086 = vadd.f32 %v8849, %v9085
        %v9087 = vpop.f32.mrf.mxu0
        %9088 = vdwg.mxu0
        %9089 = vrot.lane.b32.xlu0 %v5683, 64
        %v9090 = vpop.permute.xlu0 %9089
        %9091 = vrot.lane.b32.xlu0 %v5685, 96
        %v9092 = vpop.permute.xlu0 %9091
        %v9093 = vsel %vm5829, %v9090, 0
        %v9095 = vsel %vm5829, %v9092, 0
        %9097 = vmatprep.subr.mxu0 0.0
        %9098 = vmatpush1.xpose.msra.mxu0 0.0
        %9099 = vmatprep.subr.mxu0 0.0
        %9100 = vmatpush1.xpose.msra.mxu0 0.0
        %9101 = vmatprep.subr.mxu0 0.0
        %9102 = vmatpush1.xpose.msra.mxu0 0.0
        %9103 = vmatprep.subr.mxu0 0.0
        %9104 = vmatpush1.xpose.msra.mxu0 0.0
        %9105 = vmatprep.subr.mxu0 0.0
        %9106 = vmatpush1.xpose.msra.mxu0 0.0
        %9107 = vmatprep.subr.mxu0 0.0
        %9108 = vmatpush1.xpose.msra.mxu0 0.0
        %9109 = vmatprep.subr.mxu0 0.0
        %9110 = vmatpush1.xpose.msra.mxu0 0.0
        %9111 = vmatprep.subr.mxu0 0.0
        %9112 = vmatpush1.xpose.msra.mxu0 0.0
        %9113 = vmatprep.subr.mxu0 0.0
        %9114 = vmatpush1.xpose.msra.mxu0 0.0
        %9115 = vmatprep.subr.mxu0 0.0
        %9116 = vmatpush1.xpose.msra.mxu0 0.0
        %9117 = vmatprep.subr.mxu0 0.0
        %9118 = vmatpush1.xpose.msra.mxu0 0.0
        %9119 = vmatprep.subr.mxu0 0.0
        %9120 = vmatpush1.xpose.msra.mxu0 0.0
        %9121 = vmatprep.subr.mxu0 0.0
        %9122 = vmatpush1.xpose.msra.mxu0 0.0
        %9123 = vmatprep.subr.mxu0 0.0
        %9124 = vmatpush1.xpose.msra.mxu0 0.0
        %9125 = vmatprep.subr.mxu0 0.0
        %9126 = vmatpush1.xpose.msra.mxu0 0.0
        %9127 = vmatprep.subr.mxu0 0.0
        %9128 = vmatpush1.xpose.msra.mxu0 %v9095
        %9129 = vmatprep.subr.mxu0 0.0
        %9130 = vmatpush2.xpose.msra.mxu0 0.0
        %9131 = vmatprep.subr.mxu0 0.0
        %9132 = vmatpush2.xpose.msra.mxu0 0.0
        %9133 = vmatprep.subr.mxu0 0.0
        %9134 = vmatpush2.xpose.msra.mxu0 0.0
        %9135 = vmatprep.subr.mxu0 0.0
        %9136 = vmatpush2.xpose.msra.mxu0 0.0
        %9137 = vmatprep.subr.mxu0 0.0
        %9138 = vmatpush2.xpose.msra.mxu0 0.0
        %9139 = vmatprep.subr.mxu0 0.0
        %9140 = vmatpush2.xpose.msra.mxu0 0.0
        %9141 = vmatprep.subr.mxu0 0.0
        %9142 = vmatpush2.xpose.msra.mxu0 0.0
        %9143 = vmatprep.subr.mxu0 0.0
        %9144 = vmatpush2.xpose.msra.mxu0 0.0
        %9145 = vmatprep.subr.mxu0 0.0
        %9146 = vmatpush2.xpose.msra.mxu0 0.0
        %9147 = vmatprep.subr.mxu0 0.0
        %9148 = vmatpush2.xpose.msra.mxu0 0.0
        %9149 = vmatprep.subr.mxu0 0.0
        %9150 = vmatpush2.xpose.msra.mxu0 0.0
        %9151 = vmatprep.subr.mxu0 0.0
        %9152 = vmatpush2.xpose.msra.mxu0 0.0
        %9153 = vmatprep.subr.mxu0 0.0
        %9154 = vmatpush2.xpose.msra.mxu0 0.0
        %9155 = vmatprep.subr.mxu0 0.0
        %9156 = vmatpush2.xpose.msra.mxu0 0.0
        %9157 = vmatprep.subr.mxu0 0.0
        %9158 = vmatpush2.xpose.msra.mxu0 0.0
        %9159 = vmatprep.subr.mxu0 0.0
        %9160 = vmatpush2.xpose.msra.mxu0 0.0
        %9161 = vmatprep.mubr.f32.mxu0 0.0
        %9162 = vmatmul.mubr.f32.gmra.mxu0 %v9093
        %v9163 = vpop.f32.mrf.mxu0
        %v9164 = vadd.f32 %v8850, %v9163
        %v9165 = vpop.f32.mrf.mxu0
        %9166 = vdwg.mxu0
        %9167 = vrot.lane.b32.xlu0 %v5689, 64
        %v9168 = vpop.permute.xlu0 %9167
        %9169 = vrot.lane.b32.xlu0 %v5691, 96
        %v9170 = vpop.permute.xlu0 %9169
        %v9171 = vsel %vm5829, %v9168, 0
        %v9173 = vsel %vm5829, %v9170, 0
        %9175 = vmatprep.subr.mxu0 0.0
        %9176 = vmatpush1.xpose.msra.mxu0 0.0
        %9177 = vmatprep.subr.mxu0 0.0
        %9178 = vmatpush1.xpose.msra.mxu0 0.0
        %9179 = vmatprep.subr.mxu0 0.0
        %9180 = vmatpush1.xpose.msra.mxu0 0.0
        %9181 = vmatprep.subr.mxu0 0.0
        %9182 = vmatpush1.xpose.msra.mxu0 0.0
        %9183 = vmatprep.subr.mxu0 0.0
        %9184 = vmatpush1.xpose.msra.mxu0 0.0
        %9185 = vmatprep.subr.mxu0 0.0
        %9186 = vmatpush1.xpose.msra.mxu0 0.0
        %9187 = vmatprep.subr.mxu0 0.0
        %9188 = vmatpush1.xpose.msra.mxu0 0.0
        %9189 = vmatprep.subr.mxu0 0.0
        %9190 = vmatpush1.xpose.msra.mxu0 0.0
        %9191 = vmatprep.subr.mxu0 0.0
        %9192 = vmatpush1.xpose.msra.mxu0 0.0
        %9193 = vmatprep.subr.mxu0 0.0
        %9194 = vmatpush1.xpose.msra.mxu0 0.0
        %9195 = vmatprep.subr.mxu0 0.0
        %9196 = vmatpush1.xpose.msra.mxu0 0.0
        %9197 = vmatprep.subr.mxu0 0.0
        %9198 = vmatpush1.xpose.msra.mxu0 0.0
        %9199 = vmatprep.subr.mxu0 0.0
        %9200 = vmatpush1.xpose.msra.mxu0 0.0
        %9201 = vmatprep.subr.mxu0 0.0
        %9202 = vmatpush1.xpose.msra.mxu0 0.0
        %9203 = vmatprep.subr.mxu0 0.0
        %9204 = vmatpush1.xpose.msra.mxu0 0.0
        %9205 = vmatprep.subr.mxu0 0.0
        %9206 = vmatpush1.xpose.msra.mxu0 %v9173
        %9207 = vmatprep.subr.mxu0 0.0
        %9208 = vmatpush2.xpose.msra.mxu0 0.0
        %9209 = vmatprep.subr.mxu0 0.0
        %9210 = vmatpush2.xpose.msra.mxu0 0.0
        %9211 = vmatprep.subr.mxu0 0.0
        %9212 = vmatpush2.xpose.msra.mxu0 0.0
        %9213 = vmatprep.subr.mxu0 0.0
        %9214 = vmatpush2.xpose.msra.mxu0 0.0
        %9215 = vmatprep.subr.mxu0 0.0
        %9216 = vmatpush2.xpose.msra.mxu0 0.0
        %9217 = vmatprep.subr.mxu0 0.0
        %9218 = vmatpush2.xpose.msra.mxu0 0.0
        %9219 = vmatprep.subr.mxu0 0.0
        %9220 = vmatpush2.xpose.msra.mxu0 0.0
        %9221 = vmatprep.subr.mxu0 0.0
        %9222 = vmatpush2.xpose.msra.mxu0 0.0
        %9223 = vmatprep.subr.mxu0 0.0
        %9224 = vmatpush2.xpose.msra.mxu0 0.0
        %9225 = vmatprep.subr.mxu0 0.0
        %9226 = vmatpush2.xpose.msra.mxu0 0.0
        %9227 = vmatprep.subr.mxu0 0.0
        %9228 = vmatpush2.xpose.msra.mxu0 0.0
        %9229 = vmatprep.subr.mxu0 0.0
        %9230 = vmatpush2.xpose.msra.mxu0 0.0
        %9231 = vmatprep.subr.mxu0 0.0
        %9232 = vmatpush2.xpose.msra.mxu0 0.0
        %9233 = vmatprep.subr.mxu0 0.0
        %9234 = vmatpush2.xpose.msra.mxu0 0.0
        %9235 = vmatprep.subr.mxu0 0.0
        %9236 = vmatpush2.xpose.msra.mxu0 0.0
        %9237 = vmatprep.subr.mxu0 0.0
        %9238 = vmatpush2.xpose.msra.mxu0 0.0
        %9239 = vmatprep.mubr.f32.mxu0 0.0
        %9240 = vmatmul.mubr.f32.gmra.mxu0 %v9171
        %v9241 = vpop.f32.mrf.mxu0
        %v9242 = vadd.f32 %v8851, %v9241
        %v9243 = vpop.f32.mrf.mxu0
        %9244 = vdwg.mxu0
        %9245 = vrot.lane.b32.xlu0 %v5695, 64
        %v9246 = vpop.permute.xlu0 %9245
        %9247 = vrot.lane.b32.xlu0 %v5697, 96
        %v9248 = vpop.permute.xlu0 %9247
        %v9249 = vsel %vm5829, %v9246, 0
        %v9251 = vsel %vm5829, %v9248, 0
        %9253 = vmatprep.subr.mxu0 0.0
        %9254 = vmatpush1.xpose.msra.mxu0 0.0
        %9255 = vmatprep.subr.mxu0 0.0
        %9256 = vmatpush1.xpose.msra.mxu0 0.0
        %9257 = vmatprep.subr.mxu0 0.0
        %9258 = vmatpush1.xpose.msra.mxu0 0.0
        %9259 = vmatprep.subr.mxu0 0.0
        %9260 = vmatpush1.xpose.msra.mxu0 0.0
        %9261 = vmatprep.subr.mxu0 0.0
        %9262 = vmatpush1.xpose.msra.mxu0 0.0
        %9263 = vmatprep.subr.mxu0 0.0
        %9264 = vmatpush1.xpose.msra.mxu0 0.0
        %9265 = vmatprep.subr.mxu0 0.0
        %9266 = vmatpush1.xpose.msra.mxu0 0.0
        %9267 = vmatprep.subr.mxu0 0.0
        %9268 = vmatpush1.xpose.msra.mxu0 0.0
        %9269 = vmatprep.subr.mxu0 0.0
        %9270 = vmatpush1.xpose.msra.mxu0 0.0
        %9271 = vmatprep.subr.mxu0 0.0
        %9272 = vmatpush1.xpose.msra.mxu0 0.0
        %9273 = vmatprep.subr.mxu0 0.0
        %9274 = vmatpush1.xpose.msra.mxu0 0.0
        %9275 = vmatprep.subr.mxu0 0.0
        %9276 = vmatpush1.xpose.msra.mxu0 0.0
        %9277 = vmatprep.subr.mxu0 0.0
        %9278 = vmatpush1.xpose.msra.mxu0 0.0
        %9279 = vmatprep.subr.mxu0 0.0
        %9280 = vmatpush1.xpose.msra.mxu0 0.0
        %9281 = vmatprep.subr.mxu0 0.0
        %9282 = vmatpush1.xpose.msra.mxu0 0.0
        %9283 = vmatprep.subr.mxu0 0.0
        %9284 = vmatpush1.xpose.msra.mxu0 %v9251
        %9285 = vmatprep.subr.mxu0 0.0
        %9286 = vmatpush2.xpose.msra.mxu0 0.0
        %9287 = vmatprep.subr.mxu0 0.0
        %9288 = vmatpush2.xpose.msra.mxu0 0.0
        %9289 = vmatprep.subr.mxu0 0.0
        %9290 = vmatpush2.xpose.msra.mxu0 0.0
        %9291 = vmatprep.subr.mxu0 0.0
        %9292 = vmatpush2.xpose.msra.mxu0 0.0
        %9293 = vmatprep.subr.mxu0 0.0
        %9294 = vmatpush2.xpose.msra.mxu0 0.0
        %9295 = vmatprep.subr.mxu0 0.0
        %9296 = vmatpush2.xpose.msra.mxu0 0.0
        %9297 = vmatprep.subr.mxu0 0.0
        %9298 = vmatpush2.xpose.msra.mxu0 0.0
        %9299 = vmatprep.subr.mxu0 0.0
        %9300 = vmatpush2.xpose.msra.mxu0 0.0
        %9301 = vmatprep.subr.mxu0 0.0
        %9302 = vmatpush2.xpose.msra.mxu0 0.0
        %9303 = vmatprep.subr.mxu0 0.0
        %9304 = vmatpush2.xpose.msra.mxu0 0.0
        %9305 = vmatprep.subr.mxu0 0.0
        %9306 = vmatpush2.xpose.msra.mxu0 0.0
        %9307 = vmatprep.subr.mxu0 0.0
        %9308 = vmatpush2.xpose.msra.mxu0 0.0
        %9309 = vmatprep.subr.mxu0 0.0
        %9310 = vmatpush2.xpose.msra.mxu0 0.0
        %9311 = vmatprep.subr.mxu0 0.0
        %9312 = vmatpush2.xpose.msra.mxu0 0.0
        %9313 = vmatprep.subr.mxu0 0.0
        %9314 = vmatpush2.xpose.msra.mxu0 0.0
        %9315 = vmatprep.subr.mxu0 0.0
        %9316 = vmatpush2.xpose.msra.mxu0 0.0
        %9317 = vmatprep.mubr.f32.mxu0 0.0
        %9318 = vmatmul.mubr.f32.gmra.mxu0 %v9249
        %v9319 = vpop.f32.mrf.mxu0
        %v9320 = vadd.f32 %v8852, %v9319
        %v9321 = vpop.f32.mrf.mxu0
        %9322 = vdwg.mxu0
        %9323 = vrot.lane.b32.xlu0 %v5701, 64
        %v9324 = vpop.permute.xlu0 %9323
        %9325 = vrot.lane.b32.xlu0 %v5703, 96
        %v9326 = vpop.permute.xlu0 %9325
        %v9327 = vsel %vm5829, %v9324, 0
        %v9329 = vsel %vm5829, %v9326, 0
        %9331 = vmatprep.subr.mxu0 0.0
        %9332 = vmatpush1.xpose.msra.mxu0 0.0
        %9333 = vmatprep.subr.mxu0 0.0
        %9334 = vmatpush1.xpose.msra.mxu0 0.0
        %9335 = vmatprep.subr.mxu0 0.0
        %9336 = vmatpush1.xpose.msra.mxu0 0.0
        %9337 = vmatprep.subr.mxu0 0.0
        %9338 = vmatpush1.xpose.msra.mxu0 0.0
        %9339 = vmatprep.subr.mxu0 0.0
        %9340 = vmatpush1.xpose.msra.mxu0 0.0
        %9341 = vmatprep.subr.mxu0 0.0
        %9342 = vmatpush1.xpose.msra.mxu0 0.0
        %9343 = vmatprep.subr.mxu0 0.0
        %9344 = vmatpush1.xpose.msra.mxu0 0.0
        %9345 = vmatprep.subr.mxu0 0.0
        %9346 = vmatpush1.xpose.msra.mxu0 0.0
        %9347 = vmatprep.subr.mxu0 0.0
        %9348 = vmatpush1.xpose.msra.mxu0 0.0
        %9349 = vmatprep.subr.mxu0 0.0
        %9350 = vmatpush1.xpose.msra.mxu0 0.0
        %9351 = vmatprep.subr.mxu0 0.0
        %9352 = vmatpush1.xpose.msra.mxu0 0.0
        %9353 = vmatprep.subr.mxu0 0.0
        %9354 = vmatpush1.xpose.msra.mxu0 0.0
        %9355 = vmatprep.subr.mxu0 0.0
        %9356 = vmatpush1.xpose.msra.mxu0 0.0
        %9357 = vmatprep.subr.mxu0 0.0
        %9358 = vmatpush1.xpose.msra.mxu0 0.0
        %9359 = vmatprep.subr.mxu0 0.0
        %9360 = vmatpush1.xpose.msra.mxu0 0.0
        %9361 = vmatprep.subr.mxu0 0.0
        %9362 = vmatpush1.xpose.msra.mxu0 %v9329
        %9363 = vmatprep.subr.mxu0 0.0
        %9364 = vmatpush2.xpose.msra.mxu0 0.0
        %9365 = vmatprep.subr.mxu0 0.0
        %9366 = vmatpush2.xpose.msra.mxu0 0.0
        %9367 = vmatprep.subr.mxu0 0.0
        %9368 = vmatpush2.xpose.msra.mxu0 0.0
        %9369 = vmatprep.subr.mxu0 0.0
        %9370 = vmatpush2.xpose.msra.mxu0 0.0
        %9371 = vmatprep.subr.mxu0 0.0
        %9372 = vmatpush2.xpose.msra.mxu0 0.0
        %9373 = vmatprep.subr.mxu0 0.0
        %9374 = vmatpush2.xpose.msra.mxu0 0.0
        %9375 = vmatprep.subr.mxu0 0.0
        %9376 = vmatpush2.xpose.msra.mxu0 0.0
        %9377 = vmatprep.subr.mxu0 0.0
        %9378 = vmatpush2.xpose.msra.mxu0 0.0
        %9379 = vmatprep.subr.mxu0 0.0
        %9380 = vmatpush2.xpose.msra.mxu0 0.0
        %9381 = vmatprep.subr.mxu0 0.0
        %9382 = vmatpush2.xpose.msra.mxu0 0.0
        %9383 = vmatprep.subr.mxu0 0.0
        %9384 = vmatpush2.xpose.msra.mxu0 0.0
        %9385 = vmatprep.subr.mxu0 0.0
        %9386 = vmatpush2.xpose.msra.mxu0 0.0
        %9387 = vmatprep.subr.mxu0 0.0
        %9388 = vmatpush2.xpose.msra.mxu0 0.0
        %9389 = vmatprep.subr.mxu0 0.0
        %9390 = vmatpush2.xpose.msra.mxu0 0.0
        %9391 = vmatprep.subr.mxu0 0.0
        %9392 = vmatpush2.xpose.msra.mxu0 0.0
        %9393 = vmatprep.subr.mxu0 0.0
        %9394 = vmatpush2.xpose.msra.mxu0 0.0
        %9395 = vmatprep.mubr.f32.mxu0 0.0
        %9396 = vmatmul.mubr.f32.gmra.mxu0 %v9327
        %v9397 = vpop.f32.mrf.mxu0
        %v9398 = vadd.f32 %v8853, %v9397
        %v9399 = vpop.f32.mrf.mxu0
        %9400 = vdwg.mxu0
        %9401 = vrot.lane.b32.xlu0 %v5707, 64
        %v9402 = vpop.permute.xlu0 %9401
        %9403 = vrot.lane.b32.xlu0 %v5709, 96
        %v9404 = vpop.permute.xlu0 %9403
        %v9405 = vsel %vm5829, %v9402, 0
        %v9407 = vsel %vm5829, %v9404, 0
        %9409 = vmatprep.subr.mxu0 0.0
        %9410 = vmatpush1.xpose.msra.mxu0 0.0
        %9411 = vmatprep.subr.mxu0 0.0
        %9412 = vmatpush1.xpose.msra.mxu0 0.0
        %9413 = vmatprep.subr.mxu0 0.0
        %9414 = vmatpush1.xpose.msra.mxu0 0.0
        %9415 = vmatprep.subr.mxu0 0.0
        %9416 = vmatpush1.xpose.msra.mxu0 0.0
        %9417 = vmatprep.subr.mxu0 0.0
        %9418 = vmatpush1.xpose.msra.mxu0 0.0
        %9419 = vmatprep.subr.mxu0 0.0
        %9420 = vmatpush1.xpose.msra.mxu0 0.0
        %9421 = vmatprep.subr.mxu0 0.0
        %9422 = vmatpush1.xpose.msra.mxu0 0.0
        %9423 = vmatprep.subr.mxu0 0.0
        %9424 = vmatpush1.xpose.msra.mxu0 0.0
        %9425 = vmatprep.subr.mxu0 0.0
        %9426 = vmatpush1.xpose.msra.mxu0 0.0
        %9427 = vmatprep.subr.mxu0 0.0
        %9428 = vmatpush1.xpose.msra.mxu0 0.0
        %9429 = vmatprep.subr.mxu0 0.0
        %9430 = vmatpush1.xpose.msra.mxu0 0.0
        %9431 = vmatprep.subr.mxu0 0.0
        %9432 = vmatpush1.xpose.msra.mxu0 0.0
        %9433 = vmatprep.subr.mxu0 0.0
        %9434 = vmatpush1.xpose.msra.mxu0 0.0
        %9435 = vmatprep.subr.mxu0 0.0
        %9436 = vmatpush1.xpose.msra.mxu0 0.0
        %9437 = vmatprep.subr.mxu0 0.0
        %9438 = vmatpush1.xpose.msra.mxu0 0.0
        %9439 = vmatprep.subr.mxu0 0.0
        %9440 = vmatpush1.xpose.msra.mxu0 %v9407
        %9441 = vmatprep.subr.mxu0 0.0
        %9442 = vmatpush2.xpose.msra.mxu0 0.0
        %9443 = vmatprep.subr.mxu0 0.0
        %9444 = vmatpush2.xpose.msra.mxu0 0.0
        %9445 = vmatprep.subr.mxu0 0.0
        %9446 = vmatpush2.xpose.msra.mxu0 0.0
        %9447 = vmatprep.subr.mxu0 0.0
        %9448 = vmatpush2.xpose.msra.mxu0 0.0
        %9449 = vmatprep.subr.mxu0 0.0
        %9450 = vmatpush2.xpose.msra.mxu0 0.0
        %9451 = vmatprep.subr.mxu0 0.0
        %9452 = vmatpush2.xpose.msra.mxu0 0.0
        %9453 = vmatprep.subr.mxu0 0.0
        %9454 = vmatpush2.xpose.msra.mxu0 0.0
        %9455 = vmatprep.subr.mxu0 0.0
        %9456 = vmatpush2.xpose.msra.mxu0 0.0
        %9457 = vmatprep.subr.mxu0 0.0
        %9458 = vmatpush2.xpose.msra.mxu0 0.0
        %9459 = vmatprep.subr.mxu0 0.0
        %9460 = vmatpush2.xpose.msra.mxu0 0.0
        %9461 = vmatprep.subr.mxu0 0.0
        %9462 = vmatpush2.xpose.msra.mxu0 0.0
        %9463 = vmatprep.subr.mxu0 0.0
        %9464 = vmatpush2.xpose.msra.mxu0 0.0
        %9465 = vmatprep.subr.mxu0 0.0
        %9466 = vmatpush2.xpose.msra.mxu0 0.0
        %9467 = vmatprep.subr.mxu0 0.0
        %9468 = vmatpush2.xpose.msra.mxu0 0.0
        %9469 = vmatprep.subr.mxu0 0.0
        %9470 = vmatpush2.xpose.msra.mxu0 0.0
        %9471 = vmatprep.subr.mxu0 0.0
        %9472 = vmatpush2.xpose.msra.mxu0 0.0
        %9473 = vmatprep.mubr.f32.mxu0 0.0
        %9474 = vmatmul.mubr.f32.gmra.mxu0 %v9405
        %v9475 = vpop.f32.mrf.mxu0
        %v9476 = vadd.f32 %v8854, %v9475
        %v9477 = vpop.f32.mrf.mxu0
        %9478 = vdwg.mxu0
        %v9479 = vmul.f32 %v8930, 0.17677669
        %v9480 = vmul.f32 %v9008, 0.17677669
        %v9481 = vmul.f32 %v9086, 0.17677669
        %v9482 = vmul.f32 %v9164, 0.17677669
        %v9483 = vmul.f32 %v9242, 0.17677669
        %v9484 = vmul.f32 %v9320, 0.17677669
        %v9485 = vmul.f32 %v9398, 0.17677669
        %v9486 = vmul.f32 %v9476, 0.17677669
        %v9487 = vsel %vm5527, %v9479, -1e+30
        %v9488 = vsel %vm5528, %v9480, -1e+30
        %v9489 = vsel %vm5529, %v9481, -1e+30
        %v9490 = vsel %vm5530, %v9482, -1e+30
        %v9491 = vsel %vm5531, %v9483, -1e+30
        %v9492 = vsel %vm5532, %v9484, -1e+30
        %v9493 = vsel %vm5533, %v9485, -1e+30
        %v9494 = vsel %vm5534, %v9486, -1e+30
        %v9495 = vsel %vm6494, %v9487, -inf
        %9496 = vmax.xlane.f32.xlu0 %v9495
        %v9497 = vpop.xlane.xlu0 %9496
        %v9498 = vsel %vm6494, %v9488, -inf
        %9499 = vmax.xlane.f32.xlu0 %v9498
        %v9500 = vpop.xlane.xlu0 %9499
        %v9501 = vsel %vm6494, %v9489, -inf
        %9502 = vmax.xlane.f32.xlu0 %v9501
        %v9503 = vpop.xlane.xlu0 %9502
        %v9504 = vsel %vm6494, %v9490, -inf
        %9505 = vmax.xlane.f32.xlu0 %v9504
        %v9506 = vpop.xlane.xlu0 %9505
        %v9507 = vsel %vm6494, %v9491, -inf
        %9508 = vmax.xlane.f32.xlu0 %v9507
        %v9509 = vpop.xlane.xlu0 %9508
        %v9510 = vsel %vm6494, %v9492, -inf
        %9511 = vmax.xlane.f32.xlu0 %v9510
        %v9512 = vpop.xlane.xlu0 %9511
        %v9513 = vsel %vm6494, %v9493, -inf
        %9514 = vmax.xlane.f32.xlu0 %v9513
        %v9515 = vpop.xlane.xlu0 %9514
        %v9516 = vsel %vm6494, %v9494, -inf
        %9517 = vmax.xlane.f32.xlu0 %v9516
        %v9518 = vpop.xlane.xlu0 %9517
        %v9519 = vsub.f32 %v9487, %v9497
        %v9520 = vsub.f32 %v9488, %v9500
        %v9521 = vsub.f32 %v9489, %v9503
        %v9522 = vsub.f32 %v9490, %v9506
        %v9523 = vsub.f32 %v9491, %v9509
        %v9524 = vsub.f32 %v9492, %v9512
        %v9525 = vsub.f32 %v9493, %v9515
        %v9526 = vsub.f32 %v9494, %v9518
        %v9527 = vmul.f32 %v9519, 1.442695
        %v9528 = vpow.pop %v9527
        %v9529 = vmul.f32 %v9520, 1.442695
        %v9530 = vpow.pop %v9529
        %v9531 = vmul.f32 %v9521, 1.442695
        %v9532 = vpow.pop %v9531
        %v9533 = vmul.f32 %v9522, 1.442695
        %v9534 = vpow.pop %v9533
        %v9535 = vmul.f32 %v9523, 1.442695
        %v9536 = vpow.pop %v9535
        %v9537 = vmul.f32 %v9524, 1.442695
        %v9538 = vpow.pop %v9537
        %v9539 = vmul.f32 %v9525, 1.442695
        %v9540 = vpow.pop %v9539
        %v9541 = vmul.f32 %v9526, 1.442695
        %v9542 = vpow.pop %v9541
        %v9543 = vmul.f32 %v9528, %v5543
        %v9544 = vmul.f32 %v9530, %v5544
        %v9545 = vmul.f32 %v9532, %v5545
        %v9546 = vmul.f32 %v9534, %v5546
        %v9547 = vmul.f32 %v9536, %v5547
        %v9548 = vmul.f32 %v9538, %v5548
        %v9549 = vmul.f32 %v9540, %v5549
        %v9550 = vmul.f32 %v9542, %v5550
        %v9551 = vsel %vm6494, %v9543, 0.0
        %9552 = vadd.xlane.f32.xlu0 %v9551
        %v9553 = vpop.xlane.xlu0 %9552
        %v9554 = vsel %vm6494, %v9544, 0.0
        %9555 = vadd.xlane.f32.xlu0 %v9554
        %v9556 = vpop.xlane.xlu0 %9555
        %v9557 = vsel %vm6494, %v9545, 0.0
        %9558 = vadd.xlane.f32.xlu0 %v9557
        %v9559 = vpop.xlane.xlu0 %9558
        %v9560 = vsel %vm6494, %v9546, 0.0
        %9561 = vadd.xlane.f32.xlu0 %v9560
        %v9562 = vpop.xlane.xlu0 %9561
        %v9563 = vsel %vm6494, %v9547, 0.0
        %9564 = vadd.xlane.f32.xlu0 %v9563
        %v9565 = vpop.xlane.xlu0 %9564
        %v9566 = vsel %vm6494, %v9548, 0.0
        %9567 = vadd.xlane.f32.xlu0 %v9566
        %v9568 = vpop.xlane.xlu0 %9567
        %v9569 = vsel %vm6494, %v9549, 0.0
        %9570 = vadd.xlane.f32.xlu0 %v9569
        %v9571 = vpop.xlane.xlu0 %9570
        %v9572 = vsel %vm6494, %v9550, 0.0
        %9573 = vadd.xlane.f32.xlu0 %v9572
        %v9574 = vpop.xlane.xlu0 %9573
        %v9575 = vmax.f32 %v9553, 1e-16
        %v9576 = vmax.f32 %v9556, 1e-16
        %v9577 = vmax.f32 %v9559, 1e-16
        %v9578 = vmax.f32 %v9562, 1e-16
        %v9579 = vmax.f32 %v9565, 1e-16
        %v9580 = vmax.f32 %v9568, 1e-16
        %v9581 = vmax.f32 %v9571, 1e-16
        %v9582 = vmax.f32 %v9574, 1e-16
        %v9583 = vrcp.pop %v9575
        %v9584 = vrcp.pop %v9576
        %v9585 = vrcp.pop %v9577
        %v9586 = vrcp.pop %v9578
        %v9587 = vrcp.pop %v9579
        %v9588 = vrcp.pop %v9580
        %v9589 = vrcp.pop %v9581
        %v9590 = vrcp.pop %v9582
        %v9591 = vmul.f32 %v9575, %v9583
        %v9592 = vmul.f32 %v9576, %v9584
        %v9593 = vmul.f32 %v9577, %v9585
        %v9594 = vmul.f32 %v9578, %v9586
        %v9595 = vmul.f32 %v9579, %v9587
        %v9596 = vmul.f32 %v9580, %v9588
        %v9597 = vmul.f32 %v9581, %v9589
        %v9598 = vmul.f32 %v9582, %v9590
        %v9599 = vsub.f32 2.0, %v9591
        %v9600 = vsub.f32 2.0, %v9592
        %v9601 = vsub.f32 2.0, %v9593
        %v9602 = vsub.f32 2.0, %v9594
        %v9603 = vsub.f32 2.0, %v9595
        %v9604 = vsub.f32 2.0, %v9596
        %v9605 = vsub.f32 2.0, %v9597
        %v9606 = vsub.f32 2.0, %v9598
        %v9607 = vmul.f32 %v9583, %v9599
        %v9608 = vmul.f32 %v9584, %v9600
        %v9609 = vmul.f32 %v9585, %v9601
        %v9610 = vmul.f32 %v9586, %v9602
        %v9611 = vmul.f32 %v9587, %v9603
        %v9612 = vmul.f32 %v9588, %v9604
        %v9613 = vmul.f32 %v9589, %v9605
        %v9614 = vmul.f32 %v9590, %v9606
        %v9615 = vmul.f32 %v9543, %v9607
        %v9616 = vmul.f32 %v9544, %v9608
        %v9617 = vmul.f32 %v9545, %v9609
        %v9618 = vmul.f32 %v9546, %v9610
        %v9619 = vmul.f32 %v9547, %v9611
        %v9620 = vmul.f32 %v9548, %v9612
        %v9621 = vmul.f32 %v9549, %v9613
        %v9622 = vmul.f32 %v9550, %v9614
        %v9624 = vsel %vm6494, %v9615, 0
        %9626 = vmatprep.subr.mxu0 0.0
        %9627 = vmatpush1.msra.mxu0 0.0
        %9628 = vmatprep.subr.mxu0 0.0
        %9629 = vmatpush1.msra.mxu0 0.0
        %9630 = vmatprep.subr.mxu0 0.0
        %9631 = vmatpush1.msra.mxu0 0.0
        %9632 = vmatprep.subr.mxu0 0.0
        %9633 = vmatpush1.msra.mxu0 0.0
        %9634 = vmatprep.subr.mxu0 0.0
        %9635 = vmatpush1.msra.mxu0 0.0
        %9636 = vmatprep.subr.mxu0 0.0
        %9637 = vmatpush1.msra.mxu0 0.0
        %9638 = vmatprep.subr.mxu0 0.0
        %9639 = vmatpush1.msra.mxu0 0.0
        %9640 = vmatprep.subr.mxu0 0.0
        %9641 = vmatpush1.msra.mxu0 0.0
        %9642 = vmatprep.subr.mxu0 0.0
        %9643 = vmatpush1.msra.mxu0 0.0
        %9644 = vmatprep.subr.mxu0 0.0
        %9645 = vmatpush1.msra.mxu0 0.0
        %9646 = vmatprep.subr.mxu0 0.0
        %9647 = vmatpush1.msra.mxu0 0.0
        %9648 = vmatprep.subr.mxu0 0.0
        %9649 = vmatpush1.msra.mxu0 0.0
        %9650 = vmatprep.subr.mxu0 0.0
        %9651 = vmatpush1.msra.mxu0 0.0
        %9652 = vmatprep.subr.mxu0 0.0
        %9653 = vmatpush1.msra.mxu0 0.0
        %9654 = vmatprep.subr.mxu0 0.0
        %9655 = vmatpush1.msra.mxu0 0.0
        %9656 = vmatprep.subr.mxu0 0.0
        %9657 = vmatpush1.msra.mxu0 %v5778
        %9658 = vmatprep.subr.mxu0 0.0
        %9659 = vmatpush2.msra.mxu0 0.0
        %9660 = vmatprep.subr.mxu0 0.0
        %9661 = vmatpush2.msra.mxu0 0.0
        %9662 = vmatprep.subr.mxu0 0.0
        %9663 = vmatpush2.msra.mxu0 0.0
        %9664 = vmatprep.subr.mxu0 0.0
        %9665 = vmatpush2.msra.mxu0 0.0
        %9666 = vmatprep.subr.mxu0 0.0
        %9667 = vmatpush2.msra.mxu0 0.0
        %9668 = vmatprep.subr.mxu0 0.0
        %9669 = vmatpush2.msra.mxu0 0.0
        %9670 = vmatprep.subr.mxu0 0.0
        %9671 = vmatpush2.msra.mxu0 0.0
        %9672 = vmatprep.subr.mxu0 0.0
        %9673 = vmatpush2.msra.mxu0 0.0
        %9674 = vmatprep.subr.mxu0 0.0
        %9675 = vmatpush2.msra.mxu0 0.0
        %9676 = vmatprep.subr.mxu0 0.0
        %9677 = vmatpush2.msra.mxu0 0.0
        %9678 = vmatprep.subr.mxu0 0.0
        %9679 = vmatpush2.msra.mxu0 0.0
        %9680 = vmatprep.subr.mxu0 0.0
        %9681 = vmatpush2.msra.mxu0 0.0
        %9682 = vmatprep.subr.mxu0 0.0
        %9683 = vmatpush2.msra.mxu0 0.0
        %9684 = vmatprep.subr.mxu0 0.0
        %9685 = vmatpush2.msra.mxu0 0.0
        %9686 = vmatprep.subr.mxu0 0.0
        %9687 = vmatpush2.msra.mxu0 0.0
        %9688 = vmatprep.subr.mxu0 0.0
        %9689 = vmatpush2.msra.mxu0 0.0
        %9690 = vmatprep.mubr.f32.mxu0 0.0
        %9691 = vmatmul.mubr.f32.gmra.mxu0 %v9624
        %v9692 = vpop.f32.mrf.mxu0
        %v9693 = vadd.f32 0.0, %v9692
        %v9694 = vpop.f32.mrf.mxu0
        %9695 = vdwg.mxu0
        %v9697 = vsel %vm6494, %v9616, 0
        %9699 = vmatprep.subr.mxu0 0.0
        %9700 = vmatpush1.msra.mxu0 0.0
        %9701 = vmatprep.subr.mxu0 0.0
        %9702 = vmatpush1.msra.mxu0 0.0
        %9703 = vmatprep.subr.mxu0 0.0
        %9704 = vmatpush1.msra.mxu0 0.0
        %9705 = vmatprep.subr.mxu0 0.0
        %9706 = vmatpush1.msra.mxu0 0.0
        %9707 = vmatprep.subr.mxu0 0.0
        %9708 = vmatpush1.msra.mxu0 0.0
        %9709 = vmatprep.subr.mxu0 0.0
        %9710 = vmatpush1.msra.mxu0 0.0
        %9711 = vmatprep.subr.mxu0 0.0
        %9712 = vmatpush1.msra.mxu0 0.0
        %9713 = vmatprep.subr.mxu0 0.0
        %9714 = vmatpush1.msra.mxu0 0.0
        %9715 = vmatprep.subr.mxu0 0.0
        %9716 = vmatpush1.msra.mxu0 0.0
        %9717 = vmatprep.subr.mxu0 0.0
        %9718 = vmatpush1.msra.mxu0 0.0
        %9719 = vmatprep.subr.mxu0 0.0
        %9720 = vmatpush1.msra.mxu0 0.0
        %9721 = vmatprep.subr.mxu0 0.0
        %9722 = vmatpush1.msra.mxu0 0.0
        %9723 = vmatprep.subr.mxu0 0.0
        %9724 = vmatpush1.msra.mxu0 0.0
        %9725 = vmatprep.subr.mxu0 0.0
        %9726 = vmatpush1.msra.mxu0 0.0
        %9727 = vmatprep.subr.mxu0 0.0
        %9728 = vmatpush1.msra.mxu0 0.0
        %9729 = vmatprep.subr.mxu0 0.0
        %9730 = vmatpush1.msra.mxu0 %v5783
        %9731 = vmatprep.subr.mxu0 0.0
        %9732 = vmatpush2.msra.mxu0 0.0
        %9733 = vmatprep.subr.mxu0 0.0
        %9734 = vmatpush2.msra.mxu0 0.0
        %9735 = vmatprep.subr.mxu0 0.0
        %9736 = vmatpush2.msra.mxu0 0.0
        %9737 = vmatprep.subr.mxu0 0.0
        %9738 = vmatpush2.msra.mxu0 0.0
        %9739 = vmatprep.subr.mxu0 0.0
        %9740 = vmatpush2.msra.mxu0 0.0
        %9741 = vmatprep.subr.mxu0 0.0
        %9742 = vmatpush2.msra.mxu0 0.0
        %9743 = vmatprep.subr.mxu0 0.0
        %9744 = vmatpush2.msra.mxu0 0.0
        %9745 = vmatprep.subr.mxu0 0.0
        %9746 = vmatpush2.msra.mxu0 0.0
        %9747 = vmatprep.subr.mxu0 0.0
        %9748 = vmatpush2.msra.mxu0 0.0
        %9749 = vmatprep.subr.mxu0 0.0
        %9750 = vmatpush2.msra.mxu0 0.0
        %9751 = vmatprep.subr.mxu0 0.0
        %9752 = vmatpush2.msra.mxu0 0.0
        %9753 = vmatprep.subr.mxu0 0.0
        %9754 = vmatpush2.msra.mxu0 0.0
        %9755 = vmatprep.subr.mxu0 0.0
        %9756 = vmatpush2.msra.mxu0 0.0
        %9757 = vmatprep.subr.mxu0 0.0
        %9758 = vmatpush2.msra.mxu0 0.0
        %9759 = vmatprep.subr.mxu0 0.0
        %9760 = vmatpush2.msra.mxu0 0.0
        %9761 = vmatprep.subr.mxu0 0.0
        %9762 = vmatpush2.msra.mxu0 0.0
        %9763 = vmatprep.mubr.f32.mxu0 0.0
        %9764 = vmatmul.mubr.f32.gmra.mxu0 %v9697
        %v9765 = vpop.f32.mrf.mxu0
        %v9766 = vadd.f32 0.0, %v9765
        %v9767 = vpop.f32.mrf.mxu0
        %9768 = vdwg.mxu0
        %v9770 = vsel %vm6494, %v9617, 0
        %9772 = vmatprep.subr.mxu0 0.0
        %9773 = vmatpush1.msra.mxu0 0.0
        %9774 = vmatprep.subr.mxu0 0.0
        %9775 = vmatpush1.msra.mxu0 0.0
        %9776 = vmatprep.subr.mxu0 0.0
        %9777 = vmatpush1.msra.mxu0 0.0
        %9778 = vmatprep.subr.mxu0 0.0
        %9779 = vmatpush1.msra.mxu0 0.0
        %9780 = vmatprep.subr.mxu0 0.0
        %9781 = vmatpush1.msra.mxu0 0.0
        %9782 = vmatprep.subr.mxu0 0.0
        %9783 = vmatpush1.msra.mxu0 0.0
        %9784 = vmatprep.subr.mxu0 0.0
        %9785 = vmatpush1.msra.mxu0 0.0
        %9786 = vmatprep.subr.mxu0 0.0
        %9787 = vmatpush1.msra.mxu0 0.0
        %9788 = vmatprep.subr.mxu0 0.0
        %9789 = vmatpush1.msra.mxu0 0.0
        %9790 = vmatprep.subr.mxu0 0.0
        %9791 = vmatpush1.msra.mxu0 0.0
        %9792 = vmatprep.subr.mxu0 0.0
        %9793 = vmatpush1.msra.mxu0 0.0
        %9794 = vmatprep.subr.mxu0 0.0
        %9795 = vmatpush1.msra.mxu0 0.0
        %9796 = vmatprep.subr.mxu0 0.0
        %9797 = vmatpush1.msra.mxu0 0.0
        %9798 = vmatprep.subr.mxu0 0.0
        %9799 = vmatpush1.msra.mxu0 0.0
        %9800 = vmatprep.subr.mxu0 0.0
        %9801 = vmatpush1.msra.mxu0 0.0
        %9802 = vmatprep.subr.mxu0 0.0
        %9803 = vmatpush1.msra.mxu0 %v5788
        %9804 = vmatprep.subr.mxu0 0.0
        %9805 = vmatpush2.msra.mxu0 0.0
        %9806 = vmatprep.subr.mxu0 0.0
        %9807 = vmatpush2.msra.mxu0 0.0
        %9808 = vmatprep.subr.mxu0 0.0
        %9809 = vmatpush2.msra.mxu0 0.0
        %9810 = vmatprep.subr.mxu0 0.0
        %9811 = vmatpush2.msra.mxu0 0.0
        %9812 = vmatprep.subr.mxu0 0.0
        %9813 = vmatpush2.msra.mxu0 0.0
        %9814 = vmatprep.subr.mxu0 0.0
        %9815 = vmatpush2.msra.mxu0 0.0
        %9816 = vmatprep.subr.mxu0 0.0
        %9817 = vmatpush2.msra.mxu0 0.0
        %9818 = vmatprep.subr.mxu0 0.0
        %9819 = vmatpush2.msra.mxu0 0.0
        %9820 = vmatprep.subr.mxu0 0.0
        %9821 = vmatpush2.msra.mxu0 0.0
        %9822 = vmatprep.subr.mxu0 0.0
        %9823 = vmatpush2.msra.mxu0 0.0
        %9824 = vmatprep.subr.mxu0 0.0
        %9825 = vmatpush2.msra.mxu0 0.0
        %9826 = vmatprep.subr.mxu0 0.0
        %9827 = vmatpush2.msra.mxu0 0.0
        %9828 = vmatprep.subr.mxu0 0.0
        %9829 = vmatpush2.msra.mxu0 0.0
        %9830 = vmatprep.subr.mxu0 0.0
        %9831 = vmatpush2.msra.mxu0 0.0
        %9832 = vmatprep.subr.mxu0 0.0
        %9833 = vmatpush2.msra.mxu0 0.0
        %9834 = vmatprep.subr.mxu0 0.0
        %9835 = vmatpush2.msra.mxu0 0.0
        %9836 = vmatprep.mubr.f32.mxu0 0.0
        %9837 = vmatmul.mubr.f32.gmra.mxu0 %v9770
        %v9838 = vpop.f32.mrf.mxu0
        %v9839 = vadd.f32 0.0, %v9838
        %v9840 = vpop.f32.mrf.mxu0
        %9841 = vdwg.mxu0
        %v9843 = vsel %vm6494, %v9618, 0
        %9845 = vmatprep.subr.mxu0 0.0
        %9846 = vmatpush1.msra.mxu0 0.0
        %9847 = vmatprep.subr.mxu0 0.0
        %9848 = vmatpush1.msra.mxu0 0.0
        %9849 = vmatprep.subr.mxu0 0.0
        %9850 = vmatpush1.msra.mxu0 0.0
        %9851 = vmatprep.subr.mxu0 0.0
        %9852 = vmatpush1.msra.mxu0 0.0
        %9853 = vmatprep.subr.mxu0 0.0
        %9854 = vmatpush1.msra.mxu0 0.0
        %9855 = vmatprep.subr.mxu0 0.0
        %9856 = vmatpush1.msra.mxu0 0.0
        %9857 = vmatprep.subr.mxu0 0.0
        %9858 = vmatpush1.msra.mxu0 0.0
        %9859 = vmatprep.subr.mxu0 0.0
        %9860 = vmatpush1.msra.mxu0 0.0
        %9861 = vmatprep.subr.mxu0 0.0
        %9862 = vmatpush1.msra.mxu0 0.0
        %9863 = vmatprep.subr.mxu0 0.0
        %9864 = vmatpush1.msra.mxu0 0.0
        %9865 = vmatprep.subr.mxu0 0.0
        %9866 = vmatpush1.msra.mxu0 0.0
        %9867 = vmatprep.subr.mxu0 0.0
        %9868 = vmatpush1.msra.mxu0 0.0
        %9869 = vmatprep.subr.mxu0 0.0
        %9870 = vmatpush1.msra.mxu0 0.0
        %9871 = vmatprep.subr.mxu0 0.0
        %9872 = vmatpush1.msra.mxu0 0.0
        %9873 = vmatprep.subr.mxu0 0.0
        %9874 = vmatpush1.msra.mxu0 0.0
        %9875 = vmatprep.subr.mxu0 0.0
        %9876 = vmatpush1.msra.mxu0 %v5793
        %9877 = vmatprep.subr.mxu0 0.0
        %9878 = vmatpush2.msra.mxu0 0.0
        %9879 = vmatprep.subr.mxu0 0.0
        %9880 = vmatpush2.msra.mxu0 0.0
        %9881 = vmatprep.subr.mxu0 0.0
        %9882 = vmatpush2.msra.mxu0 0.0
        %9883 = vmatprep.subr.mxu0 0.0
        %9884 = vmatpush2.msra.mxu0 0.0
        %9885 = vmatprep.subr.mxu0 0.0
        %9886 = vmatpush2.msra.mxu0 0.0
        %9887 = vmatprep.subr.mxu0 0.0
        %9888 = vmatpush2.msra.mxu0 0.0
        %9889 = vmatprep.subr.mxu0 0.0
        %9890 = vmatpush2.msra.mxu0 0.0
        %9891 = vmatprep.subr.mxu0 0.0
        %9892 = vmatpush2.msra.mxu0 0.0
        %9893 = vmatprep.subr.mxu0 0.0
        %9894 = vmatpush2.msra.mxu0 0.0
        %9895 = vmatprep.subr.mxu0 0.0
        %9896 = vmatpush2.msra.mxu0 0.0
        %9897 = vmatprep.subr.mxu0 0.0
        %9898 = vmatpush2.msra.mxu0 0.0
        %9899 = vmatprep.subr.mxu0 0.0
        %9900 = vmatpush2.msra.mxu0 0.0
        %9901 = vmatprep.subr.mxu0 0.0
        %9902 = vmatpush2.msra.mxu0 0.0
        %9903 = vmatprep.subr.mxu0 0.0
        %9904 = vmatpush2.msra.mxu0 0.0
        %9905 = vmatprep.subr.mxu0 0.0
        %9906 = vmatpush2.msra.mxu0 0.0
        %9907 = vmatprep.subr.mxu0 0.0
        %9908 = vmatpush2.msra.mxu0 0.0
        %9909 = vmatprep.mubr.f32.mxu0 0.0
        %9910 = vmatmul.mubr.f32.gmra.mxu0 %v9843
        %v9911 = vpop.f32.mrf.mxu0
        %v9912 = vadd.f32 0.0, %v9911
        %v9913 = vpop.f32.mrf.mxu0
        %9914 = vdwg.mxu0
        %v9916 = vsel %vm6494, %v9619, 0
        %9918 = vmatprep.subr.mxu0 0.0
        %9919 = vmatpush1.msra.mxu0 0.0
        %9920 = vmatprep.subr.mxu0 0.0
        %9921 = vmatpush1.msra.mxu0 0.0
        %9922 = vmatprep.subr.mxu0 0.0
        %9923 = vmatpush1.msra.mxu0 0.0
        %9924 = vmatprep.subr.mxu0 0.0
        %9925 = vmatpush1.msra.mxu0 0.0
        %9926 = vmatprep.subr.mxu0 0.0
        %9927 = vmatpush1.msra.mxu0 0.0
        %9928 = vmatprep.subr.mxu0 0.0
        %9929 = vmatpush1.msra.mxu0 0.0
        %9930 = vmatprep.subr.mxu0 0.0
        %9931 = vmatpush1.msra.mxu0 0.0
        %9932 = vmatprep.subr.mxu0 0.0
        %9933 = vmatpush1.msra.mxu0 0.0
        %9934 = vmatprep.subr.mxu0 0.0
        %9935 = vmatpush1.msra.mxu0 0.0
        %9936 = vmatprep.subr.mxu0 0.0
        %9937 = vmatpush1.msra.mxu0 0.0
        %9938 = vmatprep.subr.mxu0 0.0
        %9939 = vmatpush1.msra.mxu0 0.0
        %9940 = vmatprep.subr.mxu0 0.0
        %9941 = vmatpush1.msra.mxu0 0.0
        %9942 = vmatprep.subr.mxu0 0.0
        %9943 = vmatpush1.msra.mxu0 0.0
        %9944 = vmatprep.subr.mxu0 0.0
        %9945 = vmatpush1.msra.mxu0 0.0
        %9946 = vmatprep.subr.mxu0 0.0
        %9947 = vmatpush1.msra.mxu0 0.0
        %9948 = vmatprep.subr.mxu0 0.0
        %9949 = vmatpush1.msra.mxu0 %v5798
        %9950 = vmatprep.subr.mxu0 0.0
        %9951 = vmatpush2.msra.mxu0 0.0
        %9952 = vmatprep.subr.mxu0 0.0
        %9953 = vmatpush2.msra.mxu0 0.0
        %9954 = vmatprep.subr.mxu0 0.0
        %9955 = vmatpush2.msra.mxu0 0.0
        %9956 = vmatprep.subr.mxu0 0.0
        %9957 = vmatpush2.msra.mxu0 0.0
        %9958 = vmatprep.subr.mxu0 0.0
        %9959 = vmatpush2.msra.mxu0 0.0
        %9960 = vmatprep.subr.mxu0 0.0
        %9961 = vmatpush2.msra.mxu0 0.0
        %9962 = vmatprep.subr.mxu0 0.0
        %9963 = vmatpush2.msra.mxu0 0.0
        %9964 = vmatprep.subr.mxu0 0.0
        %9965 = vmatpush2.msra.mxu0 0.0
        %9966 = vmatprep.subr.mxu0 0.0
        %9967 = vmatpush2.msra.mxu0 0.0
        %9968 = vmatprep.subr.mxu0 0.0
        %9969 = vmatpush2.msra.mxu0 0.0
        %9970 = vmatprep.subr.mxu0 0.0
        %9971 = vmatpush2.msra.mxu0 0.0
        %9972 = vmatprep.subr.mxu0 0.0
        %9973 = vmatpush2.msra.mxu0 0.0
        %9974 = vmatprep.subr.mxu0 0.0
        %9975 = vmatpush2.msra.mxu0 0.0
        %9976 = vmatprep.subr.mxu0 0.0
        %9977 = vmatpush2.msra.mxu0 0.0
        %9978 = vmatprep.subr.mxu0 0.0
        %9979 = vmatpush2.msra.mxu0 0.0
        %9980 = vmatprep.subr.mxu0 0.0
        %9981 = vmatpush2.msra.mxu0 0.0
        %9982 = vmatprep.mubr.f32.mxu0 0.0
        %9983 = vmatmul.mubr.f32.gmra.mxu0 %v9916
        %v9984 = vpop.f32.mrf.mxu0
        %v9985 = vadd.f32 0.0, %v9984
        %v9986 = vpop.f32.mrf.mxu0
        %9987 = vdwg.mxu0
        %v9989 = vsel %vm6494, %v9620, 0
        %9991 = vmatprep.subr.mxu0 0.0
        %9992 = vmatpush1.msra.mxu0 0.0
        %9993 = vmatprep.subr.mxu0 0.0
        %9994 = vmatpush1.msra.mxu0 0.0
        %9995 = vmatprep.subr.mxu0 0.0
        %9996 = vmatpush1.msra.mxu0 0.0
        %9997 = vmatprep.subr.mxu0 0.0
        %9998 = vmatpush1.msra.mxu0 0.0
        %9999 = vmatprep.subr.mxu0 0.0
        %10000 = vmatpush1.msra.mxu0 0.0
        %10001 = vmatprep.subr.mxu0 0.0
        %10002 = vmatpush1.msra.mxu0 0.0
        %10003 = vmatprep.subr.mxu0 0.0
        %10004 = vmatpush1.msra.mxu0 0.0
        %10005 = vmatprep.subr.mxu0 0.0
        %10006 = vmatpush1.msra.mxu0 0.0
        %10007 = vmatprep.subr.mxu0 0.0
        %10008 = vmatpush1.msra.mxu0 0.0
        %10009 = vmatprep.subr.mxu0 0.0
        %10010 = vmatpush1.msra.mxu0 0.0
        %10011 = vmatprep.subr.mxu0 0.0
        %10012 = vmatpush1.msra.mxu0 0.0
        %10013 = vmatprep.subr.mxu0 0.0
        %10014 = vmatpush1.msra.mxu0 0.0
        %10015 = vmatprep.subr.mxu0 0.0
        %10016 = vmatpush1.msra.mxu0 0.0
        %10017 = vmatprep.subr.mxu0 0.0
        %10018 = vmatpush1.msra.mxu0 0.0
        %10019 = vmatprep.subr.mxu0 0.0
        %10020 = vmatpush1.msra.mxu0 0.0
        %10021 = vmatprep.subr.mxu0 0.0
        %10022 = vmatpush1.msra.mxu0 %v5803
        %10023 = vmatprep.subr.mxu0 0.0
        %10024 = vmatpush2.msra.mxu0 0.0
        %10025 = vmatprep.subr.mxu0 0.0
        %10026 = vmatpush2.msra.mxu0 0.0
        %10027 = vmatprep.subr.mxu0 0.0
        %10028 = vmatpush2.msra.mxu0 0.0
        %10029 = vmatprep.subr.mxu0 0.0
        %10030 = vmatpush2.msra.mxu0 0.0
        %10031 = vmatprep.subr.mxu0 0.0
        %10032 = vmatpush2.msra.mxu0 0.0
        %10033 = vmatprep.subr.mxu0 0.0
        %10034 = vmatpush2.msra.mxu0 0.0
        %10035 = vmatprep.subr.mxu0 0.0
        %10036 = vmatpush2.msra.mxu0 0.0
        %10037 = vmatprep.subr.mxu0 0.0
        %10038 = vmatpush2.msra.mxu0 0.0
        %10039 = vmatprep.subr.mxu0 0.0
        %10040 = vmatpush2.msra.mxu0 0.0
        %10041 = vmatprep.subr.mxu0 0.0
        %10042 = vmatpush2.msra.mxu0 0.0
        %10043 = vmatprep.subr.mxu0 0.0
        %10044 = vmatpush2.msra.mxu0 0.0
        %10045 = vmatprep.subr.mxu0 0.0
        %10046 = vmatpush2.msra.mxu0 0.0
        %10047 = vmatprep.subr.mxu0 0.0
        %10048 = vmatpush2.msra.mxu0 0.0
        %10049 = vmatprep.subr.mxu0 0.0
        %10050 = vmatpush2.msra.mxu0 0.0
        %10051 = vmatprep.subr.mxu0 0.0
        %10052 = vmatpush2.msra.mxu0 0.0
        %10053 = vmatprep.subr.mxu0 0.0
        %10054 = vmatpush2.msra.mxu0 0.0
        %10055 = vmatprep.mubr.f32.mxu0 0.0
        %10056 = vmatmul.mubr.f32.gmra.mxu0 %v9989
        %v10057 = vpop.f32.mrf.mxu0
        %v10058 = vadd.f32 0.0, %v10057
        %v10059 = vpop.f32.mrf.mxu0
        %10060 = vdwg.mxu0
        %v10062 = vsel %vm6494, %v9621, 0
        %10064 = vmatprep.subr.mxu0 0.0
        %10065 = vmatpush1.msra.mxu0 0.0
        %10066 = vmatprep.subr.mxu0 0.0
        %10067 = vmatpush1.msra.mxu0 0.0
        %10068 = vmatprep.subr.mxu0 0.0
        %10069 = vmatpush1.msra.mxu0 0.0
        %10070 = vmatprep.subr.mxu0 0.0
        %10071 = vmatpush1.msra.mxu0 0.0
        %10072 = vmatprep.subr.mxu0 0.0
        %10073 = vmatpush1.msra.mxu0 0.0
        %10074 = vmatprep.subr.mxu0 0.0
        %10075 = vmatpush1.msra.mxu0 0.0
        %10076 = vmatprep.subr.mxu0 0.0
        %10077 = vmatpush1.msra.mxu0 0.0
        %10078 = vmatprep.subr.mxu0 0.0
        %10079 = vmatpush1.msra.mxu0 0.0
        %10080 = vmatprep.subr.mxu0 0.0
        %10081 = vmatpush1.msra.mxu0 0.0
        %10082 = vmatprep.subr.mxu0 0.0
        %10083 = vmatpush1.msra.mxu0 0.0
        %10084 = vmatprep.subr.mxu0 0.0
        %10085 = vmatpush1.msra.mxu0 0.0
        %10086 = vmatprep.subr.mxu0 0.0
        %10087 = vmatpush1.msra.mxu0 0.0
        %10088 = vmatprep.subr.mxu0 0.0
        %10089 = vmatpush1.msra.mxu0 0.0
        %10090 = vmatprep.subr.mxu0 0.0
        %10091 = vmatpush1.msra.mxu0 0.0
        %10092 = vmatprep.subr.mxu0 0.0
        %10093 = vmatpush1.msra.mxu0 0.0
        %10094 = vmatprep.subr.mxu0 0.0
        %10095 = vmatpush1.msra.mxu0 %v5808
        %10096 = vmatprep.subr.mxu0 0.0
        %10097 = vmatpush2.msra.mxu0 0.0
        %10098 = vmatprep.subr.mxu0 0.0
        %10099 = vmatpush2.msra.mxu0 0.0
        %10100 = vmatprep.subr.mxu0 0.0
        %10101 = vmatpush2.msra.mxu0 0.0
        %10102 = vmatprep.subr.mxu0 0.0
        %10103 = vmatpush2.msra.mxu0 0.0
        %10104 = vmatprep.subr.mxu0 0.0
        %10105 = vmatpush2.msra.mxu0 0.0
        %10106 = vmatprep.subr.mxu0 0.0
        %10107 = vmatpush2.msra.mxu0 0.0
        %10108 = vmatprep.subr.mxu0 0.0
        %10109 = vmatpush2.msra.mxu0 0.0
        %10110 = vmatprep.subr.mxu0 0.0
        %10111 = vmatpush2.msra.mxu0 0.0
        %10112 = vmatprep.subr.mxu0 0.0
        %10113 = vmatpush2.msra.mxu0 0.0
        %10114 = vmatprep.subr.mxu0 0.0
        %10115 = vmatpush2.msra.mxu0 0.0
        %10116 = vmatprep.subr.mxu0 0.0
        %10117 = vmatpush2.msra.mxu0 0.0
        %10118 = vmatprep.subr.mxu0 0.0
        %10119 = vmatpush2.msra.mxu0 0.0
        %10120 = vmatprep.subr.mxu0 0.0
        %10121 = vmatpush2.msra.mxu0 0.0
        %10122 = vmatprep.subr.mxu0 0.0
        %10123 = vmatpush2.msra.mxu0 0.0
        %10124 = vmatprep.subr.mxu0 0.0
        %10125 = vmatpush2.msra.mxu0 0.0
        %10126 = vmatprep.subr.mxu0 0.0
        %10127 = vmatpush2.msra.mxu0 0.0
        %10128 = vmatprep.mubr.f32.mxu0 0.0
        %10129 = vmatmul.mubr.f32.gmra.mxu0 %v10062
        %v10130 = vpop.f32.mrf.mxu0
        %v10131 = vadd.f32 0.0, %v10130
        %v10132 = vpop.f32.mrf.mxu0
        %10133 = vdwg.mxu0
        %v10135 = vsel %vm6494, %v9622, 0
        %10137 = vmatprep.subr.mxu0 0.0
        %10138 = vmatpush1.msra.mxu0 0.0
        %10139 = vmatprep.subr.mxu0 0.0
        %10140 = vmatpush1.msra.mxu0 0.0
        %10141 = vmatprep.subr.mxu0 0.0
        %10142 = vmatpush1.msra.mxu0 0.0
        %10143 = vmatprep.subr.mxu0 0.0
        %10144 = vmatpush1.msra.mxu0 0.0
        %10145 = vmatprep.subr.mxu0 0.0
        %10146 = vmatpush1.msra.mxu0 0.0
        %10147 = vmatprep.subr.mxu0 0.0
        %10148 = vmatpush1.msra.mxu0 0.0
        %10149 = vmatprep.subr.mxu0 0.0
        %10150 = vmatpush1.msra.mxu0 0.0
        %10151 = vmatprep.subr.mxu0 0.0
        %10152 = vmatpush1.msra.mxu0 0.0
        %10153 = vmatprep.subr.mxu0 0.0
        %10154 = vmatpush1.msra.mxu0 0.0
        %10155 = vmatprep.subr.mxu0 0.0
        %10156 = vmatpush1.msra.mxu0 0.0
        %10157 = vmatprep.subr.mxu0 0.0
        %10158 = vmatpush1.msra.mxu0 0.0
        %10159 = vmatprep.subr.mxu0 0.0
        %10160 = vmatpush1.msra.mxu0 0.0
        %10161 = vmatprep.subr.mxu0 0.0
        %10162 = vmatpush1.msra.mxu0 0.0
        %10163 = vmatprep.subr.mxu0 0.0
        %10164 = vmatpush1.msra.mxu0 0.0
        %10165 = vmatprep.subr.mxu0 0.0
        %10166 = vmatpush1.msra.mxu0 0.0
        %10167 = vmatprep.subr.mxu0 0.0
        %10168 = vmatpush1.msra.mxu0 %v5813
        %10169 = vmatprep.subr.mxu0 0.0
        %10170 = vmatpush2.msra.mxu0 0.0
        %10171 = vmatprep.subr.mxu0 0.0
        %10172 = vmatpush2.msra.mxu0 0.0
        %10173 = vmatprep.subr.mxu0 0.0
        %10174 = vmatpush2.msra.mxu0 0.0
        %10175 = vmatprep.subr.mxu0 0.0
        %10176 = vmatpush2.msra.mxu0 0.0
        %10177 = vmatprep.subr.mxu0 0.0
        %10178 = vmatpush2.msra.mxu0 0.0
        %10179 = vmatprep.subr.mxu0 0.0
        %10180 = vmatpush2.msra.mxu0 0.0
        %10181 = vmatprep.subr.mxu0 0.0
        %10182 = vmatpush2.msra.mxu0 0.0
        %10183 = vmatprep.subr.mxu0 0.0
        %10184 = vmatpush2.msra.mxu0 0.0
        %10185 = vmatprep.subr.mxu0 0.0
        %10186 = vmatpush2.msra.mxu0 0.0
        %10187 = vmatprep.subr.mxu0 0.0
        %10188 = vmatpush2.msra.mxu0 0.0
        %10189 = vmatprep.subr.mxu0 0.0
        %10190 = vmatpush2.msra.mxu0 0.0
        %10191 = vmatprep.subr.mxu0 0.0
        %10192 = vmatpush2.msra.mxu0 0.0
        %10193 = vmatprep.subr.mxu0 0.0
        %10194 = vmatpush2.msra.mxu0 0.0
        %10195 = vmatprep.subr.mxu0 0.0
        %10196 = vmatpush2.msra.mxu0 0.0
        %10197 = vmatprep.subr.mxu0 0.0
        %10198 = vmatpush2.msra.mxu0 0.0
        %10199 = vmatprep.subr.mxu0 0.0
        %10200 = vmatpush2.msra.mxu0 0.0
        %10201 = vmatprep.mubr.f32.mxu0 0.0
        %10202 = vmatmul.mubr.f32.gmra.mxu0 %v10135
        %v10203 = vpop.f32.mrf.mxu0
        %v10204 = vadd.f32 0.0, %v10203
        %v10205 = vpop.f32.mrf.mxu0
        %10206 = vdwg.mxu0
        %v10207 = vmul.f32 %v9615, %v5287
        %v10208 = vmul.f32 %v9616, %v5319
        %v10209 = vmul.f32 %v9617, %v5351
        %v10210 = vmul.f32 %v9618, %v5383
        %v10211 = vmul.f32 %v9619, %v5415
        %v10212 = vmul.f32 %v9620, %v5447
        %v10213 = vmul.f32 %v9621, %v5479
        %v10214 = vmul.f32 %v9622, %v5511
        %v10215 = vsel %vm6494, %v10207, 0.0
        %10216 = vadd.xlane.f32.xlu0 %v10215
        %v10217 = vpop.xlane.xlu0 %10216
        %v10218 = vsel %vm6494, %v10208, 0.0
        %10219 = vadd.xlane.f32.xlu0 %v10218
        %v10220 = vpop.xlane.xlu0 %10219
        %v10221 = vsel %vm6494, %v10209, 0.0
        %10222 = vadd.xlane.f32.xlu0 %v10221
        %v10223 = vpop.xlane.xlu0 %10222
        %v10224 = vsel %vm6494, %v10210, 0.0
        %10225 = vadd.xlane.f32.xlu0 %v10224
        %v10226 = vpop.xlane.xlu0 %10225
        %v10227 = vsel %vm6494, %v10211, 0.0
        %10228 = vadd.xlane.f32.xlu0 %v10227
        %v10229 = vpop.xlane.xlu0 %10228
        %v10230 = vsel %vm6494, %v10212, 0.0
        %10231 = vadd.xlane.f32.xlu0 %v10230
        %v10232 = vpop.xlane.xlu0 %10231
        %v10233 = vsel %vm6494, %v10213, 0.0
        %10234 = vadd.xlane.f32.xlu0 %v10233
        %v10235 = vpop.xlane.xlu0 %10234
        %v10236 = vsel %vm6494, %v10214, 0.0
        %10237 = vadd.xlane.f32.xlu0 %v10236
        %v10238 = vpop.xlane.xlu0 %10237
        %v10239 = vadd.f32 %v8767, %v9693
        %v10240 = vadd.f32 %v8768, %v9766
        %v10241 = vadd.f32 %v8769, %v9839
        %v10242 = vadd.f32 %v8770, %v9912
        %v10243 = vadd.f32 %v8771, %v9985
        %v10244 = vadd.f32 %v8772, %v10058
        %v10245 = vadd.f32 %v8773, %v10131
        %v10246 = vadd.f32 %v8774, %v10204
        %v10247 = vmul.f32 %v10217, %v8778
        %v10248 = vmul.f32 %v10220, %v8778
        %v10249 = vmul.f32 %v10223, %v8778
        %v10250 = vmul.f32 %v10226, %v8778
        %v10251 = vmul.f32 %v10229, %v8778
        %v10252 = vmul.f32 %v10232, %v8778
        %v10253 = vmul.f32 %v10235, %v8778
        %v10254 = vmul.f32 %v10238, %v8778
        %v10255 = vadd.f32 %v10239, %v10247
        %v10256 = vadd.f32 %v10240, %v10248
        %v10257 = vadd.f32 %v10241, %v10249
        %v10258 = vadd.f32 %v10242, %v10250
        %v10259 = vadd.f32 %v10243, %v10251
        %v10260 = vadd.f32 %v10244, %v10252
        %v10261 = vadd.f32 %v10245, %v10253
        %v10262 = vadd.f32 %v10246, %v10254
        %v10263 = vmul.f32 %v10255, 0.33333334
        %v10264 = vmul.f32 %v10256, 0.33333334
        %v10265 = vmul.f32 %v10257, 0.33333334
        %v10266 = vmul.f32 %v10258, 0.33333334
        %v10267 = vmul.f32 %v10259, 0.33333334
        %v10268 = vmul.f32 %v10260, 0.33333334
        %v10269 = vmul.f32 %v10261, 0.33333334
        %v10270 = vmul.f32 %v10262, 0.33333334
        %10279 = vrot.lane.b32.xlu0 %v5778, 96
        %v10280 = vpop.permute.xlu0 %10279
        %10281 = vrot.lane.b32.xlu0 %v5783, 96
        %v10282 = vpop.permute.xlu0 %10281
        %10283 = vrot.lane.b32.xlu0 %v5788, 96
        %v10284 = vpop.permute.xlu0 %10283
        %10285 = vrot.lane.b32.xlu0 %v5793, 96
        %v10286 = vpop.permute.xlu0 %10285
        %10287 = vrot.lane.b32.xlu0 %v5798, 96
        %v10288 = vpop.permute.xlu0 %10287
        %10289 = vrot.lane.b32.xlu0 %v5803, 96
        %v10290 = vpop.permute.xlu0 %10289
        %10291 = vrot.lane.b32.xlu0 %v5808, 96
        %v10292 = vpop.permute.xlu0 %10291
        %10293 = vrot.lane.b32.xlu0 %v5813, 96
        %v10294 = vpop.permute.xlu0 %10293
        %v10303 = vadd.f32 %v10263, %v10280
        %v10304 = vadd.f32 %v10264, %v10282
        %v10305 = vadd.f32 %v10265, %v10284
        %v10306 = vadd.f32 %v10266, %v10286
        %v10307 = vadd.f32 %v10267, %v10288
        %v10308 = vadd.f32 %v10268, %v10290
        %v10309 = vadd.f32 %v10269, %v10292
        %v10310 = vadd.f32 %v10270, %v10294
        %v10311 = vmax.f32 %v10303, 0.0
        %v10312 = vmax.f32 %v10304, 0.0
        %v10313 = vmax.f32 %v10305, 0.0
        %v10314 = vmax.f32 %v10306, 0.0
        %v10315 = vmax.f32 %v10307, 0.0
        %v10316 = vmax.f32 %v10308, 0.0
        %v10317 = vmax.f32 %v10309, 0.0
        %v10318 = vmax.f32 %v10310, 0.0
        %v10319 = vsel %vm5829, %v10311, 0.0
        %v10320 = vrot.slane %v10319, 4
        %v10321 = vadd.f32 %v10319, %v10320
        %v10322 = vrot.slane %v10321, 2
        %v10323 = vadd.f32 %v10321, %v10322
        %v10324 = vrot.slane %v10323, 1
        %v10325 = vadd.f32 %v10323, %v10324
        %v10326 = vsel %vm5829, %v10312, 0.0
        %v10327 = vrot.slane %v10326, 4
        %v10328 = vadd.f32 %v10326, %v10327
        %v10329 = vrot.slane %v10328, 2
        %v10330 = vadd.f32 %v10328, %v10329
        %v10331 = vrot.slane %v10330, 1
        %v10332 = vadd.f32 %v10330, %v10331
        %v10333 = vsel %vm5829, %v10313, 0.0
        %v10334 = vrot.slane %v10333, 4
        %v10335 = vadd.f32 %v10333, %v10334
        %v10336 = vrot.slane %v10335, 2
        %v10337 = vadd.f32 %v10335, %v10336
        %v10338 = vrot.slane %v10337, 1
        %v10339 = vadd.f32 %v10337, %v10338
        %v10340 = vsel %vm5829, %v10314, 0.0
        %v10341 = vrot.slane %v10340, 4
        %v10342 = vadd.f32 %v10340, %v10341
        %v10343 = vrot.slane %v10342, 2
        %v10344 = vadd.f32 %v10342, %v10343
        %v10345 = vrot.slane %v10344, 1
        %v10346 = vadd.f32 %v10344, %v10345
        %v10347 = vsel %vm5829, %v10315, 0.0
        %v10348 = vrot.slane %v10347, 4
        %v10349 = vadd.f32 %v10347, %v10348
        %v10350 = vrot.slane %v10349, 2
        %v10351 = vadd.f32 %v10349, %v10350
        %v10352 = vrot.slane %v10351, 1
        %v10353 = vadd.f32 %v10351, %v10352
        %v10354 = vsel %vm5829, %v10316, 0.0
        %v10355 = vrot.slane %v10354, 4
        %v10356 = vadd.f32 %v10354, %v10355
        %v10357 = vrot.slane %v10356, 2
        %v10358 = vadd.f32 %v10356, %v10357
        %v10359 = vrot.slane %v10358, 1
        %v10360 = vadd.f32 %v10358, %v10359
        %v10361 = vsel %vm5829, %v10317, 0.0
        %v10362 = vrot.slane %v10361, 4
        %v10363 = vadd.f32 %v10361, %v10362
        %v10364 = vrot.slane %v10363, 2
        %v10365 = vadd.f32 %v10363, %v10364
        %v10366 = vrot.slane %v10365, 1
        %v10367 = vadd.f32 %v10365, %v10366
        %v10368 = vsel %vm5829, %v10318, 0.0
        %v10369 = vrot.slane %v10368, 4
        %v10370 = vadd.f32 %v10368, %v10369
        %v10371 = vrot.slane %v10370, 2
        %v10372 = vadd.f32 %v10370, %v10371
        %v10373 = vrot.slane %v10372, 1
        %v10374 = vadd.f32 %v10372, %v10373
        %v10375 = vmul.f32 %v10325, 0.125
        %v10376 = vmul.f32 %v10332, 0.125
        %v10377 = vmul.f32 %v10339, 0.125
        %v10378 = vmul.f32 %v10346, 0.125
        %v10379 = vmul.f32 %v10353, 0.125
        %v10380 = vmul.f32 %v10360, 0.125
        %v10381 = vmul.f32 %v10367, 0.125
        %v10382 = vmul.f32 %v10374, 0.125
        %vm10391 = vcmask 1041409
        %v10392 = vsel %vm10391, %v10376, %v10375
        %vm10393 = vcmask 1042434
        %v10394 = vsel %vm10393, %v10377, %v10392
        %vm10395 = vcmask 1043459
        %v10396 = vsel %vm10395, %v10378, %v10394
        %vm10397 = vcmask 1044484
        %v10398 = vsel %vm10397, %v10379, %v10396
        %vm10399 = vcmask 1045509
        %v10400 = vsel %vm10399, %v10380, %v10398
        %vm10401 = vcmask 1046534
        %v10402 = vsel %vm10401, %v10381, %v10400
        %vm10403 = vcmask 1047559
        %v10404 = vsel %vm10403, %v10382, %v10402
        %10406 = vst.msk [vmem:[%s477] sm:$0xff] %vm5829, %v10404
        %s10407 = sand.u32 %s340, 1
        %s10408 = scalar_lea.sflag [#allocation3], %s10407
        %s10409 = sand.u32 %s340, 1
        %s10410 = smul.addr %s10409, 8
        %s10411 = scalar_lea.vmem [#allocation2], %s10410
        // Predicated region
        $region77: #{tpu_custom_call.1} parent=75 // pred_check
          %p10412 = pneg %p350
        $region78: #{tpu_custom_call.1} parent=75 // pred_check_branch
          %10414 = sbr.rel (%p10412) target = $region80
        $region79: #{tpu_custom_call.1} parent=75 // pred_region
          %s10416 = ssub.s32 128, 128
          %10417 = vsyncadd %s10408, %s10416
          %s10418 = smul.addr %s28, 128
          %s10419 = scalar_lea.hbm %s14, %s10418
          %s10421 = sshll.u32 %s10411, 4
          %s10422 = int_to_ptr.vmem [resolvable:$true] %s10421
          %10424 = dma.vmem_to_hbm [thread:$0]  %s10422, 128, %s10419, %s10408
        $region80: #{tpu_custom_call.1} parent=75 // pred_fallthru
          _
      $region76: #{tpu_custom_call.1} parent=5 // pred_fallthru
        _
      %p10425 = scmp.le.s32.totalorder 2, %s23
      // Predicated region
      $region81: #{tpu_custom_call.1} parent=5 // pred_check
        %p10426 = pneg %p10425
      $region82: #{tpu_custom_call.1} parent=5 // pred_check_branch
        %10428 = sbr.rel (%p10426) target = $region84
      $region83: #{tpu_custom_call.1} parent=5 // pred_region
        %s10429 = ssub.s32 %s23, 2
        // Predicated region
        $region85: #{tpu_custom_call.1} parent=83 // pred_check
          %p10430 = pneg %p356
        $region86: #{tpu_custom_call.1} parent=83 // pred_check_branch
          %10432 = sbr.rel (%p10430) target = $region88
        $region87: #{tpu_custom_call.1} parent=83 // pred_region
          %s10433 = sand.u32 %s341, 1
          %s10434 = scalar_lea.sflag [#allocation3], %s10433
          %s10435 = sand.u32 %s341, 1
          %s10436 = smul.addr %s10435, 8
          %s10437 = scalar_lea.vmem [#allocation2], %s10436
          %10438 = dma.done %s10434, 128
        $region88: #{tpu_custom_call.1} parent=83 // pred_fallthru
          _
      $region84: #{tpu_custom_call.1} parent=5 // pred_fallthru
        _
    $region6: #{tpu_custom_call.1} parent=1 // loop_footer
      %s27 = sadd.s32 1, %s23
    $region7: #{tpu_custom_call.1} parent=1 // loop_footer_branch
      %22 = sbr.rel target = $region3
    $region8: #{tpu_custom_call.1} parent=1 // loop_exit
      _
    %10439 = vsyncpa [#allocation3], 1
    %s10440 = scalar_lea.sflag [#allocation3], 1
    %10441 = vsyncpa %s10440, 1

</llo_original>
